<compile_context>
chip_gen: v7x
topology: tpu7x:2x2x1
jax: 0.10.0
libtpu: 0.0.40
codegen_flags: <defaults>
</compile_context>

<pallas_src>
import functools

import jax
import jax.numpy as jnp
from jax import lax
from jax.experimental import pallas as pl
from jax.experimental.pallas import tpu as pltpu

FEAT = 65          # LSTM input size == hidden size (from the module)
HID = 65
F_PAD = 128        # lane-padded feature width
H_PAD = 128        # lane-padded hidden width
G_PAD = 4 * H_PAD  # fused gate width (512)
OUT_PAD = 128      # lane-padded Linear output width
B_TILE = 32        # sublane tile for batch (raised from 8 per perf review)

# PyTorch gate order is (i, f, g, o); we pack as (i, f, o, g) so the sigmoid
# gates are one contiguous [:, :3H] slab and tanh is the last [:, 3H:] slab.
_GATE_ORDER = (0, 1, 3, 2)


def forex_lstm_kernel(x_ref, wih1_ref, whh1_ref, b1_ref,
                      w2_ref, b2_ref,
                      wlin_ref, blin_ref, out_ref,
                      xp1_ref, *, matmul_dtype=jnp.float32):
    T, B, Fp = x_ref.shape
    Hp = whh1_ref.shape[0]

    def dot(a, w):
        # Weights are already stored in matmul_dtype; only cast activations.
        return jnp.dot(a.astype(matmul_dtype), w,
                       preferred_element_type=jnp.float32)

    def apply_gates(pre, c):
        # pre: (B, 4*Hp) pre-activation, gate order i | f | o | g.
        ifo = jax.nn.sigmoid(pre[:, :3 * Hp])        # one contiguous EUP slab
        g = jnp.tanh(pre[:, 3 * Hp:])
        i = ifo[:, :Hp]
        f = ifo[:, Hp:2 * Hp]
        o = ifo[:, 2 * Hp:]
        c_new = f * c + i * g
        h_new = o * jnp.tanh(c_new)
        return h_new, c_new

    zeros = jnp.zeros((B, Hp), jnp.float32)          # init_hidden() == zeros

    # ---- Layer 1 input projections for ALL timesteps: one big MXU matmul. ----
    x_flat = x_ref[...].reshape(T * B, Fp)
    xp1_ref[...] = (dot(x_flat, wih1_ref[...]) + b1_ref[...]).reshape(T, B, 4 * Hp)

    # Hoist weight / bias loads out of the recurrence loop.
    whh1 = whh1_ref[...]          # (Hp, 4*Hp), matmul_dtype
    w2 = w2_ref[...]              # (2*Hp, 4*Hp) stacked [Wih2; Whh2], matmul_dtype
    b2 = b2_ref[...]              # (1, 4*Hp) f32

    # ---- Single interleaved recurrence over time: layer-1 then layer-2 per t. ----
    def step(t, carry):
        h1, c1, h2, c2 = carry
        # Layer 1: precomputed input projection + recurrent matmul.
        pre1 = xp1_ref[t] + dot(h1, whh1)
        h1, c1 = apply_gates(pre1, c1)
        # Layer 2: fused input+recurrent matmul, K = 2*Hp = 256.
        x2 = jnp.concatenate([h1, h2], axis=-1)      # (B, 2*Hp)
        pre2 = b2 + dot(x2, w2)
        h2, c2 = apply_gates(pre2, c2)
        return (h1, c1, h2, c2)

    _, _, h2_last, _ = lax.fori_loop(0, T, step, (zeros, zeros, zeros, zeros),
                                     unroll=True)

    # ---- Linear(65 -> 1) on the last top-layer hidden state (lane-padded). ----
    out_ref[...] = dot(h2_last, wlin_ref[...]) + blin_ref[...]


def forex_lstm_forward(x_btf, packed, *, matmul_dtype=jnp.float32):
    """x_btf: (B, T, 65) float32 (PyTorch batch_first layout). Returns (B, 1)."""
    B, T, F = x_btf.shape
    assert F == FEAT
    num_chunks = pl.cdiv(B, B_TILE)
    B_pad = num_chunks * B_TILE

    # Time-major + zero-pad batch to sublane multiple and features to 128 lanes.
    x_tbf = jnp.transpose(x_btf, (1, 0, 2))                 # (T, B, F)
    x_pad = jnp.zeros((T, B_pad, F_PAD), jnp.float32)
    x_pad = x_pad.at[:, :B, :FEAT].set(x_tbf)

    def wspec(shape):
        return pl.BlockSpec(shape, lambda b: (0, 0))

    grid_spec = pltpu.PrefetchScalarGridSpec(
        num_scalar_prefetch=0,
        grid=(num_chunks,),
        in_specs=[
            pl.BlockSpec((T, B_TILE, F_PAD), lambda b: (0, b, 0)),
            wspec((F_PAD, G_PAD)),        # wih1 (fused gates)
            wspec((H_PAD, G_PAD)),        # whh1 (fused gates)
            wspec((1, G_PAD)),            # b1 (b_ih + b_hh)
            wspec((2 * H_PAD, G_PAD)),    # stacked [Wih2; Whh2]
            wspec((1, G_PAD)),            # b2
            wspec((H_PAD, OUT_PAD)),      # linear weight
            wspec((1, OUT_PAD)),          # linear bias
        ],
        out_specs=pl.BlockSpec((B_TILE, OUT_PAD), lambda b: (b, 0)),
        scratch_shapes=[
            pltpu.VMEM((T, B_TILE, G_PAD), jnp.float32),   # layer-1 input projections
        ],
    )

    kernel = pl.pallas_call(
        functools.partial(forex_lstm_kernel, matmul_dtype=matmul_dtype),
        out_shape=jax.ShapeDtypeStruct((B_pad, OUT_PAD), jnp.float32),
        grid_spec=grid_spec,
        compiler_params=pltpu.CompilerParams(
            dimension_semantics=("parallel",)),   # batch chunks shard across TCs
    )
    out_pad = kernel(
        x_pad,
        packed["wih1"], packed["whh1"], packed["b1"],
        packed["w2"], packed["b2"],
        packed["wlin"], packed["blin"],
    )
    return out_pad[:B, :1]


# ---------------------------- parameter handling ----------------------------

def make_params(key):
    """Deterministic params in PyTorch nn.LSTM / nn.Linear layout & init ranges."""
    ks = jax.random.split(key, 10)
    bound = 1.0 / (HID ** 0.5)

    def u(k, shape):
        return jax.random.uniform(k, shape, jnp.float32, -bound, bound)

    p = {
        "w_ih_l0": u(ks[0], (4 * HID, FEAT)),
        "w_hh_l0": u(ks[1], (4 * HID, HID)),
        "b_ih_l0": u(ks[2], (4 * HID,)),
        "b_hh_l0": u(ks[3], (4 * HID,)),
        "w_ih_l1": u(ks[4], (4 * HID, HID)),
        "w_hh_l1": u(ks[5], (4 * HID, HID)),
        "b_ih_l1": u(ks[6], (4 * HID,)),
        "b_hh_l1": u(ks[7], (4 * HID,)),
    }
    xavier_std = (2.0 / (FEAT + 1)) ** 0.5
    p["w_lin"] = jax.random.normal(ks[8], (1, FEAT), jnp.float32) * xavier_std
    p["b_lin"] = jax.random.uniform(ks[9], (1,), jnp.float32, -bound, bound)
    return p


def _fuse_gate_weight(w_4h_in, in_pad):
    """(4H, in) PyTorch gate-stacked weight -> (in_pad, 4*H_PAD) fused, zero-padded."""
    in_dim = w_4h_in.shape[1]
    order = jnp.array(_GATE_ORDER)
    w = w_4h_in.reshape(4, HID, in_dim)[order]      # (4, H, in), order i,f,o,g
    w = jnp.transpose(w, (2, 0, 1))                 # (in, 4, H)  ==  W_g^T blocks
    out = jnp.zeros((in_pad, 4, H_PAD), jnp.float32)
    out = out.at[:in_dim, :, :HID].set(w)
    return out.reshape(in_pad, G_PAD)


def _fuse_gate_bias(b_ih, b_hh):
    order = jnp.array(_GATE_ORDER)
    b = (b_ih + b_hh).reshape(4, HID)[order]
    out = jnp.zeros((4, H_PAD), jnp.float32).at[:, :HID].set(b)
    return out.reshape(1, G_PAD)


def pack_params(p, matmul_dtype=jnp.float32):
    """PyTorch-layout params -> fused, lane-padded, matmul_dtype-packed kernel params."""
    wih1 = _fuse_gate_weight(p["w_ih_l0"], F_PAD)
    whh1 = _fuse_gate_weight(p["w_hh_l0"], H_PAD)
    # Layer 2: stack the input and recurrent fused-gate weights along K (rows):
    #   concat([h1, h2]) (B, 256) @ [[Wih2],[Whh2]] (256, 512).
    wih2 = _fuse_gate_weight(p["w_ih_l1"], H_PAD)
    whh2 = _fuse_gate_weight(p["w_hh_l1"], H_PAD)
    w2 = jnp.concatenate([wih2, whh2], axis=0)      # (2*H_PAD, G_PAD)

    wlin = jnp.zeros((H_PAD, OUT_PAD), jnp.float32).at[:FEAT, 0].set(p["w_lin"][0])
    blin = jnp.zeros((1, OUT_PAD), jnp.float32).at[0, 0].set(p["b_lin"][0])
    return {
        "wih1": wih1.astype(matmul_dtype),
        "whh1": whh1.astype(matmul_dtype),
        "b1": _fuse_gate_bias(p["b_ih_l0"], p["b_hh_l0"]),
        "w2": w2.astype(matmul_dtype),
        "b2": _fuse_gate_bias(p["b_ih_l1"], p["b_hh_l1"]),
        "wlin": wlin.astype(matmul_dtype),
        "blin": blin,
    }


# ------------------------------ pure-JAX reference ------------------------------

def reference_forward(x_btf, p):
    """Eval-mode (no dropout) reference in PyTorch param layout."""
    B, T, _ = x_btf.shape

    def cell(x_t, h, c, w_ih, w_hh, b_ih, b_hh):
        gates = x_t @ w_ih.T + h @ w_hh.T + b_ih + b_hh     # (B, 4H), order i,f,g,o
        i, f, g, o = jnp.split(gates, 4, axis=-1)
        c_new = jax.nn.sigmoid(f) * c + jax.nn.sigmoid(i) * jnp.tanh(g)
        h_new = jax.nn.sigmoid(o) * jnp.tanh(c_new)
        return h_new, c_new

    h1 = c1 = h2 = c2 = jnp.zeros((B, HID), jnp.float32)
    for t in range(T):
        x_t = x_btf[:, t, :]
        h1, c1 = cell(x_t, h1, c1, p["w_ih_l0"], p["w_hh_l0"], p["b_ih_l0"], p["b_hh_l0"])
        h2, c2 = cell(h1, h2, c2, p["w_ih_l1"], p["w_hh_l1"], p["b_ih_l1"], p["b_hh_l1"])
    return h2 @ p["w_lin"].T + p["b_lin"]


if __name__ == "__main__":
    key = jax.random.PRNGKey(0)
    k_param, k_x = jax.random.split(key)

    B, T = 2, 8
    x = jax.random.normal(k_x, (B, T, FEAT), jnp.float32)   # (batch, seq, 65)
    torch_params = make_params(k_param)

    # Default f32 matmuls (matches the f32 reference to 1e-4).
    # On v6e/v7x: pack_params(..., jnp.bfloat16) + matmul_dtype=jnp.bfloat16 for speed.
    packed = pack_params(torch_params)
    out = forex_lstm_forward(x, packed)
    out = jax.block_until_ready(out)

    ref = reference_forward(x, torch_params)
    assert out.shape == (B, 1), out.shape
    assert jnp.allclose(out, ref, atol=1e-4, rtol=1e-4), (out, ref)

    print("KERNEL_OK")
</pallas_src>

<mosaic_0001>
module attributes {stable_mosaic.version = 11 : i64} {
  func.func @forex_lstm_kernel(%arg0: i32, %arg1: memref<8x32x128xf32, #tpu.memory_space<vmem>>, %arg2: memref<128x512xf32, #tpu.memory_space<vmem>>, %arg3: memref<128x512xf32, #tpu.memory_space<vmem>>, %arg4: memref<1x512xf32, #tpu.memory_space<vmem>>, %arg5: memref<256x512xf32, #tpu.memory_space<vmem>>, %arg6: memref<1x512xf32, #tpu.memory_space<vmem>>, %arg7: memref<128x128xf32, #tpu.memory_space<vmem>>, %arg8: memref<1x128xf32, #tpu.memory_space<vmem>>, %arg9: memref<32x128xf32, #tpu.memory_space<vmem>>, %arg10: memref<8x32x512xf32, #tpu.memory_space<vmem>>) attributes {dimension_semantics = [#tpu.dimension_semantics<parallel>], iteration_bounds = array<i64: 1>, scalar_prefetch = 0 : i64, scratch_operands = 1 : i64, tpu.core_type = #tpu.core_type<tc>, window_params = [{transform_indices = @transform_0, window_bounds = array<i64: 8, 32, 128>}, {pipeline_mode = #tpu.pipeline_mode<synchronous>, transform_indices = @transform_1, window_bounds = array<i64: 128, 512>}, {pipeline_mode = #tpu.pipeline_mode<synchronous>, transform_indices = @transform_2, window_bounds = array<i64: 128, 512>}, {pipeline_mode = #tpu.pipeline_mode<synchronous>, transform_indices = @transform_3, window_bounds = array<i64: 1, 512>}, {pipeline_mode = #tpu.pipeline_mode<synchronous>, transform_indices = @transform_4, window_bounds = array<i64: 256, 512>}, {pipeline_mode = #tpu.pipeline_mode<synchronous>, transform_indices = @transform_5, window_bounds = array<i64: 1, 512>}, {pipeline_mode = #tpu.pipeline_mode<synchronous>, transform_indices = @transform_6, window_bounds = array<i64: 128, 128>}, {pipeline_mode = #tpu.pipeline_mode<synchronous>, transform_indices = @transform_7, window_bounds = array<i64: 1, 128>}, {transform_indices = @transform_8, window_bounds = array<i64: 32, 128>}]} {
    %cst = arith.constant 0.000000e+00 : f32
    %0 = vector.broadcast %cst : f32 to vector<32x128xf32>
    %c0 = arith.constant 0 : index
    %c0_0 = arith.constant 0 : index
    %c0_1 = arith.constant 0 : index
    %1 = vector.load %arg1[%c0, %c0_0, %c0_1] : memref<8x32x128xf32, #tpu.memory_space<vmem>>, vector<8x32x128xf32>
    %2 = vector.shape_cast %1 : vector<8x32x128xf32> to vector<256x128xf32>
    %c0_2 = arith.constant 0 : index
    %c0_3 = arith.constant 0 : index
    %3 = vector.load %arg2[%c0_2, %c0_3] : memref<128x512xf32, #tpu.memory_space<vmem>>, vector<128x512xf32>
    %cst_4 = arith.constant dense<0.000000e+00> : vector<256x512xf32>
    %4 = tpu.matmul %2, %3, %cst_4 {dimension_numbers = #tpu.dot_dimension_numbers<[1], [0], [0], [1], [0, 0, 1, 1], [], []>} : vector<256x128xf32>, vector<128x512xf32>, vector<256x512xf32> -> vector<256x512xf32>
    %c0_5 = arith.constant 0 : index
    %c0_6 = arith.constant 0 : index
    %5 = vector.load %arg4[%c0_5, %c0_6] : memref<1x512xf32, #tpu.memory_space<vmem>>, vector<1x512xf32>
    %6 = vector.broadcast %5 : vector<1x512xf32> to vector<256x512xf32>
    %7 = arith.addf %4, %6 : vector<256x512xf32>
    %8 = vector.shape_cast %7 : vector<256x512xf32> to vector<8x32x512xf32>
    %c0_7 = arith.constant 0 : index
    %c0_8 = arith.constant 0 : index
    %c0_9 = arith.constant 0 : index
    %9 = vector.load %arg10[%c0_7, %c0_8, %c0_9] : memref<8x32x512xf32, #tpu.memory_space<vmem>>, vector<8x32x512xf32>
    tpu.vector_store %arg10[%c0_7, %c0_8, %c0_9], %8 {strides = array<i32>} : memref<8x32x512xf32, #tpu.memory_space<vmem>>, vector<8x32x512xf32>,
    %c0_10 = arith.constant 0 : index
    %c0_11 = arith.constant 0 : index
    %10 = vector.load %arg3[%c0_10, %c0_11] : memref<128x512xf32, #tpu.memory_space<vmem>>, vector<128x512xf32>
    %c0_12 = arith.constant 0 : index
    %c0_13 = arith.constant 0 : index
    %11 = vector.load %arg5[%c0_12, %c0_13] : memref<256x512xf32, #tpu.memory_space<vmem>>, vector<256x512xf32>
    %c0_14 = arith.constant 0 : index
    %c0_15 = arith.constant 0 : index
    %12 = vector.load %arg6[%c0_14, %c0_15] : memref<1x512xf32, #tpu.memory_space<vmem>>, vector<1x512xf32>
    %c0_i32 = arith.constant 0 : i32
    %13 = arith.index_cast %c0_i32 : i32 to index
    %c0_16 = arith.constant 0 : index
    %c0_17 = arith.constant 0 : index
    %14 = vector.load %arg10[%13, %c0_16, %c0_17] : memref<8x32x512xf32, #tpu.memory_space<vmem>>, vector<1x32x512xf32>
    %15 = vector.shape_cast %14 : vector<1x32x512xf32> to vector<32x512xf32>
    %cst_18 = arith.constant dense<0.000000e+00> : vector<32x512xf32>
    %16 = tpu.matmul %0, %10, %cst_18 {dimension_numbers = #tpu.dot_dimension_numbers<[1], [0], [0], [1], [0, 0, 1, 1], [], []>} : vector<32x128xf32>, vector<128x512xf32>, vector<32x512xf32> -> vector<32x512xf32>
    %17 = arith.addf %15, %16 : vector<32x512xf32>
    %18 = vector.extract_strided_slice %17 {offsets = [0, 0], sizes = [32, 384], strides = [1, 1]} : vector<32x512xf32> to vector<32x384xf32>
    %19 = arith.negf %18 : vector<32x384xf32>
    %20 = math.exp %19 : vector<32x384xf32>
    %cst_19 = arith.constant 1.000000e+00 : f32
    %21 = vector.broadcast %cst_19 : f32 to vector<32x384xf32>
    %22 = arith.addf %21, %20 : vector<32x384xf32>
    %23 = arith.divf %21, %22 : vector<32x384xf32>
    %24 = vector.extract_strided_slice %17 {offsets = [0, 384], sizes = [32, 128], strides = [1, 1]} : vector<32x512xf32> to vector<32x128xf32>
    %25 = math.tanh %24 : vector<32x128xf32>
    %26 = vector.extract_strided_slice %23 {offsets = [0, 0], sizes = [32, 128], strides = [1, 1]} : vector<32x384xf32> to vector<32x128xf32>
    %27 = vector.extract_strided_slice %23 {offsets = [0, 128], sizes = [32, 128], strides = [1, 1]} : vector<32x384xf32> to vector<32x128xf32>
    %28 = vector.extract_strided_slice %23 {offsets = [0, 256], sizes = [32, 128], strides = [1, 1]} : vector<32x384xf32> to vector<32x128xf32>
    %29 = arith.mulf %27, %0 : vector<32x128xf32>
    %30 = arith.mulf %26, %25 : vector<32x128xf32>
    %31 = arith.addf %29, %30 : vector<32x128xf32>
    %32 = math.tanh %31 : vector<32x128xf32>
    %33 = arith.mulf %28, %32 : vector<32x128xf32>
    %34 = tpu.concatenate %33, %0 in 1 : vector<32x128xf32>, vector<32x128xf32> -> vector<32x256xf32>
    %cst_20 = arith.constant dense<0.000000e+00> : vector<32x512xf32>
    %35 = tpu.matmul %34, %11, %cst_20 {dimension_numbers = #tpu.dot_dimension_numbers<[1], [0], [0], [1], [0, 0, 1, 1], [], []>} : vector<32x256xf32>, vector<256x512xf32>, vector<32x512xf32> -> vector<32x512xf32>
    %36 = vector.broadcast %12 : vector<1x512xf32> to vector<32x512xf32>
    %37 = arith.addf %36, %35 : vector<32x512xf32>
    %38 = vector.extract_strided_slice %37 {offsets = [0, 0], sizes = [32, 384], strides = [1, 1]} : vector<32x512xf32> to vector<32x384xf32>
    %39 = arith.negf %38 : vector<32x384xf32>
    %40 = math.exp %39 : vector<32x384xf32>
    %cst_21 = arith.constant 1.000000e+00 : f32
    %41 = vector.broadcast %cst_21 : f32 to vector<32x384xf32>
    %42 = arith.addf %41, %40 : vector<32x384xf32>
    %43 = arith.divf %41, %42 : vector<32x384xf32>
    %44 = vector.extract_strided_slice %37 {offsets = [0, 384], sizes = [32, 128], strides = [1, 1]} : vector<32x512xf32> to vector<32x128xf32>
    %45 = math.tanh %44 : vector<32x128xf32>
    %46 = vector.extract_strided_slice %43 {offsets = [0, 0], sizes = [32, 128], strides = [1, 1]} : vector<32x384xf32> to vector<32x128xf32>
    %47 = vector.extract_strided_slice %43 {offsets = [0, 128], sizes = [32, 128], strides = [1, 1]} : vector<32x384xf32> to vector<32x128xf32>
    %48 = vector.extract_strided_slice %43 {offsets = [0, 256], sizes = [32, 128], strides = [1, 1]} : vector<32x384xf32> to vector<32x128xf32>
    %49 = arith.mulf %47, %0 : vector<32x128xf32>
    %50 = arith.mulf %46, %45 : vector<32x128xf32>
    %51 = arith.addf %49, %50 : vector<32x128xf32>
    %52 = math.tanh %51 : vector<32x128xf32>
    %53 = arith.mulf %48, %52 : vector<32x128xf32>
    %c1_i32 = arith.constant 1 : i32
    %54 = arith.index_cast %c1_i32 : i32 to index
    %c0_22 = arith.constant 0 : index
    %c0_23 = arith.constant 0 : index
    %55 = vector.load %arg10[%54, %c0_22, %c0_23] : memref<8x32x512xf32, #tpu.memory_space<vmem>>, vector<1x32x512xf32>
    %56 = vector.shape_cast %55 : vector<1x32x512xf32> to vector<32x512xf32>
    %cst_24 = arith.constant dense<0.000000e+00> : vector<32x512xf32>
    %57 = tpu.matmul %33, %10, %cst_24 {dimension_numbers = #tpu.dot_dimension_numbers<[1], [0], [0], [1], [0, 0, 1, 1], [], []>} : vector<32x128xf32>, vector<128x512xf32>, vector<32x512xf32> -> vector<32x512xf32>
    %58 = arith.addf %56, %57 : vector<32x512xf32>
    %59 = vector.extract_strided_slice %58 {offsets = [0, 0], sizes = [32, 384], strides = [1, 1]} : vector<32x512xf32> to vector<32x384xf32>
    %60 = arith.negf %59 : vector<32x384xf32>
    %61 = math.exp %60 : vector<32x384xf32>
    %cst_25 = arith.constant 1.000000e+00 : f32
    %62 = vector.broadcast %cst_25 : f32 to vector<32x384xf32>
    %63 = arith.addf %62, %61 : vector<32x384xf32>
    %64 = arith.divf %62, %63 : vector<32x384xf32>
    %65 = vector.extract_strided_slice %58 {offsets = [0, 384], sizes = [32, 128], strides = [1, 1]} : vector<32x512xf32> to vector<32x128xf32>
    %66 = math.tanh %65 : vector<32x128xf32>
    %67 = vector.extract_strided_slice %64 {offsets = [0, 0], sizes = [32, 128], strides = [1, 1]} : vector<32x384xf32> to vector<32x128xf32>
    %68 = vector.extract_strided_slice %64 {offsets = [0, 128], sizes = [32, 128], strides = [1, 1]} : vector<32x384xf32> to vector<32x128xf32>
    %69 = vector.extract_strided_slice %64 {offsets = [0, 256], sizes = [32, 128], strides = [1, 1]} : vector<32x384xf32> to vector<32x128xf32>
    %70 = arith.mulf %68, %31 : vector<32x128xf32>
    %71 = arith.mulf %67, %66 : vector<32x128xf32>
    %72 = arith.addf %70, %71 : vector<32x128xf32>
    %73 = math.tanh %72 : vector<32x128xf32>
    %74 = arith.mulf %69, %73 : vector<32x128xf32>
    %75 = tpu.concatenate %74, %53 in 1 : vector<32x128xf32>, vector<32x128xf32> -> vector<32x256xf32>
    %cst_26 = arith.constant dense<0.000000e+00> : vector<32x512xf32>
    %76 = tpu.matmul %75, %11, %cst_26 {dimension_numbers = #tpu.dot_dimension_numbers<[1], [0], [0], [1], [0, 0, 1, 1], [], []>} : vector<32x256xf32>, vector<256x512xf32>, vector<32x512xf32> -> vector<32x512xf32>
    %77 = vector.broadcast %12 : vector<1x512xf32> to vector<32x512xf32>
    %78 = arith.addf %77, %76 : vector<32x512xf32>
    %79 = vector.extract_strided_slice %78 {offsets = [0, 0], sizes = [32, 384], strides = [1, 1]} : vector<32x512xf32> to vector<32x384xf32>
    %80 = arith.negf %79 : vector<32x384xf32>
    %81 = math.exp %80 : vector<32x384xf32>
    %cst_27 = arith.constant 1.000000e+00 : f32
    %82 = vector.broadcast %cst_27 : f32 to vector<32x384xf32>
    %83 = arith.addf %82, %81 : vector<32x384xf32>
    %84 = arith.divf %82, %83 : vector<32x384xf32>
    %85 = vector.extract_strided_slice %78 {offsets = [0, 384], sizes = [32, 128], strides = [1, 1]} : vector<32x512xf32> to vector<32x128xf32>
    %86 = math.tanh %85 : vector<32x128xf32>
    %87 = vector.extract_strided_slice %84 {offsets = [0, 0], sizes = [32, 128], strides = [1, 1]} : vector<32x384xf32> to vector<32x128xf32>
    %88 = vector.extract_strided_slice %84 {offsets = [0, 128], sizes = [32, 128], strides = [1, 1]} : vector<32x384xf32> to vector<32x128xf32>
    %89 = vector.extract_strided_slice %84 {offsets = [0, 256], sizes = [32, 128], strides = [1, 1]} : vector<32x384xf32> to vector<32x128xf32>
    %90 = arith.mulf %88, %51 : vector<32x128xf32>
    %91 = arith.mulf %87, %86 : vector<32x128xf32>
    %92 = arith.addf %90, %91 : vector<32x128xf32>
    %93 = math.tanh %92 : vector<32x128xf32>
    %94 = arith.mulf %89, %93 : vector<32x128xf32>
    %c2_i32 = arith.constant 2 : i32
    %95 = arith.index_cast %c2_i32 : i32 to index
    %c0_28 = arith.constant 0 : index
    %c0_29 = arith.constant 0 : index
    %96 = vector.load %arg10[%95, %c0_28, %c0_29] : memref<8x32x512xf32, #tpu.memory_space<vmem>>, vector<1x32x512xf32>
    %97 = vector.shape_cast %96 : vector<1x32x512xf32> to vector<32x512xf32>
    %cst_30 = arith.constant dense<0.000000e+00> : vector<32x512xf32>
    %98 = tpu.matmul %74, %10, %cst_30 {dimension_numbers = #tpu.dot_dimension_numbers<[1], [0], [0], [1], [0, 0, 1, 1], [], []>} : vector<32x128xf32>, vector<128x512xf32>, vector<32x512xf32> -> vector<32x512xf32>
    %99 = arith.addf %97, %98 : vector<32x512xf32>
    %100 = vector.extract_strided_slice %99 {offsets = [0, 0], sizes = [32, 384], strides = [1, 1]} : vector<32x512xf32> to vector<32x384xf32>
    %101 = arith.negf %100 : vector<32x384xf32>
    %102 = math.exp %101 : vector<32x384xf32>
    %cst_31 = arith.constant 1.000000e+00 : f32
    %103 = vector.broadcast %cst_31 : f32 to vector<32x384xf32>
    %104 = arith.addf %103, %102 : vector<32x384xf32>
    %105 = arith.divf %103, %104 : vector<32x384xf32>
    %106 = vector.extract_strided_slice %99 {offsets = [0, 384], sizes = [32, 128], strides = [1, 1]} : vector<32x512xf32> to vector<32x128xf32>
    %107 = math.tanh %106 : vector<32x128xf32>
    %108 = vector.extract_strided_slice %105 {offsets = [0, 0], sizes = [32, 128], strides = [1, 1]} : vector<32x384xf32> to vector<32x128xf32>
    %109 = vector.extract_strided_slice %105 {offsets = [0, 128], sizes = [32, 128], strides = [1, 1]} : vector<32x384xf32> to vector<32x128xf32>
    %110 = vector.extract_strided_slice %105 {offsets = [0, 256], sizes = [32, 128], strides = [1, 1]} : vector<32x384xf32> to vector<32x128xf32>
    %111 = arith.mulf %109, %72 : vector<32x128xf32>
    %112 = arith.mulf %108, %107 : vector<32x128xf32>
    %113 = arith.addf %111, %112 : vector<32x128xf32>
    %114 = math.tanh %113 : vector<32x128xf32>
    %115 = arith.mulf %110, %114 : vector<32x128xf32>
    %116 = tpu.concatenate %115, %94 in 1 : vector<32x128xf32>, vector<32x128xf32> -> vector<32x256xf32>
    %cst_32 = arith.constant dense<0.000000e+00> : vector<32x512xf32>
    %117 = tpu.matmul %116, %11, %cst_32 {dimension_numbers = #tpu.dot_dimension_numbers<[1], [0], [0], [1], [0, 0, 1, 1], [], []>} : vector<32x256xf32>, vector<256x512xf32>, vector<32x512xf32> -> vector<32x512xf32>
    %118 = vector.broadcast %12 : vector<1x512xf32> to vector<32x512xf32>
    %119 = arith.addf %118, %117 : vector<32x512xf32>
    %120 = vector.extract_strided_slice %119 {offsets = [0, 0], sizes = [32, 384], strides = [1, 1]} : vector<32x512xf32> to vector<32x384xf32>
    %121 = arith.negf %120 : vector<32x384xf32>
    %122 = math.exp %121 : vector<32x384xf32>
    %cst_33 = arith.constant 1.000000e+00 : f32
    %123 = vector.broadcast %cst_33 : f32 to vector<32x384xf32>
    %124 = arith.addf %123, %122 : vector<32x384xf32>
    %125 = arith.divf %123, %124 : vector<32x384xf32>
    %126 = vector.extract_strided_slice %119 {offsets = [0, 384], sizes = [32, 128], strides = [1, 1]} : vector<32x512xf32> to vector<32x128xf32>
    %127 = math.tanh %126 : vector<32x128xf32>
    %128 = vector.extract_strided_slice %125 {offsets = [0, 0], sizes = [32, 128], strides = [1, 1]} : vector<32x384xf32> to vector<32x128xf32>
    %129 = vector.extract_strided_slice %125 {offsets = [0, 128], sizes = [32, 128], strides = [1, 1]} : vector<32x384xf32> to vector<32x128xf32>
    %130 = vector.extract_strided_slice %125 {offsets = [0, 256], sizes = [32, 128], strides = [1, 1]} : vector<32x384xf32> to vector<32x128xf32>
    %131 = arith.mulf %129, %92 : vector<32x128xf32>
    %132 = arith.mulf %128, %127 : vector<32x128xf32>
    %133 = arith.addf %131, %132 : vector<32x128xf32>
    %134 = math.tanh %133 : vector<32x128xf32>
    %135 = arith.mulf %130, %134 : vector<32x128xf32>
    %c3_i32 = arith.constant 3 : i32
    %136 = arith.index_cast %c3_i32 : i32 to index
    %c0_34 = arith.constant 0 : index
    %c0_35 = arith.constant 0 : index
    %137 = vector.load %arg10[%136, %c0_34, %c0_35] : memref<8x32x512xf32, #tpu.memory_space<vmem>>, vector<1x32x512xf32>
    %138 = vector.shape_cast %137 : vector<1x32x512xf32> to vector<32x512xf32>
    %cst_36 = arith.constant dense<0.000000e+00> : vector<32x512xf32>
    %139 = tpu.matmul %115, %10, %cst_36 {dimension_numbers = #tpu.dot_dimension_numbers<[1], [0], [0], [1], [0, 0, 1, 1], [], []>} : vector<32x128xf32>, vector<128x512xf32>, vector<32x512xf32> -> vector<32x512xf32>
    %140 = arith.addf %138, %139 : vector<32x512xf32>
    %141 = vector.extract_strided_slice %140 {offsets = [0, 0], sizes = [32, 384], strides = [1, 1]} : vector<32x512xf32> to vector<32x384xf32>
    %142 = arith.negf %141 : vector<32x384xf32>
    %143 = math.exp %142 : vector<32x384xf32>
    %cst_37 = arith.constant 1.000000e+00 : f32
    %144 = vector.broadcast %cst_37 : f32 to vector<32x384xf32>
    %145 = arith.addf %144, %143 : vector<32x384xf32>
    %146 = arith.divf %144, %145 : vector<32x384xf32>
    %147 = vector.extract_strided_slice %140 {offsets = [0, 384], sizes = [32, 128], strides = [1, 1]} : vector<32x512xf32> to vector<32x128xf32>
    %148 = math.tanh %147 : vector<32x128xf32>
    %149 = vector.extract_strided_slice %146 {offsets = [0, 0], sizes = [32, 128], strides = [1, 1]} : vector<32x384xf32> to vector<32x128xf32>
    %150 = vector.extract_strided_slice %146 {offsets = [0, 128], sizes = [32, 128], strides = [1, 1]} : vector<32x384xf32> to vector<32x128xf32>
    %151 = vector.extract_strided_slice %146 {offsets = [0, 256], sizes = [32, 128], strides = [1, 1]} : vector<32x384xf32> to vector<32x128xf32>
    %152 = arith.mulf %150, %113 : vector<32x128xf32>
    %153 = arith.mulf %149, %148 : vector<32x128xf32>
    %154 = arith.addf %152, %153 : vector<32x128xf32>
    %155 = math.tanh %154 : vector<32x128xf32>
    %156 = arith.mulf %151, %155 : vector<32x128xf32>
    %157 = tpu.concatenate %156, %135 in 1 : vector<32x128xf32>, vector<32x128xf32> -> vector<32x256xf32>
    %cst_38 = arith.constant dense<0.000000e+00> : vector<32x512xf32>
    %158 = tpu.matmul %157, %11, %cst_38 {dimension_numbers = #tpu.dot_dimension_numbers<[1], [0], [0], [1], [0, 0, 1, 1], [], []>} : vector<32x256xf32>, vector<256x512xf32>, vector<32x512xf32> -> vector<32x512xf32>
    %159 = vector.broadcast %12 : vector<1x512xf32> to vector<32x512xf32>
    %160 = arith.addf %159, %158 : vector<32x512xf32>
    %161 = vector.extract_strided_slice %160 {offsets = [0, 0], sizes = [32, 384], strides = [1, 1]} : vector<32x512xf32> to vector<32x384xf32>
    %162 = arith.negf %161 : vector<32x384xf32>
    %163 = math.exp %162 : vector<32x384xf32>
    %cst_39 = arith.constant 1.000000e+00 : f32
    %164 = vector.broadcast %cst_39 : f32 to vector<32x384xf32>
    %165 = arith.addf %164, %163 : vector<32x384xf32>
    %166 = arith.divf %164, %165 : vector<32x384xf32>
    %167 = vector.extract_strided_slice %160 {offsets = [0, 384], sizes = [32, 128], strides = [1, 1]} : vector<32x512xf32> to vector<32x128xf32>
    %168 = math.tanh %167 : vector<32x128xf32>
    %169 = vector.extract_strided_slice %166 {offsets = [0, 0], sizes = [32, 128], strides = [1, 1]} : vector<32x384xf32> to vector<32x128xf32>
    %170 = vector.extract_strided_slice %166 {offsets = [0, 128], sizes = [32, 128], strides = [1, 1]} : vector<32x384xf32> to vector<32x128xf32>
    %171 = vector.extract_strided_slice %166 {offsets = [0, 256], sizes = [32, 128], strides = [1, 1]} : vector<32x384xf32> to vector<32x128xf32>
    %172 = arith.mulf %170, %133 : vector<32x128xf32>
    %173 = arith.mulf %169, %168 : vector<32x128xf32>
    %174 = arith.addf %172, %173 : vector<32x128xf32>
    %175 = math.tanh %174 : vector<32x128xf32>
    %176 = arith.mulf %171, %175 : vector<32x128xf32>
    %c4_i32 = arith.constant 4 : i32
    %177 = arith.index_cast %c4_i32 : i32 to index
    %c0_40 = arith.constant 0 : index
    %c0_41 = arith.constant 0 : index
    %178 = vector.load %arg10[%177, %c0_40, %c0_41] : memref<8x32x512xf32, #tpu.memory_space<vmem>>, vector<1x32x512xf32>
    %179 = vector.shape_cast %178 : vector<1x32x512xf32> to vector<32x512xf32>
    %cst_42 = arith.constant dense<0.000000e+00> : vector<32x512xf32>
    %180 = tpu.matmul %156, %10, %cst_42 {dimension_numbers = #tpu.dot_dimension_numbers<[1], [0], [0], [1], [0, 0, 1, 1], [], []>} : vector<32x128xf32>, vector<128x512xf32>, vector<32x512xf32> -> vector<32x512xf32>
    %181 = arith.addf %179, %180 : vector<32x512xf32>
    %182 = vector.extract_strided_slice %181 {offsets = [0, 0], sizes = [32, 384], strides = [1, 1]} : vector<32x512xf32> to vector<32x384xf32>
    %183 = arith.negf %182 : vector<32x384xf32>
    %184 = math.exp %183 : vector<32x384xf32>
    %cst_43 = arith.constant 1.000000e+00 : f32
    %185 = vector.broadcast %cst_43 : f32 to vector<32x384xf32>
    %186 = arith.addf %185, %184 : vector<32x384xf32>
    %187 = arith.divf %185, %186 : vector<32x384xf32>
    %188 = vector.extract_strided_slice %181 {offsets = [0, 384], sizes = [32, 128], strides = [1, 1]} : vector<32x512xf32> to vector<32x128xf32>
    %189 = math.tanh %188 : vector<32x128xf32>
    %190 = vector.extract_strided_slice %187 {offsets = [0, 0], sizes = [32, 128], strides = [1, 1]} : vector<32x384xf32> to vector<32x128xf32>
    %191 = vector.extract_strided_slice %187 {offsets = [0, 128], sizes = [32, 128], strides = [1, 1]} : vector<32x384xf32> to vector<32x128xf32>
    %192 = vector.extract_strided_slice %187 {offsets = [0, 256], sizes = [32, 128], strides = [1, 1]} : vector<32x384xf32> to vector<32x128xf32>
    %193 = arith.mulf %191, %154 : vector<32x128xf32>
    %194 = arith.mulf %190, %189 : vector<32x128xf32>
    %195 = arith.addf %193, %194 : vector<32x128xf32>
    %196 = math.tanh %195 : vector<32x128xf32>
    %197 = arith.mulf %192, %196 : vector<32x128xf32>
    %198 = tpu.concatenate %197, %176 in 1 : vector<32x128xf32>, vector<32x128xf32> -> vector<32x256xf32>
    %cst_44 = arith.constant dense<0.000000e+00> : vector<32x512xf32>
    %199 = tpu.matmul %198, %11, %cst_44 {dimension_numbers = #tpu.dot_dimension_numbers<[1], [0], [0], [1], [0, 0, 1, 1], [], []>} : vector<32x256xf32>, vector<256x512xf32>, vector<32x512xf32> -> vector<32x512xf32>
    %200 = vector.broadcast %12 : vector<1x512xf32> to vector<32x512xf32>
    %201 = arith.addf %200, %199 : vector<32x512xf32>
    %202 = vector.extract_strided_slice %201 {offsets = [0, 0], sizes = [32, 384], strides = [1, 1]} : vector<32x512xf32> to vector<32x384xf32>
    %203 = arith.negf %202 : vector<32x384xf32>
    %204 = math.exp %203 : vector<32x384xf32>
    %cst_45 = arith.constant 1.000000e+00 : f32
    %205 = vector.broadcast %cst_45 : f32 to vector<32x384xf32>
    %206 = arith.addf %205, %204 : vector<32x384xf32>
    %207 = arith.divf %205, %206 : vector<32x384xf32>
    %208 = vector.extract_strided_slice %201 {offsets = [0, 384], sizes = [32, 128], strides = [1, 1]} : vector<32x512xf32> to vector<32x128xf32>
    %209 = math.tanh %208 : vector<32x128xf32>
    %210 = vector.extract_strided_slice %207 {offsets = [0, 0], sizes = [32, 128], strides = [1, 1]} : vector<32x384xf32> to vector<32x128xf32>
    %211 = vector.extract_strided_slice %207 {offsets = [0, 128], sizes = [32, 128], strides = [1, 1]} : vector<32x384xf32> to vector<32x128xf32>
    %212 = vector.extract_strided_slice %207 {offsets = [0, 256], sizes = [32, 128], strides = [1, 1]} : vector<32x384xf32> to vector<32x128xf32>
    %213 = arith.mulf %211, %174 : vector<32x128xf32>
    %214 = arith.mulf %210, %209 : vector<32x128xf32>
    %215 = arith.addf %213, %214 : vector<32x128xf32>
    %216 = math.tanh %215 : vector<32x128xf32>
    %217 = arith.mulf %212, %216 : vector<32x128xf32>
    %c5_i32 = arith.constant 5 : i32
    %218 = arith.index_cast %c5_i32 : i32 to index
    %c0_46 = arith.constant 0 : index
    %c0_47 = arith.constant 0 : index
    %219 = vector.load %arg10[%218, %c0_46, %c0_47] : memref<8x32x512xf32, #tpu.memory_space<vmem>>, vector<1x32x512xf32>
    %220 = vector.shape_cast %219 : vector<1x32x512xf32> to vector<32x512xf32>
    %cst_48 = arith.constant dense<0.000000e+00> : vector<32x512xf32>
    %221 = tpu.matmul %197, %10, %cst_48 {dimension_numbers = #tpu.dot_dimension_numbers<[1], [0], [0], [1], [0, 0, 1, 1], [], []>} : vector<32x128xf32>, vector<128x512xf32>, vector<32x512xf32> -> vector<32x512xf32>
    %222 = arith.addf %220, %221 : vector<32x512xf32>
    %223 = vector.extract_strided_slice %222 {offsets = [0, 0], sizes = [32, 384], strides = [1, 1]} : vector<32x512xf32> to vector<32x384xf32>
    %224 = arith.negf %223 : vector<32x384xf32>
    %225 = math.exp %224 : vector<32x384xf32>
    %cst_49 = arith.constant 1.000000e+00 : f32
    %226 = vector.broadcast %cst_49 : f32 to vector<32x384xf32>
    %227 = arith.addf %226, %225 : vector<32x384xf32>
    %228 = arith.divf %226, %227 : vector<32x384xf32>
    %229 = vector.extract_strided_slice %222 {offsets = [0, 384], sizes = [32, 128], strides = [1, 1]} : vector<32x512xf32> to vector<32x128xf32>
    %230 = math.tanh %229 : vector<32x128xf32>
    %231 = vector.extract_strided_slice %228 {offsets = [0, 0], sizes = [32, 128], strides = [1, 1]} : vector<32x384xf32> to vector<32x128xf32>
    %232 = vector.extract_strided_slice %228 {offsets = [0, 128], sizes = [32, 128], strides = [1, 1]} : vector<32x384xf32> to vector<32x128xf32>
    %233 = vector.extract_strided_slice %228 {offsets = [0, 256], sizes = [32, 128], strides = [1, 1]} : vector<32x384xf32> to vector<32x128xf32>
    %234 = arith.mulf %232, %195 : vector<32x128xf32>
    %235 = arith.mulf %231, %230 : vector<32x128xf32>
    %236 = arith.addf %234, %235 : vector<32x128xf32>
    %237 = math.tanh %236 : vector<32x128xf32>
    %238 = arith.mulf %233, %237 : vector<32x128xf32>
    %239 = tpu.concatenate %238, %217 in 1 : vector<32x128xf32>, vector<32x128xf32> -> vector<32x256xf32>
    %cst_50 = arith.constant dense<0.000000e+00> : vector<32x512xf32>
    %240 = tpu.matmul %239, %11, %cst_50 {dimension_numbers = #tpu.dot_dimension_numbers<[1], [0], [0], [1], [0, 0, 1, 1], [], []>} : vector<32x256xf32>, vector<256x512xf32>, vector<32x512xf32> -> vector<32x512xf32>
    %241 = vector.broadcast %12 : vector<1x512xf32> to vector<32x512xf32>
    %242 = arith.addf %241, %240 : vector<32x512xf32>
    %243 = vector.extract_strided_slice %242 {offsets = [0, 0], sizes = [32, 384], strides = [1, 1]} : vector<32x512xf32> to vector<32x384xf32>
    %244 = arith.negf %243 : vector<32x384xf32>
    %245 = math.exp %244 : vector<32x384xf32>
    %cst_51 = arith.constant 1.000000e+00 : f32
    %246 = vector.broadcast %cst_51 : f32 to vector<32x384xf32>
    %247 = arith.addf %246, %245 : vector<32x384xf32>
    %248 = arith.divf %246, %247 : vector<32x384xf32>
    %249 = vector.extract_strided_slice %242 {offsets = [0, 384], sizes = [32, 128], strides = [1, 1]} : vector<32x512xf32> to vector<32x128xf32>
    %250 = math.tanh %249 : vector<32x128xf32>
    %251 = vector.extract_strided_slice %248 {offsets = [0, 0], sizes = [32, 128], strides = [1, 1]} : vector<32x384xf32> to vector<32x128xf32>
    %252 = vector.extract_strided_slice %248 {offsets = [0, 128], sizes = [32, 128], strides = [1, 1]} : vector<32x384xf32> to vector<32x128xf32>
    %253 = vector.extract_strided_slice %248 {offsets = [0, 256], sizes = [32, 128], strides = [1, 1]} : vector<32x384xf32> to vector<32x128xf32>
    %254 = arith.mulf %252, %215 : vector<32x128xf32>
    %255 = arith.mulf %251, %250 : vector<32x128xf32>
    %256 = arith.addf %254, %255 : vector<32x128xf32>
    %257 = math.tanh %256 : vector<32x128xf32>
    %258 = arith.mulf %253, %257 : vector<32x128xf32>
    %c6_i32 = arith.constant 6 : i32
    %259 = arith.index_cast %c6_i32 : i32 to index
    %c0_52 = arith.constant 0 : index
    %c0_53 = arith.constant 0 : index
    %260 = vector.load %arg10[%259, %c0_52, %c0_53] : memref<8x32x512xf32, #tpu.memory_space<vmem>>, vector<1x32x512xf32>
    %261 = vector.shape_cast %260 : vector<1x32x512xf32> to vector<32x512xf32>
    %cst_54 = arith.constant dense<0.000000e+00> : vector<32x512xf32>
    %262 = tpu.matmul %238, %10, %cst_54 {dimension_numbers = #tpu.dot_dimension_numbers<[1], [0], [0], [1], [0, 0, 1, 1], [], []>} : vector<32x128xf32>, vector<128x512xf32>, vector<32x512xf32> -> vector<32x512xf32>
    %263 = arith.addf %261, %262 : vector<32x512xf32>
    %264 = vector.extract_strided_slice %263 {offsets = [0, 0], sizes = [32, 384], strides = [1, 1]} : vector<32x512xf32> to vector<32x384xf32>
    %265 = arith.negf %264 : vector<32x384xf32>
    %266 = math.exp %265 : vector<32x384xf32>
    %cst_55 = arith.constant 1.000000e+00 : f32
    %267 = vector.broadcast %cst_55 : f32 to vector<32x384xf32>
    %268 = arith.addf %267, %266 : vector<32x384xf32>
    %269 = arith.divf %267, %268 : vector<32x384xf32>
    %270 = vector.extract_strided_slice %263 {offsets = [0, 384], sizes = [32, 128], strides = [1, 1]} : vector<32x512xf32> to vector<32x128xf32>
    %271 = math.tanh %270 : vector<32x128xf32>
    %272 = vector.extract_strided_slice %269 {offsets = [0, 0], sizes = [32, 128], strides = [1, 1]} : vector<32x384xf32> to vector<32x128xf32>
    %273 = vector.extract_strided_slice %269 {offsets = [0, 128], sizes = [32, 128], strides = [1, 1]} : vector<32x384xf32> to vector<32x128xf32>
    %274 = vector.extract_strided_slice %269 {offsets = [0, 256], sizes = [32, 128], strides = [1, 1]} : vector<32x384xf32> to vector<32x128xf32>
    %275 = arith.mulf %273, %236 : vector<32x128xf32>
    %276 = arith.mulf %272, %271 : vector<32x128xf32>
    %277 = arith.addf %275, %276 : vector<32x128xf32>
    %278 = math.tanh %277 : vector<32x128xf32>
    %279 = arith.mulf %274, %278 : vector<32x128xf32>
    %280 = tpu.concatenate %279, %258 in 1 : vector<32x128xf32>, vector<32x128xf32> -> vector<32x256xf32>
    %cst_56 = arith.constant dense<0.000000e+00> : vector<32x512xf32>
    %281 = tpu.matmul %280, %11, %cst_56 {dimension_numbers = #tpu.dot_dimension_numbers<[1], [0], [0], [1], [0, 0, 1, 1], [], []>} : vector<32x256xf32>, vector<256x512xf32>, vector<32x512xf32> -> vector<32x512xf32>
    %282 = vector.broadcast %12 : vector<1x512xf32> to vector<32x512xf32>
    %283 = arith.addf %282, %281 : vector<32x512xf32>
    %284 = vector.extract_strided_slice %283 {offsets = [0, 0], sizes = [32, 384], strides = [1, 1]} : vector<32x512xf32> to vector<32x384xf32>
    %285 = arith.negf %284 : vector<32x384xf32>
    %286 = math.exp %285 : vector<32x384xf32>
    %cst_57 = arith.constant 1.000000e+00 : f32
    %287 = vector.broadcast %cst_57 : f32 to vector<32x384xf32>
    %288 = arith.addf %287, %286 : vector<32x384xf32>
    %289 = arith.divf %287, %288 : vector<32x384xf32>
    %290 = vector.extract_strided_slice %283 {offsets = [0, 384], sizes = [32, 128], strides = [1, 1]} : vector<32x512xf32> to vector<32x128xf32>
    %291 = math.tanh %290 : vector<32x128xf32>
    %292 = vector.extract_strided_slice %289 {offsets = [0, 0], sizes = [32, 128], strides = [1, 1]} : vector<32x384xf32> to vector<32x128xf32>
    %293 = vector.extract_strided_slice %289 {offsets = [0, 128], sizes = [32, 128], strides = [1, 1]} : vector<32x384xf32> to vector<32x128xf32>
    %294 = vector.extract_strided_slice %289 {offsets = [0, 256], sizes = [32, 128], strides = [1, 1]} : vector<32x384xf32> to vector<32x128xf32>
    %295 = arith.mulf %293, %256 : vector<32x128xf32>
    %296 = arith.mulf %292, %291 : vector<32x128xf32>
    %297 = arith.addf %295, %296 : vector<32x128xf32>
    %298 = math.tanh %297 : vector<32x128xf32>
    %299 = arith.mulf %294, %298 : vector<32x128xf32>
    %c7_i32 = arith.constant 7 : i32
    %300 = arith.index_cast %c7_i32 : i32 to index
    %c0_58 = arith.constant 0 : index
    %c0_59 = arith.constant 0 : index
    %301 = vector.load %arg10[%300, %c0_58, %c0_59] : memref<8x32x512xf32, #tpu.memory_space<vmem>>, vector<1x32x512xf32>
    %302 = vector.shape_cast %301 : vector<1x32x512xf32> to vector<32x512xf32>
    %cst_60 = arith.constant dense<0.000000e+00> : vector<32x512xf32>
    %303 = tpu.matmul %279, %10, %cst_60 {dimension_numbers = #tpu.dot_dimension_numbers<[1], [0], [0], [1], [0, 0, 1, 1], [], []>} : vector<32x128xf32>, vector<128x512xf32>, vector<32x512xf32> -> vector<32x512xf32>
    %304 = arith.addf %302, %303 : vector<32x512xf32>
    %305 = vector.extract_strided_slice %304 {offsets = [0, 0], sizes = [32, 384], strides = [1, 1]} : vector<32x512xf32> to vector<32x384xf32>
    %306 = arith.negf %305 : vector<32x384xf32>
    %307 = math.exp %306 : vector<32x384xf32>
    %cst_61 = arith.constant 1.000000e+00 : f32
    %308 = vector.broadcast %cst_61 : f32 to vector<32x384xf32>
    %309 = arith.addf %308, %307 : vector<32x384xf32>
    %310 = arith.divf %308, %309 : vector<32x384xf32>
    %311 = vector.extract_strided_slice %304 {offsets = [0, 384], sizes = [32, 128], strides = [1, 1]} : vector<32x512xf32> to vector<32x128xf32>
    %312 = math.tanh %311 : vector<32x128xf32>
    %313 = vector.extract_strided_slice %310 {offsets = [0, 0], sizes = [32, 128], strides = [1, 1]} : vector<32x384xf32> to vector<32x128xf32>
    %314 = vector.extract_strided_slice %310 {offsets = [0, 128], sizes = [32, 128], strides = [1, 1]} : vector<32x384xf32> to vector<32x128xf32>
    %315 = vector.extract_strided_slice %310 {offsets = [0, 256], sizes = [32, 128], strides = [1, 1]} : vector<32x384xf32> to vector<32x128xf32>
    %316 = arith.mulf %314, %277 : vector<32x128xf32>
    %317 = arith.mulf %313, %312 : vector<32x128xf32>
    %318 = arith.addf %316, %317 : vector<32x128xf32>
    %319 = math.tanh %318 : vector<32x128xf32>
    %320 = arith.mulf %315, %319 : vector<32x128xf32>
    %321 = tpu.concatenate %320, %299 in 1 : vector<32x128xf32>, vector<32x128xf32> -> vector<32x256xf32>
    %cst_62 = arith.constant dense<0.000000e+00> : vector<32x512xf32>
    %322 = tpu.matmul %321, %11, %cst_62 {dimension_numbers = #tpu.dot_dimension_numbers<[1], [0], [0], [1], [0, 0, 1, 1], [], []>} : vector<32x256xf32>, vector<256x512xf32>, vector<32x512xf32> -> vector<32x512xf32>
    %323 = vector.broadcast %12 : vector<1x512xf32> to vector<32x512xf32>
    %324 = arith.addf %323, %322 : vector<32x512xf32>
    %325 = vector.extract_strided_slice %324 {offsets = [0, 0], sizes = [32, 384], strides = [1, 1]} : vector<32x512xf32> to vector<32x384xf32>
    %326 = arith.negf %325 : vector<32x384xf32>
    %327 = math.exp %326 : vector<32x384xf32>
    %cst_63 = arith.constant 1.000000e+00 : f32
    %328 = vector.broadcast %cst_63 : f32 to vector<32x384xf32>
    %329 = arith.addf %328, %327 : vector<32x384xf32>
    %330 = arith.divf %328, %329 : vector<32x384xf32>
    %331 = vector.extract_strided_slice %324 {offsets = [0, 384], sizes = [32, 128], strides = [1, 1]} : vector<32x512xf32> to vector<32x128xf32>
    %332 = math.tanh %331 : vector<32x128xf32>
    %333 = vector.extract_strided_slice %330 {offsets = [0, 0], sizes = [32, 128], strides = [1, 1]} : vector<32x384xf32> to vector<32x128xf32>
    %334 = vector.extract_strided_slice %330 {offsets = [0, 128], sizes = [32, 128], strides = [1, 1]} : vector<32x384xf32> to vector<32x128xf32>
    %335 = vector.extract_strided_slice %330 {offsets = [0, 256], sizes = [32, 128], strides = [1, 1]} : vector<32x384xf32> to vector<32x128xf32>
    %336 = arith.mulf %334, %297 : vector<32x128xf32>
    %337 = arith.mulf %333, %332 : vector<32x128xf32>
    %338 = arith.addf %336, %337 : vector<32x128xf32>
    %339 = math.tanh %338 : vector<32x128xf32>
    %340 = arith.mulf %335, %339 : vector<32x128xf32>
    %c8_i32 = arith.constant 8 : i32
    %c0_64 = arith.constant 0 : index
    %c0_65 = arith.constant 0 : index
    %341 = vector.load %arg7[%c0_64, %c0_65] : memref<128x128xf32, #tpu.memory_space<vmem>>, vector<128x128xf32>
    %cst_66 = arith.constant dense<0.000000e+00> : vector<32x128xf32>
    %342 = tpu.matmul %340, %341, %cst_66 {dimension_numbers = #tpu.dot_dimension_numbers<[1], [0], [0], [1], [0, 0, 1, 1], [], []>} : vector<32x128xf32>, vector<128x128xf32>, vector<32x128xf32> -> vector<32x128xf32>
    %c0_67 = arith.constant 0 : index
    %c0_68 = arith.constant 0 : index
    %343 = vector.load %arg8[%c0_67, %c0_68] : memref<1x128xf32, #tpu.memory_space<vmem>>, vector<1x128xf32>
    %344 = vector.broadcast %343 : vector<1x128xf32> to vector<32x128xf32>
    %345 = arith.addf %342, %344 : vector<32x128xf32>
    %c0_69 = arith.constant 0 : index
    %c0_70 = arith.constant 0 : index
    %346 = vector.load %arg9[%c0_69, %c0_70] : memref<32x128xf32, #tpu.memory_space<vmem>>, vector<32x128xf32>
    tpu.vector_store %arg9[%c0_69, %c0_70], %345 {strides = array<i32>} : memref<32x128xf32, #tpu.memory_space<vmem>>, vector<32x128xf32>,
    return
  }
  func.func @transform_0(%arg0: i32) -> (i32, i32, i32) {
    %c0_i32 = arith.constant 0 : i32
    %c0_i32_0 = arith.constant 0 : i32
    %c0_i32_1 = arith.constant 0 : i32
    return %c0_i32, %arg0, %c0_i32_0 : i32, i32, i32
  }
  func.func @transform_1(%arg0: i32) -> (i32, i32) {
    %c0_i32 = arith.constant 0 : i32
    %c0_i32_0 = arith.constant 0 : i32
    %c0_i32_1 = arith.constant 0 : i32
    return %c0_i32, %c0_i32_0 : i32, i32
  }
  func.func @transform_2(%arg0: i32) -> (i32, i32) {
    %c0_i32 = arith.constant 0 : i32
    %c0_i32_0 = arith.constant 0 : i32
    %c0_i32_1 = arith.constant 0 : i32
    return %c0_i32, %c0_i32_0 : i32, i32
  }
  func.func @transform_3(%arg0: i32) -> (i32, i32) {
    %c0_i32 = arith.constant 0 : i32
    %c0_i32_0 = arith.constant 0 : i32
    %c0_i32_1 = arith.constant 0 : i32
    return %c0_i32, %c0_i32_0 : i32, i32
  }
  func.func @transform_4(%arg0: i32) -> (i32, i32) {
    %c0_i32 = arith.constant 0 : i32
    %c0_i32_0 = arith.constant 0 : i32
    %c0_i32_1 = arith.constant 0 : i32
    return %c0_i32, %c0_i32_0 : i32, i32
  }
  func.func @transform_5(%arg0: i32) -> (i32, i32) {
    %c0_i32 = arith.constant 0 : i32
    %c0_i32_0 = arith.constant 0 : i32
    %c0_i32_1 = arith.constant 0 : i32
    return %c0_i32, %c0_i32_0 : i32, i32
  }
  func.func @transform_6(%arg0: i32) -> (i32, i32) {
    %c0_i32 = arith.constant 0 : i32
    %c0_i32_0 = arith.constant 0 : i32
    %c0_i32_1 = arith.constant 0 : i32
    return %c0_i32, %c0_i32_0 : i32, i32
  }
  func.func @transform_7(%arg0: i32) -> (i32, i32) {
    %c0_i32 = arith.constant 0 : i32
    %c0_i32_0 = arith.constant 0 : i32
    %c0_i32_1 = arith.constant 0 : i32
    return %c0_i32, %c0_i32_0 : i32, i32
  }
  func.func @transform_8(%arg0: i32) -> (i32, i32) {
    %c0_i32 = arith.constant 0 : i32
    %c0_i32_0 = arith.constant 0 : i32
    return %arg0, %c0_i32 : i32, i32
  }
}

</mosaic_0001>

<llo_original>
// kernel: tpu_custom_call.1
$region0: #{tpu_custom_call.1}
  #allocation0 [shape = 'u32[]', space=smem, size = 0x4, offset = 0x4, fixed_abs, tag = 'smem constant byte address 0x4 - core index']
  #allocation1 [shape = 'u32[144,128]{1,0:T(1,128)}', space=vmem, size = 0x12000, scoped, tag = 'internal scratch']
  #allocation2 [shape = 'f32[8,32,512]{2,1,0:T(8,128)}', space=vmem, size = 0x80000, scoped, tag = 'scratch operand']
  %s0 = inlined_call_operand.hbm [shape: f32[8,32,128], index: 0, kind: input, shape index: {}]
  %s1 = inlined_call_operand.hbm [shape: f32[128,512], index: 1, kind: input, shape index: {}]
  %s2 = inlined_call_operand.hbm [shape: f32[128,512], index: 2, kind: input, shape index: {}]
  %s3 = inlined_call_operand.vmem [shape: f32[1,512], index: 3, kind: input, shape index: {}]
  %s4 = inlined_call_operand.hbm [shape: f32[256,512], index: 4, kind: input, shape index: {}]
  %s5 = inlined_call_operand.vmem [shape: f32[1,512], index: 5, kind: input, shape index: {}]
  %s6 = inlined_call_operand.hbm [shape: f32[128,128], index: 6, kind: input, shape index: {}]
  %s7 = inlined_call_operand.vmem [shape: f32[1,128], index: 7, kind: input, shape index: {}]
  %s8 = inlined_call_operand.hbm [shape: f32[32,128], index: 8, kind: output, shape index: {}]
  %s9 = sld [smem:[#allocation0]]
  $region62: #{tpu_custom_call.1} parent=0
    _
  %s11 = ssub.s32 1, %s9
  %s12 = scalar_select 0, %s11, %s9
  $region1: #{tpu_custom_call.1} parent=0
    #allocation3 [shape = 'u8[131072]{0}', space=vmem, size = 0x20000, scoped, tag = 'input window, operand 0, single buffered']
    #allocation4 [shape = 's32[1]{0}', space=sflag, size = 0x4, scoped, tag = 'scoped memory for tpu_custom_call.1']
    #allocation5 [shape = 's32[1]{0}', space=sflag, size = 0x4, scoped, tag = 'scoped memory for tpu_custom_call.1']
    #allocation6 [shape = 'u8[262144]{0}', space=vmem, size = 0x40000, scoped, tag = 'input window, operand 1, single buffered']
    #allocation7 [shape = 's32[1]{0}', space=sflag, size = 0x4, scoped, tag = 'scoped memory for tpu_custom_call.1']
    #allocation8 [shape = 'u8[262144]{0}', space=vmem, size = 0x40000, scoped, tag = 'input window, operand 2, single buffered']
    #allocation9 [shape = 'u8[524288]{0}', space=vmem, size = 0x80000, scoped, tag = 'input window, operand 4, single buffered']
    #allocation10 [shape = 's32[1]{0}', space=sflag, size = 0x4, scoped, tag = 'scoped memory for tpu_custom_call.1']
    #allocation11 [shape = 'u8[65536]{0}', space=vmem, size = 0x10000, scoped, tag = 'input window, operand 6, single buffered']
    #allocation12 [shape = 'u8[16384]{0}', space=vmem, size = 0x4000, scoped, tag = 'output window, operand 0, single buffered']
    %13 = vsyncpa [#allocation4], 0
    %14 = vsyncpa [#allocation7], 0
    %15 = vsyncpa [#allocation10], 0
    %16 = vsyncpa [#allocation5], 0
    // Predicated region
    $region2: #{tpu_custom_call.1} parent=1 // pred_check
      _
    $region3: #{tpu_custom_call.1} parent=1 // pred_check_branch
      %18 = sbr.rel (0) target = $region5
    $region4: #{tpu_custom_call.1} parent=1 // pred_region
      %s20 = ssub.s32 4096, 4096
      %21 = vsyncadd [#allocation4], %s20
      %s22 = sshll.u32 [#allocation3], 4
      %s23 = int_to_ptr.vmem [resolvable:$true] %s22
      %28 = dma.hbm_to_vmem [thread:$0]  %s0, 4096, %s23, [#allocation4], 128, 128, 8
    $region5: #{tpu_custom_call.1} parent=1 // pred_fallthru
      _
    // Predicated region
    $region6: #{tpu_custom_call.1} parent=1 // pred_check
      _
    $region7: #{tpu_custom_call.1} parent=1 // pred_check_branch
      %30 = sbr.rel (0) target = $region9
    $region8: #{tpu_custom_call.1} parent=1 // pred_region
      %s32 = ssub.s32 8192, 8192
      %33 = vsyncadd [#allocation7], %s32
      %s34 = sshll.u32 [#allocation6], 4
      %s35 = int_to_ptr.vmem [resolvable:$true] %s34
      %40 = dma.hbm_to_vmem [thread:$0]  %s1, 8192, %s35, [#allocation7], 512, 512, 32
    $region9: #{tpu_custom_call.1} parent=1 // pred_fallthru
      _
    // Predicated region
    $region10: #{tpu_custom_call.1} parent=1 // pred_check
      _
    $region11: #{tpu_custom_call.1} parent=1 // pred_check_branch
      %42 = sbr.rel (0) target = $region13
    $region12: #{tpu_custom_call.1} parent=1 // pred_region
      %s44 = ssub.s32 8192, 8192
      %45 = vsyncadd [#allocation7], %s44
      %s46 = sshll.u32 [#allocation8], 4
      %s47 = int_to_ptr.vmem [resolvable:$true] %s46
      %52 = dma.hbm_to_vmem [thread:$0]  %s2, 8192, %s47, [#allocation7], 512, 512, 32
    $region13: #{tpu_custom_call.1} parent=1 // pred_fallthru
      _
    // Predicated region
    $region14: #{tpu_custom_call.1} parent=1 // pred_check
      _
    $region15: #{tpu_custom_call.1} parent=1 // pred_check_branch
      %54 = sbr.rel (0) target = $region17
    $region16: #{tpu_custom_call.1} parent=1 // pred_region
      _
    $region17: #{tpu_custom_call.1} parent=1 // pred_fallthru
      _
    // Predicated region
    $region18: #{tpu_custom_call.1} parent=1 // pred_check
      _
    $region19: #{tpu_custom_call.1} parent=1 // pred_check_branch
      %56 = sbr.rel (0) target = $region21
    $region20: #{tpu_custom_call.1} parent=1 // pred_region
      %s58 = ssub.s32 16384, 16384
      %59 = vsyncadd [#allocation10], %s58
      %s60 = sshll.u32 [#allocation9], 4
      %s61 = int_to_ptr.vmem [resolvable:$true] %s60
      %66 = dma.hbm_to_vmem [thread:$0]  %s4, 16384, %s61, [#allocation10], 512, 512, 32
    $region21: #{tpu_custom_call.1} parent=1 // pred_fallthru
      _
    // Predicated region
    $region22: #{tpu_custom_call.1} parent=1 // pred_check
      _
    $region23: #{tpu_custom_call.1} parent=1 // pred_check_branch
      %68 = sbr.rel (0) target = $region25
    $region24: #{tpu_custom_call.1} parent=1 // pred_region
      _
    $region25: #{tpu_custom_call.1} parent=1 // pred_fallthru
      _
    // Predicated region
    $region26: #{tpu_custom_call.1} parent=1 // pred_check
      _
    $region27: #{tpu_custom_call.1} parent=1 // pred_check_branch
      %70 = sbr.rel (0) target = $region29
    $region28: #{tpu_custom_call.1} parent=1 // pred_region
      %s72 = ssub.s32 2048, 2048
      %73 = vsyncadd [#allocation10], %s72
      %s74 = sshll.u32 [#allocation11], 4
      %s75 = int_to_ptr.vmem [resolvable:$true] %s74
      %80 = dma.hbm_to_vmem [thread:$0]  %s6, 2048, %s75, [#allocation10], 128, 128, 8
    $region29: #{tpu_custom_call.1} parent=1 // pred_fallthru
      _
    // Predicated region
    $region30: #{tpu_custom_call.1} parent=1 // pred_check
      _
    $region31: #{tpu_custom_call.1} parent=1 // pred_check_branch
      %82 = sbr.rel (0) target = $region33
    $region32: #{tpu_custom_call.1} parent=1 // pred_region
      _
    $region33: #{tpu_custom_call.1} parent=1 // pred_fallthru
      _
    // Predicated region
    $region34: #{tpu_custom_call.1} parent=1 // pred_check
      _
    $region35: #{tpu_custom_call.1} parent=1 // pred_check_branch
      %84 = sbr.rel (0) target = $region37
    $region36: #{tpu_custom_call.1} parent=1 // pred_region
      %85 = dma.done [#allocation4], 4096
    $region37: #{tpu_custom_call.1} parent=1 // pred_fallthru
      _
    // Predicated region
    $region38: #{tpu_custom_call.1} parent=1 // pred_check
      _
    $region39: #{tpu_custom_call.1} parent=1 // pred_check_branch
      %87 = sbr.rel (0) target = $region41
    $region40: #{tpu_custom_call.1} parent=1 // pred_region
      %88 = dma.done [#allocation7], 8192
    $region41: #{tpu_custom_call.1} parent=1 // pred_fallthru
      _
    // Predicated region
    $region42: #{tpu_custom_call.1} parent=1 // pred_check
      _
    $region43: #{tpu_custom_call.1} parent=1 // pred_check_branch
      %90 = sbr.rel (0) target = $region45
    $region44: #{tpu_custom_call.1} parent=1 // pred_region
      %91 = dma.done [#allocation7], 8192
    $region45: #{tpu_custom_call.1} parent=1 // pred_fallthru
      _
    // Predicated region
    $region46: #{tpu_custom_call.1} parent=1 // pred_check
      _
    $region47: #{tpu_custom_call.1} parent=1 // pred_check_branch
      %93 = sbr.rel (0) target = $region49
    $region48: #{tpu_custom_call.1} parent=1 // pred_region
      %94 = dma.done [#allocation10], 16384
    $region49: #{tpu_custom_call.1} parent=1 // pred_fallthru
      _
    // Predicated region
    $region50: #{tpu_custom_call.1} parent=1 // pred_check
      _
    $region51: #{tpu_custom_call.1} parent=1 // pred_check_branch
      %96 = sbr.rel (0) target = $region53
    $region52: #{tpu_custom_call.1} parent=1 // pred_region
      %97 = dma.done [#allocation10], 2048
    $region53: #{tpu_custom_call.1} parent=1 // pred_fallthru
      _
    %v98 = vld [vmem:[#allocation3] sm:$0xff]
    %v99 = vld [vmem:[#allocation3 + $0x8] sm:$0xff]
    %v100 = vld [vmem:[#allocation3 + $0x10] sm:$0xff]
    %v101 = vld [vmem:[#allocation3 + $0x18] sm:$0xff]
    %v102 = vld [vmem:[#allocation3 + $0x20] sm:$0xff]
    %v103 = vld [vmem:[#allocation3 + $0x28] sm:$0xff]
    %v104 = vld [vmem:[#allocation3 + $0x30] sm:$0xff]
    %v105 = vld [vmem:[#allocation3 + $0x38] sm:$0xff]
    %v106 = vld [vmem:[#allocation3 + $0x40] sm:$0xff]
    %v107 = vld [vmem:[#allocation3 + $0x48] sm:$0xff]
    %v108 = vld [vmem:[#allocation3 + $0x50] sm:$0xff]
    %v109 = vld [vmem:[#allocation3 + $0x58] sm:$0xff]
    %v110 = vld [vmem:[#allocation3 + $0x60] sm:$0xff]
    %v111 = vld [vmem:[#allocation3 + $0x68] sm:$0xff]
    %v112 = vld [vmem:[#allocation3 + $0x70] sm:$0xff]
    %v113 = vld [vmem:[#allocation3 + $0x78] sm:$0xff]
    %v114 = vld [vmem:[#allocation3 + $0x80] sm:$0xff]
    %v115 = vld [vmem:[#allocation3 + $0x88] sm:$0xff]
    %v116 = vld [vmem:[#allocation3 + $0x90] sm:$0xff]
    %v117 = vld [vmem:[#allocation3 + $0x98] sm:$0xff]
    %v118 = vld [vmem:[#allocation3 + $0xa0] sm:$0xff]
    %v119 = vld [vmem:[#allocation3 + $0xa8] sm:$0xff]
    %v120 = vld [vmem:[#allocation3 + $0xb0] sm:$0xff]
    %v121 = vld [vmem:[#allocation3 + $0xb8] sm:$0xff]
    %v122 = vld [vmem:[#allocation3 + $0xc0] sm:$0xff]
    %v123 = vld [vmem:[#allocation3 + $0xc8] sm:$0xff]
    %v124 = vld [vmem:[#allocation3 + $0xd0] sm:$0xff]
    %v125 = vld [vmem:[#allocation3 + $0xd8] sm:$0xff]
    %v126 = vld [vmem:[#allocation3 + $0xe0] sm:$0xff]
    %v127 = vld [vmem:[#allocation3 + $0xe8] sm:$0xff]
    %v128 = vld [vmem:[#allocation3 + $0xf0] sm:$0xff]
    %v129 = vld [vmem:[#allocation3 + $0xf8] sm:$0xff]
    %v130 = vld [vmem:[#allocation6] sm:$0xff]
    %v131 = vld [vmem:[#allocation6 + $0x8] sm:$0xff]
    %v132 = vld [vmem:[#allocation6 + $0x10] sm:$0xff]
    %v133 = vld [vmem:[#allocation6 + $0x18] sm:$0xff]
    %v134 = vld [vmem:[#allocation6 + $0x20] sm:$0xff]
    %v135 = vld [vmem:[#allocation6 + $0x28] sm:$0xff]
    %v136 = vld [vmem:[#allocation6 + $0x30] sm:$0xff]
    %v137 = vld [vmem:[#allocation6 + $0x38] sm:$0xff]
    %v138 = vld [vmem:[#allocation6 + $0x40] sm:$0xff]
    %v139 = vld [vmem:[#allocation6 + $0x48] sm:$0xff]
    %v140 = vld [vmem:[#allocation6 + $0x50] sm:$0xff]
    %v141 = vld [vmem:[#allocation6 + $0x58] sm:$0xff]
    %v142 = vld [vmem:[#allocation6 + $0x60] sm:$0xff]
    %v143 = vld [vmem:[#allocation6 + $0x68] sm:$0xff]
    %v144 = vld [vmem:[#allocation6 + $0x70] sm:$0xff]
    %v145 = vld [vmem:[#allocation6 + $0x78] sm:$0xff]
    %v146 = vld [vmem:[#allocation6 + $0x80] sm:$0xff]
    %v147 = vld [vmem:[#allocation6 + $0x88] sm:$0xff]
    %v148 = vld [vmem:[#allocation6 + $0x90] sm:$0xff]
    %v149 = vld [vmem:[#allocation6 + $0x98] sm:$0xff]
    %v150 = vld [vmem:[#allocation6 + $0xa0] sm:$0xff]
    %v151 = vld [vmem:[#allocation6 + $0xa8] sm:$0xff]
    %v152 = vld [vmem:[#allocation6 + $0xb0] sm:$0xff]
    %v153 = vld [vmem:[#allocation6 + $0xb8] sm:$0xff]
    %v154 = vld [vmem:[#allocation6 + $0xc0] sm:$0xff]
    %v155 = vld [vmem:[#allocation6 + $0xc8] sm:$0xff]
    %v156 = vld [vmem:[#allocation6 + $0xd0] sm:$0xff]
    %v157 = vld [vmem:[#allocation6 + $0xd8] sm:$0xff]
    %v158 = vld [vmem:[#allocation6 + $0xe0] sm:$0xff]
    %v159 = vld [vmem:[#allocation6 + $0xe8] sm:$0xff]
    %v160 = vld [vmem:[#allocation6 + $0xf0] sm:$0xff]
    %v161 = vld [vmem:[#allocation6 + $0xf8] sm:$0xff]
    %v162 = vld [vmem:[#allocation6 + $0x100] sm:$0xff]
    %v163 = vld [vmem:[#allocation6 + $0x108] sm:$0xff]
    %v164 = vld [vmem:[#allocation6 + $0x110] sm:$0xff]
    %v165 = vld [vmem:[#allocation6 + $0x118] sm:$0xff]
    %v166 = vld [vmem:[#allocation6 + $0x120] sm:$0xff]
    %v167 = vld [vmem:[#allocation6 + $0x128] sm:$0xff]
    %v168 = vld [vmem:[#allocation6 + $0x130] sm:$0xff]
    %v169 = vld [vmem:[#allocation6 + $0x138] sm:$0xff]
    %v170 = vld [vmem:[#allocation6 + $0x140] sm:$0xff]
    %v171 = vld [vmem:[#allocation6 + $0x148] sm:$0xff]
    %v172 = vld [vmem:[#allocation6 + $0x150] sm:$0xff]
    %v173 = vld [vmem:[#allocation6 + $0x158] sm:$0xff]
    %v174 = vld [vmem:[#allocation6 + $0x160] sm:$0xff]
    %v175 = vld [vmem:[#allocation6 + $0x168] sm:$0xff]
    %v176 = vld [vmem:[#allocation6 + $0x170] sm:$0xff]
    %v177 = vld [vmem:[#allocation6 + $0x178] sm:$0xff]
    %v178 = vld [vmem:[#allocation6 + $0x180] sm:$0xff]
    %v179 = vld [vmem:[#allocation6 + $0x188] sm:$0xff]
    %v180 = vld [vmem:[#allocation6 + $0x190] sm:$0xff]
    %v181 = vld [vmem:[#allocation6 + $0x198] sm:$0xff]
    %v182 = vld [vmem:[#allocation6 + $0x1a0] sm:$0xff]
    %v183 = vld [vmem:[#allocation6 + $0x1a8] sm:$0xff]
    %v184 = vld [vmem:[#allocation6 + $0x1b0] sm:$0xff]
    %v185 = vld [vmem:[#allocation6 + $0x1b8] sm:$0xff]
    %v186 = vld [vmem:[#allocation6 + $0x1c0] sm:$0xff]
    %v187 = vld [vmem:[#allocation6 + $0x1c8] sm:$0xff]
    %v188 = vld [vmem:[#allocation6 + $0x1d0] sm:$0xff]
    %v189 = vld [vmem:[#allocation6 + $0x1d8] sm:$0xff]
    %v190 = vld [vmem:[#allocation6 + $0x1e0] sm:$0xff]
    %v191 = vld [vmem:[#allocation6 + $0x1e8] sm:$0xff]
    %v192 = vld [vmem:[#allocation6 + $0x1f0] sm:$0xff]
    %v193 = vld [vmem:[#allocation6 + $0x1f8] sm:$0xff]
    %v194 = vld [vmem:[%s3] sm:$0xf]
    %v196 = vlaneseq
    %v197 = vshrl.u32 %v196, 7
    %v198 = vsub.s32 0, %v197
    %v199 = vrot.slane %v194, %v198
    %v200 = vlaneseq
    %v201 = vshrl.u32 %v200, 7
    %v202 = vsub.s32 1, %v201
    %v203 = vrot.slane %v194, %v202
    %v204 = vlaneseq
    %v205 = vshrl.u32 %v204, 7
    %v206 = vsub.s32 2, %v205
    %v207 = vrot.slane %v194, %v206
    %v208 = vlaneseq
    %v209 = vshrl.u32 %v208, 7
    %v210 = vsub.s32 3, %v209
    %v211 = vrot.slane %v194, %v210
    %216 = vmatprep.subr.mxu0 %v131
    %217 = vmatpush1.msra.mxu0 %v130
    %218 = vmatprep.subr.mxu0 %v135
    %219 = vmatpush1.msra.mxu0 %v134
    %220 = vmatprep.subr.mxu0 %v139
    %221 = vmatpush1.msra.mxu0 %v138
    %222 = vmatprep.subr.mxu0 %v143
    %223 = vmatpush1.msra.mxu0 %v142
    %224 = vmatprep.subr.mxu0 %v147
    %225 = vmatpush1.msra.mxu0 %v146
    %226 = vmatprep.subr.mxu0 %v151
    %227 = vmatpush1.msra.mxu0 %v150
    %228 = vmatprep.subr.mxu0 %v155
    %229 = vmatpush1.msra.mxu0 %v154
    %230 = vmatprep.subr.mxu0 %v159
    %231 = vmatpush1.msra.mxu0 %v158
    %232 = vmatprep.subr.mxu0 %v163
    %233 = vmatpush1.msra.mxu0 %v162
    %234 = vmatprep.subr.mxu0 %v167
    %235 = vmatpush1.msra.mxu0 %v166
    %236 = vmatprep.subr.mxu0 %v171
    %237 = vmatpush1.msra.mxu0 %v170
    %238 = vmatprep.subr.mxu0 %v175
    %239 = vmatpush1.msra.mxu0 %v174
    %240 = vmatprep.subr.mxu0 %v179
    %241 = vmatpush1.msra.mxu0 %v178
    %242 = vmatprep.subr.mxu0 %v183
    %243 = vmatpush1.msra.mxu0 %v182
    %244 = vmatprep.subr.mxu0 %v187
    %245 = vmatpush1.msra.mxu0 %v186
    %246 = vmatprep.subr.mxu0 %v191
    %247 = vmatpush1.msra.mxu0 %v190
    %248 = vmatprep.subr.mxu0 0.0
    %249 = vmatpush1.msra.mxu0 0.0
    %250 = vmatprep.subr.mxu0 0.0
    %251 = vmatpush1.msra.mxu0 0.0
    %252 = vmatprep.subr.mxu0 0.0
    %253 = vmatpush1.msra.mxu0 0.0
    %254 = vmatprep.subr.mxu0 0.0
    %255 = vmatpush1.msra.mxu0 0.0
    %256 = vmatprep.subr.mxu0 0.0
    %257 = vmatpush1.msra.mxu0 0.0
    %258 = vmatprep.subr.mxu0 0.0
    %259 = vmatpush1.msra.mxu0 0.0
    %260 = vmatprep.subr.mxu0 0.0
    %261 = vmatpush1.msra.mxu0 0.0
    %262 = vmatprep.subr.mxu0 0.0
    %263 = vmatpush1.msra.mxu0 0.0
    %264 = vmatprep.subr.mxu0 0.0
    %265 = vmatpush1.msra.mxu0 0.0
    %266 = vmatprep.subr.mxu0 0.0
    %267 = vmatpush1.msra.mxu0 0.0
    %268 = vmatprep.subr.mxu0 0.0
    %269 = vmatpush1.msra.mxu0 0.0
    %270 = vmatprep.subr.mxu0 0.0
    %271 = vmatpush1.msra.mxu0 0.0
    %272 = vmatprep.subr.mxu0 0.0
    %273 = vmatpush1.msra.mxu0 0.0
    %274 = vmatprep.subr.mxu0 0.0
    %275 = vmatpush1.msra.mxu0 0.0
    %276 = vmatprep.subr.mxu0 0.0
    %277 = vmatpush1.msra.mxu0 0.0
    %278 = vmatprep.subr.mxu0 0.0
    %279 = vmatpush1.msra.mxu0 0.0
    %280 = vmatprep.mubr.f32.mxu0 0.0
    %281 = vmatmul.mubr.f32.gmra.mrb[0].mxu0 %v98
    %v282 = vpop.f32.mrb[0].mxu0
    %v283 = vadd.f32 %v199, %v282
    %v284 = vpop.f32.mrb[0].mxu0
    %v285 = vadd.f32 %v203, %v284
    %286 = vmatprep.mubr.f32.mxu0 0.0
    %287 = vmatmul.mubr.f32.gmra.mrb[0].mxu0 %v99
    %v288 = vpop.f32.mrb[0].mxu0
    %v289 = vadd.f32 %v199, %v288
    %v290 = vpop.f32.mrb[0].mxu0
    %v291 = vadd.f32 %v203, %v290
    %292 = vmatprep.mubr.f32.mxu0 0.0
    %293 = vmatmul.mubr.f32.gmra.mrb[0].mxu0 %v100
    %v294 = vpop.f32.mrb[0].mxu0
    %v295 = vadd.f32 %v199, %v294
    %v296 = vpop.f32.mrb[0].mxu0
    %v297 = vadd.f32 %v203, %v296
    %298 = vmatprep.mubr.f32.mxu0 0.0
    %299 = vmatmul.mubr.f32.gmra.mrb[0].mxu0 %v101
    %v300 = vpop.f32.mrb[0].mxu0
    %v301 = vadd.f32 %v199, %v300
    %v302 = vpop.f32.mrb[0].mxu0
    %v303 = vadd.f32 %v203, %v302
    %304 = vmatprep.mubr.f32.mxu0 0.0
    %305 = vmatmul.mubr.f32.gmra.mrb[0].mxu0 %v102
    %v306 = vpop.f32.mrb[0].mxu0
    %v307 = vadd.f32 %v199, %v306
    %v308 = vpop.f32.mrb[0].mxu0
    %v309 = vadd.f32 %v203, %v308
    %310 = vmatprep.mubr.f32.mxu0 0.0
    %311 = vmatmul.mubr.f32.gmra.mrb[0].mxu0 %v103
    %v312 = vpop.f32.mrb[0].mxu0
    %v313 = vadd.f32 %v199, %v312
    %v314 = vpop.f32.mrb[0].mxu0
    %v315 = vadd.f32 %v203, %v314
    %316 = vmatprep.mubr.f32.mxu0 0.0
    %317 = vmatmul.mubr.f32.gmra.mrb[0].mxu0 %v104
    %v318 = vpop.f32.mrb[0].mxu0
    %v319 = vadd.f32 %v199, %v318
    %v320 = vpop.f32.mrb[0].mxu0
    %v321 = vadd.f32 %v203, %v320
    %322 = vmatprep.mubr.f32.mxu0 0.0
    %323 = vmatmul.mubr.f32.gmra.mrb[0].mxu0 %v105
    %v324 = vpop.f32.mrb[0].mxu0
    %v325 = vadd.f32 %v199, %v324
    %v326 = vpop.f32.mrb[0].mxu0
    %v327 = vadd.f32 %v203, %v326
    %328 = vmatprep.mubr.f32.mxu0 0.0
    %329 = vmatmul.mubr.f32.gmra.mrb[0].mxu0 %v106
    %v330 = vpop.f32.mrb[0].mxu0
    %v331 = vadd.f32 %v199, %v330
    %v332 = vpop.f32.mrb[0].mxu0
    %v333 = vadd.f32 %v203, %v332
    %334 = vmatprep.mubr.f32.mxu0 0.0
    %335 = vmatmul.mubr.f32.gmra.mrb[0].mxu0 %v107
    %v336 = vpop.f32.mrb[0].mxu0
    %v337 = vadd.f32 %v199, %v336
    %v338 = vpop.f32.mrb[0].mxu0
    %v339 = vadd.f32 %v203, %v338
    %340 = vmatprep.mubr.f32.mxu0 0.0
    %341 = vmatmul.mubr.f32.gmra.mrb[0].mxu0 %v108
    %v342 = vpop.f32.mrb[0].mxu0
    %v343 = vadd.f32 %v199, %v342
    %v344 = vpop.f32.mrb[0].mxu0
    %v345 = vadd.f32 %v203, %v344
    %346 = vmatprep.mubr.f32.mxu0 0.0
    %347 = vmatmul.mubr.f32.gmra.mrb[0].mxu0 %v109
    %v348 = vpop.f32.mrb[0].mxu0
    %v349 = vadd.f32 %v199, %v348
    %v350 = vpop.f32.mrb[0].mxu0
    %v351 = vadd.f32 %v203, %v350
    %352 = vmatprep.mubr.f32.mxu0 0.0
    %353 = vmatmul.mubr.f32.gmra.mrb[0].mxu0 %v110
    %v354 = vpop.f32.mrb[0].mxu0
    %v355 = vadd.f32 %v199, %v354
    %v356 = vpop.f32.mrb[0].mxu0
    %v357 = vadd.f32 %v203, %v356
    %358 = vmatprep.mubr.f32.mxu0 0.0
    %359 = vmatmul.mubr.f32.gmra.mrb[0].mxu0 %v111
    %v360 = vpop.f32.mrb[0].mxu0
    %v361 = vadd.f32 %v199, %v360
    %v362 = vpop.f32.mrb[0].mxu0
    %v363 = vadd.f32 %v203, %v362
    %364 = vmatprep.mubr.f32.mxu0 0.0
    %365 = vmatmul.mubr.f32.gmra.mrb[0].mxu0 %v112
    %v366 = vpop.f32.mrb[0].mxu0
    %v367 = vadd.f32 %v199, %v366
    %v368 = vpop.f32.mrb[0].mxu0
    %v369 = vadd.f32 %v203, %v368
    %370 = vmatprep.mubr.f32.mxu0 0.0
    %371 = vmatmul.mubr.f32.gmra.mrb[0].mxu0 %v113
    %v372 = vpop.f32.mrb[0].mxu0
    %v373 = vadd.f32 %v199, %v372
    %v374 = vpop.f32.mrb[0].mxu0
    %v375 = vadd.f32 %v203, %v374
    %376 = vmatprep.mubr.f32.mxu0 0.0
    %377 = vmatmul.mubr.f32.gmra.mrb[0].mxu0 %v114
    %v378 = vpop.f32.mrb[0].mxu0
    %v379 = vadd.f32 %v199, %v378
    %v380 = vpop.f32.mrb[0].mxu0
    %v381 = vadd.f32 %v203, %v380
    %382 = vmatprep.mubr.f32.mxu0 0.0
    %383 = vmatmul.mubr.f32.gmra.mrb[0].mxu0 %v115
    %v384 = vpop.f32.mrb[0].mxu0
    %v385 = vadd.f32 %v199, %v384
    %v386 = vpop.f32.mrb[0].mxu0
    %v387 = vadd.f32 %v203, %v386
    %388 = vmatprep.mubr.f32.mxu0 0.0
    %389 = vmatmul.mubr.f32.gmra.mrb[0].mxu0 %v116
    %v390 = vpop.f32.mrb[0].mxu0
    %v391 = vadd.f32 %v199, %v390
    %v392 = vpop.f32.mrb[0].mxu0
    %v393 = vadd.f32 %v203, %v392
    %394 = vmatprep.mubr.f32.mxu0 0.0
    %395 = vmatmul.mubr.f32.gmra.mrb[0].mxu0 %v117
    %v396 = vpop.f32.mrb[0].mxu0
    %v397 = vadd.f32 %v199, %v396
    %v398 = vpop.f32.mrb[0].mxu0
    %v399 = vadd.f32 %v203, %v398
    %400 = vmatprep.mubr.f32.mxu0 0.0
    %401 = vmatmul.mubr.f32.gmra.mrb[0].mxu0 %v118
    %v402 = vpop.f32.mrb[0].mxu0
    %v403 = vadd.f32 %v199, %v402
    %v404 = vpop.f32.mrb[0].mxu0
    %v405 = vadd.f32 %v203, %v404
    %406 = vmatprep.mubr.f32.mxu0 0.0
    %407 = vmatmul.mubr.f32.gmra.mrb[0].mxu0 %v119
    %v408 = vpop.f32.mrb[0].mxu0
    %v409 = vadd.f32 %v199, %v408
    %v410 = vpop.f32.mrb[0].mxu0
    %v411 = vadd.f32 %v203, %v410
    %412 = vmatprep.mubr.f32.mxu0 0.0
    %413 = vmatmul.mubr.f32.gmra.mrb[0].mxu0 %v120
    %v414 = vpop.f32.mrb[0].mxu0
    %v415 = vadd.f32 %v199, %v414
    %v416 = vpop.f32.mrb[0].mxu0
    %v417 = vadd.f32 %v203, %v416
    %418 = vmatprep.mubr.f32.mxu0 0.0
    %419 = vmatmul.mubr.f32.gmra.mrb[0].mxu0 %v121
    %v420 = vpop.f32.mrb[0].mxu0
    %v421 = vadd.f32 %v199, %v420
    %v422 = vpop.f32.mrb[0].mxu0
    %v423 = vadd.f32 %v203, %v422
    %424 = vmatprep.mubr.f32.mxu0 0.0
    %425 = vmatmul.mubr.f32.gmra.mrb[0].mxu0 %v122
    %v426 = vpop.f32.mrb[0].mxu0
    %v427 = vadd.f32 %v199, %v426
    %v428 = vpop.f32.mrb[0].mxu0
    %v429 = vadd.f32 %v203, %v428
    %430 = vmatprep.mubr.f32.mxu0 0.0
    %431 = vmatmul.mubr.f32.gmra.mrb[0].mxu0 %v123
    %v432 = vpop.f32.mrb[0].mxu0
    %v433 = vadd.f32 %v199, %v432
    %v434 = vpop.f32.mrb[0].mxu0
    %v435 = vadd.f32 %v203, %v434
    %436 = vmatprep.mubr.f32.mxu0 0.0
    %437 = vmatmul.mubr.f32.gmra.mrb[0].mxu0 %v124
    %v438 = vpop.f32.mrb[0].mxu0
    %v439 = vadd.f32 %v199, %v438
    %v440 = vpop.f32.mrb[0].mxu0
    %v441 = vadd.f32 %v203, %v440
    %442 = vmatprep.mubr.f32.mxu0 0.0
    %443 = vmatmul.mubr.f32.gmra.mrb[0].mxu0 %v125
    %v444 = vpop.f32.mrb[0].mxu0
    %v445 = vadd.f32 %v199, %v444
    %v446 = vpop.f32.mrb[0].mxu0
    %v447 = vadd.f32 %v203, %v446
    %448 = vmatprep.mubr.f32.mxu0 0.0
    %449 = vmatmul.mubr.f32.gmra.mrb[0].mxu0 %v126
    %v450 = vpop.f32.mrb[0].mxu0
    %v451 = vadd.f32 %v199, %v450
    %v452 = vpop.f32.mrb[0].mxu0
    %v453 = vadd.f32 %v203, %v452
    %454 = vmatprep.mubr.f32.mxu0 0.0
    %455 = vmatmul.mubr.f32.gmra.mrb[0].mxu0 %v127
    %v456 = vpop.f32.mrb[0].mxu0
    %v457 = vadd.f32 %v199, %v456
    %v458 = vpop.f32.mrb[0].mxu0
    %v459 = vadd.f32 %v203, %v458
    %460 = vmatprep.mubr.f32.mxu0 0.0
    %461 = vmatmul.mubr.f32.gmra.mrb[0].mxu0 %v128
    %v462 = vpop.f32.mrb[0].mxu0
    %v463 = vadd.f32 %v199, %v462
    %v464 = vpop.f32.mrb[0].mxu0
    %v465 = vadd.f32 %v203, %v464
    %466 = vmatprep.mubr.f32.mxu0 0.0
    %467 = vmatmul.mubr.f32.gmra.mrb[0].mxu0 %v129
    %v468 = vpop.f32.mrb[0].mxu0
    %v469 = vadd.f32 %v199, %v468
    %v470 = vpop.f32.mrb[0].mxu0
    %v471 = vadd.f32 %v203, %v470
    %472 = vdwg.mxu0
    %473 = vmatprep.subr.mxu0 %v133
    %474 = vmatpush1.msra.mxu0 %v132
    %475 = vmatprep.subr.mxu0 %v137
    %476 = vmatpush1.msra.mxu0 %v136
    %477 = vmatprep.subr.mxu0 %v141
    %478 = vmatpush1.msra.mxu0 %v140
    %479 = vmatprep.subr.mxu0 %v145
    %480 = vmatpush1.msra.mxu0 %v144
    %481 = vmatprep.subr.mxu0 %v149
    %482 = vmatpush1.msra.mxu0 %v148
    %483 = vmatprep.subr.mxu0 %v153
    %484 = vmatpush1.msra.mxu0 %v152
    %485 = vmatprep.subr.mxu0 %v157
    %486 = vmatpush1.msra.mxu0 %v156
    %487 = vmatprep.subr.mxu0 %v161
    %488 = vmatpush1.msra.mxu0 %v160
    %489 = vmatprep.subr.mxu0 %v165
    %490 = vmatpush1.msra.mxu0 %v164
    %491 = vmatprep.subr.mxu0 %v169
    %492 = vmatpush1.msra.mxu0 %v168
    %493 = vmatprep.subr.mxu0 %v173
    %494 = vmatpush1.msra.mxu0 %v172
    %495 = vmatprep.subr.mxu0 %v177
    %496 = vmatpush1.msra.mxu0 %v176
    %497 = vmatprep.subr.mxu0 %v181
    %498 = vmatpush1.msra.mxu0 %v180
    %499 = vmatprep.subr.mxu0 %v185
    %500 = vmatpush1.msra.mxu0 %v184
    %501 = vmatprep.subr.mxu0 %v189
    %502 = vmatpush1.msra.mxu0 %v188
    %503 = vmatprep.subr.mxu0 %v193
    %504 = vmatpush1.msra.mxu0 %v192
    %505 = vmatprep.subr.mxu0 0.0
    %506 = vmatpush1.msra.mxu0 0.0
    %507 = vmatprep.subr.mxu0 0.0
    %508 = vmatpush1.msra.mxu0 0.0
    %509 = vmatprep.subr.mxu0 0.0
    %510 = vmatpush1.msra.mxu0 0.0
    %511 = vmatprep.subr.mxu0 0.0
    %512 = vmatpush1.msra.mxu0 0.0
    %513 = vmatprep.subr.mxu0 0.0
    %514 = vmatpush1.msra.mxu0 0.0
    %515 = vmatprep.subr.mxu0 0.0
    %516 = vmatpush1.msra.mxu0 0.0
    %517 = vmatprep.subr.mxu0 0.0
    %518 = vmatpush1.msra.mxu0 0.0
    %519 = vmatprep.subr.mxu0 0.0
    %520 = vmatpush1.msra.mxu0 0.0
    %521 = vmatprep.subr.mxu0 0.0
    %522 = vmatpush1.msra.mxu0 0.0
    %523 = vmatprep.subr.mxu0 0.0
    %524 = vmatpush1.msra.mxu0 0.0
    %525 = vmatprep.subr.mxu0 0.0
    %526 = vmatpush1.msra.mxu0 0.0
    %527 = vmatprep.subr.mxu0 0.0
    %528 = vmatpush1.msra.mxu0 0.0
    %529 = vmatprep.subr.mxu0 0.0
    %530 = vmatpush1.msra.mxu0 0.0
    %531 = vmatprep.subr.mxu0 0.0
    %532 = vmatpush1.msra.mxu0 0.0
    %533 = vmatprep.subr.mxu0 0.0
    %534 = vmatpush1.msra.mxu0 0.0
    %535 = vmatprep.subr.mxu0 0.0
    %536 = vmatpush1.msra.mxu0 0.0
    %537 = vmatprep.mubr.f32.mxu0 0.0
    %538 = vmatmul.mubr.f32.gmra.mrb[0].mxu0 %v98
    %v539 = vpop.f32.mrb[0].mxu0
    %v540 = vadd.f32 %v207, %v539
    %v541 = vpop.f32.mrb[0].mxu0
    %v542 = vadd.f32 %v211, %v541
    %543 = vmatprep.mubr.f32.mxu0 0.0
    %544 = vmatmul.mubr.f32.gmra.mrb[0].mxu0 %v99
    %v545 = vpop.f32.mrb[0].mxu0
    %v546 = vadd.f32 %v207, %v545
    %v547 = vpop.f32.mrb[0].mxu0
    %v548 = vadd.f32 %v211, %v547
    %549 = vmatprep.mubr.f32.mxu0 0.0
    %550 = vmatmul.mubr.f32.gmra.mrb[0].mxu0 %v100
    %v551 = vpop.f32.mrb[0].mxu0
    %v552 = vadd.f32 %v207, %v551
    %v553 = vpop.f32.mrb[0].mxu0
    %v554 = vadd.f32 %v211, %v553
    %555 = vmatprep.mubr.f32.mxu0 0.0
    %556 = vmatmul.mubr.f32.gmra.mrb[0].mxu0 %v101
    %v557 = vpop.f32.mrb[0].mxu0
    %v558 = vadd.f32 %v207, %v557
    %v559 = vpop.f32.mrb[0].mxu0
    %v560 = vadd.f32 %v211, %v559
    %561 = vmatprep.mubr.f32.mxu0 0.0
    %562 = vmatmul.mubr.f32.gmra.mrb[0].mxu0 %v102
    %v563 = vpop.f32.mrb[0].mxu0
    %v564 = vadd.f32 %v207, %v563
    %v565 = vpop.f32.mrb[0].mxu0
    %v566 = vadd.f32 %v211, %v565
    %567 = vmatprep.mubr.f32.mxu0 0.0
    %568 = vmatmul.mubr.f32.gmra.mrb[0].mxu0 %v103
    %v569 = vpop.f32.mrb[0].mxu0
    %v570 = vadd.f32 %v207, %v569
    %v571 = vpop.f32.mrb[0].mxu0
    %v572 = vadd.f32 %v211, %v571
    %573 = vmatprep.mubr.f32.mxu0 0.0
    %574 = vmatmul.mubr.f32.gmra.mrb[0].mxu0 %v104
    %v575 = vpop.f32.mrb[0].mxu0
    %v576 = vadd.f32 %v207, %v575
    %v577 = vpop.f32.mrb[0].mxu0
    %v578 = vadd.f32 %v211, %v577
    %579 = vmatprep.mubr.f32.mxu0 0.0
    %580 = vmatmul.mubr.f32.gmra.mrb[0].mxu0 %v105
    %v581 = vpop.f32.mrb[0].mxu0
    %v582 = vadd.f32 %v207, %v581
    %v583 = vpop.f32.mrb[0].mxu0
    %v584 = vadd.f32 %v211, %v583
    %585 = vmatprep.mubr.f32.mxu0 0.0
    %586 = vmatmul.mubr.f32.gmra.mrb[0].mxu0 %v106
    %v587 = vpop.f32.mrb[0].mxu0
    %v588 = vadd.f32 %v207, %v587
    %v589 = vpop.f32.mrb[0].mxu0
    %v590 = vadd.f32 %v211, %v589
    %591 = vmatprep.mubr.f32.mxu0 0.0
    %592 = vmatmul.mubr.f32.gmra.mrb[0].mxu0 %v107
    %v593 = vpop.f32.mrb[0].mxu0
    %v594 = vadd.f32 %v207, %v593
    %v595 = vpop.f32.mrb[0].mxu0
    %v596 = vadd.f32 %v211, %v595
    %597 = vmatprep.mubr.f32.mxu0 0.0
    %598 = vmatmul.mubr.f32.gmra.mrb[0].mxu0 %v108
    %v599 = vpop.f32.mrb[0].mxu0
    %v600 = vadd.f32 %v207, %v599
    %v601 = vpop.f32.mrb[0].mxu0
    %v602 = vadd.f32 %v211, %v601
    %603 = vmatprep.mubr.f32.mxu0 0.0
    %604 = vmatmul.mubr.f32.gmra.mrb[0].mxu0 %v109
    %v605 = vpop.f32.mrb[0].mxu0
    %v606 = vadd.f32 %v207, %v605
    %v607 = vpop.f32.mrb[0].mxu0
    %v608 = vadd.f32 %v211, %v607
    %609 = vmatprep.mubr.f32.mxu0 0.0
    %610 = vmatmul.mubr.f32.gmra.mrb[0].mxu0 %v110
    %v611 = vpop.f32.mrb[0].mxu0
    %v612 = vadd.f32 %v207, %v611
    %v613 = vpop.f32.mrb[0].mxu0
    %v614 = vadd.f32 %v211, %v613
    %615 = vmatprep.mubr.f32.mxu0 0.0
    %616 = vmatmul.mubr.f32.gmra.mrb[0].mxu0 %v111
    %v617 = vpop.f32.mrb[0].mxu0
    %v618 = vadd.f32 %v207, %v617
    %v619 = vpop.f32.mrb[0].mxu0
    %v620 = vadd.f32 %v211, %v619
    %621 = vmatprep.mubr.f32.mxu0 0.0
    %622 = vmatmul.mubr.f32.gmra.mrb[0].mxu0 %v112
    %v623 = vpop.f32.mrb[0].mxu0
    %v624 = vadd.f32 %v207, %v623
    %v625 = vpop.f32.mrb[0].mxu0
    %v626 = vadd.f32 %v211, %v625
    %627 = vmatprep.mubr.f32.mxu0 0.0
    %628 = vmatmul.mubr.f32.gmra.mrb[0].mxu0 %v113
    %v629 = vpop.f32.mrb[0].mxu0
    %v630 = vadd.f32 %v207, %v629
    %v631 = vpop.f32.mrb[0].mxu0
    %v632 = vadd.f32 %v211, %v631
    %633 = vmatprep.mubr.f32.mxu0 0.0
    %634 = vmatmul.mubr.f32.gmra.mrb[0].mxu0 %v114
    %v635 = vpop.f32.mrb[0].mxu0
    %v636 = vadd.f32 %v207, %v635
    %v637 = vpop.f32.mrb[0].mxu0
    %v638 = vadd.f32 %v211, %v637
    %639 = vmatprep.mubr.f32.mxu0 0.0
    %640 = vmatmul.mubr.f32.gmra.mrb[0].mxu0 %v115
    %v641 = vpop.f32.mrb[0].mxu0
    %v642 = vadd.f32 %v207, %v641
    %v643 = vpop.f32.mrb[0].mxu0
    %v644 = vadd.f32 %v211, %v643
    %645 = vmatprep.mubr.f32.mxu0 0.0
    %646 = vmatmul.mubr.f32.gmra.mrb[0].mxu0 %v116
    %v647 = vpop.f32.mrb[0].mxu0
    %v648 = vadd.f32 %v207, %v647
    %v649 = vpop.f32.mrb[0].mxu0
    %v650 = vadd.f32 %v211, %v649
    %651 = vmatprep.mubr.f32.mxu0 0.0
    %652 = vmatmul.mubr.f32.gmra.mrb[0].mxu0 %v117
    %v653 = vpop.f32.mrb[0].mxu0
    %v654 = vadd.f32 %v207, %v653
    %v655 = vpop.f32.mrb[0].mxu0
    %v656 = vadd.f32 %v211, %v655
    %657 = vmatprep.mubr.f32.mxu0 0.0
    %658 = vmatmul.mubr.f32.gmra.mrb[0].mxu0 %v118
    %v659 = vpop.f32.mrb[0].mxu0
    %v660 = vadd.f32 %v207, %v659
    %v661 = vpop.f32.mrb[0].mxu0
    %v662 = vadd.f32 %v211, %v661
    %663 = vmatprep.mubr.f32.mxu0 0.0
    %664 = vmatmul.mubr.f32.gmra.mrb[0].mxu0 %v119
    %v665 = vpop.f32.mrb[0].mxu0
    %v666 = vadd.f32 %v207, %v665
    %v667 = vpop.f32.mrb[0].mxu0
    %v668 = vadd.f32 %v211, %v667
    %669 = vmatprep.mubr.f32.mxu0 0.0
    %670 = vmatmul.mubr.f32.gmra.mrb[0].mxu0 %v120
    %v671 = vpop.f32.mrb[0].mxu0
    %v672 = vadd.f32 %v207, %v671
    %v673 = vpop.f32.mrb[0].mxu0
    %v674 = vadd.f32 %v211, %v673
    %675 = vmatprep.mubr.f32.mxu0 0.0
    %676 = vmatmul.mubr.f32.gmra.mrb[0].mxu0 %v121
    %v677 = vpop.f32.mrb[0].mxu0
    %v678 = vadd.f32 %v207, %v677
    %v679 = vpop.f32.mrb[0].mxu0
    %v680 = vadd.f32 %v211, %v679
    %681 = vmatprep.mubr.f32.mxu0 0.0
    %682 = vmatmul.mubr.f32.gmra.mrb[0].mxu0 %v122
    %v683 = vpop.f32.mrb[0].mxu0
    %v684 = vadd.f32 %v207, %v683
    %v685 = vpop.f32.mrb[0].mxu0
    %v686 = vadd.f32 %v211, %v685
    %687 = vmatprep.mubr.f32.mxu0 0.0
    %688 = vmatmul.mubr.f32.gmra.mrb[0].mxu0 %v123
    %v689 = vpop.f32.mrb[0].mxu0
    %v690 = vadd.f32 %v207, %v689
    %v691 = vpop.f32.mrb[0].mxu0
    %v692 = vadd.f32 %v211, %v691
    %693 = vmatprep.mubr.f32.mxu0 0.0
    %694 = vmatmul.mubr.f32.gmra.mrb[0].mxu0 %v124
    %v695 = vpop.f32.mrb[0].mxu0
    %v696 = vadd.f32 %v207, %v695
    %v697 = vpop.f32.mrb[0].mxu0
    %v698 = vadd.f32 %v211, %v697
    %699 = vmatprep.mubr.f32.mxu0 0.0
    %700 = vmatmul.mubr.f32.gmra.mrb[0].mxu0 %v125
    %v701 = vpop.f32.mrb[0].mxu0
    %v702 = vadd.f32 %v207, %v701
    %v703 = vpop.f32.mrb[0].mxu0
    %v704 = vadd.f32 %v211, %v703
    %705 = vmatprep.mubr.f32.mxu0 0.0
    %706 = vmatmul.mubr.f32.gmra.mrb[0].mxu0 %v126
    %v707 = vpop.f32.mrb[0].mxu0
    %v708 = vadd.f32 %v207, %v707
    %v709 = vpop.f32.mrb[0].mxu0
    %v710 = vadd.f32 %v211, %v709
    %711 = vmatprep.mubr.f32.mxu0 0.0
    %712 = vmatmul.mubr.f32.gmra.mrb[0].mxu0 %v127
    %v713 = vpop.f32.mrb[0].mxu0
    %v714 = vadd.f32 %v207, %v713
    %v715 = vpop.f32.mrb[0].mxu0
    %v716 = vadd.f32 %v211, %v715
    %717 = vmatprep.mubr.f32.mxu0 0.0
    %718 = vmatmul.mubr.f32.gmra.mrb[0].mxu0 %v128
    %v719 = vpop.f32.mrb[0].mxu0
    %v720 = vadd.f32 %v207, %v719
    %v721 = vpop.f32.mrb[0].mxu0
    %v722 = vadd.f32 %v211, %v721
    %723 = vmatprep.mubr.f32.mxu0 0.0
    %724 = vmatmul.mubr.f32.gmra.mrb[0].mxu0 %v129
    %v725 = vpop.f32.mrb[0].mxu0
    %v726 = vadd.f32 %v207, %v725
    %v727 = vpop.f32.mrb[0].mxu0
    %v728 = vadd.f32 %v211, %v727
    %729 = vdwg.mxu0
    %730 = vst [vmem:[#allocation2] sm:$0xff] %v283
    %731 = vst [vmem:[#allocation2 + $0x8] sm:$0xff] %v285
    %732 = vst [vmem:[#allocation2 + $0x10] sm:$0xff] %v540
    %733 = vst [vmem:[#allocation2 + $0x18] sm:$0xff] %v542
    %734 = vst [vmem:[#allocation2 + $0x20] sm:$0xff] %v289
    %735 = vst [vmem:[#allocation2 + $0x28] sm:$0xff] %v291
    %736 = vst [vmem:[#allocation2 + $0x30] sm:$0xff] %v546
    %737 = vst [vmem:[#allocation2 + $0x38] sm:$0xff] %v548
    %738 = vst [vmem:[#allocation2 + $0x40] sm:$0xff] %v295
    %739 = vst [vmem:[#allocation2 + $0x48] sm:$0xff] %v297
    %740 = vst [vmem:[#allocation2 + $0x50] sm:$0xff] %v552
    %741 = vst [vmem:[#allocation2 + $0x58] sm:$0xff] %v554
    %742 = vst [vmem:[#allocation2 + $0x60] sm:$0xff] %v301
    %743 = vst [vmem:[#allocation2 + $0x68] sm:$0xff] %v303
    %744 = vst [vmem:[#allocation2 + $0x70] sm:$0xff] %v558
    %745 = vst [vmem:[#allocation2 + $0x78] sm:$0xff] %v560
    %746 = vst [vmem:[#allocation2 + $0x80] sm:$0xff] %v307
    %747 = vst [vmem:[#allocation2 + $0x88] sm:$0xff] %v309
    %748 = vst [vmem:[#allocation2 + $0x90] sm:$0xff] %v564
    %749 = vst [vmem:[#allocation2 + $0x98] sm:$0xff] %v566
    %750 = vst [vmem:[#allocation2 + $0xa0] sm:$0xff] %v313
    %751 = vst [vmem:[#allocation2 + $0xa8] sm:$0xff] %v315
    %752 = vst [vmem:[#allocation2 + $0xb0] sm:$0xff] %v570
    %753 = vst [vmem:[#allocation2 + $0xb8] sm:$0xff] %v572
    %754 = vst [vmem:[#allocation2 + $0xc0] sm:$0xff] %v319
    %755 = vst [vmem:[#allocation2 + $0xc8] sm:$0xff] %v321
    %756 = vst [vmem:[#allocation2 + $0xd0] sm:$0xff] %v576
    %757 = vst [vmem:[#allocation2 + $0xd8] sm:$0xff] %v578
    %758 = vst [vmem:[#allocation2 + $0xe0] sm:$0xff] %v325
    %759 = vst [vmem:[#allocation2 + $0xe8] sm:$0xff] %v327
    %760 = vst [vmem:[#allocation2 + $0xf0] sm:$0xff] %v582
    %761 = vst [vmem:[#allocation2 + $0xf8] sm:$0xff] %v584
    %762 = vst [vmem:[#allocation2 + $0x100] sm:$0xff] %v331
    %763 = vst [vmem:[#allocation2 + $0x108] sm:$0xff] %v333
    %764 = vst [vmem:[#allocation2 + $0x110] sm:$0xff] %v588
    %765 = vst [vmem:[#allocation2 + $0x118] sm:$0xff] %v590
    %766 = vst [vmem:[#allocation2 + $0x120] sm:$0xff] %v337
    %767 = vst [vmem:[#allocation2 + $0x128] sm:$0xff] %v339
    %768 = vst [vmem:[#allocation2 + $0x130] sm:$0xff] %v594
    %769 = vst [vmem:[#allocation2 + $0x138] sm:$0xff] %v596
    %770 = vst [vmem:[#allocation2 + $0x140] sm:$0xff] %v343
    %771 = vst [vmem:[#allocation2 + $0x148] sm:$0xff] %v345
    %772 = vst [vmem:[#allocation2 + $0x150] sm:$0xff] %v600
    %773 = vst [vmem:[#allocation2 + $0x158] sm:$0xff] %v602
    %774 = vst [vmem:[#allocation2 + $0x160] sm:$0xff] %v349
    %775 = vst [vmem:[#allocation2 + $0x168] sm:$0xff] %v351
    %776 = vst [vmem:[#allocation2 + $0x170] sm:$0xff] %v606
    %777 = vst [vmem:[#allocation2 + $0x178] sm:$0xff] %v608
    %778 = vst [vmem:[#allocation2 + $0x180] sm:$0xff] %v355
    %779 = vst [vmem:[#allocation2 + $0x188] sm:$0xff] %v357
    %780 = vst [vmem:[#allocation2 + $0x190] sm:$0xff] %v612
    %781 = vst [vmem:[#allocation2 + $0x198] sm:$0xff] %v614
    %782 = vst [vmem:[#allocation2 + $0x1a0] sm:$0xff] %v361
    %783 = vst [vmem:[#allocation2 + $0x1a8] sm:$0xff] %v363
    %784 = vst [vmem:[#allocation2 + $0x1b0] sm:$0xff] %v618
    %785 = vst [vmem:[#allocation2 + $0x1b8] sm:$0xff] %v620
    %786 = vst [vmem:[#allocation2 + $0x1c0] sm:$0xff] %v367
    %787 = vst [vmem:[#allocation2 + $0x1c8] sm:$0xff] %v369
    %788 = vst [vmem:[#allocation2 + $0x1d0] sm:$0xff] %v624
    %789 = vst [vmem:[#allocation2 + $0x1d8] sm:$0xff] %v626
    %790 = vst [vmem:[#allocation2 + $0x1e0] sm:$0xff] %v373
    %791 = vst [vmem:[#allocation2 + $0x1e8] sm:$0xff] %v375
    %792 = vst [vmem:[#allocation2 + $0x1f0] sm:$0xff] %v630
    %793 = vst [vmem:[#allocation2 + $0x1f8] sm:$0xff] %v632
    %794 = vst [vmem:[#allocation2 + $0x200] sm:$0xff] %v379
    %795 = vst [vmem:[#allocation2 + $0x208] sm:$0xff] %v381
    %796 = vst [vmem:[#allocation2 + $0x210] sm:$0xff] %v636
    %797 = vst [vmem:[#allocation2 + $0x218] sm:$0xff] %v638
    %798 = vst [vmem:[#allocation2 + $0x220] sm:$0xff] %v385
    %799 = vst [vmem:[#allocation2 + $0x228] sm:$0xff] %v387
    %800 = vst [vmem:[#allocation2 + $0x230] sm:$0xff] %v642
    %801 = vst [vmem:[#allocation2 + $0x238] sm:$0xff] %v644
    %802 = vst [vmem:[#allocation2 + $0x240] sm:$0xff] %v391
    %803 = vst [vmem:[#allocation2 + $0x248] sm:$0xff] %v393
    %804 = vst [vmem:[#allocation2 + $0x250] sm:$0xff] %v648
    %805 = vst [vmem:[#allocation2 + $0x258] sm:$0xff] %v650
    %806 = vst [vmem:[#allocation2 + $0x260] sm:$0xff] %v397
    %807 = vst [vmem:[#allocation2 + $0x268] sm:$0xff] %v399
    %808 = vst [vmem:[#allocation2 + $0x270] sm:$0xff] %v654
    %809 = vst [vmem:[#allocation2 + $0x278] sm:$0xff] %v656
    %810 = vst [vmem:[#allocation2 + $0x280] sm:$0xff] %v403
    %811 = vst [vmem:[#allocation2 + $0x288] sm:$0xff] %v405
    %812 = vst [vmem:[#allocation2 + $0x290] sm:$0xff] %v660
    %813 = vst [vmem:[#allocation2 + $0x298] sm:$0xff] %v662
    %814 = vst [vmem:[#allocation2 + $0x2a0] sm:$0xff] %v409
    %815 = vst [vmem:[#allocation2 + $0x2a8] sm:$0xff] %v411
    %816 = vst [vmem:[#allocation2 + $0x2b0] sm:$0xff] %v666
    %817 = vst [vmem:[#allocation2 + $0x2b8] sm:$0xff] %v668
    %818 = vst [vmem:[#allocation2 + $0x2c0] sm:$0xff] %v415
    %819 = vst [vmem:[#allocation2 + $0x2c8] sm:$0xff] %v417
    %820 = vst [vmem:[#allocation2 + $0x2d0] sm:$0xff] %v672
    %821 = vst [vmem:[#allocation2 + $0x2d8] sm:$0xff] %v674
    %822 = vst [vmem:[#allocation2 + $0x2e0] sm:$0xff] %v421
    %823 = vst [vmem:[#allocation2 + $0x2e8] sm:$0xff] %v423
    %824 = vst [vmem:[#allocation2 + $0x2f0] sm:$0xff] %v678
    %825 = vst [vmem:[#allocation2 + $0x2f8] sm:$0xff] %v680
    %826 = vst [vmem:[#allocation2 + $0x300] sm:$0xff] %v427
    %827 = vst [vmem:[#allocation2 + $0x308] sm:$0xff] %v429
    %828 = vst [vmem:[#allocation2 + $0x310] sm:$0xff] %v684
    %829 = vst [vmem:[#allocation2 + $0x318] sm:$0xff] %v686
    %830 = vst [vmem:[#allocation2 + $0x320] sm:$0xff] %v433
    %831 = vst [vmem:[#allocation2 + $0x328] sm:$0xff] %v435
    %832 = vst [vmem:[#allocation2 + $0x330] sm:$0xff] %v690
    %833 = vst [vmem:[#allocation2 + $0x338] sm:$0xff] %v692
    %834 = vst [vmem:[#allocation2 + $0x340] sm:$0xff] %v439
    %835 = vst [vmem:[#allocation2 + $0x348] sm:$0xff] %v441
    %836 = vst [vmem:[#allocation2 + $0x350] sm:$0xff] %v696
    %837 = vst [vmem:[#allocation2 + $0x358] sm:$0xff] %v698
    %838 = vst [vmem:[#allocation2 + $0x360] sm:$0xff] %v445
    %839 = vst [vmem:[#allocation2 + $0x368] sm:$0xff] %v447
    %840 = vst [vmem:[#allocation2 + $0x370] sm:$0xff] %v702
    %841 = vst [vmem:[#allocation2 + $0x378] sm:$0xff] %v704
    %842 = vst [vmem:[#allocation2 + $0x380] sm:$0xff] %v451
    %843 = vst [vmem:[#allocation2 + $0x388] sm:$0xff] %v453
    %844 = vst [vmem:[#allocation2 + $0x390] sm:$0xff] %v708
    %845 = vst [vmem:[#allocation2 + $0x398] sm:$0xff] %v710
    %846 = vst [vmem:[#allocation2 + $0x3a0] sm:$0xff] %v457
    %847 = vst [vmem:[#allocation2 + $0x3a8] sm:$0xff] %v459
    %848 = vst [vmem:[#allocation2 + $0x3b0] sm:$0xff] %v714
    %849 = vst [vmem:[#allocation2 + $0x3b8] sm:$0xff] %v716
    %850 = vst [vmem:[#allocation2 + $0x3c0] sm:$0xff] %v463
    %851 = vst [vmem:[#allocation2 + $0x3c8] sm:$0xff] %v465
    %852 = vst [vmem:[#allocation2 + $0x3d0] sm:$0xff] %v720
    %853 = vst [vmem:[#allocation2 + $0x3d8] sm:$0xff] %v722
    %854 = vst [vmem:[#allocation2 + $0x3e0] sm:$0xff] %v469
    %855 = vst [vmem:[#allocation2 + $0x3e8] sm:$0xff] %v471
    %856 = vst [vmem:[#allocation2 + $0x3f0] sm:$0xff] %v726
    %857 = vst [vmem:[#allocation2 + $0x3f8] sm:$0xff] %v728
    %v858 = vld [vmem:[#allocation8] sm:$0xff]
    %v859 = vld [vmem:[#allocation8 + $0x8] sm:$0xff]
    %v860 = vld [vmem:[#allocation8 + $0x10] sm:$0xff]
    %v861 = vld [vmem:[#allocation8 + $0x18] sm:$0xff]
    %v862 = vld [vmem:[#allocation8 + $0x20] sm:$0xff]
    %v863 = vld [vmem:[#allocation8 + $0x28] sm:$0xff]
    %v864 = vld [vmem:[#allocation8 + $0x30] sm:$0xff]
    %v865 = vld [vmem:[#allocation8 + $0x38] sm:$0xff]
    %v866 = vld [vmem:[#allocation8 + $0x40] sm:$0xff]
    %v867 = vld [vmem:[#allocation8 + $0x48] sm:$0xff]
    %v868 = vld [vmem:[#allocation8 + $0x50] sm:$0xff]
    %v869 = vld [vmem:[#allocation8 + $0x58] sm:$0xff]
    %v870 = vld [vmem:[#allocation8 + $0x60] sm:$0xff]
    %v871 = vld [vmem:[#allocation8 + $0x68] sm:$0xff]
    %v872 = vld [vmem:[#allocation8 + $0x70] sm:$0xff]
    %v873 = vld [vmem:[#allocation8 + $0x78] sm:$0xff]
    %v874 = vld [vmem:[#allocation8 + $0x80] sm:$0xff]
    %v875 = vld [vmem:[#allocation8 + $0x88] sm:$0xff]
    %v876 = vld [vmem:[#allocation8 + $0x90] sm:$0xff]
    %v877 = vld [vmem:[#allocation8 + $0x98] sm:$0xff]
    %v878 = vld [vmem:[#allocation8 + $0xa0] sm:$0xff]
    %v879 = vld [vmem:[#allocation8 + $0xa8] sm:$0xff]
    %v880 = vld [vmem:[#allocation8 + $0xb0] sm:$0xff]
    %v881 = vld [vmem:[#allocation8 + $0xb8] sm:$0xff]
    %v882 = vld [vmem:[#allocation8 + $0xc0] sm:$0xff]
    %v883 = vld [vmem:[#allocation8 + $0xc8] sm:$0xff]
    %v884 = vld [vmem:[#allocation8 + $0xd0] sm:$0xff]
    %v885 = vld [vmem:[#allocation8 + $0xd8] sm:$0xff]
    %v886 = vld [vmem:[#allocation8 + $0xe0] sm:$0xff]
    %v887 = vld [vmem:[#allocation8 + $0xe8] sm:$0xff]
    %v888 = vld [vmem:[#allocation8 + $0xf0] sm:$0xff]
    %v889 = vld [vmem:[#allocation8 + $0xf8] sm:$0xff]
    %v890 = vld [vmem:[#allocation8 + $0x100] sm:$0xff]
    %v891 = vld [vmem:[#allocation8 + $0x108] sm:$0xff]
    %v892 = vld [vmem:[#allocation8 + $0x110] sm:$0xff]
    %v893 = vld [vmem:[#allocation8 + $0x118] sm:$0xff]
    %v894 = vld [vmem:[#allocation8 + $0x120] sm:$0xff]
    %v895 = vld [vmem:[#allocation8 + $0x128] sm:$0xff]
    %v896 = vld [vmem:[#allocation8 + $0x130] sm:$0xff]
    %v897 = vld [vmem:[#allocation8 + $0x138] sm:$0xff]
    %v898 = vld [vmem:[#allocation8 + $0x140] sm:$0xff]
    %v899 = vld [vmem:[#allocation8 + $0x148] sm:$0xff]
    %v900 = vld [vmem:[#allocation8 + $0x150] sm:$0xff]
    %v901 = vld [vmem:[#allocation8 + $0x158] sm:$0xff]
    %v902 = vld [vmem:[#allocation8 + $0x160] sm:$0xff]
    %v903 = vld [vmem:[#allocation8 + $0x168] sm:$0xff]
    %v904 = vld [vmem:[#allocation8 + $0x170] sm:$0xff]
    %v905 = vld [vmem:[#allocation8 + $0x178] sm:$0xff]
    %v906 = vld [vmem:[#allocation8 + $0x180] sm:$0xff]
    %v907 = vld [vmem:[#allocation8 + $0x188] sm:$0xff]
    %v908 = vld [vmem:[#allocation8 + $0x190] sm:$0xff]
    %v909 = vld [vmem:[#allocation8 + $0x198] sm:$0xff]
    %v910 = vld [vmem:[#allocation8 + $0x1a0] sm:$0xff]
    %v911 = vld [vmem:[#allocation8 + $0x1a8] sm:$0xff]
    %v912 = vld [vmem:[#allocation8 + $0x1b0] sm:$0xff]
    %v913 = vld [vmem:[#allocation8 + $0x1b8] sm:$0xff]
    %v914 = vld [vmem:[#allocation8 + $0x1c0] sm:$0xff]
    %v915 = vld [vmem:[#allocation8 + $0x1c8] sm:$0xff]
    %v916 = vld [vmem:[#allocation8 + $0x1d0] sm:$0xff]
    %v917 = vld [vmem:[#allocation8 + $0x1d8] sm:$0xff]
    %v918 = vld [vmem:[#allocation8 + $0x1e0] sm:$0xff]
    %v919 = vld [vmem:[#allocation8 + $0x1e8] sm:$0xff]
    %v920 = vld [vmem:[#allocation8 + $0x1f0] sm:$0xff]
    %v921 = vld [vmem:[#allocation8 + $0x1f8] sm:$0xff]
    %v922 = vld [vmem:[#allocation9] sm:$0xff]
    %v923 = vld [vmem:[#allocation9 + $0x8] sm:$0xff]
    %v924 = vld [vmem:[#allocation9 + $0x10] sm:$0xff]
    %v925 = vld [vmem:[#allocation9 + $0x18] sm:$0xff]
    %v926 = vld [vmem:[#allocation9 + $0x20] sm:$0xff]
    %v927 = vld [vmem:[#allocation9 + $0x28] sm:$0xff]
    %v928 = vld [vmem:[#allocation9 + $0x30] sm:$0xff]
    %v929 = vld [vmem:[#allocation9 + $0x38] sm:$0xff]
    %v930 = vld [vmem:[#allocation9 + $0x40] sm:$0xff]
    %v931 = vld [vmem:[#allocation9 + $0x48] sm:$0xff]
    %v932 = vld [vmem:[#allocation9 + $0x50] sm:$0xff]
    %v933 = vld [vmem:[#allocation9 + $0x58] sm:$0xff]
    %v934 = vld [vmem:[#allocation9 + $0x60] sm:$0xff]
    %v935 = vld [vmem:[#allocation9 + $0x68] sm:$0xff]
    %v936 = vld [vmem:[#allocation9 + $0x70] sm:$0xff]
    %v937 = vld [vmem:[#allocation9 + $0x78] sm:$0xff]
    %v938 = vld [vmem:[#allocation9 + $0x80] sm:$0xff]
    %v939 = vld [vmem:[#allocation9 + $0x88] sm:$0xff]
    %v940 = vld [vmem:[#allocation9 + $0x90] sm:$0xff]
    %v941 = vld [vmem:[#allocation9 + $0x98] sm:$0xff]
    %v942 = vld [vmem:[#allocation9 + $0xa0] sm:$0xff]
    %v943 = vld [vmem:[#allocation9 + $0xa8] sm:$0xff]
    %v944 = vld [vmem:[#allocation9 + $0xb0] sm:$0xff]
    %v945 = vld [vmem:[#allocation9 + $0xb8] sm:$0xff]
    %v946 = vld [vmem:[#allocation9 + $0xc0] sm:$0xff]
    %v947 = vld [vmem:[#allocation9 + $0xc8] sm:$0xff]
    %v948 = vld [vmem:[#allocation9 + $0xd0] sm:$0xff]
    %v949 = vld [vmem:[#allocation9 + $0xd8] sm:$0xff]
    %v950 = vld [vmem:[#allocation9 + $0xe0] sm:$0xff]
    %v951 = vld [vmem:[#allocation9 + $0xe8] sm:$0xff]
    %v952 = vld [vmem:[#allocation9 + $0xf0] sm:$0xff]
    %v953 = vld [vmem:[#allocation9 + $0xf8] sm:$0xff]
    %v954 = vld [vmem:[#allocation9 + $0x100] sm:$0xff]
    %v955 = vld [vmem:[#allocation9 + $0x108] sm:$0xff]
    %v956 = vld [vmem:[#allocation9 + $0x110] sm:$0xff]
    %v957 = vld [vmem:[#allocation9 + $0x118] sm:$0xff]
    %v958 = vld [vmem:[#allocation9 + $0x120] sm:$0xff]
    %v959 = vld [vmem:[#allocation9 + $0x128] sm:$0xff]
    %v960 = vld [vmem:[#allocation9 + $0x130] sm:$0xff]
    %v961 = vld [vmem:[#allocation9 + $0x138] sm:$0xff]
    %v962 = vld [vmem:[#allocation9 + $0x140] sm:$0xff]
    %v963 = vld [vmem:[#allocation9 + $0x148] sm:$0xff]
    %v964 = vld [vmem:[#allocation9 + $0x150] sm:$0xff]
    %v965 = vld [vmem:[#allocation9 + $0x158] sm:$0xff]
    %v966 = vld [vmem:[#allocation9 + $0x160] sm:$0xff]
    %v967 = vld [vmem:[#allocation9 + $0x168] sm:$0xff]
    %v968 = vld [vmem:[#allocation9 + $0x170] sm:$0xff]
    %v969 = vld [vmem:[#allocation9 + $0x178] sm:$0xff]
    %v970 = vld [vmem:[#allocation9 + $0x180] sm:$0xff]
    %v971 = vld [vmem:[#allocation9 + $0x188] sm:$0xff]
    %v972 = vld [vmem:[#allocation9 + $0x190] sm:$0xff]
    %v973 = vld [vmem:[#allocation9 + $0x198] sm:$0xff]
    %v974 = vld [vmem:[#allocation9 + $0x1a0] sm:$0xff]
    %v975 = vld [vmem:[#allocation9 + $0x1a8] sm:$0xff]
    %v976 = vld [vmem:[#allocation9 + $0x1b0] sm:$0xff]
    %v977 = vld [vmem:[#allocation9 + $0x1b8] sm:$0xff]
    %v978 = vld [vmem:[#allocation9 + $0x1c0] sm:$0xff]
    %v979 = vld [vmem:[#allocation9 + $0x1c8] sm:$0xff]
    %v980 = vld [vmem:[#allocation9 + $0x1d0] sm:$0xff]
    %v981 = vld [vmem:[#allocation9 + $0x1d8] sm:$0xff]
    %v982 = vld [vmem:[#allocation9 + $0x1e0] sm:$0xff]
    %v983 = vld [vmem:[#allocation9 + $0x1e8] sm:$0xff]
    %v984 = vld [vmem:[#allocation9 + $0x1f0] sm:$0xff]
    %v985 = vld [vmem:[#allocation9 + $0x1f8] sm:$0xff]
    %v986 = vld [vmem:[#allocation9 + $0x200] sm:$0xff]
    %v987 = vld [vmem:[#allocation9 + $0x208] sm:$0xff]
    %v988 = vld [vmem:[#allocation9 + $0x210] sm:$0xff]
    %v989 = vld [vmem:[#allocation9 + $0x218] sm:$0xff]
    %v990 = vld [vmem:[#allocation9 + $0x220] sm:$0xff]
    %v991 = vld [vmem:[#allocation9 + $0x228] sm:$0xff]
    %v992 = vld [vmem:[#allocation9 + $0x230] sm:$0xff]
    %v993 = vld [vmem:[#allocation9 + $0x238] sm:$0xff]
    %v994 = vld [vmem:[#allocation9 + $0x240] sm:$0xff]
    %v995 = vld [vmem:[#allocation9 + $0x248] sm:$0xff]
    %v996 = vld [vmem:[#allocation9 + $0x250] sm:$0xff]
    %v997 = vld [vmem:[#allocation9 + $0x258] sm:$0xff]
    %v998 = vld [vmem:[#allocation9 + $0x260] sm:$0xff]
    %v999 = vld [vmem:[#allocation9 + $0x268] sm:$0xff]
    %v1000 = vld [vmem:[#allocation9 + $0x270] sm:$0xff]
    %v1001 = vld [vmem:[#allocation9 + $0x278] sm:$0xff]
    %v1002 = vld [vmem:[#allocation9 + $0x280] sm:$0xff]
    %v1003 = vld [vmem:[#allocation9 + $0x288] sm:$0xff]
    %v1004 = vld [vmem:[#allocation9 + $0x290] sm:$0xff]
    %v1005 = vld [vmem:[#allocation9 + $0x298] sm:$0xff]
    %v1006 = vld [vmem:[#allocation9 + $0x2a0] sm:$0xff]
    %v1007 = vld [vmem:[#allocation9 + $0x2a8] sm:$0xff]
    %v1008 = vld [vmem:[#allocation9 + $0x2b0] sm:$0xff]
    %v1009 = vld [vmem:[#allocation9 + $0x2b8] sm:$0xff]
    %v1010 = vld [vmem:[#allocation9 + $0x2c0] sm:$0xff]
    %v1011 = vld [vmem:[#allocation9 + $0x2c8] sm:$0xff]
    %v1012 = vld [vmem:[#allocation9 + $0x2d0] sm:$0xff]
    %v1013 = vld [vmem:[#allocation9 + $0x2d8] sm:$0xff]
    %v1014 = vld [vmem:[#allocation9 + $0x2e0] sm:$0xff]
    %v1015 = vld [vmem:[#allocation9 + $0x2e8] sm:$0xff]
    %v1016 = vld [vmem:[#allocation9 + $0x2f0] sm:$0xff]
    %v1017 = vld [vmem:[#allocation9 + $0x2f8] sm:$0xff]
    %v1018 = vld [vmem:[#allocation9 + $0x300] sm:$0xff]
    %v1019 = vld [vmem:[#allocation9 + $0x308] sm:$0xff]
    %v1020 = vld [vmem:[#allocation9 + $0x310] sm:$0xff]
    %v1021 = vld [vmem:[#allocation9 + $0x318] sm:$0xff]
    %v1022 = vld [vmem:[#allocation9 + $0x320] sm:$0xff]
    %v1023 = vld [vmem:[#allocation9 + $0x328] sm:$0xff]
    %v1024 = vld [vmem:[#allocation9 + $0x330] sm:$0xff]
    %v1025 = vld [vmem:[#allocation9 + $0x338] sm:$0xff]
    %v1026 = vld [vmem:[#allocation9 + $0x340] sm:$0xff]
    %v1027 = vld [vmem:[#allocation9 + $0x348] sm:$0xff]
    %v1028 = vld [vmem:[#allocation9 + $0x350] sm:$0xff]
    %v1029 = vld [vmem:[#allocation9 + $0x358] sm:$0xff]
    %v1030 = vld [vmem:[#allocation9 + $0x360] sm:$0xff]
    %v1031 = vld [vmem:[#allocation9 + $0x368] sm:$0xff]
    %v1032 = vld [vmem:[#allocation9 + $0x370] sm:$0xff]
    %v1033 = vld [vmem:[#allocation9 + $0x378] sm:$0xff]
    %v1034 = vld [vmem:[#allocation9 + $0x380] sm:$0xff]
    %v1035 = vld [vmem:[#allocation9 + $0x388] sm:$0xff]
    %v1036 = vld [vmem:[#allocation9 + $0x390] sm:$0xff]
    %v1037 = vld [vmem:[#allocation9 + $0x398] sm:$0xff]
    %v1038 = vld [vmem:[#allocation9 + $0x3a0] sm:$0xff]
    %v1039 = vld [vmem:[#allocation9 + $0x3a8] sm:$0xff]
    %v1040 = vld [vmem:[#allocation9 + $0x3b0] sm:$0xff]
    %v1041 = vld [vmem:[#allocation9 + $0x3b8] sm:$0xff]
    %v1042 = vld [vmem:[#allocation9 + $0x3c0] sm:$0xff]
    %v1043 = vld [vmem:[#allocation9 + $0x3c8] sm:$0xff]
    %v1044 = vld [vmem:[#allocation9 + $0x3d0] sm:$0xff]
    %v1045 = vld [vmem:[#allocation9 + $0x3d8] sm:$0xff]
    %v1046 = vld [vmem:[#allocation9 + $0x3e0] sm:$0xff]
    %v1047 = vld [vmem:[#allocation9 + $0x3e8] sm:$0xff]
    %v1048 = vld [vmem:[#allocation9 + $0x3f0] sm:$0xff]
    %v1049 = vld [vmem:[#allocation9 + $0x3f8] sm:$0xff]
    %v1050 = vld [vmem:[%s5] sm:$0xf]
    %v1051 = vld [vmem:[#allocation2] sm:$0xff]
    %v1052 = vld [vmem:[#allocation2 + $0x8] sm:$0xff]
    %v1053 = vld [vmem:[#allocation2 + $0x10] sm:$0xff]
    %v1054 = vld [vmem:[#allocation2 + $0x18] sm:$0xff]
    %v1055 = vld [vmem:[#allocation2 + $0x20] sm:$0xff]
    %v1056 = vld [vmem:[#allocation2 + $0x28] sm:$0xff]
    %v1057 = vld [vmem:[#allocation2 + $0x30] sm:$0xff]
    %v1058 = vld [vmem:[#allocation2 + $0x38] sm:$0xff]
    %v1059 = vld [vmem:[#allocation2 + $0x40] sm:$0xff]
    %v1060 = vld [vmem:[#allocation2 + $0x48] sm:$0xff]
    %v1061 = vld [vmem:[#allocation2 + $0x50] sm:$0xff]
    %v1062 = vld [vmem:[#allocation2 + $0x58] sm:$0xff]
    %v1063 = vld [vmem:[#allocation2 + $0x60] sm:$0xff]
    %v1064 = vld [vmem:[#allocation2 + $0x68] sm:$0xff]
    %v1065 = vld [vmem:[#allocation2 + $0x70] sm:$0xff]
    %v1066 = vld [vmem:[#allocation2 + $0x78] sm:$0xff]
    %1067 = vmatprep.subr.mxu0 %v859
    %1068 = vmatpush1.msra.mxu0 %v858
    %1069 = vmatprep.subr.mxu0 %v863
    %1070 = vmatpush1.msra.mxu0 %v862
    %1071 = vmatprep.subr.mxu0 %v867
    %1072 = vmatpush1.msra.mxu0 %v866
    %1073 = vmatprep.subr.mxu0 %v871
    %1074 = vmatpush1.msra.mxu0 %v870
    %1075 = vmatprep.subr.mxu0 %v875
    %1076 = vmatpush1.msra.mxu0 %v874
    %1077 = vmatprep.subr.mxu0 %v879
    %1078 = vmatpush1.msra.mxu0 %v878
    %1079 = vmatprep.subr.mxu0 %v883
    %1080 = vmatpush1.msra.mxu0 %v882
    %1081 = vmatprep.subr.mxu0 %v887
    %1082 = vmatpush1.msra.mxu0 %v886
    %1083 = vmatprep.subr.mxu0 %v891
    %1084 = vmatpush1.msra.mxu0 %v890
    %1085 = vmatprep.subr.mxu0 %v895
    %1086 = vmatpush1.msra.mxu0 %v894
    %1087 = vmatprep.subr.mxu0 %v899
    %1088 = vmatpush1.msra.mxu0 %v898
    %1089 = vmatprep.subr.mxu0 %v903
    %1090 = vmatpush1.msra.mxu0 %v902
    %1091 = vmatprep.subr.mxu0 %v907
    %1092 = vmatpush1.msra.mxu0 %v906
    %1093 = vmatprep.subr.mxu0 %v911
    %1094 = vmatpush1.msra.mxu0 %v910
    %1095 = vmatprep.subr.mxu0 %v915
    %1096 = vmatpush1.msra.mxu0 %v914
    %1097 = vmatprep.subr.mxu0 %v919
    %1098 = vmatpush1.msra.mxu0 %v918
    %1099 = vmatprep.subr.mxu0 0.0
    %1100 = vmatpush1.msra.mxu0 0.0
    %1101 = vmatprep.subr.mxu0 0.0
    %1102 = vmatpush1.msra.mxu0 0.0
    %1103 = vmatprep.subr.mxu0 0.0
    %1104 = vmatpush1.msra.mxu0 0.0
    %1105 = vmatprep.subr.mxu0 0.0
    %1106 = vmatpush1.msra.mxu0 0.0
    %1107 = vmatprep.subr.mxu0 0.0
    %1108 = vmatpush1.msra.mxu0 0.0
    %1109 = vmatprep.subr.mxu0 0.0
    %1110 = vmatpush1.msra.mxu0 0.0
    %1111 = vmatprep.subr.mxu0 0.0
    %1112 = vmatpush1.msra.mxu0 0.0
    %1113 = vmatprep.subr.mxu0 0.0
    %1114 = vmatpush1.msra.mxu0 0.0
    %1115 = vmatprep.subr.mxu0 0.0
    %1116 = vmatpush1.msra.mxu0 0.0
    %1117 = vmatprep.subr.mxu0 0.0
    %1118 = vmatpush1.msra.mxu0 0.0
    %1119 = vmatprep.subr.mxu0 0.0
    %1120 = vmatpush1.msra.mxu0 0.0
    %1121 = vmatprep.subr.mxu0 0.0
    %1122 = vmatpush1.msra.mxu0 0.0
    %1123 = vmatprep.subr.mxu0 0.0
    %1124 = vmatpush1.msra.mxu0 0.0
    %1125 = vmatprep.subr.mxu0 0.0
    %1126 = vmatpush1.msra.mxu0 0.0
    %1127 = vmatprep.subr.mxu0 0.0
    %1128 = vmatpush1.msra.mxu0 0.0
    %1129 = vmatprep.subr.mxu0 0.0
    %1130 = vmatpush1.msra.mxu0 0.0
    %1131 = vmatprep.mubr.f32.mxu0 0.0
    %1132 = vmatmul.mubr.f32.gmra.mrb[0].mxu0 0.0
    %v1133 = vpop.f32.mrb[0].mxu0
    %v1134 = vadd.f32 0.0, %v1133
    %v1135 = vpop.f32.mrb[0].mxu0
    %v1136 = vadd.f32 0.0, %v1135
    %1137 = vmatprep.mubr.f32.mxu0 0.0
    %1138 = vmatmul.mubr.f32.gmra.mrb[0].mxu0 0.0
    %v1139 = vpop.f32.mrb[0].mxu0
    %v1140 = vadd.f32 0.0, %v1139
    %v1141 = vpop.f32.mrb[0].mxu0
    %v1142 = vadd.f32 0.0, %v1141
    %1143 = vmatprep.mubr.f32.mxu0 0.0
    %1144 = vmatmul.mubr.f32.gmra.mrb[0].mxu0 0.0
    %v1145 = vpop.f32.mrb[0].mxu0
    %v1146 = vadd.f32 0.0, %v1145
    %v1147 = vpop.f32.mrb[0].mxu0
    %v1148 = vadd.f32 0.0, %v1147
    %1149 = vmatprep.mubr.f32.mxu0 0.0
    %1150 = vmatmul.mubr.f32.gmra.mrb[0].mxu0 0.0
    %v1151 = vpop.f32.mrb[0].mxu0
    %v1152 = vadd.f32 0.0, %v1151
    %v1153 = vpop.f32.mrb[0].mxu0
    %v1154 = vadd.f32 0.0, %v1153
    %1155 = vdwg.mxu0
    %1156 = vmatprep.subr.mxu0 %v861
    %1157 = vmatpush1.msra.mxu0 %v860
    %1158 = vmatprep.subr.mxu0 %v865
    %1159 = vmatpush1.msra.mxu0 %v864
    %1160 = vmatprep.subr.mxu0 %v869
    %1161 = vmatpush1.msra.mxu0 %v868
    %1162 = vmatprep.subr.mxu0 %v873
    %1163 = vmatpush1.msra.mxu0 %v872
    %1164 = vmatprep.subr.mxu0 %v877
    %1165 = vmatpush1.msra.mxu0 %v876
    %1166 = vmatprep.subr.mxu0 %v881
    %1167 = vmatpush1.msra.mxu0 %v880
    %1168 = vmatprep.subr.mxu0 %v885
    %1169 = vmatpush1.msra.mxu0 %v884
    %1170 = vmatprep.subr.mxu0 %v889
    %1171 = vmatpush1.msra.mxu0 %v888
    %1172 = vmatprep.subr.mxu0 %v893
    %1173 = vmatpush1.msra.mxu0 %v892
    %1174 = vmatprep.subr.mxu0 %v897
    %1175 = vmatpush1.msra.mxu0 %v896
    %1176 = vmatprep.subr.mxu0 %v901
    %1177 = vmatpush1.msra.mxu0 %v900
    %1178 = vmatprep.subr.mxu0 %v905
    %1179 = vmatpush1.msra.mxu0 %v904
    %1180 = vmatprep.subr.mxu0 %v909
    %1181 = vmatpush1.msra.mxu0 %v908
    %1182 = vmatprep.subr.mxu0 %v913
    %1183 = vmatpush1.msra.mxu0 %v912
    %1184 = vmatprep.subr.mxu0 %v917
    %1185 = vmatpush1.msra.mxu0 %v916
    %1186 = vmatprep.subr.mxu0 %v921
    %1187 = vmatpush1.msra.mxu0 %v920
    %1188 = vmatprep.subr.mxu0 0.0
    %1189 = vmatpush1.msra.mxu0 0.0
    %1190 = vmatprep.subr.mxu0 0.0
    %1191 = vmatpush1.msra.mxu0 0.0
    %1192 = vmatprep.subr.mxu0 0.0
    %1193 = vmatpush1.msra.mxu0 0.0
    %1194 = vmatprep.subr.mxu0 0.0
    %1195 = vmatpush1.msra.mxu0 0.0
    %1196 = vmatprep.subr.mxu0 0.0
    %1197 = vmatpush1.msra.mxu0 0.0
    %1198 = vmatprep.subr.mxu0 0.0
    %1199 = vmatpush1.msra.mxu0 0.0
    %1200 = vmatprep.subr.mxu0 0.0
    %1201 = vmatpush1.msra.mxu0 0.0
    %1202 = vmatprep.subr.mxu0 0.0
    %1203 = vmatpush1.msra.mxu0 0.0
    %1204 = vmatprep.subr.mxu0 0.0
    %1205 = vmatpush1.msra.mxu0 0.0
    %1206 = vmatprep.subr.mxu0 0.0
    %1207 = vmatpush1.msra.mxu0 0.0
    %1208 = vmatprep.subr.mxu0 0.0
    %1209 = vmatpush1.msra.mxu0 0.0
    %1210 = vmatprep.subr.mxu0 0.0
    %1211 = vmatpush1.msra.mxu0 0.0
    %1212 = vmatprep.subr.mxu0 0.0
    %1213 = vmatpush1.msra.mxu0 0.0
    %1214 = vmatprep.subr.mxu0 0.0
    %1215 = vmatpush1.msra.mxu0 0.0
    %1216 = vmatprep.subr.mxu0 0.0
    %1217 = vmatpush1.msra.mxu0 0.0
    %1218 = vmatprep.subr.mxu0 0.0
    %1219 = vmatpush1.msra.mxu0 0.0
    %1220 = vmatprep.mubr.f32.mxu0 0.0
    %1221 = vmatmul.mubr.f32.gmra.mrb[0].mxu0 0.0
    %v1222 = vpop.f32.mrb[0].mxu0
    %v1223 = vadd.f32 0.0, %v1222
    %v1224 = vpop.f32.mrb[0].mxu0
    %v1225 = vadd.f32 0.0, %v1224
    %1226 = vmatprep.mubr.f32.mxu0 0.0
    %1227 = vmatmul.mubr.f32.gmra.mrb[0].mxu0 0.0
    %v1228 = vpop.f32.mrb[0].mxu0
    %v1229 = vadd.f32 0.0, %v1228
    %v1230 = vpop.f32.mrb[0].mxu0
    %v1231 = vadd.f32 0.0, %v1230
    %1232 = vmatprep.mubr.f32.mxu0 0.0
    %1233 = vmatmul.mubr.f32.gmra.mrb[0].mxu0 0.0
    %v1234 = vpop.f32.mrb[0].mxu0
    %v1235 = vadd.f32 0.0, %v1234
    %v1236 = vpop.f32.mrb[0].mxu0
    %v1237 = vadd.f32 0.0, %v1236
    %1238 = vmatprep.mubr.f32.mxu0 0.0
    %1239 = vmatmul.mubr.f32.gmra.mrb[0].mxu0 0.0
    %v1240 = vpop.f32.mrb[0].mxu0
    %v1241 = vadd.f32 0.0, %v1240
    %v1242 = vpop.f32.mrb[0].mxu0
    %v1243 = vadd.f32 0.0, %v1242
    %1244 = vdwg.mxu0
    %v1245 = vadd.f32 %v1051, %v1134
    %v1246 = vadd.f32 %v1052, %v1136
    %v1247 = vadd.f32 %v1053, %v1223
    %v1248 = vadd.f32 %v1054, %v1225
    %v1249 = vadd.f32 %v1055, %v1140
    %v1250 = vadd.f32 %v1056, %v1142
    %v1251 = vadd.f32 %v1057, %v1229
    %v1252 = vadd.f32 %v1058, %v1231
    %v1253 = vadd.f32 %v1059, %v1146
    %v1254 = vadd.f32 %v1060, %v1148
    %v1255 = vadd.f32 %v1061, %v1235
    %v1256 = vadd.f32 %v1062, %v1237
    %v1257 = vadd.f32 %v1063, %v1152
    %v1258 = vadd.f32 %v1064, %v1154
    %v1259 = vadd.f32 %v1065, %v1241
    %v1260 = vadd.f32 %v1066, %v1243
    %v1261 = vxor.u32 %v1245, 2147483648
    %v1262 = vxor.u32 %v1246, 2147483648
    %v1263 = vxor.u32 %v1247, 2147483648
    %v1264 = vxor.u32 %v1249, 2147483648
    %v1265 = vxor.u32 %v1250, 2147483648
    %v1266 = vxor.u32 %v1251, 2147483648
    %v1267 = vxor.u32 %v1253, 2147483648
    %v1268 = vxor.u32 %v1254, 2147483648
    %v1269 = vxor.u32 %v1255, 2147483648
    %v1270 = vxor.u32 %v1257, 2147483648
    %v1271 = vxor.u32 %v1258, 2147483648
    %v1272 = vxor.u32 %v1259, 2147483648
    %v1273 = vmul.f32 %v1261, 1.442695
    %v1274 = vpow.pop %v1273
    %v1275 = vmul.f32 %v1262, 1.442695
    %v1276 = vpow.pop %v1275
    %v1277 = vmul.f32 %v1263, 1.442695
    %v1278 = vpow.pop %v1277
    %v1279 = vmul.f32 %v1264, 1.442695
    %v1280 = vpow.pop %v1279
    %v1281 = vmul.f32 %v1265, 1.442695
    %v1282 = vpow.pop %v1281
    %v1283 = vmul.f32 %v1266, 1.442695
    %v1284 = vpow.pop %v1283
    %v1285 = vmul.f32 %v1267, 1.442695
    %v1286 = vpow.pop %v1285
    %v1287 = vmul.f32 %v1268, 1.442695
    %v1288 = vpow.pop %v1287
    %v1289 = vmul.f32 %v1269, 1.442695
    %v1290 = vpow.pop %v1289
    %v1291 = vmul.f32 %v1270, 1.442695
    %v1292 = vpow.pop %v1291
    %v1293 = vmul.f32 %v1271, 1.442695
    %v1294 = vpow.pop %v1293
    %v1295 = vmul.f32 %v1272, 1.442695
    %v1296 = vpow.pop %v1295
    %v1297 = vadd.f32 %v1274, 1.0
    %v1298 = vadd.f32 %v1276, 1.0
    %v1299 = vadd.f32 %v1278, 1.0
    %v1300 = vadd.f32 %v1280, 1.0
    %v1301 = vadd.f32 %v1282, 1.0
    %v1302 = vadd.f32 %v1284, 1.0
    %v1303 = vadd.f32 %v1286, 1.0
    %v1304 = vadd.f32 %v1288, 1.0
    %v1305 = vadd.f32 %v1290, 1.0
    %v1306 = vadd.f32 %v1292, 1.0
    %v1307 = vadd.f32 %v1294, 1.0
    %v1308 = vadd.f32 %v1296, 1.0
    %v1309 = vrcp.pop %v1297
    %v1310 = vmul.f32 1.0, %v1309
    %v1311 = vrcp.pop %v1298
    %v1312 = vmul.f32 1.0, %v1311
    %v1313 = vrcp.pop %v1299
    %v1314 = vmul.f32 1.0, %v1313
    %v1315 = vrcp.pop %v1300
    %v1316 = vmul.f32 1.0, %v1315
    %v1317 = vrcp.pop %v1301
    %v1318 = vmul.f32 1.0, %v1317
    %v1319 = vrcp.pop %v1302
    %v1320 = vmul.f32 1.0, %v1319
    %v1321 = vrcp.pop %v1303
    %v1322 = vmul.f32 1.0, %v1321
    %v1323 = vrcp.pop %v1304
    %v1324 = vmul.f32 1.0, %v1323
    %v1325 = vrcp.pop %v1305
    %v1326 = vmul.f32 1.0, %v1325
    %v1327 = vrcp.pop %v1306
    %v1328 = vmul.f32 1.0, %v1327
    %v1329 = vrcp.pop %v1307
    %v1330 = vmul.f32 1.0, %v1329
    %v1331 = vrcp.pop %v1308
    %v1332 = vmul.f32 1.0, %v1331
    %v1333 = vtanh.pop %v1248
    %v1334 = vtanh.pop %v1252
    %v1335 = vtanh.pop %v1256
    %v1336 = vtanh.pop %v1260
    %v1337 = vmul.f32 %v1312, 0.0
    %v1338 = vmul.f32 %v1318, 0.0
    %v1339 = vmul.f32 %v1324, 0.0
    %v1340 = vmul.f32 %v1330, 0.0
    %v1341 = vmul.f32 %v1310, %v1333
    %v1342 = vmul.f32 %v1316, %v1334
    %v1343 = vmul.f32 %v1322, %v1335
    %v1344 = vmul.f32 %v1328, %v1336
    %v1345 = vadd.f32 %v1337, %v1341
    %v1346 = vadd.f32 %v1338, %v1342
    %v1347 = vadd.f32 %v1339, %v1343
    %v1348 = vadd.f32 %v1340, %v1344
    %v1349 = vtanh.pop %v1345
    %v1350 = vtanh.pop %v1346
    %v1351 = vtanh.pop %v1347
    %v1352 = vtanh.pop %v1348
    %v1353 = vmul.f32 %v1314, %v1349
    %v1354 = vmul.f32 %v1320, %v1350
    %v1355 = vmul.f32 %v1326, %v1351
    %v1356 = vmul.f32 %v1332, %v1352
    %1357 = vmatprep.subr.mxu0 %v923
    %1358 = vmatpush1.msra.mxu0 %v922
    %1359 = vmatprep.subr.mxu0 %v927
    %1360 = vmatpush1.msra.mxu0 %v926
    %1361 = vmatprep.subr.mxu0 %v931
    %1362 = vmatpush1.msra.mxu0 %v930
    %1363 = vmatprep.subr.mxu0 %v935
    %1364 = vmatpush1.msra.mxu0 %v934
    %1365 = vmatprep.subr.mxu0 %v939
    %1366 = vmatpush1.msra.mxu0 %v938
    %1367 = vmatprep.subr.mxu0 %v943
    %1368 = vmatpush1.msra.mxu0 %v942
    %1369 = vmatprep.subr.mxu0 %v947
    %1370 = vmatpush1.msra.mxu0 %v946
    %1371 = vmatprep.subr.mxu0 %v951
    %1372 = vmatpush1.msra.mxu0 %v950
    %1373 = vmatprep.subr.mxu0 %v955
    %1374 = vmatpush1.msra.mxu0 %v954
    %1375 = vmatprep.subr.mxu0 %v959
    %1376 = vmatpush1.msra.mxu0 %v958
    %1377 = vmatprep.subr.mxu0 %v963
    %1378 = vmatpush1.msra.mxu0 %v962
    %1379 = vmatprep.subr.mxu0 %v967
    %1380 = vmatpush1.msra.mxu0 %v966
    %1381 = vmatprep.subr.mxu0 %v971
    %1382 = vmatpush1.msra.mxu0 %v970
    %1383 = vmatprep.subr.mxu0 %v975
    %1384 = vmatpush1.msra.mxu0 %v974
    %1385 = vmatprep.subr.mxu0 %v979
    %1386 = vmatpush1.msra.mxu0 %v978
    %1387 = vmatprep.subr.mxu0 %v983
    %1388 = vmatpush1.msra.mxu0 %v982
    %1389 = vmatprep.subr.mxu0 %v987
    %1390 = vmatpush1.msra.mxu0 %v986
    %1391 = vmatprep.subr.mxu0 %v991
    %1392 = vmatpush1.msra.mxu0 %v990
    %1393 = vmatprep.subr.mxu0 %v995
    %1394 = vmatpush1.msra.mxu0 %v994
    %1395 = vmatprep.subr.mxu0 %v999
    %1396 = vmatpush1.msra.mxu0 %v998
    %1397 = vmatprep.subr.mxu0 %v1003
    %1398 = vmatpush1.msra.mxu0 %v1002
    %1399 = vmatprep.subr.mxu0 %v1007
    %1400 = vmatpush1.msra.mxu0 %v1006
    %1401 = vmatprep.subr.mxu0 %v1011
    %1402 = vmatpush1.msra.mxu0 %v1010
    %1403 = vmatprep.subr.mxu0 %v1015
    %1404 = vmatpush1.msra.mxu0 %v1014
    %1405 = vmatprep.subr.mxu0 %v1019
    %1406 = vmatpush1.msra.mxu0 %v1018
    %1407 = vmatprep.subr.mxu0 %v1023
    %1408 = vmatpush1.msra.mxu0 %v1022
    %1409 = vmatprep.subr.mxu0 %v1027
    %1410 = vmatpush1.msra.mxu0 %v1026
    %1411 = vmatprep.subr.mxu0 %v1031
    %1412 = vmatpush1.msra.mxu0 %v1030
    %1413 = vmatprep.subr.mxu0 %v1035
    %1414 = vmatpush1.msra.mxu0 %v1034
    %1415 = vmatprep.subr.mxu0 %v1039
    %1416 = vmatpush1.msra.mxu0 %v1038
    %1417 = vmatprep.subr.mxu0 %v1043
    %1418 = vmatpush1.msra.mxu0 %v1042
    %1419 = vmatprep.subr.mxu0 %v1047
    %1420 = vmatpush1.msra.mxu0 %v1046
    %1421 = vmatprep.mubr.f32.mxu0 0.0
    %1422 = vmatmul.mubr.f32.gmra.mrb[0].mxu0 %v1353
    %v1423 = vpop.f32.mrb[0].mxu0
    %v1424 = vadd.f32 0.0, %v1423
    %v1425 = vpop.f32.mrb[0].mxu0
    %v1426 = vadd.f32 0.0, %v1425
    %1427 = vmatprep.mubr.f32.mxu0 0.0
    %1428 = vmatmul.mubr.f32.gmra.mrb[0].mxu0 %v1354
    %v1429 = vpop.f32.mrb[0].mxu0
    %v1430 = vadd.f32 0.0, %v1429
    %v1431 = vpop.f32.mrb[0].mxu0
    %v1432 = vadd.f32 0.0, %v1431
    %1433 = vmatprep.mubr.f32.mxu0 0.0
    %1434 = vmatmul.mubr.f32.gmra.mrb[0].mxu0 %v1355
    %v1435 = vpop.f32.mrb[0].mxu0
    %v1436 = vadd.f32 0.0, %v1435
    %v1437 = vpop.f32.mrb[0].mxu0
    %v1438 = vadd.f32 0.0, %v1437
    %1439 = vmatprep.mubr.f32.mxu0 0.0
    %1440 = vmatmul.mubr.f32.gmra.mrb[0].mxu0 %v1356
    %v1441 = vpop.f32.mrb[0].mxu0
    %v1442 = vadd.f32 0.0, %v1441
    %v1443 = vpop.f32.mrb[0].mxu0
    %v1444 = vadd.f32 0.0, %v1443
    %1445 = vdwg.mxu0
    %1446 = vmatprep.subr.mxu0 %v925
    %1447 = vmatpush1.msra.mxu0 %v924
    %1448 = vmatprep.subr.mxu0 %v929
    %1449 = vmatpush1.msra.mxu0 %v928
    %1450 = vmatprep.subr.mxu0 %v933
    %1451 = vmatpush1.msra.mxu0 %v932
    %1452 = vmatprep.subr.mxu0 %v937
    %1453 = vmatpush1.msra.mxu0 %v936
    %1454 = vmatprep.subr.mxu0 %v941
    %1455 = vmatpush1.msra.mxu0 %v940
    %1456 = vmatprep.subr.mxu0 %v945
    %1457 = vmatpush1.msra.mxu0 %v944
    %1458 = vmatprep.subr.mxu0 %v949
    %1459 = vmatpush1.msra.mxu0 %v948
    %1460 = vmatprep.subr.mxu0 %v953
    %1461 = vmatpush1.msra.mxu0 %v952
    %1462 = vmatprep.subr.mxu0 %v957
    %1463 = vmatpush1.msra.mxu0 %v956
    %1464 = vmatprep.subr.mxu0 %v961
    %1465 = vmatpush1.msra.mxu0 %v960
    %1466 = vmatprep.subr.mxu0 %v965
    %1467 = vmatpush1.msra.mxu0 %v964
    %1468 = vmatprep.subr.mxu0 %v969
    %1469 = vmatpush1.msra.mxu0 %v968
    %1470 = vmatprep.subr.mxu0 %v973
    %1471 = vmatpush1.msra.mxu0 %v972
    %1472 = vmatprep.subr.mxu0 %v977
    %1473 = vmatpush1.msra.mxu0 %v976
    %1474 = vmatprep.subr.mxu0 %v981
    %1475 = vmatpush1.msra.mxu0 %v980
    %1476 = vmatprep.subr.mxu0 %v985
    %1477 = vmatpush1.msra.mxu0 %v984
    %1478 = vmatprep.subr.mxu0 %v989
    %1479 = vmatpush1.msra.mxu0 %v988
    %1480 = vmatprep.subr.mxu0 %v993
    %1481 = vmatpush1.msra.mxu0 %v992
    %1482 = vmatprep.subr.mxu0 %v997
    %1483 = vmatpush1.msra.mxu0 %v996
    %1484 = vmatprep.subr.mxu0 %v1001
    %1485 = vmatpush1.msra.mxu0 %v1000
    %1486 = vmatprep.subr.mxu0 %v1005
    %1487 = vmatpush1.msra.mxu0 %v1004
    %1488 = vmatprep.subr.mxu0 %v1009
    %1489 = vmatpush1.msra.mxu0 %v1008
    %1490 = vmatprep.subr.mxu0 %v1013
    %1491 = vmatpush1.msra.mxu0 %v1012
    %1492 = vmatprep.subr.mxu0 %v1017
    %1493 = vmatpush1.msra.mxu0 %v1016
    %1494 = vmatprep.subr.mxu0 %v1021
    %1495 = vmatpush1.msra.mxu0 %v1020
    %1496 = vmatprep.subr.mxu0 %v1025
    %1497 = vmatpush1.msra.mxu0 %v1024
    %1498 = vmatprep.subr.mxu0 %v1029
    %1499 = vmatpush1.msra.mxu0 %v1028
    %1500 = vmatprep.subr.mxu0 %v1033
    %1501 = vmatpush1.msra.mxu0 %v1032
    %1502 = vmatprep.subr.mxu0 %v1037
    %1503 = vmatpush1.msra.mxu0 %v1036
    %1504 = vmatprep.subr.mxu0 %v1041
    %1505 = vmatpush1.msra.mxu0 %v1040
    %1506 = vmatprep.subr.mxu0 %v1045
    %1507 = vmatpush1.msra.mxu0 %v1044
    %1508 = vmatprep.subr.mxu0 %v1049
    %1509 = vmatpush1.msra.mxu0 %v1048
    %1510 = vmatprep.mubr.f32.mxu0 0.0
    %1511 = vmatmul.mubr.f32.gmra.mrb[0].mxu0 %v1353
    %v1512 = vpop.f32.mrb[0].mxu0
    %v1513 = vadd.f32 0.0, %v1512
    %v1514 = vpop.f32.mrb[0].mxu0
    %v1515 = vadd.f32 0.0, %v1514
    %1516 = vmatprep.mubr.f32.mxu0 0.0
    %1517 = vmatmul.mubr.f32.gmra.mrb[0].mxu0 %v1354
    %v1518 = vpop.f32.mrb[0].mxu0
    %v1519 = vadd.f32 0.0, %v1518
    %v1520 = vpop.f32.mrb[0].mxu0
    %v1521 = vadd.f32 0.0, %v1520
    %1522 = vmatprep.mubr.f32.mxu0 0.0
    %1523 = vmatmul.mubr.f32.gmra.mrb[0].mxu0 %v1355
    %v1524 = vpop.f32.mrb[0].mxu0
    %v1525 = vadd.f32 0.0, %v1524
    %v1526 = vpop.f32.mrb[0].mxu0
    %v1527 = vadd.f32 0.0, %v1526
    %1528 = vmatprep.mubr.f32.mxu0 0.0
    %1529 = vmatmul.mubr.f32.gmra.mrb[0].mxu0 %v1356
    %v1530 = vpop.f32.mrb[0].mxu0
    %v1531 = vadd.f32 0.0, %v1530
    %v1532 = vpop.f32.mrb[0].mxu0
    %v1533 = vadd.f32 0.0, %v1532
    %1534 = vdwg.mxu0
    %v1536 = vlaneseq
    %v1537 = vshrl.u32 %v1536, 7
    %v1538 = vsub.s32 0, %v1537
    %v1539 = vrot.slane %v1050, %v1538
    %v1540 = vlaneseq
    %v1541 = vshrl.u32 %v1540, 7
    %v1542 = vsub.s32 1, %v1541
    %v1543 = vrot.slane %v1050, %v1542
    %v1544 = vlaneseq
    %v1545 = vshrl.u32 %v1544, 7
    %v1546 = vsub.s32 2, %v1545
    %v1547 = vrot.slane %v1050, %v1546
    %v1548 = vlaneseq
    %v1549 = vshrl.u32 %v1548, 7
    %v1550 = vsub.s32 3, %v1549
    %v1551 = vrot.slane %v1050, %v1550
    %v1556 = vadd.f32 %v1539, %v1424
    %v1557 = vadd.f32 %v1543, %v1426
    %v1558 = vadd.f32 %v1547, %v1513
    %v1559 = vadd.f32 %v1551, %v1515
    %v1560 = vadd.f32 %v1539, %v1430
    %v1561 = vadd.f32 %v1543, %v1432
    %v1562 = vadd.f32 %v1547, %v1519
    %v1563 = vadd.f32 %v1551, %v1521
    %v1564 = vadd.f32 %v1539, %v1436
    %v1565 = vadd.f32 %v1543, %v1438
    %v1566 = vadd.f32 %v1547, %v1525
    %v1567 = vadd.f32 %v1551, %v1527
    %v1568 = vadd.f32 %v1539, %v1442
    %v1569 = vadd.f32 %v1543, %v1444
    %v1570 = vadd.f32 %v1547, %v1531
    %v1571 = vadd.f32 %v1551, %v1533
    %v1572 = vxor.u32 %v1556, 2147483648
    %v1573 = vxor.u32 %v1557, 2147483648
    %v1574 = vxor.u32 %v1558, 2147483648
    %v1575 = vxor.u32 %v1560, 2147483648
    %v1576 = vxor.u32 %v1561, 2147483648
    %v1577 = vxor.u32 %v1562, 2147483648
    %v1578 = vxor.u32 %v1564, 2147483648
    %v1579 = vxor.u32 %v1565, 2147483648
    %v1580 = vxor.u32 %v1566, 2147483648
    %v1581 = vxor.u32 %v1568, 2147483648
    %v1582 = vxor.u32 %v1569, 2147483648
    %v1583 = vxor.u32 %v1570, 2147483648
    %v1584 = vmul.f32 %v1572, 1.442695
    %v1585 = vpow.pop %v1584
    %v1586 = vmul.f32 %v1573, 1.442695
    %v1587 = vpow.pop %v1586
    %v1588 = vmul.f32 %v1574, 1.442695
    %v1589 = vpow.pop %v1588
    %v1590 = vmul.f32 %v1575, 1.442695
    %v1591 = vpow.pop %v1590
    %v1592 = vmul.f32 %v1576, 1.442695
    %v1593 = vpow.pop %v1592
    %v1594 = vmul.f32 %v1577, 1.442695
    %v1595 = vpow.pop %v1594
    %v1596 = vmul.f32 %v1578, 1.442695
    %v1597 = vpow.pop %v1596
    %v1598 = vmul.f32 %v1579, 1.442695
    %v1599 = vpow.pop %v1598
    %v1600 = vmul.f32 %v1580, 1.442695
    %v1601 = vpow.pop %v1600
    %v1602 = vmul.f32 %v1581, 1.442695
    %v1603 = vpow.pop %v1602
    %v1604 = vmul.f32 %v1582, 1.442695
    %v1605 = vpow.pop %v1604
    %v1606 = vmul.f32 %v1583, 1.442695
    %v1607 = vpow.pop %v1606
    %v1608 = vadd.f32 %v1585, 1.0
    %v1609 = vadd.f32 %v1587, 1.0
    %v1610 = vadd.f32 %v1589, 1.0
    %v1611 = vadd.f32 %v1591, 1.0
    %v1612 = vadd.f32 %v1593, 1.0
    %v1613 = vadd.f32 %v1595, 1.0
    %v1614 = vadd.f32 %v1597, 1.0
    %v1615 = vadd.f32 %v1599, 1.0
    %v1616 = vadd.f32 %v1601, 1.0
    %v1617 = vadd.f32 %v1603, 1.0
    %v1618 = vadd.f32 %v1605, 1.0
    %v1619 = vadd.f32 %v1607, 1.0
    %v1620 = vrcp.pop %v1608
    %v1621 = vmul.f32 1.0, %v1620
    %v1622 = vrcp.pop %v1609
    %v1623 = vmul.f32 1.0, %v1622
    %v1624 = vrcp.pop %v1610
    %v1625 = vmul.f32 1.0, %v1624
    %v1626 = vrcp.pop %v1611
    %v1627 = vmul.f32 1.0, %v1626
    %v1628 = vrcp.pop %v1612
    %v1629 = vmul.f32 1.0, %v1628
    %v1630 = vrcp.pop %v1613
    %v1631 = vmul.f32 1.0, %v1630
    %v1632 = vrcp.pop %v1614
    %v1633 = vmul.f32 1.0, %v1632
    %v1634 = vrcp.pop %v1615
    %v1635 = vmul.f32 1.0, %v1634
    %v1636 = vrcp.pop %v1616
    %v1637 = vmul.f32 1.0, %v1636
    %v1638 = vrcp.pop %v1617
    %v1639 = vmul.f32 1.0, %v1638
    %v1640 = vrcp.pop %v1618
    %v1641 = vmul.f32 1.0, %v1640
    %v1642 = vrcp.pop %v1619
    %v1643 = vmul.f32 1.0, %v1642
    %v1644 = vtanh.pop %v1559
    %v1645 = vtanh.pop %v1563
    %v1646 = vtanh.pop %v1567
    %v1647 = vtanh.pop %v1571
    %v1648 = vmul.f32 %v1623, 0.0
    %v1649 = vmul.f32 %v1629, 0.0
    %v1650 = vmul.f32 %v1635, 0.0
    %v1651 = vmul.f32 %v1641, 0.0
    %v1652 = vmul.f32 %v1621, %v1644
    %v1653 = vmul.f32 %v1627, %v1645
    %v1654 = vmul.f32 %v1633, %v1646
    %v1655 = vmul.f32 %v1639, %v1647
    %v1656 = vadd.f32 %v1648, %v1652
    %v1657 = vadd.f32 %v1649, %v1653
    %v1658 = vadd.f32 %v1650, %v1654
    %v1659 = vadd.f32 %v1651, %v1655
    %v1660 = vtanh.pop %v1656
    %v1661 = vtanh.pop %v1657
    %v1662 = vtanh.pop %v1658
    %v1663 = vtanh.pop %v1659
    %v1664 = vmul.f32 %v1625, %v1660
    %v1665 = vmul.f32 %v1631, %v1661
    %v1666 = vmul.f32 %v1637, %v1662
    %v1667 = vmul.f32 %v1643, %v1663
    %s1668 = scalar_lea.vmem [#allocation2], 128
    %v1669 = vld [vmem:[%s1668] sm:$0xff]
    %v1670 = vld [vmem:[%s1668 + $0x8] sm:$0xff]
    %v1671 = vld [vmem:[%s1668 + $0x10] sm:$0xff]
    %v1672 = vld [vmem:[%s1668 + $0x18] sm:$0xff]
    %v1673 = vld [vmem:[%s1668 + $0x20] sm:$0xff]
    %v1674 = vld [vmem:[%s1668 + $0x28] sm:$0xff]
    %v1675 = vld [vmem:[%s1668 + $0x30] sm:$0xff]
    %v1676 = vld [vmem:[%s1668 + $0x38] sm:$0xff]
    %v1677 = vld [vmem:[%s1668 + $0x40] sm:$0xff]
    %v1678 = vld [vmem:[%s1668 + $0x48] sm:$0xff]
    %v1679 = vld [vmem:[%s1668 + $0x50] sm:$0xff]
    %v1680 = vld [vmem:[%s1668 + $0x58] sm:$0xff]
    %v1681 = vld [vmem:[%s1668 + $0x60] sm:$0xff]
    %v1682 = vld [vmem:[%s1668 + $0x68] sm:$0xff]
    %v1683 = vld [vmem:[%s1668 + $0x70] sm:$0xff]
    %v1684 = vld [vmem:[%s1668 + $0x78] sm:$0xff]
    %1685 = vmatprep.subr.mxu0 %v859
    %1686 = vmatpush1.msra.mxu0 %v858
    %1687 = vmatprep.subr.mxu0 %v863
    %1688 = vmatpush1.msra.mxu0 %v862
    %1689 = vmatprep.subr.mxu0 %v867
    %1690 = vmatpush1.msra.mxu0 %v866
    %1691 = vmatprep.subr.mxu0 %v871
    %1692 = vmatpush1.msra.mxu0 %v870
    %1693 = vmatprep.subr.mxu0 %v875
    %1694 = vmatpush1.msra.mxu0 %v874
    %1695 = vmatprep.subr.mxu0 %v879
    %1696 = vmatpush1.msra.mxu0 %v878
    %1697 = vmatprep.subr.mxu0 %v883
    %1698 = vmatpush1.msra.mxu0 %v882
    %1699 = vmatprep.subr.mxu0 %v887
    %1700 = vmatpush1.msra.mxu0 %v886
    %1701 = vmatprep.subr.mxu0 %v891
    %1702 = vmatpush1.msra.mxu0 %v890
    %1703 = vmatprep.subr.mxu0 %v895
    %1704 = vmatpush1.msra.mxu0 %v894
    %1705 = vmatprep.subr.mxu0 %v899
    %1706 = vmatpush1.msra.mxu0 %v898
    %1707 = vmatprep.subr.mxu0 %v903
    %1708 = vmatpush1.msra.mxu0 %v902
    %1709 = vmatprep.subr.mxu0 %v907
    %1710 = vmatpush1.msra.mxu0 %v906
    %1711 = vmatprep.subr.mxu0 %v911
    %1712 = vmatpush1.msra.mxu0 %v910
    %1713 = vmatprep.subr.mxu0 %v915
    %1714 = vmatpush1.msra.mxu0 %v914
    %1715 = vmatprep.subr.mxu0 %v919
    %1716 = vmatpush1.msra.mxu0 %v918
    %1717 = vmatprep.subr.mxu0 0.0
    %1718 = vmatpush1.msra.mxu0 0.0
    %1719 = vmatprep.subr.mxu0 0.0
    %1720 = vmatpush1.msra.mxu0 0.0
    %1721 = vmatprep.subr.mxu0 0.0
    %1722 = vmatpush1.msra.mxu0 0.0
    %1723 = vmatprep.subr.mxu0 0.0
    %1724 = vmatpush1.msra.mxu0 0.0
    %1725 = vmatprep.subr.mxu0 0.0
    %1726 = vmatpush1.msra.mxu0 0.0
    %1727 = vmatprep.subr.mxu0 0.0
    %1728 = vmatpush1.msra.mxu0 0.0
    %1729 = vmatprep.subr.mxu0 0.0
    %1730 = vmatpush1.msra.mxu0 0.0
    %1731 = vmatprep.subr.mxu0 0.0
    %1732 = vmatpush1.msra.mxu0 0.0
    %1733 = vmatprep.subr.mxu0 0.0
    %1734 = vmatpush1.msra.mxu0 0.0
    %1735 = vmatprep.subr.mxu0 0.0
    %1736 = vmatpush1.msra.mxu0 0.0
    %1737 = vmatprep.subr.mxu0 0.0
    %1738 = vmatpush1.msra.mxu0 0.0
    %1739 = vmatprep.subr.mxu0 0.0
    %1740 = vmatpush1.msra.mxu0 0.0
    %1741 = vmatprep.subr.mxu0 0.0
    %1742 = vmatpush1.msra.mxu0 0.0
    %1743 = vmatprep.subr.mxu0 0.0
    %1744 = vmatpush1.msra.mxu0 0.0
    %1745 = vmatprep.subr.mxu0 0.0
    %1746 = vmatpush1.msra.mxu0 0.0
    %1747 = vmatprep.subr.mxu0 0.0
    %1748 = vmatpush1.msra.mxu0 0.0
    %1749 = vmatprep.mubr.f32.mxu0 0.0
    %1750 = vmatmul.mubr.f32.gmra.mrb[0].mxu0 %v1353
    %v1751 = vpop.f32.mrb[0].mxu0
    %v1752 = vadd.f32 0.0, %v1751
    %v1753 = vpop.f32.mrb[0].mxu0
    %v1754 = vadd.f32 0.0, %v1753
    %1755 = vmatprep.mubr.f32.mxu0 0.0
    %1756 = vmatmul.mubr.f32.gmra.mrb[0].mxu0 %v1354
    %v1757 = vpop.f32.mrb[0].mxu0
    %v1758 = vadd.f32 0.0, %v1757
    %v1759 = vpop.f32.mrb[0].mxu0
    %v1760 = vadd.f32 0.0, %v1759
    %1761 = vmatprep.mubr.f32.mxu0 0.0
    %1762 = vmatmul.mubr.f32.gmra.mrb[0].mxu0 %v1355
    %v1763 = vpop.f32.mrb[0].mxu0
    %v1764 = vadd.f32 0.0, %v1763
    %v1765 = vpop.f32.mrb[0].mxu0
    %v1766 = vadd.f32 0.0, %v1765
    %1767 = vmatprep.mubr.f32.mxu0 0.0
    %1768 = vmatmul.mubr.f32.gmra.mrb[0].mxu0 %v1356
    %v1769 = vpop.f32.mrb[0].mxu0
    %v1770 = vadd.f32 0.0, %v1769
    %v1771 = vpop.f32.mrb[0].mxu0
    %v1772 = vadd.f32 0.0, %v1771
    %1773 = vdwg.mxu0
    %1774 = vmatprep.subr.mxu0 %v861
    %1775 = vmatpush1.msra.mxu0 %v860
    %1776 = vmatprep.subr.mxu0 %v865
    %1777 = vmatpush1.msra.mxu0 %v864
    %1778 = vmatprep.subr.mxu0 %v869
    %1779 = vmatpush1.msra.mxu0 %v868
    %1780 = vmatprep.subr.mxu0 %v873
    %1781 = vmatpush1.msra.mxu0 %v872
    %1782 = vmatprep.subr.mxu0 %v877
    %1783 = vmatpush1.msra.mxu0 %v876
    %1784 = vmatprep.subr.mxu0 %v881
    %1785 = vmatpush1.msra.mxu0 %v880
    %1786 = vmatprep.subr.mxu0 %v885
    %1787 = vmatpush1.msra.mxu0 %v884
    %1788 = vmatprep.subr.mxu0 %v889
    %1789 = vmatpush1.msra.mxu0 %v888
    %1790 = vmatprep.subr.mxu0 %v893
    %1791 = vmatpush1.msra.mxu0 %v892
    %1792 = vmatprep.subr.mxu0 %v897
    %1793 = vmatpush1.msra.mxu0 %v896
    %1794 = vmatprep.subr.mxu0 %v901
    %1795 = vmatpush1.msra.mxu0 %v900
    %1796 = vmatprep.subr.mxu0 %v905
    %1797 = vmatpush1.msra.mxu0 %v904
    %1798 = vmatprep.subr.mxu0 %v909
    %1799 = vmatpush1.msra.mxu0 %v908
    %1800 = vmatprep.subr.mxu0 %v913
    %1801 = vmatpush1.msra.mxu0 %v912
    %1802 = vmatprep.subr.mxu0 %v917
    %1803 = vmatpush1.msra.mxu0 %v916
    %1804 = vmatprep.subr.mxu0 %v921
    %1805 = vmatpush1.msra.mxu0 %v920
    %1806 = vmatprep.subr.mxu0 0.0
    %1807 = vmatpush1.msra.mxu0 0.0
    %1808 = vmatprep.subr.mxu0 0.0
    %1809 = vmatpush1.msra.mxu0 0.0
    %1810 = vmatprep.subr.mxu0 0.0
    %1811 = vmatpush1.msra.mxu0 0.0
    %1812 = vmatprep.subr.mxu0 0.0
    %1813 = vmatpush1.msra.mxu0 0.0
    %1814 = vmatprep.subr.mxu0 0.0
    %1815 = vmatpush1.msra.mxu0 0.0
    %1816 = vmatprep.subr.mxu0 0.0
    %1817 = vmatpush1.msra.mxu0 0.0
    %1818 = vmatprep.subr.mxu0 0.0
    %1819 = vmatpush1.msra.mxu0 0.0
    %1820 = vmatprep.subr.mxu0 0.0
    %1821 = vmatpush1.msra.mxu0 0.0
    %1822 = vmatprep.subr.mxu0 0.0
    %1823 = vmatpush1.msra.mxu0 0.0
    %1824 = vmatprep.subr.mxu0 0.0
    %1825 = vmatpush1.msra.mxu0 0.0
    %1826 = vmatprep.subr.mxu0 0.0
    %1827 = vmatpush1.msra.mxu0 0.0
    %1828 = vmatprep.subr.mxu0 0.0
    %1829 = vmatpush1.msra.mxu0 0.0
    %1830 = vmatprep.subr.mxu0 0.0
    %1831 = vmatpush1.msra.mxu0 0.0
    %1832 = vmatprep.subr.mxu0 0.0
    %1833 = vmatpush1.msra.mxu0 0.0
    %1834 = vmatprep.subr.mxu0 0.0
    %1835 = vmatpush1.msra.mxu0 0.0
    %1836 = vmatprep.subr.mxu0 0.0
    %1837 = vmatpush1.msra.mxu0 0.0
    %1838 = vmatprep.mubr.f32.mxu0 0.0
    %1839 = vmatmul.mubr.f32.gmra.mrb[0].mxu0 %v1353
    %v1840 = vpop.f32.mrb[0].mxu0
    %v1841 = vadd.f32 0.0, %v1840
    %v1842 = vpop.f32.mrb[0].mxu0
    %v1843 = vadd.f32 0.0, %v1842
    %1844 = vmatprep.mubr.f32.mxu0 0.0
    %1845 = vmatmul.mubr.f32.gmra.mrb[0].mxu0 %v1354
    %v1846 = vpop.f32.mrb[0].mxu0
    %v1847 = vadd.f32 0.0, %v1846
    %v1848 = vpop.f32.mrb[0].mxu0
    %v1849 = vadd.f32 0.0, %v1848
    %1850 = vmatprep.mubr.f32.mxu0 0.0
    %1851 = vmatmul.mubr.f32.gmra.mrb[0].mxu0 %v1355
    %v1852 = vpop.f32.mrb[0].mxu0
    %v1853 = vadd.f32 0.0, %v1852
    %v1854 = vpop.f32.mrb[0].mxu0
    %v1855 = vadd.f32 0.0, %v1854
    %1856 = vmatprep.mubr.f32.mxu0 0.0
    %1857 = vmatmul.mubr.f32.gmra.mrb[0].mxu0 %v1356
    %v1858 = vpop.f32.mrb[0].mxu0
    %v1859 = vadd.f32 0.0, %v1858
    %v1860 = vpop.f32.mrb[0].mxu0
    %v1861 = vadd.f32 0.0, %v1860
    %1862 = vdwg.mxu0
    %v1863 = vadd.f32 %v1669, %v1752
    %v1864 = vadd.f32 %v1670, %v1754
    %v1865 = vadd.f32 %v1671, %v1841
    %v1866 = vadd.f32 %v1672, %v1843
    %v1867 = vadd.f32 %v1673, %v1758
    %v1868 = vadd.f32 %v1674, %v1760
    %v1869 = vadd.f32 %v1675, %v1847
    %v1870 = vadd.f32 %v1676, %v1849
    %v1871 = vadd.f32 %v1677, %v1764
    %v1872 = vadd.f32 %v1678, %v1766
    %v1873 = vadd.f32 %v1679, %v1853
    %v1874 = vadd.f32 %v1680, %v1855
    %v1875 = vadd.f32 %v1681, %v1770
    %v1876 = vadd.f32 %v1682, %v1772
    %v1877 = vadd.f32 %v1683, %v1859
    %v1878 = vadd.f32 %v1684, %v1861
    %v1879 = vxor.u32 %v1863, 2147483648
    %v1880 = vxor.u32 %v1864, 2147483648
    %v1881 = vxor.u32 %v1865, 2147483648
    %v1882 = vxor.u32 %v1867, 2147483648
    %v1883 = vxor.u32 %v1868, 2147483648
    %v1884 = vxor.u32 %v1869, 2147483648
    %v1885 = vxor.u32 %v1871, 2147483648
    %v1886 = vxor.u32 %v1872, 2147483648
    %v1887 = vxor.u32 %v1873, 2147483648
    %v1888 = vxor.u32 %v1875, 2147483648
    %v1889 = vxor.u32 %v1876, 2147483648
    %v1890 = vxor.u32 %v1877, 2147483648
    %v1891 = vmul.f32 %v1879, 1.442695
    %v1892 = vpow.pop %v1891
    %v1893 = vmul.f32 %v1880, 1.442695
    %v1894 = vpow.pop %v1893
    %v1895 = vmul.f32 %v1881, 1.442695
    %v1896 = vpow.pop %v1895
    %v1897 = vmul.f32 %v1882, 1.442695
    %v1898 = vpow.pop %v1897
    %v1899 = vmul.f32 %v1883, 1.442695
    %v1900 = vpow.pop %v1899
    %v1901 = vmul.f32 %v1884, 1.442695
    %v1902 = vpow.pop %v1901
    %v1903 = vmul.f32 %v1885, 1.442695
    %v1904 = vpow.pop %v1903
    %v1905 = vmul.f32 %v1886, 1.442695
    %v1906 = vpow.pop %v1905
    %v1907 = vmul.f32 %v1887, 1.442695
    %v1908 = vpow.pop %v1907
    %v1909 = vmul.f32 %v1888, 1.442695
    %v1910 = vpow.pop %v1909
    %v1911 = vmul.f32 %v1889, 1.442695
    %v1912 = vpow.pop %v1911
    %v1913 = vmul.f32 %v1890, 1.442695
    %v1914 = vpow.pop %v1913
    %v1915 = vadd.f32 %v1892, 1.0
    %v1916 = vadd.f32 %v1894, 1.0
    %v1917 = vadd.f32 %v1896, 1.0
    %v1918 = vadd.f32 %v1898, 1.0
    %v1919 = vadd.f32 %v1900, 1.0
    %v1920 = vadd.f32 %v1902, 1.0
    %v1921 = vadd.f32 %v1904, 1.0
    %v1922 = vadd.f32 %v1906, 1.0
    %v1923 = vadd.f32 %v1908, 1.0
    %v1924 = vadd.f32 %v1910, 1.0
    %v1925 = vadd.f32 %v1912, 1.0
    %v1926 = vadd.f32 %v1914, 1.0
    %v1927 = vrcp.pop %v1915
    %v1928 = vmul.f32 1.0, %v1927
    %v1929 = vrcp.pop %v1916
    %v1930 = vmul.f32 1.0, %v1929
    %v1931 = vrcp.pop %v1917
    %v1932 = vmul.f32 1.0, %v1931
    %v1933 = vrcp.pop %v1918
    %v1934 = vmul.f32 1.0, %v1933
    %v1935 = vrcp.pop %v1919
    %v1936 = vmul.f32 1.0, %v1935
    %v1937 = vrcp.pop %v1920
    %v1938 = vmul.f32 1.0, %v1937
    %v1939 = vrcp.pop %v1921
    %v1940 = vmul.f32 1.0, %v1939
    %v1941 = vrcp.pop %v1922
    %v1942 = vmul.f32 1.0, %v1941
    %v1943 = vrcp.pop %v1923
    %v1944 = vmul.f32 1.0, %v1943
    %v1945 = vrcp.pop %v1924
    %v1946 = vmul.f32 1.0, %v1945
    %v1947 = vrcp.pop %v1925
    %v1948 = vmul.f32 1.0, %v1947
    %v1949 = vrcp.pop %v1926
    %v1950 = vmul.f32 1.0, %v1949
    %v1951 = vtanh.pop %v1866
    %v1952 = vtanh.pop %v1870
    %v1953 = vtanh.pop %v1874
    %v1954 = vtanh.pop %v1878
    %v1955 = vmul.f32 %v1930, %v1345
    %v1956 = vmul.f32 %v1936, %v1346
    %v1957 = vmul.f32 %v1942, %v1347
    %v1958 = vmul.f32 %v1948, %v1348
    %v1959 = vmul.f32 %v1928, %v1951
    %v1960 = vmul.f32 %v1934, %v1952
    %v1961 = vmul.f32 %v1940, %v1953
    %v1962 = vmul.f32 %v1946, %v1954
    %v1963 = vadd.f32 %v1955, %v1959
    %v1964 = vadd.f32 %v1956, %v1960
    %v1965 = vadd.f32 %v1957, %v1961
    %v1966 = vadd.f32 %v1958, %v1962
    %v1967 = vtanh.pop %v1963
    %v1968 = vtanh.pop %v1964
    %v1969 = vtanh.pop %v1965
    %v1970 = vtanh.pop %v1966
    %v1971 = vmul.f32 %v1932, %v1967
    %v1972 = vmul.f32 %v1938, %v1968
    %v1973 = vmul.f32 %v1944, %v1969
    %v1974 = vmul.f32 %v1950, %v1970
    %1975 = vmatprep.subr.mxu0 %v923
    %1976 = vmatpush1.msra.mxu0 %v922
    %1977 = vmatprep.subr.mxu0 %v927
    %1978 = vmatpush1.msra.mxu0 %v926
    %1979 = vmatprep.subr.mxu0 %v931
    %1980 = vmatpush1.msra.mxu0 %v930
    %1981 = vmatprep.subr.mxu0 %v935
    %1982 = vmatpush1.msra.mxu0 %v934
    %1983 = vmatprep.subr.mxu0 %v939
    %1984 = vmatpush1.msra.mxu0 %v938
    %1985 = vmatprep.subr.mxu0 %v943
    %1986 = vmatpush1.msra.mxu0 %v942
    %1987 = vmatprep.subr.mxu0 %v947
    %1988 = vmatpush1.msra.mxu0 %v946
    %1989 = vmatprep.subr.mxu0 %v951
    %1990 = vmatpush1.msra.mxu0 %v950
    %1991 = vmatprep.subr.mxu0 %v955
    %1992 = vmatpush1.msra.mxu0 %v954
    %1993 = vmatprep.subr.mxu0 %v959
    %1994 = vmatpush1.msra.mxu0 %v958
    %1995 = vmatprep.subr.mxu0 %v963
    %1996 = vmatpush1.msra.mxu0 %v962
    %1997 = vmatprep.subr.mxu0 %v967
    %1998 = vmatpush1.msra.mxu0 %v966
    %1999 = vmatprep.subr.mxu0 %v971
    %2000 = vmatpush1.msra.mxu0 %v970
    %2001 = vmatprep.subr.mxu0 %v975
    %2002 = vmatpush1.msra.mxu0 %v974
    %2003 = vmatprep.subr.mxu0 %v979
    %2004 = vmatpush1.msra.mxu0 %v978
    %2005 = vmatprep.subr.mxu0 %v983
    %2006 = vmatpush1.msra.mxu0 %v982
    %2007 = vmatprep.subr.mxu0 %v987
    %2008 = vmatpush1.msra.mxu0 %v986
    %2009 = vmatprep.subr.mxu0 %v991
    %2010 = vmatpush1.msra.mxu0 %v990
    %2011 = vmatprep.subr.mxu0 %v995
    %2012 = vmatpush1.msra.mxu0 %v994
    %2013 = vmatprep.subr.mxu0 %v999
    %2014 = vmatpush1.msra.mxu0 %v998
    %2015 = vmatprep.subr.mxu0 %v1003
    %2016 = vmatpush1.msra.mxu0 %v1002
    %2017 = vmatprep.subr.mxu0 %v1007
    %2018 = vmatpush1.msra.mxu0 %v1006
    %2019 = vmatprep.subr.mxu0 %v1011
    %2020 = vmatpush1.msra.mxu0 %v1010
    %2021 = vmatprep.subr.mxu0 %v1015
    %2022 = vmatpush1.msra.mxu0 %v1014
    %2023 = vmatprep.subr.mxu0 %v1019
    %2024 = vmatpush1.msra.mxu0 %v1018
    %2025 = vmatprep.subr.mxu0 %v1023
    %2026 = vmatpush1.msra.mxu0 %v1022
    %2027 = vmatprep.subr.mxu0 %v1027
    %2028 = vmatpush1.msra.mxu0 %v1026
    %2029 = vmatprep.subr.mxu0 %v1031
    %2030 = vmatpush1.msra.mxu0 %v1030
    %2031 = vmatprep.subr.mxu0 %v1035
    %2032 = vmatpush1.msra.mxu0 %v1034
    %2033 = vmatprep.subr.mxu0 %v1039
    %2034 = vmatpush1.msra.mxu0 %v1038
    %2035 = vmatprep.subr.mxu0 %v1043
    %2036 = vmatpush1.msra.mxu0 %v1042
    %2037 = vmatprep.subr.mxu0 %v1047
    %2038 = vmatpush1.msra.mxu0 %v1046
    %2039 = vmatprep.mubr.f32.mxu0 %v1664
    %2040 = vmatmul.mubr.f32.gmra.mrb[0].mxu0 %v1971
    %v2041 = vpop.f32.mrb[0].mxu0
    %v2042 = vadd.f32 0.0, %v2041
    %v2043 = vpop.f32.mrb[0].mxu0
    %v2044 = vadd.f32 0.0, %v2043
    %2045 = vmatprep.mubr.f32.mxu0 %v1665
    %2046 = vmatmul.mubr.f32.gmra.mrb[0].mxu0 %v1972
    %v2047 = vpop.f32.mrb[0].mxu0
    %v2048 = vadd.f32 0.0, %v2047
    %v2049 = vpop.f32.mrb[0].mxu0
    %v2050 = vadd.f32 0.0, %v2049
    %2051 = vmatprep.mubr.f32.mxu0 %v1666
    %2052 = vmatmul.mubr.f32.gmra.mrb[0].mxu0 %v1973
    %v2053 = vpop.f32.mrb[0].mxu0
    %v2054 = vadd.f32 0.0, %v2053
    %v2055 = vpop.f32.mrb[0].mxu0
    %v2056 = vadd.f32 0.0, %v2055
    %2057 = vmatprep.mubr.f32.mxu0 %v1667
    %2058 = vmatmul.mubr.f32.gmra.mrb[0].mxu0 %v1974
    %v2059 = vpop.f32.mrb[0].mxu0
    %v2060 = vadd.f32 0.0, %v2059
    %v2061 = vpop.f32.mrb[0].mxu0
    %v2062 = vadd.f32 0.0, %v2061
    %2063 = vdwg.mxu0
    %2064 = vmatprep.subr.mxu0 %v925
    %2065 = vmatpush1.msra.mxu0 %v924
    %2066 = vmatprep.subr.mxu0 %v929
    %2067 = vmatpush1.msra.mxu0 %v928
    %2068 = vmatprep.subr.mxu0 %v933
    %2069 = vmatpush1.msra.mxu0 %v932
    %2070 = vmatprep.subr.mxu0 %v937
    %2071 = vmatpush1.msra.mxu0 %v936
    %2072 = vmatprep.subr.mxu0 %v941
    %2073 = vmatpush1.msra.mxu0 %v940
    %2074 = vmatprep.subr.mxu0 %v945
    %2075 = vmatpush1.msra.mxu0 %v944
    %2076 = vmatprep.subr.mxu0 %v949
    %2077 = vmatpush1.msra.mxu0 %v948
    %2078 = vmatprep.subr.mxu0 %v953
    %2079 = vmatpush1.msra.mxu0 %v952
    %2080 = vmatprep.subr.mxu0 %v957
    %2081 = vmatpush1.msra.mxu0 %v956
    %2082 = vmatprep.subr.mxu0 %v961
    %2083 = vmatpush1.msra.mxu0 %v960
    %2084 = vmatprep.subr.mxu0 %v965
    %2085 = vmatpush1.msra.mxu0 %v964
    %2086 = vmatprep.subr.mxu0 %v969
    %2087 = vmatpush1.msra.mxu0 %v968
    %2088 = vmatprep.subr.mxu0 %v973
    %2089 = vmatpush1.msra.mxu0 %v972
    %2090 = vmatprep.subr.mxu0 %v977
    %2091 = vmatpush1.msra.mxu0 %v976
    %2092 = vmatprep.subr.mxu0 %v981
    %2093 = vmatpush1.msra.mxu0 %v980
    %2094 = vmatprep.subr.mxu0 %v985
    %2095 = vmatpush1.msra.mxu0 %v984
    %2096 = vmatprep.subr.mxu0 %v989
    %2097 = vmatpush1.msra.mxu0 %v988
    %2098 = vmatprep.subr.mxu0 %v993
    %2099 = vmatpush1.msra.mxu0 %v992
    %2100 = vmatprep.subr.mxu0 %v997
    %2101 = vmatpush1.msra.mxu0 %v996
    %2102 = vmatprep.subr.mxu0 %v1001
    %2103 = vmatpush1.msra.mxu0 %v1000
    %2104 = vmatprep.subr.mxu0 %v1005
    %2105 = vmatpush1.msra.mxu0 %v1004
    %2106 = vmatprep.subr.mxu0 %v1009
    %2107 = vmatpush1.msra.mxu0 %v1008
    %2108 = vmatprep.subr.mxu0 %v1013
    %2109 = vmatpush1.msra.mxu0 %v1012
    %2110 = vmatprep.subr.mxu0 %v1017
    %2111 = vmatpush1.msra.mxu0 %v1016
    %2112 = vmatprep.subr.mxu0 %v1021
    %2113 = vmatpush1.msra.mxu0 %v1020
    %2114 = vmatprep.subr.mxu0 %v1025
    %2115 = vmatpush1.msra.mxu0 %v1024
    %2116 = vmatprep.subr.mxu0 %v1029
    %2117 = vmatpush1.msra.mxu0 %v1028
    %2118 = vmatprep.subr.mxu0 %v1033
    %2119 = vmatpush1.msra.mxu0 %v1032
    %2120 = vmatprep.subr.mxu0 %v1037
    %2121 = vmatpush1.msra.mxu0 %v1036
    %2122 = vmatprep.subr.mxu0 %v1041
    %2123 = vmatpush1.msra.mxu0 %v1040
    %2124 = vmatprep.subr.mxu0 %v1045
    %2125 = vmatpush1.msra.mxu0 %v1044
    %2126 = vmatprep.subr.mxu0 %v1049
    %2127 = vmatpush1.msra.mxu0 %v1048
    %2128 = vmatprep.mubr.f32.mxu0 %v1664
    %2129 = vmatmul.mubr.f32.gmra.mrb[0].mxu0 %v1971
    %v2130 = vpop.f32.mrb[0].mxu0
    %v2131 = vadd.f32 0.0, %v2130
    %v2132 = vpop.f32.mrb[0].mxu0
    %v2133 = vadd.f32 0.0, %v2132
    %2134 = vmatprep.mubr.f32.mxu0 %v1665
    %2135 = vmatmul.mubr.f32.gmra.mrb[0].mxu0 %v1972
    %v2136 = vpop.f32.mrb[0].mxu0
    %v2137 = vadd.f32 0.0, %v2136
    %v2138 = vpop.f32.mrb[0].mxu0
    %v2139 = vadd.f32 0.0, %v2138
    %2140 = vmatprep.mubr.f32.mxu0 %v1666
    %2141 = vmatmul.mubr.f32.gmra.mrb[0].mxu0 %v1973
    %v2142 = vpop.f32.mrb[0].mxu0
    %v2143 = vadd.f32 0.0, %v2142
    %v2144 = vpop.f32.mrb[0].mxu0
    %v2145 = vadd.f32 0.0, %v2144
    %2146 = vmatprep.mubr.f32.mxu0 %v1667
    %2147 = vmatmul.mubr.f32.gmra.mrb[0].mxu0 %v1974
    %v2148 = vpop.f32.mrb[0].mxu0
    %v2149 = vadd.f32 0.0, %v2148
    %v2150 = vpop.f32.mrb[0].mxu0
    %v2151 = vadd.f32 0.0, %v2150
    %2152 = vdwg.mxu0
    %v2153 = vadd.f32 %v1539, %v2042
    %v2154 = vadd.f32 %v1543, %v2044
    %v2155 = vadd.f32 %v1547, %v2131
    %v2156 = vadd.f32 %v1551, %v2133
    %v2157 = vadd.f32 %v1539, %v2048
    %v2158 = vadd.f32 %v1543, %v2050
    %v2159 = vadd.f32 %v1547, %v2137
    %v2160 = vadd.f32 %v1551, %v2139
    %v2161 = vadd.f32 %v1539, %v2054
    %v2162 = vadd.f32 %v1543, %v2056
    %v2163 = vadd.f32 %v1547, %v2143
    %v2164 = vadd.f32 %v1551, %v2145
    %v2165 = vadd.f32 %v1539, %v2060
    %v2166 = vadd.f32 %v1543, %v2062
    %v2167 = vadd.f32 %v1547, %v2149
    %v2168 = vadd.f32 %v1551, %v2151
    %v2169 = vxor.u32 %v2153, 2147483648
    %v2170 = vxor.u32 %v2154, 2147483648
    %v2171 = vxor.u32 %v2155, 2147483648
    %v2172 = vxor.u32 %v2157, 2147483648
    %v2173 = vxor.u32 %v2158, 2147483648
    %v2174 = vxor.u32 %v2159, 2147483648
    %v2175 = vxor.u32 %v2161, 2147483648
    %v2176 = vxor.u32 %v2162, 2147483648
    %v2177 = vxor.u32 %v2163, 2147483648
    %v2178 = vxor.u32 %v2165, 2147483648
    %v2179 = vxor.u32 %v2166, 2147483648
    %v2180 = vxor.u32 %v2167, 2147483648
    %v2181 = vmul.f32 %v2169, 1.442695
    %v2182 = vpow.pop %v2181
    %v2183 = vmul.f32 %v2170, 1.442695
    %v2184 = vpow.pop %v2183
    %v2185 = vmul.f32 %v2171, 1.442695
    %v2186 = vpow.pop %v2185
    %v2187 = vmul.f32 %v2172, 1.442695
    %v2188 = vpow.pop %v2187
    %v2189 = vmul.f32 %v2173, 1.442695
    %v2190 = vpow.pop %v2189
    %v2191 = vmul.f32 %v2174, 1.442695
    %v2192 = vpow.pop %v2191
    %v2193 = vmul.f32 %v2175, 1.442695
    %v2194 = vpow.pop %v2193
    %v2195 = vmul.f32 %v2176, 1.442695
    %v2196 = vpow.pop %v2195
    %v2197 = vmul.f32 %v2177, 1.442695
    %v2198 = vpow.pop %v2197
    %v2199 = vmul.f32 %v2178, 1.442695
    %v2200 = vpow.pop %v2199
    %v2201 = vmul.f32 %v2179, 1.442695
    %v2202 = vpow.pop %v2201
    %v2203 = vmul.f32 %v2180, 1.442695
    %v2204 = vpow.pop %v2203
    %v2205 = vadd.f32 %v2182, 1.0
    %v2206 = vadd.f32 %v2184, 1.0
    %v2207 = vadd.f32 %v2186, 1.0
    %v2208 = vadd.f32 %v2188, 1.0
    %v2209 = vadd.f32 %v2190, 1.0
    %v2210 = vadd.f32 %v2192, 1.0
    %v2211 = vadd.f32 %v2194, 1.0
    %v2212 = vadd.f32 %v2196, 1.0
    %v2213 = vadd.f32 %v2198, 1.0
    %v2214 = vadd.f32 %v2200, 1.0
    %v2215 = vadd.f32 %v2202, 1.0
    %v2216 = vadd.f32 %v2204, 1.0
    %v2217 = vrcp.pop %v2205
    %v2218 = vmul.f32 1.0, %v2217
    %v2219 = vrcp.pop %v2206
    %v2220 = vmul.f32 1.0, %v2219
    %v2221 = vrcp.pop %v2207
    %v2222 = vmul.f32 1.0, %v2221
    %v2223 = vrcp.pop %v2208
    %v2224 = vmul.f32 1.0, %v2223
    %v2225 = vrcp.pop %v2209
    %v2226 = vmul.f32 1.0, %v2225
    %v2227 = vrcp.pop %v2210
    %v2228 = vmul.f32 1.0, %v2227
    %v2229 = vrcp.pop %v2211
    %v2230 = vmul.f32 1.0, %v2229
    %v2231 = vrcp.pop %v2212
    %v2232 = vmul.f32 1.0, %v2231
    %v2233 = vrcp.pop %v2213
    %v2234 = vmul.f32 1.0, %v2233
    %v2235 = vrcp.pop %v2214
    %v2236 = vmul.f32 1.0, %v2235
    %v2237 = vrcp.pop %v2215
    %v2238 = vmul.f32 1.0, %v2237
    %v2239 = vrcp.pop %v2216
    %v2240 = vmul.f32 1.0, %v2239
    %v2241 = vtanh.pop %v2156
    %v2242 = vtanh.pop %v2160
    %v2243 = vtanh.pop %v2164
    %v2244 = vtanh.pop %v2168
    %v2245 = vmul.f32 %v2220, %v1656
    %v2246 = vmul.f32 %v2226, %v1657
    %v2247 = vmul.f32 %v2232, %v1658
    %v2248 = vmul.f32 %v2238, %v1659
    %v2249 = vmul.f32 %v2218, %v2241
    %v2250 = vmul.f32 %v2224, %v2242
    %v2251 = vmul.f32 %v2230, %v2243
    %v2252 = vmul.f32 %v2236, %v2244
    %v2253 = vadd.f32 %v2245, %v2249
    %v2254 = vadd.f32 %v2246, %v2250
    %v2255 = vadd.f32 %v2247, %v2251
    %v2256 = vadd.f32 %v2248, %v2252
    %v2257 = vtanh.pop %v2253
    %v2258 = vtanh.pop %v2254
    %v2259 = vtanh.pop %v2255
    %v2260 = vtanh.pop %v2256
    %v2261 = vmul.f32 %v2222, %v2257
    %v2262 = vmul.f32 %v2228, %v2258
    %v2263 = vmul.f32 %v2234, %v2259
    %v2264 = vmul.f32 %v2240, %v2260
    %s2265 = scalar_lea.vmem [#allocation2], 256
    %v2266 = vld [vmem:[%s2265] sm:$0xff]
    %v2267 = vld [vmem:[%s2265 + $0x8] sm:$0xff]
    %v2268 = vld [vmem:[%s2265 + $0x10] sm:$0xff]
    %v2269 = vld [vmem:[%s2265 + $0x18] sm:$0xff]
    %v2270 = vld [vmem:[%s2265 + $0x20] sm:$0xff]
    %v2271 = vld [vmem:[%s2265 + $0x28] sm:$0xff]
    %v2272 = vld [vmem:[%s2265 + $0x30] sm:$0xff]
    %v2273 = vld [vmem:[%s2265 + $0x38] sm:$0xff]
    %v2274 = vld [vmem:[%s2265 + $0x40] sm:$0xff]
    %v2275 = vld [vmem:[%s2265 + $0x48] sm:$0xff]
    %v2276 = vld [vmem:[%s2265 + $0x50] sm:$0xff]
    %v2277 = vld [vmem:[%s2265 + $0x58] sm:$0xff]
    %v2278 = vld [vmem:[%s2265 + $0x60] sm:$0xff]
    %v2279 = vld [vmem:[%s2265 + $0x68] sm:$0xff]
    %v2280 = vld [vmem:[%s2265 + $0x70] sm:$0xff]
    %v2281 = vld [vmem:[%s2265 + $0x78] sm:$0xff]
    %2282 = vmatprep.subr.mxu0 %v859
    %2283 = vmatpush1.msra.mxu0 %v858
    %2284 = vmatprep.subr.mxu0 %v863
    %2285 = vmatpush1.msra.mxu0 %v862
    %2286 = vmatprep.subr.mxu0 %v867
    %2287 = vmatpush1.msra.mxu0 %v866
    %2288 = vmatprep.subr.mxu0 %v871
    %2289 = vmatpush1.msra.mxu0 %v870
    %2290 = vmatprep.subr.mxu0 %v875
    %2291 = vmatpush1.msra.mxu0 %v874
    %2292 = vmatprep.subr.mxu0 %v879
    %2293 = vmatpush1.msra.mxu0 %v878
    %2294 = vmatprep.subr.mxu0 %v883
    %2295 = vmatpush1.msra.mxu0 %v882
    %2296 = vmatprep.subr.mxu0 %v887
    %2297 = vmatpush1.msra.mxu0 %v886
    %2298 = vmatprep.subr.mxu0 %v891
    %2299 = vmatpush1.msra.mxu0 %v890
    %2300 = vmatprep.subr.mxu0 %v895
    %2301 = vmatpush1.msra.mxu0 %v894
    %2302 = vmatprep.subr.mxu0 %v899
    %2303 = vmatpush1.msra.mxu0 %v898
    %2304 = vmatprep.subr.mxu0 %v903
    %2305 = vmatpush1.msra.mxu0 %v902
    %2306 = vmatprep.subr.mxu0 %v907
    %2307 = vmatpush1.msra.mxu0 %v906
    %2308 = vmatprep.subr.mxu0 %v911
    %2309 = vmatpush1.msra.mxu0 %v910
    %2310 = vmatprep.subr.mxu0 %v915
    %2311 = vmatpush1.msra.mxu0 %v914
    %2312 = vmatprep.subr.mxu0 %v919
    %2313 = vmatpush1.msra.mxu0 %v918
    %2314 = vmatprep.subr.mxu0 0.0
    %2315 = vmatpush1.msra.mxu0 0.0
    %2316 = vmatprep.subr.mxu0 0.0
    %2317 = vmatpush1.msra.mxu0 0.0
    %2318 = vmatprep.subr.mxu0 0.0
    %2319 = vmatpush1.msra.mxu0 0.0
    %2320 = vmatprep.subr.mxu0 0.0
    %2321 = vmatpush1.msra.mxu0 0.0
    %2322 = vmatprep.subr.mxu0 0.0
    %2323 = vmatpush1.msra.mxu0 0.0
    %2324 = vmatprep.subr.mxu0 0.0
    %2325 = vmatpush1.msra.mxu0 0.0
    %2326 = vmatprep.subr.mxu0 0.0
    %2327 = vmatpush1.msra.mxu0 0.0
    %2328 = vmatprep.subr.mxu0 0.0
    %2329 = vmatpush1.msra.mxu0 0.0
    %2330 = vmatprep.subr.mxu0 0.0
    %2331 = vmatpush1.msra.mxu0 0.0
    %2332 = vmatprep.subr.mxu0 0.0
    %2333 = vmatpush1.msra.mxu0 0.0
    %2334 = vmatprep.subr.mxu0 0.0
    %2335 = vmatpush1.msra.mxu0 0.0
    %2336 = vmatprep.subr.mxu0 0.0
    %2337 = vmatpush1.msra.mxu0 0.0
    %2338 = vmatprep.subr.mxu0 0.0
    %2339 = vmatpush1.msra.mxu0 0.0
    %2340 = vmatprep.subr.mxu0 0.0
    %2341 = vmatpush1.msra.mxu0 0.0
    %2342 = vmatprep.subr.mxu0 0.0
    %2343 = vmatpush1.msra.mxu0 0.0
    %2344 = vmatprep.subr.mxu0 0.0
    %2345 = vmatpush1.msra.mxu0 0.0
    %2346 = vmatprep.mubr.f32.mxu0 0.0
    %2347 = vmatmul.mubr.f32.gmra.mrb[0].mxu0 %v1971
    %v2348 = vpop.f32.mrb[0].mxu0
    %v2349 = vadd.f32 0.0, %v2348
    %v2350 = vpop.f32.mrb[0].mxu0
    %v2351 = vadd.f32 0.0, %v2350
    %2352 = vmatprep.mubr.f32.mxu0 0.0
    %2353 = vmatmul.mubr.f32.gmra.mrb[0].mxu0 %v1972
    %v2354 = vpop.f32.mrb[0].mxu0
    %v2355 = vadd.f32 0.0, %v2354
    %v2356 = vpop.f32.mrb[0].mxu0
    %v2357 = vadd.f32 0.0, %v2356
    %2358 = vmatprep.mubr.f32.mxu0 0.0
    %2359 = vmatmul.mubr.f32.gmra.mrb[0].mxu0 %v1973
    %v2360 = vpop.f32.mrb[0].mxu0
    %v2361 = vadd.f32 0.0, %v2360
    %v2362 = vpop.f32.mrb[0].mxu0
    %v2363 = vadd.f32 0.0, %v2362
    %2364 = vmatprep.mubr.f32.mxu0 0.0
    %2365 = vmatmul.mubr.f32.gmra.mrb[0].mxu0 %v1974
    %v2366 = vpop.f32.mrb[0].mxu0
    %v2367 = vadd.f32 0.0, %v2366
    %v2368 = vpop.f32.mrb[0].mxu0
    %v2369 = vadd.f32 0.0, %v2368
    %2370 = vdwg.mxu0
    %2371 = vmatprep.subr.mxu0 %v861
    %2372 = vmatpush1.msra.mxu0 %v860
    %2373 = vmatprep.subr.mxu0 %v865
    %2374 = vmatpush1.msra.mxu0 %v864
    %2375 = vmatprep.subr.mxu0 %v869
    %2376 = vmatpush1.msra.mxu0 %v868
    %2377 = vmatprep.subr.mxu0 %v873
    %2378 = vmatpush1.msra.mxu0 %v872
    %2379 = vmatprep.subr.mxu0 %v877
    %2380 = vmatpush1.msra.mxu0 %v876
    %2381 = vmatprep.subr.mxu0 %v881
    %2382 = vmatpush1.msra.mxu0 %v880
    %2383 = vmatprep.subr.mxu0 %v885
    %2384 = vmatpush1.msra.mxu0 %v884
    %2385 = vmatprep.subr.mxu0 %v889
    %2386 = vmatpush1.msra.mxu0 %v888
    %2387 = vmatprep.subr.mxu0 %v893
    %2388 = vmatpush1.msra.mxu0 %v892
    %2389 = vmatprep.subr.mxu0 %v897
    %2390 = vmatpush1.msra.mxu0 %v896
    %2391 = vmatprep.subr.mxu0 %v901
    %2392 = vmatpush1.msra.mxu0 %v900
    %2393 = vmatprep.subr.mxu0 %v905
    %2394 = vmatpush1.msra.mxu0 %v904
    %2395 = vmatprep.subr.mxu0 %v909
    %2396 = vmatpush1.msra.mxu0 %v908
    %2397 = vmatprep.subr.mxu0 %v913
    %2398 = vmatpush1.msra.mxu0 %v912
    %2399 = vmatprep.subr.mxu0 %v917
    %2400 = vmatpush1.msra.mxu0 %v916
    %2401 = vmatprep.subr.mxu0 %v921
    %2402 = vmatpush1.msra.mxu0 %v920
    %2403 = vmatprep.subr.mxu0 0.0
    %2404 = vmatpush1.msra.mxu0 0.0
    %2405 = vmatprep.subr.mxu0 0.0
    %2406 = vmatpush1.msra.mxu0 0.0
    %2407 = vmatprep.subr.mxu0 0.0
    %2408 = vmatpush1.msra.mxu0 0.0
    %2409 = vmatprep.subr.mxu0 0.0
    %2410 = vmatpush1.msra.mxu0 0.0
    %2411 = vmatprep.subr.mxu0 0.0
    %2412 = vmatpush1.msra.mxu0 0.0
    %2413 = vmatprep.subr.mxu0 0.0
    %2414 = vmatpush1.msra.mxu0 0.0
    %2415 = vmatprep.subr.mxu0 0.0
    %2416 = vmatpush1.msra.mxu0 0.0
    %2417 = vmatprep.subr.mxu0 0.0
    %2418 = vmatpush1.msra.mxu0 0.0
    %2419 = vmatprep.subr.mxu0 0.0
    %2420 = vmatpush1.msra.mxu0 0.0
    %2421 = vmatprep.subr.mxu0 0.0
    %2422 = vmatpush1.msra.mxu0 0.0
    %2423 = vmatprep.subr.mxu0 0.0
    %2424 = vmatpush1.msra.mxu0 0.0
    %2425 = vmatprep.subr.mxu0 0.0
    %2426 = vmatpush1.msra.mxu0 0.0
    %2427 = vmatprep.subr.mxu0 0.0
    %2428 = vmatpush1.msra.mxu0 0.0
    %2429 = vmatprep.subr.mxu0 0.0
    %2430 = vmatpush1.msra.mxu0 0.0
    %2431 = vmatprep.subr.mxu0 0.0
    %2432 = vmatpush1.msra.mxu0 0.0
    %2433 = vmatprep.subr.mxu0 0.0
    %2434 = vmatpush1.msra.mxu0 0.0
    %2435 = vmatprep.mubr.f32.mxu0 0.0
    %2436 = vmatmul.mubr.f32.gmra.mrb[0].mxu0 %v1971
    %v2437 = vpop.f32.mrb[0].mxu0
    %v2438 = vadd.f32 0.0, %v2437
    %v2439 = vpop.f32.mrb[0].mxu0
    %v2440 = vadd.f32 0.0, %v2439
    %2441 = vmatprep.mubr.f32.mxu0 0.0
    %2442 = vmatmul.mubr.f32.gmra.mrb[0].mxu0 %v1972
    %v2443 = vpop.f32.mrb[0].mxu0
    %v2444 = vadd.f32 0.0, %v2443
    %v2445 = vpop.f32.mrb[0].mxu0
    %v2446 = vadd.f32 0.0, %v2445
    %2447 = vmatprep.mubr.f32.mxu0 0.0
    %2448 = vmatmul.mubr.f32.gmra.mrb[0].mxu0 %v1973
    %v2449 = vpop.f32.mrb[0].mxu0
    %v2450 = vadd.f32 0.0, %v2449
    %v2451 = vpop.f32.mrb[0].mxu0
    %v2452 = vadd.f32 0.0, %v2451
    %2453 = vmatprep.mubr.f32.mxu0 0.0
    %2454 = vmatmul.mubr.f32.gmra.mrb[0].mxu0 %v1974
    %v2455 = vpop.f32.mrb[0].mxu0
    %v2456 = vadd.f32 0.0, %v2455
    %v2457 = vpop.f32.mrb[0].mxu0
    %v2458 = vadd.f32 0.0, %v2457
    %2459 = vdwg.mxu0
    %v2460 = vadd.f32 %v2266, %v2349
    %v2461 = vadd.f32 %v2267, %v2351
    %v2462 = vadd.f32 %v2268, %v2438
    %v2463 = vadd.f32 %v2269, %v2440
    %v2464 = vadd.f32 %v2270, %v2355
    %v2465 = vadd.f32 %v2271, %v2357
    %v2466 = vadd.f32 %v2272, %v2444
    %v2467 = vadd.f32 %v2273, %v2446
    %v2468 = vadd.f32 %v2274, %v2361
    %v2469 = vadd.f32 %v2275, %v2363
    %v2470 = vadd.f32 %v2276, %v2450
    %v2471 = vadd.f32 %v2277, %v2452
    %v2472 = vadd.f32 %v2278, %v2367
    %v2473 = vadd.f32 %v2279, %v2369
    %v2474 = vadd.f32 %v2280, %v2456
    %v2475 = vadd.f32 %v2281, %v2458
    %v2476 = vxor.u32 %v2460, 2147483648
    %v2477 = vxor.u32 %v2461, 2147483648
    %v2478 = vxor.u32 %v2462, 2147483648
    %v2479 = vxor.u32 %v2464, 2147483648
    %v2480 = vxor.u32 %v2465, 2147483648
    %v2481 = vxor.u32 %v2466, 2147483648
    %v2482 = vxor.u32 %v2468, 2147483648
    %v2483 = vxor.u32 %v2469, 2147483648
    %v2484 = vxor.u32 %v2470, 2147483648
    %v2485 = vxor.u32 %v2472, 2147483648
    %v2486 = vxor.u32 %v2473, 2147483648
    %v2487 = vxor.u32 %v2474, 2147483648
    %v2488 = vmul.f32 %v2476, 1.442695
    %v2489 = vpow.pop %v2488
    %v2490 = vmul.f32 %v2477, 1.442695
    %v2491 = vpow.pop %v2490
    %v2492 = vmul.f32 %v2478, 1.442695
    %v2493 = vpow.pop %v2492
    %v2494 = vmul.f32 %v2479, 1.442695
    %v2495 = vpow.pop %v2494
    %v2496 = vmul.f32 %v2480, 1.442695
    %v2497 = vpow.pop %v2496
    %v2498 = vmul.f32 %v2481, 1.442695
    %v2499 = vpow.pop %v2498
    %v2500 = vmul.f32 %v2482, 1.442695
    %v2501 = vpow.pop %v2500
    %v2502 = vmul.f32 %v2483, 1.442695
    %v2503 = vpow.pop %v2502
    %v2504 = vmul.f32 %v2484, 1.442695
    %v2505 = vpow.pop %v2504
    %v2506 = vmul.f32 %v2485, 1.442695
    %v2507 = vpow.pop %v2506
    %v2508 = vmul.f32 %v2486, 1.442695
    %v2509 = vpow.pop %v2508
    %v2510 = vmul.f32 %v2487, 1.442695
    %v2511 = vpow.pop %v2510
    %v2512 = vadd.f32 %v2489, 1.0
    %v2513 = vadd.f32 %v2491, 1.0
    %v2514 = vadd.f32 %v2493, 1.0
    %v2515 = vadd.f32 %v2495, 1.0
    %v2516 = vadd.f32 %v2497, 1.0
    %v2517 = vadd.f32 %v2499, 1.0
    %v2518 = vadd.f32 %v2501, 1.0
    %v2519 = vadd.f32 %v2503, 1.0
    %v2520 = vadd.f32 %v2505, 1.0
    %v2521 = vadd.f32 %v2507, 1.0
    %v2522 = vadd.f32 %v2509, 1.0
    %v2523 = vadd.f32 %v2511, 1.0
    %v2524 = vrcp.pop %v2512
    %v2525 = vmul.f32 1.0, %v2524
    %v2526 = vrcp.pop %v2513
    %v2527 = vmul.f32 1.0, %v2526
    %v2528 = vrcp.pop %v2514
    %v2529 = vmul.f32 1.0, %v2528
    %v2530 = vrcp.pop %v2515
    %v2531 = vmul.f32 1.0, %v2530
    %v2532 = vrcp.pop %v2516
    %v2533 = vmul.f32 1.0, %v2532
    %v2534 = vrcp.pop %v2517
    %v2535 = vmul.f32 1.0, %v2534
    %v2536 = vrcp.pop %v2518
    %v2537 = vmul.f32 1.0, %v2536
    %v2538 = vrcp.pop %v2519
    %v2539 = vmul.f32 1.0, %v2538
    %v2540 = vrcp.pop %v2520
    %v2541 = vmul.f32 1.0, %v2540
    %v2542 = vrcp.pop %v2521
    %v2543 = vmul.f32 1.0, %v2542
    %v2544 = vrcp.pop %v2522
    %v2545 = vmul.f32 1.0, %v2544
    %v2546 = vrcp.pop %v2523
    %v2547 = vmul.f32 1.0, %v2546
    %v2548 = vtanh.pop %v2463
    %v2549 = vtanh.pop %v2467
    %v2550 = vtanh.pop %v2471
    %v2551 = vtanh.pop %v2475
    %v2552 = vmul.f32 %v2527, %v1963
    %v2553 = vmul.f32 %v2533, %v1964
    %v2554 = vmul.f32 %v2539, %v1965
    %v2555 = vmul.f32 %v2545, %v1966
    %v2556 = vmul.f32 %v2525, %v2548
    %v2557 = vmul.f32 %v2531, %v2549
    %v2558 = vmul.f32 %v2537, %v2550
    %v2559 = vmul.f32 %v2543, %v2551
    %v2560 = vadd.f32 %v2552, %v2556
    %v2561 = vadd.f32 %v2553, %v2557
    %v2562 = vadd.f32 %v2554, %v2558
    %v2563 = vadd.f32 %v2555, %v2559
    %v2564 = vtanh.pop %v2560
    %v2565 = vtanh.pop %v2561
    %v2566 = vtanh.pop %v2562
    %v2567 = vtanh.pop %v2563
    %v2568 = vmul.f32 %v2529, %v2564
    %v2569 = vmul.f32 %v2535, %v2565
    %v2570 = vmul.f32 %v2541, %v2566
    %v2571 = vmul.f32 %v2547, %v2567
    %2572 = vmatprep.subr.mxu0 %v923
    %2573 = vmatpush1.msra.mxu0 %v922
    %2574 = vmatprep.subr.mxu0 %v927
    %2575 = vmatpush1.msra.mxu0 %v926
    %2576 = vmatprep.subr.mxu0 %v931
    %2577 = vmatpush1.msra.mxu0 %v930
    %2578 = vmatprep.subr.mxu0 %v935
    %2579 = vmatpush1.msra.mxu0 %v934
    %2580 = vmatprep.subr.mxu0 %v939
    %2581 = vmatpush1.msra.mxu0 %v938
    %2582 = vmatprep.subr.mxu0 %v943
    %2583 = vmatpush1.msra.mxu0 %v942
    %2584 = vmatprep.subr.mxu0 %v947
    %2585 = vmatpush1.msra.mxu0 %v946
    %2586 = vmatprep.subr.mxu0 %v951
    %2587 = vmatpush1.msra.mxu0 %v950
    %2588 = vmatprep.subr.mxu0 %v955
    %2589 = vmatpush1.msra.mxu0 %v954
    %2590 = vmatprep.subr.mxu0 %v959
    %2591 = vmatpush1.msra.mxu0 %v958
    %2592 = vmatprep.subr.mxu0 %v963
    %2593 = vmatpush1.msra.mxu0 %v962
    %2594 = vmatprep.subr.mxu0 %v967
    %2595 = vmatpush1.msra.mxu0 %v966
    %2596 = vmatprep.subr.mxu0 %v971
    %2597 = vmatpush1.msra.mxu0 %v970
    %2598 = vmatprep.subr.mxu0 %v975
    %2599 = vmatpush1.msra.mxu0 %v974
    %2600 = vmatprep.subr.mxu0 %v979
    %2601 = vmatpush1.msra.mxu0 %v978
    %2602 = vmatprep.subr.mxu0 %v983
    %2603 = vmatpush1.msra.mxu0 %v982
    %2604 = vmatprep.subr.mxu0 %v987
    %2605 = vmatpush1.msra.mxu0 %v986
    %2606 = vmatprep.subr.mxu0 %v991
    %2607 = vmatpush1.msra.mxu0 %v990
    %2608 = vmatprep.subr.mxu0 %v995
    %2609 = vmatpush1.msra.mxu0 %v994
    %2610 = vmatprep.subr.mxu0 %v999
    %2611 = vmatpush1.msra.mxu0 %v998
    %2612 = vmatprep.subr.mxu0 %v1003
    %2613 = vmatpush1.msra.mxu0 %v1002
    %2614 = vmatprep.subr.mxu0 %v1007
    %2615 = vmatpush1.msra.mxu0 %v1006
    %2616 = vmatprep.subr.mxu0 %v1011
    %2617 = vmatpush1.msra.mxu0 %v1010
    %2618 = vmatprep.subr.mxu0 %v1015
    %2619 = vmatpush1.msra.mxu0 %v1014
    %2620 = vmatprep.subr.mxu0 %v1019
    %2621 = vmatpush1.msra.mxu0 %v1018
    %2622 = vmatprep.subr.mxu0 %v1023
    %2623 = vmatpush1.msra.mxu0 %v1022
    %2624 = vmatprep.subr.mxu0 %v1027
    %2625 = vmatpush1.msra.mxu0 %v1026
    %2626 = vmatprep.subr.mxu0 %v1031
    %2627 = vmatpush1.msra.mxu0 %v1030
    %2628 = vmatprep.subr.mxu0 %v1035
    %2629 = vmatpush1.msra.mxu0 %v1034
    %2630 = vmatprep.subr.mxu0 %v1039
    %2631 = vmatpush1.msra.mxu0 %v1038
    %2632 = vmatprep.subr.mxu0 %v1043
    %2633 = vmatpush1.msra.mxu0 %v1042
    %2634 = vmatprep.subr.mxu0 %v1047
    %2635 = vmatpush1.msra.mxu0 %v1046
    %2636 = vmatprep.mubr.f32.mxu0 %v2261
    %2637 = vmatmul.mubr.f32.gmra.mrb[0].mxu0 %v2568
    %v2638 = vpop.f32.mrb[0].mxu0
    %v2639 = vadd.f32 0.0, %v2638
    %v2640 = vpop.f32.mrb[0].mxu0
    %v2641 = vadd.f32 0.0, %v2640
    %2642 = vmatprep.mubr.f32.mxu0 %v2262
    %2643 = vmatmul.mubr.f32.gmra.mrb[0].mxu0 %v2569
    %v2644 = vpop.f32.mrb[0].mxu0
    %v2645 = vadd.f32 0.0, %v2644
    %v2646 = vpop.f32.mrb[0].mxu0
    %v2647 = vadd.f32 0.0, %v2646
    %2648 = vmatprep.mubr.f32.mxu0 %v2263
    %2649 = vmatmul.mubr.f32.gmra.mrb[0].mxu0 %v2570
    %v2650 = vpop.f32.mrb[0].mxu0
    %v2651 = vadd.f32 0.0, %v2650
    %v2652 = vpop.f32.mrb[0].mxu0
    %v2653 = vadd.f32 0.0, %v2652
    %2654 = vmatprep.mubr.f32.mxu0 %v2264
    %2655 = vmatmul.mubr.f32.gmra.mrb[0].mxu0 %v2571
    %v2656 = vpop.f32.mrb[0].mxu0
    %v2657 = vadd.f32 0.0, %v2656
    %v2658 = vpop.f32.mrb[0].mxu0
    %v2659 = vadd.f32 0.0, %v2658
    %2660 = vdwg.mxu0
    %2661 = vmatprep.subr.mxu0 %v925
    %2662 = vmatpush1.msra.mxu0 %v924
    %2663 = vmatprep.subr.mxu0 %v929
    %2664 = vmatpush1.msra.mxu0 %v928
    %2665 = vmatprep.subr.mxu0 %v933
    %2666 = vmatpush1.msra.mxu0 %v932
    %2667 = vmatprep.subr.mxu0 %v937
    %2668 = vmatpush1.msra.mxu0 %v936
    %2669 = vmatprep.subr.mxu0 %v941
    %2670 = vmatpush1.msra.mxu0 %v940
    %2671 = vmatprep.subr.mxu0 %v945
    %2672 = vmatpush1.msra.mxu0 %v944
    %2673 = vmatprep.subr.mxu0 %v949
    %2674 = vmatpush1.msra.mxu0 %v948
    %2675 = vmatprep.subr.mxu0 %v953
    %2676 = vmatpush1.msra.mxu0 %v952
    %2677 = vmatprep.subr.mxu0 %v957
    %2678 = vmatpush1.msra.mxu0 %v956
    %2679 = vmatprep.subr.mxu0 %v961
    %2680 = vmatpush1.msra.mxu0 %v960
    %2681 = vmatprep.subr.mxu0 %v965
    %2682 = vmatpush1.msra.mxu0 %v964
    %2683 = vmatprep.subr.mxu0 %v969
    %2684 = vmatpush1.msra.mxu0 %v968
    %2685 = vmatprep.subr.mxu0 %v973
    %2686 = vmatpush1.msra.mxu0 %v972
    %2687 = vmatprep.subr.mxu0 %v977
    %2688 = vmatpush1.msra.mxu0 %v976
    %2689 = vmatprep.subr.mxu0 %v981
    %2690 = vmatpush1.msra.mxu0 %v980
    %2691 = vmatprep.subr.mxu0 %v985
    %2692 = vmatpush1.msra.mxu0 %v984
    %2693 = vmatprep.subr.mxu0 %v989
    %2694 = vmatpush1.msra.mxu0 %v988
    %2695 = vmatprep.subr.mxu0 %v993
    %2696 = vmatpush1.msra.mxu0 %v992
    %2697 = vmatprep.subr.mxu0 %v997
    %2698 = vmatpush1.msra.mxu0 %v996
    %2699 = vmatprep.subr.mxu0 %v1001
    %2700 = vmatpush1.msra.mxu0 %v1000
    %2701 = vmatprep.subr.mxu0 %v1005
    %2702 = vmatpush1.msra.mxu0 %v1004
    %2703 = vmatprep.subr.mxu0 %v1009
    %2704 = vmatpush1.msra.mxu0 %v1008
    %2705 = vmatprep.subr.mxu0 %v1013
    %2706 = vmatpush1.msra.mxu0 %v1012
    %2707 = vmatprep.subr.mxu0 %v1017
    %2708 = vmatpush1.msra.mxu0 %v1016
    %2709 = vmatprep.subr.mxu0 %v1021
    %2710 = vmatpush1.msra.mxu0 %v1020
    %2711 = vmatprep.subr.mxu0 %v1025
    %2712 = vmatpush1.msra.mxu0 %v1024
    %2713 = vmatprep.subr.mxu0 %v1029
    %2714 = vmatpush1.msra.mxu0 %v1028
    %2715 = vmatprep.subr.mxu0 %v1033
    %2716 = vmatpush1.msra.mxu0 %v1032
    %2717 = vmatprep.subr.mxu0 %v1037
    %2718 = vmatpush1.msra.mxu0 %v1036
    %2719 = vmatprep.subr.mxu0 %v1041
    %2720 = vmatpush1.msra.mxu0 %v1040
    %2721 = vmatprep.subr.mxu0 %v1045
    %2722 = vmatpush1.msra.mxu0 %v1044
    %2723 = vmatprep.subr.mxu0 %v1049
    %2724 = vmatpush1.msra.mxu0 %v1048
    %2725 = vmatprep.mubr.f32.mxu0 %v2261
    %2726 = vmatmul.mubr.f32.gmra.mrb[0].mxu0 %v2568
    %v2727 = vpop.f32.mrb[0].mxu0
    %v2728 = vadd.f32 0.0, %v2727
    %v2729 = vpop.f32.mrb[0].mxu0
    %v2730 = vadd.f32 0.0, %v2729
    %2731 = vmatprep.mubr.f32.mxu0 %v2262
    %2732 = vmatmul.mubr.f32.gmra.mrb[0].mxu0 %v2569
    %v2733 = vpop.f32.mrb[0].mxu0
    %v2734 = vadd.f32 0.0, %v2733
    %v2735 = vpop.f32.mrb[0].mxu0
    %v2736 = vadd.f32 0.0, %v2735
    %2737 = vmatprep.mubr.f32.mxu0 %v2263
    %2738 = vmatmul.mubr.f32.gmra.mrb[0].mxu0 %v2570
    %v2739 = vpop.f32.mrb[0].mxu0
    %v2740 = vadd.f32 0.0, %v2739
    %v2741 = vpop.f32.mrb[0].mxu0
    %v2742 = vadd.f32 0.0, %v2741
    %2743 = vmatprep.mubr.f32.mxu0 %v2264
    %2744 = vmatmul.mubr.f32.gmra.mrb[0].mxu0 %v2571
    %v2745 = vpop.f32.mrb[0].mxu0
    %v2746 = vadd.f32 0.0, %v2745
    %v2747 = vpop.f32.mrb[0].mxu0
    %v2748 = vadd.f32 0.0, %v2747
    %2749 = vdwg.mxu0
    %v2750 = vadd.f32 %v1539, %v2639
    %v2751 = vadd.f32 %v1543, %v2641
    %v2752 = vadd.f32 %v1547, %v2728
    %v2753 = vadd.f32 %v1551, %v2730
    %v2754 = vadd.f32 %v1539, %v2645
    %v2755 = vadd.f32 %v1543, %v2647
    %v2756 = vadd.f32 %v1547, %v2734
    %v2757 = vadd.f32 %v1551, %v2736
    %v2758 = vadd.f32 %v1539, %v2651
    %v2759 = vadd.f32 %v1543, %v2653
    %v2760 = vadd.f32 %v1547, %v2740
    %v2761 = vadd.f32 %v1551, %v2742
    %v2762 = vadd.f32 %v1539, %v2657
    %v2763 = vadd.f32 %v1543, %v2659
    %v2764 = vadd.f32 %v1547, %v2746
    %v2765 = vadd.f32 %v1551, %v2748
    %v2766 = vxor.u32 %v2750, 2147483648
    %v2767 = vxor.u32 %v2751, 2147483648
    %v2768 = vxor.u32 %v2752, 2147483648
    %v2769 = vxor.u32 %v2754, 2147483648
    %v2770 = vxor.u32 %v2755, 2147483648
    %v2771 = vxor.u32 %v2756, 2147483648
    %v2772 = vxor.u32 %v2758, 2147483648
    %v2773 = vxor.u32 %v2759, 2147483648
    %v2774 = vxor.u32 %v2760, 2147483648
    %v2775 = vxor.u32 %v2762, 2147483648
    %v2776 = vxor.u32 %v2763, 2147483648
    %v2777 = vxor.u32 %v2764, 2147483648
    %v2778 = vmul.f32 %v2766, 1.442695
    %v2779 = vpow.pop %v2778
    %v2780 = vmul.f32 %v2767, 1.442695
    %v2781 = vpow.pop %v2780
    %v2782 = vmul.f32 %v2768, 1.442695
    %v2783 = vpow.pop %v2782
    %v2784 = vmul.f32 %v2769, 1.442695
    %v2785 = vpow.pop %v2784
    %v2786 = vmul.f32 %v2770, 1.442695
    %v2787 = vpow.pop %v2786
    %v2788 = vmul.f32 %v2771, 1.442695
    %v2789 = vpow.pop %v2788
    %v2790 = vmul.f32 %v2772, 1.442695
    %v2791 = vpow.pop %v2790
    %v2792 = vmul.f32 %v2773, 1.442695
    %v2793 = vpow.pop %v2792
    %v2794 = vmul.f32 %v2774, 1.442695
    %v2795 = vpow.pop %v2794
    %v2796 = vmul.f32 %v2775, 1.442695
    %v2797 = vpow.pop %v2796
    %v2798 = vmul.f32 %v2776, 1.442695
    %v2799 = vpow.pop %v2798
    %v2800 = vmul.f32 %v2777, 1.442695
    %v2801 = vpow.pop %v2800
    %v2802 = vadd.f32 %v2779, 1.0
    %v2803 = vadd.f32 %v2781, 1.0
    %v2804 = vadd.f32 %v2783, 1.0
    %v2805 = vadd.f32 %v2785, 1.0
    %v2806 = vadd.f32 %v2787, 1.0
    %v2807 = vadd.f32 %v2789, 1.0
    %v2808 = vadd.f32 %v2791, 1.0
    %v2809 = vadd.f32 %v2793, 1.0
    %v2810 = vadd.f32 %v2795, 1.0
    %v2811 = vadd.f32 %v2797, 1.0
    %v2812 = vadd.f32 %v2799, 1.0
    %v2813 = vadd.f32 %v2801, 1.0
    %v2814 = vrcp.pop %v2802
    %v2815 = vmul.f32 1.0, %v2814
    %v2816 = vrcp.pop %v2803
    %v2817 = vmul.f32 1.0, %v2816
    %v2818 = vrcp.pop %v2804
    %v2819 = vmul.f32 1.0, %v2818
    %v2820 = vrcp.pop %v2805
    %v2821 = vmul.f32 1.0, %v2820
    %v2822 = vrcp.pop %v2806
    %v2823 = vmul.f32 1.0, %v2822
    %v2824 = vrcp.pop %v2807
    %v2825 = vmul.f32 1.0, %v2824
    %v2826 = vrcp.pop %v2808
    %v2827 = vmul.f32 1.0, %v2826
    %v2828 = vrcp.pop %v2809
    %v2829 = vmul.f32 1.0, %v2828
    %v2830 = vrcp.pop %v2810
    %v2831 = vmul.f32 1.0, %v2830
    %v2832 = vrcp.pop %v2811
    %v2833 = vmul.f32 1.0, %v2832
    %v2834 = vrcp.pop %v2812
    %v2835 = vmul.f32 1.0, %v2834
    %v2836 = vrcp.pop %v2813
    %v2837 = vmul.f32 1.0, %v2836
    %v2838 = vtanh.pop %v2753
    %v2839 = vtanh.pop %v2757
    %v2840 = vtanh.pop %v2761
    %v2841 = vtanh.pop %v2765
    %v2842 = vmul.f32 %v2817, %v2253
    %v2843 = vmul.f32 %v2823, %v2254
    %v2844 = vmul.f32 %v2829, %v2255
    %v2845 = vmul.f32 %v2835, %v2256
    %v2846 = vmul.f32 %v2815, %v2838
    %v2847 = vmul.f32 %v2821, %v2839
    %v2848 = vmul.f32 %v2827, %v2840
    %v2849 = vmul.f32 %v2833, %v2841
    %v2850 = vadd.f32 %v2842, %v2846
    %v2851 = vadd.f32 %v2843, %v2847
    %v2852 = vadd.f32 %v2844, %v2848
    %v2853 = vadd.f32 %v2845, %v2849
    %v2854 = vtanh.pop %v2850
    %v2855 = vtanh.pop %v2851
    %v2856 = vtanh.pop %v2852
    %v2857 = vtanh.pop %v2853
    %v2858 = vmul.f32 %v2819, %v2854
    %v2859 = vmul.f32 %v2825, %v2855
    %v2860 = vmul.f32 %v2831, %v2856
    %v2861 = vmul.f32 %v2837, %v2857
    %s2862 = scalar_lea.vmem [#allocation2], 384
    %v2863 = vld [vmem:[%s2862] sm:$0xff]
    %v2864 = vld [vmem:[%s2862 + $0x8] sm:$0xff]
    %v2865 = vld [vmem:[%s2862 + $0x10] sm:$0xff]
    %v2866 = vld [vmem:[%s2862 + $0x18] sm:$0xff]
    %v2867 = vld [vmem:[%s2862 + $0x20] sm:$0xff]
    %v2868 = vld [vmem:[%s2862 + $0x28] sm:$0xff]
    %v2869 = vld [vmem:[%s2862 + $0x30] sm:$0xff]
    %v2870 = vld [vmem:[%s2862 + $0x38] sm:$0xff]
    %v2871 = vld [vmem:[%s2862 + $0x40] sm:$0xff]
    %v2872 = vld [vmem:[%s2862 + $0x48] sm:$0xff]
    %v2873 = vld [vmem:[%s2862 + $0x50] sm:$0xff]
    %v2874 = vld [vmem:[%s2862 + $0x58] sm:$0xff]
    %v2875 = vld [vmem:[%s2862 + $0x60] sm:$0xff]
    %v2876 = vld [vmem:[%s2862 + $0x68] sm:$0xff]
    %v2877 = vld [vmem:[%s2862 + $0x70] sm:$0xff]
    %v2878 = vld [vmem:[%s2862 + $0x78] sm:$0xff]
    %2879 = vmatprep.subr.mxu0 %v859
    %2880 = vmatpush1.msra.mxu0 %v858
    %2881 = vmatprep.subr.mxu0 %v863
    %2882 = vmatpush1.msra.mxu0 %v862
    %2883 = vmatprep.subr.mxu0 %v867
    %2884 = vmatpush1.msra.mxu0 %v866
    %2885 = vmatprep.subr.mxu0 %v871
    %2886 = vmatpush1.msra.mxu0 %v870
    %2887 = vmatprep.subr.mxu0 %v875
    %2888 = vmatpush1.msra.mxu0 %v874
    %2889 = vmatprep.subr.mxu0 %v879
    %2890 = vmatpush1.msra.mxu0 %v878
    %2891 = vmatprep.subr.mxu0 %v883
    %2892 = vmatpush1.msra.mxu0 %v882
    %2893 = vmatprep.subr.mxu0 %v887
    %2894 = vmatpush1.msra.mxu0 %v886
    %2895 = vmatprep.subr.mxu0 %v891
    %2896 = vmatpush1.msra.mxu0 %v890
    %2897 = vmatprep.subr.mxu0 %v895
    %2898 = vmatpush1.msra.mxu0 %v894
    %2899 = vmatprep.subr.mxu0 %v899
    %2900 = vmatpush1.msra.mxu0 %v898
    %2901 = vmatprep.subr.mxu0 %v903
    %2902 = vmatpush1.msra.mxu0 %v902
    %2903 = vmatprep.subr.mxu0 %v907
    %2904 = vmatpush1.msra.mxu0 %v906
    %2905 = vmatprep.subr.mxu0 %v911
    %2906 = vmatpush1.msra.mxu0 %v910
    %2907 = vmatprep.subr.mxu0 %v915
    %2908 = vmatpush1.msra.mxu0 %v914
    %2909 = vmatprep.subr.mxu0 %v919
    %2910 = vmatpush1.msra.mxu0 %v918
    %2911 = vmatprep.subr.mxu0 0.0
    %2912 = vmatpush1.msra.mxu0 0.0
    %2913 = vmatprep.subr.mxu0 0.0
    %2914 = vmatpush1.msra.mxu0 0.0
    %2915 = vmatprep.subr.mxu0 0.0
    %2916 = vmatpush1.msra.mxu0 0.0
    %2917 = vmatprep.subr.mxu0 0.0
    %2918 = vmatpush1.msra.mxu0 0.0
    %2919 = vmatprep.subr.mxu0 0.0
    %2920 = vmatpush1.msra.mxu0 0.0
    %2921 = vmatprep.subr.mxu0 0.0
    %2922 = vmatpush1.msra.mxu0 0.0
    %2923 = vmatprep.subr.mxu0 0.0
    %2924 = vmatpush1.msra.mxu0 0.0
    %2925 = vmatprep.subr.mxu0 0.0
    %2926 = vmatpush1.msra.mxu0 0.0
    %2927 = vmatprep.subr.mxu0 0.0
    %2928 = vmatpush1.msra.mxu0 0.0
    %2929 = vmatprep.subr.mxu0 0.0
    %2930 = vmatpush1.msra.mxu0 0.0
    %2931 = vmatprep.subr.mxu0 0.0
    %2932 = vmatpush1.msra.mxu0 0.0
    %2933 = vmatprep.subr.mxu0 0.0
    %2934 = vmatpush1.msra.mxu0 0.0
    %2935 = vmatprep.subr.mxu0 0.0
    %2936 = vmatpush1.msra.mxu0 0.0
    %2937 = vmatprep.subr.mxu0 0.0
    %2938 = vmatpush1.msra.mxu0 0.0
    %2939 = vmatprep.subr.mxu0 0.0
    %2940 = vmatpush1.msra.mxu0 0.0
    %2941 = vmatprep.subr.mxu0 0.0
    %2942 = vmatpush1.msra.mxu0 0.0
    %2943 = vmatprep.mubr.f32.mxu0 0.0
    %2944 = vmatmul.mubr.f32.gmra.mrb[0].mxu0 %v2568
    %v2945 = vpop.f32.mrb[0].mxu0
    %v2946 = vadd.f32 0.0, %v2945
    %v2947 = vpop.f32.mrb[0].mxu0
    %v2948 = vadd.f32 0.0, %v2947
    %2949 = vmatprep.mubr.f32.mxu0 0.0
    %2950 = vmatmul.mubr.f32.gmra.mrb[0].mxu0 %v2569
    %v2951 = vpop.f32.mrb[0].mxu0
    %v2952 = vadd.f32 0.0, %v2951
    %v2953 = vpop.f32.mrb[0].mxu0
    %v2954 = vadd.f32 0.0, %v2953
    %2955 = vmatprep.mubr.f32.mxu0 0.0
    %2956 = vmatmul.mubr.f32.gmra.mrb[0].mxu0 %v2570
    %v2957 = vpop.f32.mrb[0].mxu0
    %v2958 = vadd.f32 0.0, %v2957
    %v2959 = vpop.f32.mrb[0].mxu0
    %v2960 = vadd.f32 0.0, %v2959
    %2961 = vmatprep.mubr.f32.mxu0 0.0
    %2962 = vmatmul.mubr.f32.gmra.mrb[0].mxu0 %v2571
    %v2963 = vpop.f32.mrb[0].mxu0
    %v2964 = vadd.f32 0.0, %v2963
    %v2965 = vpop.f32.mrb[0].mxu0
    %v2966 = vadd.f32 0.0, %v2965
    %2967 = vdwg.mxu0
    %2968 = vmatprep.subr.mxu0 %v861
    %2969 = vmatpush1.msra.mxu0 %v860
    %2970 = vmatprep.subr.mxu0 %v865
    %2971 = vmatpush1.msra.mxu0 %v864
    %2972 = vmatprep.subr.mxu0 %v869
    %2973 = vmatpush1.msra.mxu0 %v868
    %2974 = vmatprep.subr.mxu0 %v873
    %2975 = vmatpush1.msra.mxu0 %v872
    %2976 = vmatprep.subr.mxu0 %v877
    %2977 = vmatpush1.msra.mxu0 %v876
    %2978 = vmatprep.subr.mxu0 %v881
    %2979 = vmatpush1.msra.mxu0 %v880
    %2980 = vmatprep.subr.mxu0 %v885
    %2981 = vmatpush1.msra.mxu0 %v884
    %2982 = vmatprep.subr.mxu0 %v889
    %2983 = vmatpush1.msra.mxu0 %v888
    %2984 = vmatprep.subr.mxu0 %v893
    %2985 = vmatpush1.msra.mxu0 %v892
    %2986 = vmatprep.subr.mxu0 %v897
    %2987 = vmatpush1.msra.mxu0 %v896
    %2988 = vmatprep.subr.mxu0 %v901
    %2989 = vmatpush1.msra.mxu0 %v900
    %2990 = vmatprep.subr.mxu0 %v905
    %2991 = vmatpush1.msra.mxu0 %v904
    %2992 = vmatprep.subr.mxu0 %v909
    %2993 = vmatpush1.msra.mxu0 %v908
    %2994 = vmatprep.subr.mxu0 %v913
    %2995 = vmatpush1.msra.mxu0 %v912
    %2996 = vmatprep.subr.mxu0 %v917
    %2997 = vmatpush1.msra.mxu0 %v916
    %2998 = vmatprep.subr.mxu0 %v921
    %2999 = vmatpush1.msra.mxu0 %v920
    %3000 = vmatprep.subr.mxu0 0.0
    %3001 = vmatpush1.msra.mxu0 0.0
    %3002 = vmatprep.subr.mxu0 0.0
    %3003 = vmatpush1.msra.mxu0 0.0
    %3004 = vmatprep.subr.mxu0 0.0
    %3005 = vmatpush1.msra.mxu0 0.0
    %3006 = vmatprep.subr.mxu0 0.0
    %3007 = vmatpush1.msra.mxu0 0.0
    %3008 = vmatprep.subr.mxu0 0.0
    %3009 = vmatpush1.msra.mxu0 0.0
    %3010 = vmatprep.subr.mxu0 0.0
    %3011 = vmatpush1.msra.mxu0 0.0
    %3012 = vmatprep.subr.mxu0 0.0
    %3013 = vmatpush1.msra.mxu0 0.0
    %3014 = vmatprep.subr.mxu0 0.0
    %3015 = vmatpush1.msra.mxu0 0.0
    %3016 = vmatprep.subr.mxu0 0.0
    %3017 = vmatpush1.msra.mxu0 0.0
    %3018 = vmatprep.subr.mxu0 0.0
    %3019 = vmatpush1.msra.mxu0 0.0
    %3020 = vmatprep.subr.mxu0 0.0
    %3021 = vmatpush1.msra.mxu0 0.0
    %3022 = vmatprep.subr.mxu0 0.0
    %3023 = vmatpush1.msra.mxu0 0.0
    %3024 = vmatprep.subr.mxu0 0.0
    %3025 = vmatpush1.msra.mxu0 0.0
    %3026 = vmatprep.subr.mxu0 0.0
    %3027 = vmatpush1.msra.mxu0 0.0
    %3028 = vmatprep.subr.mxu0 0.0
    %3029 = vmatpush1.msra.mxu0 0.0
    %3030 = vmatprep.subr.mxu0 0.0
    %3031 = vmatpush1.msra.mxu0 0.0
    %3032 = vmatprep.mubr.f32.mxu0 0.0
    %3033 = vmatmul.mubr.f32.gmra.mrb[0].mxu0 %v2568
    %v3034 = vpop.f32.mrb[0].mxu0
    %v3035 = vadd.f32 0.0, %v3034
    %v3036 = vpop.f32.mrb[0].mxu0
    %v3037 = vadd.f32 0.0, %v3036
    %3038 = vmatprep.mubr.f32.mxu0 0.0
    %3039 = vmatmul.mubr.f32.gmra.mrb[0].mxu0 %v2569
    %v3040 = vpop.f32.mrb[0].mxu0
    %v3041 = vadd.f32 0.0, %v3040
    %v3042 = vpop.f32.mrb[0].mxu0
    %v3043 = vadd.f32 0.0, %v3042
    %3044 = vmatprep.mubr.f32.mxu0 0.0
    %3045 = vmatmul.mubr.f32.gmra.mrb[0].mxu0 %v2570
    %v3046 = vpop.f32.mrb[0].mxu0
    %v3047 = vadd.f32 0.0, %v3046
    %v3048 = vpop.f32.mrb[0].mxu0
    %v3049 = vadd.f32 0.0, %v3048
    %3050 = vmatprep.mubr.f32.mxu0 0.0
    %3051 = vmatmul.mubr.f32.gmra.mrb[0].mxu0 %v2571
    %v3052 = vpop.f32.mrb[0].mxu0
    %v3053 = vadd.f32 0.0, %v3052
    %v3054 = vpop.f32.mrb[0].mxu0
    %v3055 = vadd.f32 0.0, %v3054
    %3056 = vdwg.mxu0
    %v3057 = vadd.f32 %v2863, %v2946
    %v3058 = vadd.f32 %v2864, %v2948
    %v3059 = vadd.f32 %v2865, %v3035
    %v3060 = vadd.f32 %v2866, %v3037
    %v3061 = vadd.f32 %v2867, %v2952
    %v3062 = vadd.f32 %v2868, %v2954
    %v3063 = vadd.f32 %v2869, %v3041
    %v3064 = vadd.f32 %v2870, %v3043
    %v3065 = vadd.f32 %v2871, %v2958
    %v3066 = vadd.f32 %v2872, %v2960
    %v3067 = vadd.f32 %v2873, %v3047
    %v3068 = vadd.f32 %v2874, %v3049
    %v3069 = vadd.f32 %v2875, %v2964
    %v3070 = vadd.f32 %v2876, %v2966
    %v3071 = vadd.f32 %v2877, %v3053
    %v3072 = vadd.f32 %v2878, %v3055
    %v3073 = vxor.u32 %v3057, 2147483648
    %v3074 = vxor.u32 %v3058, 2147483648
    %v3075 = vxor.u32 %v3059, 2147483648
    %v3076 = vxor.u32 %v3061, 2147483648
    %v3077 = vxor.u32 %v3062, 2147483648
    %v3078 = vxor.u32 %v3063, 2147483648
    %v3079 = vxor.u32 %v3065, 2147483648
    %v3080 = vxor.u32 %v3066, 2147483648
    %v3081 = vxor.u32 %v3067, 2147483648
    %v3082 = vxor.u32 %v3069, 2147483648
    %v3083 = vxor.u32 %v3070, 2147483648
    %v3084 = vxor.u32 %v3071, 2147483648
    %v3085 = vmul.f32 %v3073, 1.442695
    %v3086 = vpow.pop %v3085
    %v3087 = vmul.f32 %v3074, 1.442695
    %v3088 = vpow.pop %v3087
    %v3089 = vmul.f32 %v3075, 1.442695
    %v3090 = vpow.pop %v3089
    %v3091 = vmul.f32 %v3076, 1.442695
    %v3092 = vpow.pop %v3091
    %v3093 = vmul.f32 %v3077, 1.442695
    %v3094 = vpow.pop %v3093
    %v3095 = vmul.f32 %v3078, 1.442695
    %v3096 = vpow.pop %v3095
    %v3097 = vmul.f32 %v3079, 1.442695
    %v3098 = vpow.pop %v3097
    %v3099 = vmul.f32 %v3080, 1.442695
    %v3100 = vpow.pop %v3099
    %v3101 = vmul.f32 %v3081, 1.442695
    %v3102 = vpow.pop %v3101
    %v3103 = vmul.f32 %v3082, 1.442695
    %v3104 = vpow.pop %v3103
    %v3105 = vmul.f32 %v3083, 1.442695
    %v3106 = vpow.pop %v3105
    %v3107 = vmul.f32 %v3084, 1.442695
    %v3108 = vpow.pop %v3107
    %v3109 = vadd.f32 %v3086, 1.0
    %v3110 = vadd.f32 %v3088, 1.0
    %v3111 = vadd.f32 %v3090, 1.0
    %v3112 = vadd.f32 %v3092, 1.0
    %v3113 = vadd.f32 %v3094, 1.0
    %v3114 = vadd.f32 %v3096, 1.0
    %v3115 = vadd.f32 %v3098, 1.0
    %v3116 = vadd.f32 %v3100, 1.0
    %v3117 = vadd.f32 %v3102, 1.0
    %v3118 = vadd.f32 %v3104, 1.0
    %v3119 = vadd.f32 %v3106, 1.0
    %v3120 = vadd.f32 %v3108, 1.0
    %v3121 = vrcp.pop %v3109
    %v3122 = vmul.f32 1.0, %v3121
    %v3123 = vrcp.pop %v3110
    %v3124 = vmul.f32 1.0, %v3123
    %v3125 = vrcp.pop %v3111
    %v3126 = vmul.f32 1.0, %v3125
    %v3127 = vrcp.pop %v3112
    %v3128 = vmul.f32 1.0, %v3127
    %v3129 = vrcp.pop %v3113
    %v3130 = vmul.f32 1.0, %v3129
    %v3131 = vrcp.pop %v3114
    %v3132 = vmul.f32 1.0, %v3131
    %v3133 = vrcp.pop %v3115
    %v3134 = vmul.f32 1.0, %v3133
    %v3135 = vrcp.pop %v3116
    %v3136 = vmul.f32 1.0, %v3135
    %v3137 = vrcp.pop %v3117
    %v3138 = vmul.f32 1.0, %v3137
    %v3139 = vrcp.pop %v3118
    %v3140 = vmul.f32 1.0, %v3139
    %v3141 = vrcp.pop %v3119
    %v3142 = vmul.f32 1.0, %v3141
    %v3143 = vrcp.pop %v3120
    %v3144 = vmul.f32 1.0, %v3143
    %v3145 = vtanh.pop %v3060
    %v3146 = vtanh.pop %v3064
    %v3147 = vtanh.pop %v3068
    %v3148 = vtanh.pop %v3072
    %v3149 = vmul.f32 %v3124, %v2560
    %v3150 = vmul.f32 %v3130, %v2561
    %v3151 = vmul.f32 %v3136, %v2562
    %v3152 = vmul.f32 %v3142, %v2563
    %v3153 = vmul.f32 %v3122, %v3145
    %v3154 = vmul.f32 %v3128, %v3146
    %v3155 = vmul.f32 %v3134, %v3147
    %v3156 = vmul.f32 %v3140, %v3148
    %v3157 = vadd.f32 %v3149, %v3153
    %v3158 = vadd.f32 %v3150, %v3154
    %v3159 = vadd.f32 %v3151, %v3155
    %v3160 = vadd.f32 %v3152, %v3156
    %v3161 = vtanh.pop %v3157
    %v3162 = vtanh.pop %v3158
    %v3163 = vtanh.pop %v3159
    %v3164 = vtanh.pop %v3160
    %v3165 = vmul.f32 %v3126, %v3161
    %v3166 = vmul.f32 %v3132, %v3162
    %v3167 = vmul.f32 %v3138, %v3163
    %v3168 = vmul.f32 %v3144, %v3164
    %3169 = vmatprep.subr.mxu0 %v923
    %3170 = vmatpush1.msra.mxu0 %v922
    %3171 = vmatprep.subr.mxu0 %v927
    %3172 = vmatpush1.msra.mxu0 %v926
    %3173 = vmatprep.subr.mxu0 %v931
    %3174 = vmatpush1.msra.mxu0 %v930
    %3175 = vmatprep.subr.mxu0 %v935
    %3176 = vmatpush1.msra.mxu0 %v934
    %3177 = vmatprep.subr.mxu0 %v939
    %3178 = vmatpush1.msra.mxu0 %v938
    %3179 = vmatprep.subr.mxu0 %v943
    %3180 = vmatpush1.msra.mxu0 %v942
    %3181 = vmatprep.subr.mxu0 %v947
    %3182 = vmatpush1.msra.mxu0 %v946
    %3183 = vmatprep.subr.mxu0 %v951
    %3184 = vmatpush1.msra.mxu0 %v950
    %3185 = vmatprep.subr.mxu0 %v955
    %3186 = vmatpush1.msra.mxu0 %v954
    %3187 = vmatprep.subr.mxu0 %v959
    %3188 = vmatpush1.msra.mxu0 %v958
    %3189 = vmatprep.subr.mxu0 %v963
    %3190 = vmatpush1.msra.mxu0 %v962
    %3191 = vmatprep.subr.mxu0 %v967
    %3192 = vmatpush1.msra.mxu0 %v966
    %3193 = vmatprep.subr.mxu0 %v971
    %3194 = vmatpush1.msra.mxu0 %v970
    %3195 = vmatprep.subr.mxu0 %v975
    %3196 = vmatpush1.msra.mxu0 %v974
    %3197 = vmatprep.subr.mxu0 %v979
    %3198 = vmatpush1.msra.mxu0 %v978
    %3199 = vmatprep.subr.mxu0 %v983
    %3200 = vmatpush1.msra.mxu0 %v982
    %3201 = vmatprep.subr.mxu0 %v987
    %3202 = vmatpush1.msra.mxu0 %v986
    %3203 = vmatprep.subr.mxu0 %v991
    %3204 = vmatpush1.msra.mxu0 %v990
    %3205 = vmatprep.subr.mxu0 %v995
    %3206 = vmatpush1.msra.mxu0 %v994
    %3207 = vmatprep.subr.mxu0 %v999
    %3208 = vmatpush1.msra.mxu0 %v998
    %3209 = vmatprep.subr.mxu0 %v1003
    %3210 = vmatpush1.msra.mxu0 %v1002
    %3211 = vmatprep.subr.mxu0 %v1007
    %3212 = vmatpush1.msra.mxu0 %v1006
    %3213 = vmatprep.subr.mxu0 %v1011
    %3214 = vmatpush1.msra.mxu0 %v1010
    %3215 = vmatprep.subr.mxu0 %v1015
    %3216 = vmatpush1.msra.mxu0 %v1014
    %3217 = vmatprep.subr.mxu0 %v1019
    %3218 = vmatpush1.msra.mxu0 %v1018
    %3219 = vmatprep.subr.mxu0 %v1023
    %3220 = vmatpush1.msra.mxu0 %v1022
    %3221 = vmatprep.subr.mxu0 %v1027
    %3222 = vmatpush1.msra.mxu0 %v1026
    %3223 = vmatprep.subr.mxu0 %v1031
    %3224 = vmatpush1.msra.mxu0 %v1030
    %3225 = vmatprep.subr.mxu0 %v1035
    %3226 = vmatpush1.msra.mxu0 %v1034
    %3227 = vmatprep.subr.mxu0 %v1039
    %3228 = vmatpush1.msra.mxu0 %v1038
    %3229 = vmatprep.subr.mxu0 %v1043
    %3230 = vmatpush1.msra.mxu0 %v1042
    %3231 = vmatprep.subr.mxu0 %v1047
    %3232 = vmatpush1.msra.mxu0 %v1046
    %3233 = vmatprep.mubr.f32.mxu0 %v2858
    %3234 = vmatmul.mubr.f32.gmra.mrb[0].mxu0 %v3165
    %v3235 = vpop.f32.mrb[0].mxu0
    %v3236 = vadd.f32 0.0, %v3235
    %v3237 = vpop.f32.mrb[0].mxu0
    %v3238 = vadd.f32 0.0, %v3237
    %3239 = vmatprep.mubr.f32.mxu0 %v2859
    %3240 = vmatmul.mubr.f32.gmra.mrb[0].mxu0 %v3166
    %v3241 = vpop.f32.mrb[0].mxu0
    %v3242 = vadd.f32 0.0, %v3241
    %v3243 = vpop.f32.mrb[0].mxu0
    %v3244 = vadd.f32 0.0, %v3243
    %3245 = vmatprep.mubr.f32.mxu0 %v2860
    %3246 = vmatmul.mubr.f32.gmra.mrb[0].mxu0 %v3167
    %v3247 = vpop.f32.mrb[0].mxu0
    %v3248 = vadd.f32 0.0, %v3247
    %v3249 = vpop.f32.mrb[0].mxu0
    %v3250 = vadd.f32 0.0, %v3249
    %3251 = vmatprep.mubr.f32.mxu0 %v2861
    %3252 = vmatmul.mubr.f32.gmra.mrb[0].mxu0 %v3168
    %v3253 = vpop.f32.mrb[0].mxu0
    %v3254 = vadd.f32 0.0, %v3253
    %v3255 = vpop.f32.mrb[0].mxu0
    %v3256 = vadd.f32 0.0, %v3255
    %3257 = vdwg.mxu0
    %3258 = vmatprep.subr.mxu0 %v925
    %3259 = vmatpush1.msra.mxu0 %v924
    %3260 = vmatprep.subr.mxu0 %v929
    %3261 = vmatpush1.msra.mxu0 %v928
    %3262 = vmatprep.subr.mxu0 %v933
    %3263 = vmatpush1.msra.mxu0 %v932
    %3264 = vmatprep.subr.mxu0 %v937
    %3265 = vmatpush1.msra.mxu0 %v936
    %3266 = vmatprep.subr.mxu0 %v941
    %3267 = vmatpush1.msra.mxu0 %v940
    %3268 = vmatprep.subr.mxu0 %v945
    %3269 = vmatpush1.msra.mxu0 %v944
    %3270 = vmatprep.subr.mxu0 %v949
    %3271 = vmatpush1.msra.mxu0 %v948
    %3272 = vmatprep.subr.mxu0 %v953
    %3273 = vmatpush1.msra.mxu0 %v952
    %3274 = vmatprep.subr.mxu0 %v957
    %3275 = vmatpush1.msra.mxu0 %v956
    %3276 = vmatprep.subr.mxu0 %v961
    %3277 = vmatpush1.msra.mxu0 %v960
    %3278 = vmatprep.subr.mxu0 %v965
    %3279 = vmatpush1.msra.mxu0 %v964
    %3280 = vmatprep.subr.mxu0 %v969
    %3281 = vmatpush1.msra.mxu0 %v968
    %3282 = vmatprep.subr.mxu0 %v973
    %3283 = vmatpush1.msra.mxu0 %v972
    %3284 = vmatprep.subr.mxu0 %v977
    %3285 = vmatpush1.msra.mxu0 %v976
    %3286 = vmatprep.subr.mxu0 %v981
    %3287 = vmatpush1.msra.mxu0 %v980
    %3288 = vmatprep.subr.mxu0 %v985
    %3289 = vmatpush1.msra.mxu0 %v984
    %3290 = vmatprep.subr.mxu0 %v989
    %3291 = vmatpush1.msra.mxu0 %v988
    %3292 = vmatprep.subr.mxu0 %v993
    %3293 = vmatpush1.msra.mxu0 %v992
    %3294 = vmatprep.subr.mxu0 %v997
    %3295 = vmatpush1.msra.mxu0 %v996
    %3296 = vmatprep.subr.mxu0 %v1001
    %3297 = vmatpush1.msra.mxu0 %v1000
    %3298 = vmatprep.subr.mxu0 %v1005
    %3299 = vmatpush1.msra.mxu0 %v1004
    %3300 = vmatprep.subr.mxu0 %v1009
    %3301 = vmatpush1.msra.mxu0 %v1008
    %3302 = vmatprep.subr.mxu0 %v1013
    %3303 = vmatpush1.msra.mxu0 %v1012
    %3304 = vmatprep.subr.mxu0 %v1017
    %3305 = vmatpush1.msra.mxu0 %v1016
    %3306 = vmatprep.subr.mxu0 %v1021
    %3307 = vmatpush1.msra.mxu0 %v1020
    %3308 = vmatprep.subr.mxu0 %v1025
    %3309 = vmatpush1.msra.mxu0 %v1024
    %3310 = vmatprep.subr.mxu0 %v1029
    %3311 = vmatpush1.msra.mxu0 %v1028
    %3312 = vmatprep.subr.mxu0 %v1033
    %3313 = vmatpush1.msra.mxu0 %v1032
    %3314 = vmatprep.subr.mxu0 %v1037
    %3315 = vmatpush1.msra.mxu0 %v1036
    %3316 = vmatprep.subr.mxu0 %v1041
    %3317 = vmatpush1.msra.mxu0 %v1040
    %3318 = vmatprep.subr.mxu0 %v1045
    %3319 = vmatpush1.msra.mxu0 %v1044
    %3320 = vmatprep.subr.mxu0 %v1049
    %3321 = vmatpush1.msra.mxu0 %v1048
    %3322 = vmatprep.mubr.f32.mxu0 %v2858
    %3323 = vmatmul.mubr.f32.gmra.mrb[0].mxu0 %v3165
    %v3324 = vpop.f32.mrb[0].mxu0
    %v3325 = vadd.f32 0.0, %v3324
    %v3326 = vpop.f32.mrb[0].mxu0
    %v3327 = vadd.f32 0.0, %v3326
    %3328 = vmatprep.mubr.f32.mxu0 %v2859
    %3329 = vmatmul.mubr.f32.gmra.mrb[0].mxu0 %v3166
    %v3330 = vpop.f32.mrb[0].mxu0
    %v3331 = vadd.f32 0.0, %v3330
    %v3332 = vpop.f32.mrb[0].mxu0
    %v3333 = vadd.f32 0.0, %v3332
    %3334 = vmatprep.mubr.f32.mxu0 %v2860
    %3335 = vmatmul.mubr.f32.gmra.mrb[0].mxu0 %v3167
    %v3336 = vpop.f32.mrb[0].mxu0
    %v3337 = vadd.f32 0.0, %v3336
    %v3338 = vpop.f32.mrb[0].mxu0
    %v3339 = vadd.f32 0.0, %v3338
    %3340 = vmatprep.mubr.f32.mxu0 %v2861
    %3341 = vmatmul.mubr.f32.gmra.mrb[0].mxu0 %v3168
    %v3342 = vpop.f32.mrb[0].mxu0
    %v3343 = vadd.f32 0.0, %v3342
    %v3344 = vpop.f32.mrb[0].mxu0
    %v3345 = vadd.f32 0.0, %v3344
    %3346 = vdwg.mxu0
    %v3347 = vadd.f32 %v1539, %v3236
    %v3348 = vadd.f32 %v1543, %v3238
    %v3349 = vadd.f32 %v1547, %v3325
    %v3350 = vadd.f32 %v1551, %v3327
    %v3351 = vadd.f32 %v1539, %v3242
    %v3352 = vadd.f32 %v1543, %v3244
    %v3353 = vadd.f32 %v1547, %v3331
    %v3354 = vadd.f32 %v1551, %v3333
    %v3355 = vadd.f32 %v1539, %v3248
    %v3356 = vadd.f32 %v1543, %v3250
    %v3357 = vadd.f32 %v1547, %v3337
    %v3358 = vadd.f32 %v1551, %v3339
    %v3359 = vadd.f32 %v1539, %v3254
    %v3360 = vadd.f32 %v1543, %v3256
    %v3361 = vadd.f32 %v1547, %v3343
    %v3362 = vadd.f32 %v1551, %v3345
    %v3363 = vxor.u32 %v3347, 2147483648
    %v3364 = vxor.u32 %v3348, 2147483648
    %v3365 = vxor.u32 %v3349, 2147483648
    %v3366 = vxor.u32 %v3351, 2147483648
    %v3367 = vxor.u32 %v3352, 2147483648
    %v3368 = vxor.u32 %v3353, 2147483648
    %v3369 = vxor.u32 %v3355, 2147483648
    %v3370 = vxor.u32 %v3356, 2147483648
    %v3371 = vxor.u32 %v3357, 2147483648
    %v3372 = vxor.u32 %v3359, 2147483648
    %v3373 = vxor.u32 %v3360, 2147483648
    %v3374 = vxor.u32 %v3361, 2147483648
    %v3375 = vmul.f32 %v3363, 1.442695
    %v3376 = vpow.pop %v3375
    %v3377 = vmul.f32 %v3364, 1.442695
    %v3378 = vpow.pop %v3377
    %v3379 = vmul.f32 %v3365, 1.442695
    %v3380 = vpow.pop %v3379
    %v3381 = vmul.f32 %v3366, 1.442695
    %v3382 = vpow.pop %v3381
    %v3383 = vmul.f32 %v3367, 1.442695
    %v3384 = vpow.pop %v3383
    %v3385 = vmul.f32 %v3368, 1.442695
    %v3386 = vpow.pop %v3385
    %v3387 = vmul.f32 %v3369, 1.442695
    %v3388 = vpow.pop %v3387
    %v3389 = vmul.f32 %v3370, 1.442695
    %v3390 = vpow.pop %v3389
    %v3391 = vmul.f32 %v3371, 1.442695
    %v3392 = vpow.pop %v3391
    %v3393 = vmul.f32 %v3372, 1.442695
    %v3394 = vpow.pop %v3393
    %v3395 = vmul.f32 %v3373, 1.442695
    %v3396 = vpow.pop %v3395
    %v3397 = vmul.f32 %v3374, 1.442695
    %v3398 = vpow.pop %v3397
    %v3399 = vadd.f32 %v3376, 1.0
    %v3400 = vadd.f32 %v3378, 1.0
    %v3401 = vadd.f32 %v3380, 1.0
    %v3402 = vadd.f32 %v3382, 1.0
    %v3403 = vadd.f32 %v3384, 1.0
    %v3404 = vadd.f32 %v3386, 1.0
    %v3405 = vadd.f32 %v3388, 1.0
    %v3406 = vadd.f32 %v3390, 1.0
    %v3407 = vadd.f32 %v3392, 1.0
    %v3408 = vadd.f32 %v3394, 1.0
    %v3409 = vadd.f32 %v3396, 1.0
    %v3410 = vadd.f32 %v3398, 1.0
    %v3411 = vrcp.pop %v3399
    %v3412 = vmul.f32 1.0, %v3411
    %v3413 = vrcp.pop %v3400
    %v3414 = vmul.f32 1.0, %v3413
    %v3415 = vrcp.pop %v3401
    %v3416 = vmul.f32 1.0, %v3415
    %v3417 = vrcp.pop %v3402
    %v3418 = vmul.f32 1.0, %v3417
    %v3419 = vrcp.pop %v3403
    %v3420 = vmul.f32 1.0, %v3419
    %v3421 = vrcp.pop %v3404
    %v3422 = vmul.f32 1.0, %v3421
    %v3423 = vrcp.pop %v3405
    %v3424 = vmul.f32 1.0, %v3423
    %v3425 = vrcp.pop %v3406
    %v3426 = vmul.f32 1.0, %v3425
    %v3427 = vrcp.pop %v3407
    %v3428 = vmul.f32 1.0, %v3427
    %v3429 = vrcp.pop %v3408
    %v3430 = vmul.f32 1.0, %v3429
    %v3431 = vrcp.pop %v3409
    %v3432 = vmul.f32 1.0, %v3431
    %v3433 = vrcp.pop %v3410
    %v3434 = vmul.f32 1.0, %v3433
    %v3435 = vtanh.pop %v3350
    %v3436 = vtanh.pop %v3354
    %v3437 = vtanh.pop %v3358
    %v3438 = vtanh.pop %v3362
    %v3439 = vmul.f32 %v3414, %v2850
    %v3440 = vmul.f32 %v3420, %v2851
    %v3441 = vmul.f32 %v3426, %v2852
    %v3442 = vmul.f32 %v3432, %v2853
    %v3443 = vmul.f32 %v3412, %v3435
    %v3444 = vmul.f32 %v3418, %v3436
    %v3445 = vmul.f32 %v3424, %v3437
    %v3446 = vmul.f32 %v3430, %v3438
    %v3447 = vadd.f32 %v3439, %v3443
    %v3448 = vadd.f32 %v3440, %v3444
    %v3449 = vadd.f32 %v3441, %v3445
    %v3450 = vadd.f32 %v3442, %v3446
    %v3451 = vtanh.pop %v3447
    %v3452 = vtanh.pop %v3448
    %v3453 = vtanh.pop %v3449
    %v3454 = vtanh.pop %v3450
    %v3455 = vmul.f32 %v3416, %v3451
    %v3456 = vmul.f32 %v3422, %v3452
    %v3457 = vmul.f32 %v3428, %v3453
    %v3458 = vmul.f32 %v3434, %v3454
    %s3459 = scalar_lea.vmem [#allocation2], 512
    %v3460 = vld [vmem:[%s3459] sm:$0xff]
    %v3461 = vld [vmem:[%s3459 + $0x8] sm:$0xff]
    %v3462 = vld [vmem:[%s3459 + $0x10] sm:$0xff]
    %v3463 = vld [vmem:[%s3459 + $0x18] sm:$0xff]
    %v3464 = vld [vmem:[%s3459 + $0x20] sm:$0xff]
    %v3465 = vld [vmem:[%s3459 + $0x28] sm:$0xff]
    %v3466 = vld [vmem:[%s3459 + $0x30] sm:$0xff]
    %v3467 = vld [vmem:[%s3459 + $0x38] sm:$0xff]
    %v3468 = vld [vmem:[%s3459 + $0x40] sm:$0xff]
    %v3469 = vld [vmem:[%s3459 + $0x48] sm:$0xff]
    %v3470 = vld [vmem:[%s3459 + $0x50] sm:$0xff]
    %v3471 = vld [vmem:[%s3459 + $0x58] sm:$0xff]
    %v3472 = vld [vmem:[%s3459 + $0x60] sm:$0xff]
    %v3473 = vld [vmem:[%s3459 + $0x68] sm:$0xff]
    %v3474 = vld [vmem:[%s3459 + $0x70] sm:$0xff]
    %v3475 = vld [vmem:[%s3459 + $0x78] sm:$0xff]
    %3476 = vmatprep.subr.mxu0 %v859
    %3477 = vmatpush1.msra.mxu0 %v858
    %3478 = vmatprep.subr.mxu0 %v863
    %3479 = vmatpush1.msra.mxu0 %v862
    %3480 = vmatprep.subr.mxu0 %v867
    %3481 = vmatpush1.msra.mxu0 %v866
    %3482 = vmatprep.subr.mxu0 %v871
    %3483 = vmatpush1.msra.mxu0 %v870
    %3484 = vmatprep.subr.mxu0 %v875
    %3485 = vmatpush1.msra.mxu0 %v874
    %3486 = vmatprep.subr.mxu0 %v879
    %3487 = vmatpush1.msra.mxu0 %v878
    %3488 = vmatprep.subr.mxu0 %v883
    %3489 = vmatpush1.msra.mxu0 %v882
    %3490 = vmatprep.subr.mxu0 %v887
    %3491 = vmatpush1.msra.mxu0 %v886
    %3492 = vmatprep.subr.mxu0 %v891
    %3493 = vmatpush1.msra.mxu0 %v890
    %3494 = vmatprep.subr.mxu0 %v895
    %3495 = vmatpush1.msra.mxu0 %v894
    %3496 = vmatprep.subr.mxu0 %v899
    %3497 = vmatpush1.msra.mxu0 %v898
    %3498 = vmatprep.subr.mxu0 %v903
    %3499 = vmatpush1.msra.mxu0 %v902
    %3500 = vmatprep.subr.mxu0 %v907
    %3501 = vmatpush1.msra.mxu0 %v906
    %3502 = vmatprep.subr.mxu0 %v911
    %3503 = vmatpush1.msra.mxu0 %v910
    %3504 = vmatprep.subr.mxu0 %v915
    %3505 = vmatpush1.msra.mxu0 %v914
    %3506 = vmatprep.subr.mxu0 %v919
    %3507 = vmatpush1.msra.mxu0 %v918
    %3508 = vmatprep.subr.mxu0 0.0
    %3509 = vmatpush1.msra.mxu0 0.0
    %3510 = vmatprep.subr.mxu0 0.0
    %3511 = vmatpush1.msra.mxu0 0.0
    %3512 = vmatprep.subr.mxu0 0.0
    %3513 = vmatpush1.msra.mxu0 0.0
    %3514 = vmatprep.subr.mxu0 0.0
    %3515 = vmatpush1.msra.mxu0 0.0
    %3516 = vmatprep.subr.mxu0 0.0
    %3517 = vmatpush1.msra.mxu0 0.0
    %3518 = vmatprep.subr.mxu0 0.0
    %3519 = vmatpush1.msra.mxu0 0.0
    %3520 = vmatprep.subr.mxu0 0.0
    %3521 = vmatpush1.msra.mxu0 0.0
    %3522 = vmatprep.subr.mxu0 0.0
    %3523 = vmatpush1.msra.mxu0 0.0
    %3524 = vmatprep.subr.mxu0 0.0
    %3525 = vmatpush1.msra.mxu0 0.0
    %3526 = vmatprep.subr.mxu0 0.0
    %3527 = vmatpush1.msra.mxu0 0.0
    %3528 = vmatprep.subr.mxu0 0.0
    %3529 = vmatpush1.msra.mxu0 0.0
    %3530 = vmatprep.subr.mxu0 0.0
    %3531 = vmatpush1.msra.mxu0 0.0
    %3532 = vmatprep.subr.mxu0 0.0
    %3533 = vmatpush1.msra.mxu0 0.0
    %3534 = vmatprep.subr.mxu0 0.0
    %3535 = vmatpush1.msra.mxu0 0.0
    %3536 = vmatprep.subr.mxu0 0.0
    %3537 = vmatpush1.msra.mxu0 0.0
    %3538 = vmatprep.subr.mxu0 0.0
    %3539 = vmatpush1.msra.mxu0 0.0
    %3540 = vmatprep.mubr.f32.mxu0 0.0
    %3541 = vmatmul.mubr.f32.gmra.mrb[0].mxu0 %v3165
    %v3542 = vpop.f32.mrb[0].mxu0
    %v3543 = vadd.f32 0.0, %v3542
    %v3544 = vpop.f32.mrb[0].mxu0
    %v3545 = vadd.f32 0.0, %v3544
    %3546 = vmatprep.mubr.f32.mxu0 0.0
    %3547 = vmatmul.mubr.f32.gmra.mrb[0].mxu0 %v3166
    %v3548 = vpop.f32.mrb[0].mxu0
    %v3549 = vadd.f32 0.0, %v3548
    %v3550 = vpop.f32.mrb[0].mxu0
    %v3551 = vadd.f32 0.0, %v3550
    %3552 = vmatprep.mubr.f32.mxu0 0.0
    %3553 = vmatmul.mubr.f32.gmra.mrb[0].mxu0 %v3167
    %v3554 = vpop.f32.mrb[0].mxu0
    %v3555 = vadd.f32 0.0, %v3554
    %v3556 = vpop.f32.mrb[0].mxu0
    %v3557 = vadd.f32 0.0, %v3556
    %3558 = vmatprep.mubr.f32.mxu0 0.0
    %3559 = vmatmul.mubr.f32.gmra.mrb[0].mxu0 %v3168
    %v3560 = vpop.f32.mrb[0].mxu0
    %v3561 = vadd.f32 0.0, %v3560
    %v3562 = vpop.f32.mrb[0].mxu0
    %v3563 = vadd.f32 0.0, %v3562
    %3564 = vdwg.mxu0
    %3565 = vmatprep.subr.mxu0 %v861
    %3566 = vmatpush1.msra.mxu0 %v860
    %3567 = vmatprep.subr.mxu0 %v865
    %3568 = vmatpush1.msra.mxu0 %v864
    %3569 = vmatprep.subr.mxu0 %v869
    %3570 = vmatpush1.msra.mxu0 %v868
    %3571 = vmatprep.subr.mxu0 %v873
    %3572 = vmatpush1.msra.mxu0 %v872
    %3573 = vmatprep.subr.mxu0 %v877
    %3574 = vmatpush1.msra.mxu0 %v876
    %3575 = vmatprep.subr.mxu0 %v881
    %3576 = vmatpush1.msra.mxu0 %v880
    %3577 = vmatprep.subr.mxu0 %v885
    %3578 = vmatpush1.msra.mxu0 %v884
    %3579 = vmatprep.subr.mxu0 %v889
    %3580 = vmatpush1.msra.mxu0 %v888
    %3581 = vmatprep.subr.mxu0 %v893
    %3582 = vmatpush1.msra.mxu0 %v892
    %3583 = vmatprep.subr.mxu0 %v897
    %3584 = vmatpush1.msra.mxu0 %v896
    %3585 = vmatprep.subr.mxu0 %v901
    %3586 = vmatpush1.msra.mxu0 %v900
    %3587 = vmatprep.subr.mxu0 %v905
    %3588 = vmatpush1.msra.mxu0 %v904
    %3589 = vmatprep.subr.mxu0 %v909
    %3590 = vmatpush1.msra.mxu0 %v908
    %3591 = vmatprep.subr.mxu0 %v913
    %3592 = vmatpush1.msra.mxu0 %v912
    %3593 = vmatprep.subr.mxu0 %v917
    %3594 = vmatpush1.msra.mxu0 %v916
    %3595 = vmatprep.subr.mxu0 %v921
    %3596 = vmatpush1.msra.mxu0 %v920
    %3597 = vmatprep.subr.mxu0 0.0
    %3598 = vmatpush1.msra.mxu0 0.0
    %3599 = vmatprep.subr.mxu0 0.0
    %3600 = vmatpush1.msra.mxu0 0.0
    %3601 = vmatprep.subr.mxu0 0.0
    %3602 = vmatpush1.msra.mxu0 0.0
    %3603 = vmatprep.subr.mxu0 0.0
    %3604 = vmatpush1.msra.mxu0 0.0
    %3605 = vmatprep.subr.mxu0 0.0
    %3606 = vmatpush1.msra.mxu0 0.0
    %3607 = vmatprep.subr.mxu0 0.0
    %3608 = vmatpush1.msra.mxu0 0.0
    %3609 = vmatprep.subr.mxu0 0.0
    %3610 = vmatpush1.msra.mxu0 0.0
    %3611 = vmatprep.subr.mxu0 0.0
    %3612 = vmatpush1.msra.mxu0 0.0
    %3613 = vmatprep.subr.mxu0 0.0
    %3614 = vmatpush1.msra.mxu0 0.0
    %3615 = vmatprep.subr.mxu0 0.0
    %3616 = vmatpush1.msra.mxu0 0.0
    %3617 = vmatprep.subr.mxu0 0.0
    %3618 = vmatpush1.msra.mxu0 0.0
    %3619 = vmatprep.subr.mxu0 0.0
    %3620 = vmatpush1.msra.mxu0 0.0
    %3621 = vmatprep.subr.mxu0 0.0
    %3622 = vmatpush1.msra.mxu0 0.0
    %3623 = vmatprep.subr.mxu0 0.0
    %3624 = vmatpush1.msra.mxu0 0.0
    %3625 = vmatprep.subr.mxu0 0.0
    %3626 = vmatpush1.msra.mxu0 0.0
    %3627 = vmatprep.subr.mxu0 0.0
    %3628 = vmatpush1.msra.mxu0 0.0
    %3629 = vmatprep.mubr.f32.mxu0 0.0
    %3630 = vmatmul.mubr.f32.gmra.mrb[0].mxu0 %v3165
    %v3631 = vpop.f32.mrb[0].mxu0
    %v3632 = vadd.f32 0.0, %v3631
    %v3633 = vpop.f32.mrb[0].mxu0
    %v3634 = vadd.f32 0.0, %v3633
    %3635 = vmatprep.mubr.f32.mxu0 0.0
    %3636 = vmatmul.mubr.f32.gmra.mrb[0].mxu0 %v3166
    %v3637 = vpop.f32.mrb[0].mxu0
    %v3638 = vadd.f32 0.0, %v3637
    %v3639 = vpop.f32.mrb[0].mxu0
    %v3640 = vadd.f32 0.0, %v3639
    %3641 = vmatprep.mubr.f32.mxu0 0.0
    %3642 = vmatmul.mubr.f32.gmra.mrb[0].mxu0 %v3167
    %v3643 = vpop.f32.mrb[0].mxu0
    %v3644 = vadd.f32 0.0, %v3643
    %v3645 = vpop.f32.mrb[0].mxu0
    %v3646 = vadd.f32 0.0, %v3645
    %3647 = vmatprep.mubr.f32.mxu0 0.0
    %3648 = vmatmul.mubr.f32.gmra.mrb[0].mxu0 %v3168
    %v3649 = vpop.f32.mrb[0].mxu0
    %v3650 = vadd.f32 0.0, %v3649
    %v3651 = vpop.f32.mrb[0].mxu0
    %v3652 = vadd.f32 0.0, %v3651
    %3653 = vdwg.mxu0
    %v3654 = vadd.f32 %v3460, %v3543
    %v3655 = vadd.f32 %v3461, %v3545
    %v3656 = vadd.f32 %v3462, %v3632
    %v3657 = vadd.f32 %v3463, %v3634
    %v3658 = vadd.f32 %v3464, %v3549
    %v3659 = vadd.f32 %v3465, %v3551
    %v3660 = vadd.f32 %v3466, %v3638
    %v3661 = vadd.f32 %v3467, %v3640
    %v3662 = vadd.f32 %v3468, %v3555
    %v3663 = vadd.f32 %v3469, %v3557
    %v3664 = vadd.f32 %v3470, %v3644
    %v3665 = vadd.f32 %v3471, %v3646
    %v3666 = vadd.f32 %v3472, %v3561
    %v3667 = vadd.f32 %v3473, %v3563
    %v3668 = vadd.f32 %v3474, %v3650
    %v3669 = vadd.f32 %v3475, %v3652
    %v3670 = vxor.u32 %v3654, 2147483648
    %v3671 = vxor.u32 %v3655, 2147483648
    %v3672 = vxor.u32 %v3656, 2147483648
    %v3673 = vxor.u32 %v3658, 2147483648
    %v3674 = vxor.u32 %v3659, 2147483648
    %v3675 = vxor.u32 %v3660, 2147483648
    %v3676 = vxor.u32 %v3662, 2147483648
    %v3677 = vxor.u32 %v3663, 2147483648
    %v3678 = vxor.u32 %v3664, 2147483648
    %v3679 = vxor.u32 %v3666, 2147483648
    %v3680 = vxor.u32 %v3667, 2147483648
    %v3681 = vxor.u32 %v3668, 2147483648
    %v3682 = vmul.f32 %v3670, 1.442695
    %v3683 = vpow.pop %v3682
    %v3684 = vmul.f32 %v3671, 1.442695
    %v3685 = vpow.pop %v3684
    %v3686 = vmul.f32 %v3672, 1.442695
    %v3687 = vpow.pop %v3686
    %v3688 = vmul.f32 %v3673, 1.442695
    %v3689 = vpow.pop %v3688
    %v3690 = vmul.f32 %v3674, 1.442695
    %v3691 = vpow.pop %v3690
    %v3692 = vmul.f32 %v3675, 1.442695
    %v3693 = vpow.pop %v3692
    %v3694 = vmul.f32 %v3676, 1.442695
    %v3695 = vpow.pop %v3694
    %v3696 = vmul.f32 %v3677, 1.442695
    %v3697 = vpow.pop %v3696
    %v3698 = vmul.f32 %v3678, 1.442695
    %v3699 = vpow.pop %v3698
    %v3700 = vmul.f32 %v3679, 1.442695
    %v3701 = vpow.pop %v3700
    %v3702 = vmul.f32 %v3680, 1.442695
    %v3703 = vpow.pop %v3702
    %v3704 = vmul.f32 %v3681, 1.442695
    %v3705 = vpow.pop %v3704
    %v3706 = vadd.f32 %v3683, 1.0
    %v3707 = vadd.f32 %v3685, 1.0
    %v3708 = vadd.f32 %v3687, 1.0
    %v3709 = vadd.f32 %v3689, 1.0
    %v3710 = vadd.f32 %v3691, 1.0
    %v3711 = vadd.f32 %v3693, 1.0
    %v3712 = vadd.f32 %v3695, 1.0
    %v3713 = vadd.f32 %v3697, 1.0
    %v3714 = vadd.f32 %v3699, 1.0
    %v3715 = vadd.f32 %v3701, 1.0
    %v3716 = vadd.f32 %v3703, 1.0
    %v3717 = vadd.f32 %v3705, 1.0
    %v3718 = vrcp.pop %v3706
    %v3719 = vmul.f32 1.0, %v3718
    %v3720 = vrcp.pop %v3707
    %v3721 = vmul.f32 1.0, %v3720
    %v3722 = vrcp.pop %v3708
    %v3723 = vmul.f32 1.0, %v3722
    %v3724 = vrcp.pop %v3709
    %v3725 = vmul.f32 1.0, %v3724
    %v3726 = vrcp.pop %v3710
    %v3727 = vmul.f32 1.0, %v3726
    %v3728 = vrcp.pop %v3711
    %v3729 = vmul.f32 1.0, %v3728
    %v3730 = vrcp.pop %v3712
    %v3731 = vmul.f32 1.0, %v3730
    %v3732 = vrcp.pop %v3713
    %v3733 = vmul.f32 1.0, %v3732
    %v3734 = vrcp.pop %v3714
    %v3735 = vmul.f32 1.0, %v3734
    %v3736 = vrcp.pop %v3715
    %v3737 = vmul.f32 1.0, %v3736
    %v3738 = vrcp.pop %v3716
    %v3739 = vmul.f32 1.0, %v3738
    %v3740 = vrcp.pop %v3717
    %v3741 = vmul.f32 1.0, %v3740
    %v3742 = vtanh.pop %v3657
    %v3743 = vtanh.pop %v3661
    %v3744 = vtanh.pop %v3665
    %v3745 = vtanh.pop %v3669
    %v3746 = vmul.f32 %v3721, %v3157
    %v3747 = vmul.f32 %v3727, %v3158
    %v3748 = vmul.f32 %v3733, %v3159
    %v3749 = vmul.f32 %v3739, %v3160
    %v3750 = vmul.f32 %v3719, %v3742
    %v3751 = vmul.f32 %v3725, %v3743
    %v3752 = vmul.f32 %v3731, %v3744
    %v3753 = vmul.f32 %v3737, %v3745
    %v3754 = vadd.f32 %v3746, %v3750
    %v3755 = vadd.f32 %v3747, %v3751
    %v3756 = vadd.f32 %v3748, %v3752
    %v3757 = vadd.f32 %v3749, %v3753
    %v3758 = vtanh.pop %v3754
    %v3759 = vtanh.pop %v3755
    %v3760 = vtanh.pop %v3756
    %v3761 = vtanh.pop %v3757
    %v3762 = vmul.f32 %v3723, %v3758
    %v3763 = vmul.f32 %v3729, %v3759
    %v3764 = vmul.f32 %v3735, %v3760
    %v3765 = vmul.f32 %v3741, %v3761
    %3766 = vmatprep.subr.mxu0 %v923
    %3767 = vmatpush1.msra.mxu0 %v922
    %3768 = vmatprep.subr.mxu0 %v927
    %3769 = vmatpush1.msra.mxu0 %v926
    %3770 = vmatprep.subr.mxu0 %v931
    %3771 = vmatpush1.msra.mxu0 %v930
    %3772 = vmatprep.subr.mxu0 %v935
    %3773 = vmatpush1.msra.mxu0 %v934
    %3774 = vmatprep.subr.mxu0 %v939
    %3775 = vmatpush1.msra.mxu0 %v938
    %3776 = vmatprep.subr.mxu0 %v943
    %3777 = vmatpush1.msra.mxu0 %v942
    %3778 = vmatprep.subr.mxu0 %v947
    %3779 = vmatpush1.msra.mxu0 %v946
    %3780 = vmatprep.subr.mxu0 %v951
    %3781 = vmatpush1.msra.mxu0 %v950
    %3782 = vmatprep.subr.mxu0 %v955
    %3783 = vmatpush1.msra.mxu0 %v954
    %3784 = vmatprep.subr.mxu0 %v959
    %3785 = vmatpush1.msra.mxu0 %v958
    %3786 = vmatprep.subr.mxu0 %v963
    %3787 = vmatpush1.msra.mxu0 %v962
    %3788 = vmatprep.subr.mxu0 %v967
    %3789 = vmatpush1.msra.mxu0 %v966
    %3790 = vmatprep.subr.mxu0 %v971
    %3791 = vmatpush1.msra.mxu0 %v970
    %3792 = vmatprep.subr.mxu0 %v975
    %3793 = vmatpush1.msra.mxu0 %v974
    %3794 = vmatprep.subr.mxu0 %v979
    %3795 = vmatpush1.msra.mxu0 %v978
    %3796 = vmatprep.subr.mxu0 %v983
    %3797 = vmatpush1.msra.mxu0 %v982
    %3798 = vmatprep.subr.mxu0 %v987
    %3799 = vmatpush1.msra.mxu0 %v986
    %3800 = vmatprep.subr.mxu0 %v991
    %3801 = vmatpush1.msra.mxu0 %v990
    %3802 = vmatprep.subr.mxu0 %v995
    %3803 = vmatpush1.msra.mxu0 %v994
    %3804 = vmatprep.subr.mxu0 %v999
    %3805 = vmatpush1.msra.mxu0 %v998
    %3806 = vmatprep.subr.mxu0 %v1003
    %3807 = vmatpush1.msra.mxu0 %v1002
    %3808 = vmatprep.subr.mxu0 %v1007
    %3809 = vmatpush1.msra.mxu0 %v1006
    %3810 = vmatprep.subr.mxu0 %v1011
    %3811 = vmatpush1.msra.mxu0 %v1010
    %3812 = vmatprep.subr.mxu0 %v1015
    %3813 = vmatpush1.msra.mxu0 %v1014
    %3814 = vmatprep.subr.mxu0 %v1019
    %3815 = vmatpush1.msra.mxu0 %v1018
    %3816 = vmatprep.subr.mxu0 %v1023
    %3817 = vmatpush1.msra.mxu0 %v1022
    %3818 = vmatprep.subr.mxu0 %v1027
    %3819 = vmatpush1.msra.mxu0 %v1026
    %3820 = vmatprep.subr.mxu0 %v1031
    %3821 = vmatpush1.msra.mxu0 %v1030
    %3822 = vmatprep.subr.mxu0 %v1035
    %3823 = vmatpush1.msra.mxu0 %v1034
    %3824 = vmatprep.subr.mxu0 %v1039
    %3825 = vmatpush1.msra.mxu0 %v1038
    %3826 = vmatprep.subr.mxu0 %v1043
    %3827 = vmatpush1.msra.mxu0 %v1042
    %3828 = vmatprep.subr.mxu0 %v1047
    %3829 = vmatpush1.msra.mxu0 %v1046
    %3830 = vmatprep.mubr.f32.mxu0 %v3455
    %3831 = vmatmul.mubr.f32.gmra.mrb[0].mxu0 %v3762
    %v3832 = vpop.f32.mrb[0].mxu0
    %v3833 = vadd.f32 0.0, %v3832
    %v3834 = vpop.f32.mrb[0].mxu0
    %v3835 = vadd.f32 0.0, %v3834
    %3836 = vmatprep.mubr.f32.mxu0 %v3456
    %3837 = vmatmul.mubr.f32.gmra.mrb[0].mxu0 %v3763
    %v3838 = vpop.f32.mrb[0].mxu0
    %v3839 = vadd.f32 0.0, %v3838
    %v3840 = vpop.f32.mrb[0].mxu0
    %v3841 = vadd.f32 0.0, %v3840
    %3842 = vmatprep.mubr.f32.mxu0 %v3457
    %3843 = vmatmul.mubr.f32.gmra.mrb[0].mxu0 %v3764
    %v3844 = vpop.f32.mrb[0].mxu0
    %v3845 = vadd.f32 0.0, %v3844
    %v3846 = vpop.f32.mrb[0].mxu0
    %v3847 = vadd.f32 0.0, %v3846
    %3848 = vmatprep.mubr.f32.mxu0 %v3458
    %3849 = vmatmul.mubr.f32.gmra.mrb[0].mxu0 %v3765
    %v3850 = vpop.f32.mrb[0].mxu0
    %v3851 = vadd.f32 0.0, %v3850
    %v3852 = vpop.f32.mrb[0].mxu0
    %v3853 = vadd.f32 0.0, %v3852
    %3854 = vdwg.mxu0
    %3855 = vmatprep.subr.mxu0 %v925
    %3856 = vmatpush1.msra.mxu0 %v924
    %3857 = vmatprep.subr.mxu0 %v929
    %3858 = vmatpush1.msra.mxu0 %v928
    %3859 = vmatprep.subr.mxu0 %v933
    %3860 = vmatpush1.msra.mxu0 %v932
    %3861 = vmatprep.subr.mxu0 %v937
    %3862 = vmatpush1.msra.mxu0 %v936
    %3863 = vmatprep.subr.mxu0 %v941
    %3864 = vmatpush1.msra.mxu0 %v940
    %3865 = vmatprep.subr.mxu0 %v945
    %3866 = vmatpush1.msra.mxu0 %v944
    %3867 = vmatprep.subr.mxu0 %v949
    %3868 = vmatpush1.msra.mxu0 %v948
    %3869 = vmatprep.subr.mxu0 %v953
    %3870 = vmatpush1.msra.mxu0 %v952
    %3871 = vmatprep.subr.mxu0 %v957
    %3872 = vmatpush1.msra.mxu0 %v956
    %3873 = vmatprep.subr.mxu0 %v961
    %3874 = vmatpush1.msra.mxu0 %v960
    %3875 = vmatprep.subr.mxu0 %v965
    %3876 = vmatpush1.msra.mxu0 %v964
    %3877 = vmatprep.subr.mxu0 %v969
    %3878 = vmatpush1.msra.mxu0 %v968
    %3879 = vmatprep.subr.mxu0 %v973
    %3880 = vmatpush1.msra.mxu0 %v972
    %3881 = vmatprep.subr.mxu0 %v977
    %3882 = vmatpush1.msra.mxu0 %v976
    %3883 = vmatprep.subr.mxu0 %v981
    %3884 = vmatpush1.msra.mxu0 %v980
    %3885 = vmatprep.subr.mxu0 %v985
    %3886 = vmatpush1.msra.mxu0 %v984
    %3887 = vmatprep.subr.mxu0 %v989
    %3888 = vmatpush1.msra.mxu0 %v988
    %3889 = vmatprep.subr.mxu0 %v993
    %3890 = vmatpush1.msra.mxu0 %v992
    %3891 = vmatprep.subr.mxu0 %v997
    %3892 = vmatpush1.msra.mxu0 %v996
    %3893 = vmatprep.subr.mxu0 %v1001
    %3894 = vmatpush1.msra.mxu0 %v1000
    %3895 = vmatprep.subr.mxu0 %v1005
    %3896 = vmatpush1.msra.mxu0 %v1004
    %3897 = vmatprep.subr.mxu0 %v1009
    %3898 = vmatpush1.msra.mxu0 %v1008
    %3899 = vmatprep.subr.mxu0 %v1013
    %3900 = vmatpush1.msra.mxu0 %v1012
    %3901 = vmatprep.subr.mxu0 %v1017
    %3902 = vmatpush1.msra.mxu0 %v1016
    %3903 = vmatprep.subr.mxu0 %v1021
    %3904 = vmatpush1.msra.mxu0 %v1020
    %3905 = vmatprep.subr.mxu0 %v1025
    %3906 = vmatpush1.msra.mxu0 %v1024
    %3907 = vmatprep.subr.mxu0 %v1029
    %3908 = vmatpush1.msra.mxu0 %v1028
    %3909 = vmatprep.subr.mxu0 %v1033
    %3910 = vmatpush1.msra.mxu0 %v1032
    %3911 = vmatprep.subr.mxu0 %v1037
    %3912 = vmatpush1.msra.mxu0 %v1036
    %3913 = vmatprep.subr.mxu0 %v1041
    %3914 = vmatpush1.msra.mxu0 %v1040
    %3915 = vmatprep.subr.mxu0 %v1045
    %3916 = vmatpush1.msra.mxu0 %v1044
    %3917 = vmatprep.subr.mxu0 %v1049
    %3918 = vmatpush1.msra.mxu0 %v1048
    %3919 = vmatprep.mubr.f32.mxu0 %v3455
    %3920 = vmatmul.mubr.f32.gmra.mrb[0].mxu0 %v3762
    %v3921 = vpop.f32.mrb[0].mxu0
    %v3922 = vadd.f32 0.0, %v3921
    %v3923 = vpop.f32.mrb[0].mxu0
    %v3924 = vadd.f32 0.0, %v3923
    %3925 = vmatprep.mubr.f32.mxu0 %v3456
    %3926 = vmatmul.mubr.f32.gmra.mrb[0].mxu0 %v3763
    %v3927 = vpop.f32.mrb[0].mxu0
    %v3928 = vadd.f32 0.0, %v3927
    %v3929 = vpop.f32.mrb[0].mxu0
    %v3930 = vadd.f32 0.0, %v3929
    %3931 = vmatprep.mubr.f32.mxu0 %v3457
    %3932 = vmatmul.mubr.f32.gmra.mrb[0].mxu0 %v3764
    %v3933 = vpop.f32.mrb[0].mxu0
    %v3934 = vadd.f32 0.0, %v3933
    %v3935 = vpop.f32.mrb[0].mxu0
    %v3936 = vadd.f32 0.0, %v3935
    %3937 = vmatprep.mubr.f32.mxu0 %v3458
    %3938 = vmatmul.mubr.f32.gmra.mrb[0].mxu0 %v3765
    %v3939 = vpop.f32.mrb[0].mxu0
    %v3940 = vadd.f32 0.0, %v3939
    %v3941 = vpop.f32.mrb[0].mxu0
    %v3942 = vadd.f32 0.0, %v3941
    %3943 = vdwg.mxu0
    %v3944 = vadd.f32 %v1539, %v3833
    %v3945 = vadd.f32 %v1543, %v3835
    %v3946 = vadd.f32 %v1547, %v3922
    %v3947 = vadd.f32 %v1551, %v3924
    %v3948 = vadd.f32 %v1539, %v3839
    %v3949 = vadd.f32 %v1543, %v3841
    %v3950 = vadd.f32 %v1547, %v3928
    %v3951 = vadd.f32 %v1551, %v3930
    %v3952 = vadd.f32 %v1539, %v3845
    %v3953 = vadd.f32 %v1543, %v3847
    %v3954 = vadd.f32 %v1547, %v3934
    %v3955 = vadd.f32 %v1551, %v3936
    %v3956 = vadd.f32 %v1539, %v3851
    %v3957 = vadd.f32 %v1543, %v3853
    %v3958 = vadd.f32 %v1547, %v3940
    %v3959 = vadd.f32 %v1551, %v3942
    %v3960 = vxor.u32 %v3944, 2147483648
    %v3961 = vxor.u32 %v3945, 2147483648
    %v3962 = vxor.u32 %v3946, 2147483648
    %v3963 = vxor.u32 %v3948, 2147483648
    %v3964 = vxor.u32 %v3949, 2147483648
    %v3965 = vxor.u32 %v3950, 2147483648
    %v3966 = vxor.u32 %v3952, 2147483648
    %v3967 = vxor.u32 %v3953, 2147483648
    %v3968 = vxor.u32 %v3954, 2147483648
    %v3969 = vxor.u32 %v3956, 2147483648
    %v3970 = vxor.u32 %v3957, 2147483648
    %v3971 = vxor.u32 %v3958, 2147483648
    %v3972 = vmul.f32 %v3960, 1.442695
    %v3973 = vpow.pop %v3972
    %v3974 = vmul.f32 %v3961, 1.442695
    %v3975 = vpow.pop %v3974
    %v3976 = vmul.f32 %v3962, 1.442695
    %v3977 = vpow.pop %v3976
    %v3978 = vmul.f32 %v3963, 1.442695
    %v3979 = vpow.pop %v3978
    %v3980 = vmul.f32 %v3964, 1.442695
    %v3981 = vpow.pop %v3980
    %v3982 = vmul.f32 %v3965, 1.442695
    %v3983 = vpow.pop %v3982
    %v3984 = vmul.f32 %v3966, 1.442695
    %v3985 = vpow.pop %v3984
    %v3986 = vmul.f32 %v3967, 1.442695
    %v3987 = vpow.pop %v3986
    %v3988 = vmul.f32 %v3968, 1.442695
    %v3989 = vpow.pop %v3988
    %v3990 = vmul.f32 %v3969, 1.442695
    %v3991 = vpow.pop %v3990
    %v3992 = vmul.f32 %v3970, 1.442695
    %v3993 = vpow.pop %v3992
    %v3994 = vmul.f32 %v3971, 1.442695
    %v3995 = vpow.pop %v3994
    %v3996 = vadd.f32 %v3973, 1.0
    %v3997 = vadd.f32 %v3975, 1.0
    %v3998 = vadd.f32 %v3977, 1.0
    %v3999 = vadd.f32 %v3979, 1.0
    %v4000 = vadd.f32 %v3981, 1.0
    %v4001 = vadd.f32 %v3983, 1.0
    %v4002 = vadd.f32 %v3985, 1.0
    %v4003 = vadd.f32 %v3987, 1.0
    %v4004 = vadd.f32 %v3989, 1.0
    %v4005 = vadd.f32 %v3991, 1.0
    %v4006 = vadd.f32 %v3993, 1.0
    %v4007 = vadd.f32 %v3995, 1.0
    %v4008 = vrcp.pop %v3996
    %v4009 = vmul.f32 1.0, %v4008
    %v4010 = vrcp.pop %v3997
    %v4011 = vmul.f32 1.0, %v4010
    %v4012 = vrcp.pop %v3998
    %v4013 = vmul.f32 1.0, %v4012
    %v4014 = vrcp.pop %v3999
    %v4015 = vmul.f32 1.0, %v4014
    %v4016 = vrcp.pop %v4000
    %v4017 = vmul.f32 1.0, %v4016
    %v4018 = vrcp.pop %v4001
    %v4019 = vmul.f32 1.0, %v4018
    %v4020 = vrcp.pop %v4002
    %v4021 = vmul.f32 1.0, %v4020
    %v4022 = vrcp.pop %v4003
    %v4023 = vmul.f32 1.0, %v4022
    %v4024 = vrcp.pop %v4004
    %v4025 = vmul.f32 1.0, %v4024
    %v4026 = vrcp.pop %v4005
    %v4027 = vmul.f32 1.0, %v4026
    %v4028 = vrcp.pop %v4006
    %v4029 = vmul.f32 1.0, %v4028
    %v4030 = vrcp.pop %v4007
    %v4031 = vmul.f32 1.0, %v4030
    %v4032 = vtanh.pop %v3947
    %v4033 = vtanh.pop %v3951
    %v4034 = vtanh.pop %v3955
    %v4035 = vtanh.pop %v3959
    %v4036 = vmul.f32 %v4011, %v3447
    %v4037 = vmul.f32 %v4017, %v3448
    %v4038 = vmul.f32 %v4023, %v3449
    %v4039 = vmul.f32 %v4029, %v3450
    %v4040 = vmul.f32 %v4009, %v4032
    %v4041 = vmul.f32 %v4015, %v4033
    %v4042 = vmul.f32 %v4021, %v4034
    %v4043 = vmul.f32 %v4027, %v4035
    %v4044 = vadd.f32 %v4036, %v4040
    %v4045 = vadd.f32 %v4037, %v4041
    %v4046 = vadd.f32 %v4038, %v4042
    %v4047 = vadd.f32 %v4039, %v4043
    %v4048 = vtanh.pop %v4044
    %v4049 = vtanh.pop %v4045
    %v4050 = vtanh.pop %v4046
    %v4051 = vtanh.pop %v4047
    %v4052 = vmul.f32 %v4013, %v4048
    %v4053 = vmul.f32 %v4019, %v4049
    %v4054 = vmul.f32 %v4025, %v4050
    %v4055 = vmul.f32 %v4031, %v4051
    %s4056 = scalar_lea.vmem [#allocation2], 640
    %v4057 = vld [vmem:[%s4056] sm:$0xff]
    %v4058 = vld [vmem:[%s4056 + $0x8] sm:$0xff]
    %v4059 = vld [vmem:[%s4056 + $0x10] sm:$0xff]
    %v4060 = vld [vmem:[%s4056 + $0x18] sm:$0xff]
    %v4061 = vld [vmem:[%s4056 + $0x20] sm:$0xff]
    %v4062 = vld [vmem:[%s4056 + $0x28] sm:$0xff]
    %v4063 = vld [vmem:[%s4056 + $0x30] sm:$0xff]
    %v4064 = vld [vmem:[%s4056 + $0x38] sm:$0xff]
    %v4065 = vld [vmem:[%s4056 + $0x40] sm:$0xff]
    %v4066 = vld [vmem:[%s4056 + $0x48] sm:$0xff]
    %v4067 = vld [vmem:[%s4056 + $0x50] sm:$0xff]
    %v4068 = vld [vmem:[%s4056 + $0x58] sm:$0xff]
    %v4069 = vld [vmem:[%s4056 + $0x60] sm:$0xff]
    %v4070 = vld [vmem:[%s4056 + $0x68] sm:$0xff]
    %v4071 = vld [vmem:[%s4056 + $0x70] sm:$0xff]
    %v4072 = vld [vmem:[%s4056 + $0x78] sm:$0xff]
    %4073 = vmatprep.subr.mxu0 %v859
    %4074 = vmatpush1.msra.mxu0 %v858
    %4075 = vmatprep.subr.mxu0 %v863
    %4076 = vmatpush1.msra.mxu0 %v862
    %4077 = vmatprep.subr.mxu0 %v867
    %4078 = vmatpush1.msra.mxu0 %v866
    %4079 = vmatprep.subr.mxu0 %v871
    %4080 = vmatpush1.msra.mxu0 %v870
    %4081 = vmatprep.subr.mxu0 %v875
    %4082 = vmatpush1.msra.mxu0 %v874
    %4083 = vmatprep.subr.mxu0 %v879
    %4084 = vmatpush1.msra.mxu0 %v878
    %4085 = vmatprep.subr.mxu0 %v883
    %4086 = vmatpush1.msra.mxu0 %v882
    %4087 = vmatprep.subr.mxu0 %v887
    %4088 = vmatpush1.msra.mxu0 %v886
    %4089 = vmatprep.subr.mxu0 %v891
    %4090 = vmatpush1.msra.mxu0 %v890
    %4091 = vmatprep.subr.mxu0 %v895
    %4092 = vmatpush1.msra.mxu0 %v894
    %4093 = vmatprep.subr.mxu0 %v899
    %4094 = vmatpush1.msra.mxu0 %v898
    %4095 = vmatprep.subr.mxu0 %v903
    %4096 = vmatpush1.msra.mxu0 %v902
    %4097 = vmatprep.subr.mxu0 %v907
    %4098 = vmatpush1.msra.mxu0 %v906
    %4099 = vmatprep.subr.mxu0 %v911
    %4100 = vmatpush1.msra.mxu0 %v910
    %4101 = vmatprep.subr.mxu0 %v915
    %4102 = vmatpush1.msra.mxu0 %v914
    %4103 = vmatprep.subr.mxu0 %v919
    %4104 = vmatpush1.msra.mxu0 %v918
    %4105 = vmatprep.subr.mxu0 0.0
    %4106 = vmatpush1.msra.mxu0 0.0
    %4107 = vmatprep.subr.mxu0 0.0
    %4108 = vmatpush1.msra.mxu0 0.0
    %4109 = vmatprep.subr.mxu0 0.0
    %4110 = vmatpush1.msra.mxu0 0.0
    %4111 = vmatprep.subr.mxu0 0.0
    %4112 = vmatpush1.msra.mxu0 0.0
    %4113 = vmatprep.subr.mxu0 0.0
    %4114 = vmatpush1.msra.mxu0 0.0
    %4115 = vmatprep.subr.mxu0 0.0
    %4116 = vmatpush1.msra.mxu0 0.0
    %4117 = vmatprep.subr.mxu0 0.0
    %4118 = vmatpush1.msra.mxu0 0.0
    %4119 = vmatprep.subr.mxu0 0.0
    %4120 = vmatpush1.msra.mxu0 0.0
    %4121 = vmatprep.subr.mxu0 0.0
    %4122 = vmatpush1.msra.mxu0 0.0
    %4123 = vmatprep.subr.mxu0 0.0
    %4124 = vmatpush1.msra.mxu0 0.0
    %4125 = vmatprep.subr.mxu0 0.0
    %4126 = vmatpush1.msra.mxu0 0.0
    %4127 = vmatprep.subr.mxu0 0.0
    %4128 = vmatpush1.msra.mxu0 0.0
    %4129 = vmatprep.subr.mxu0 0.0
    %4130 = vmatpush1.msra.mxu0 0.0
    %4131 = vmatprep.subr.mxu0 0.0
    %4132 = vmatpush1.msra.mxu0 0.0
    %4133 = vmatprep.subr.mxu0 0.0
    %4134 = vmatpush1.msra.mxu0 0.0
    %4135 = vmatprep.subr.mxu0 0.0
    %4136 = vmatpush1.msra.mxu0 0.0
    %4137 = vmatprep.mubr.f32.mxu0 0.0
    %4138 = vmatmul.mubr.f32.gmra.mrb[0].mxu0 %v3762
    %v4139 = vpop.f32.mrb[0].mxu0
    %v4140 = vadd.f32 0.0, %v4139
    %v4141 = vpop.f32.mrb[0].mxu0
    %v4142 = vadd.f32 0.0, %v4141
    %4143 = vmatprep.mubr.f32.mxu0 0.0
    %4144 = vmatmul.mubr.f32.gmra.mrb[0].mxu0 %v3763
    %v4145 = vpop.f32.mrb[0].mxu0
    %v4146 = vadd.f32 0.0, %v4145
    %v4147 = vpop.f32.mrb[0].mxu0
    %v4148 = vadd.f32 0.0, %v4147
    %4149 = vmatprep.mubr.f32.mxu0 0.0
    %4150 = vmatmul.mubr.f32.gmra.mrb[0].mxu0 %v3764
    %v4151 = vpop.f32.mrb[0].mxu0
    %v4152 = vadd.f32 0.0, %v4151
    %v4153 = vpop.f32.mrb[0].mxu0
    %v4154 = vadd.f32 0.0, %v4153
    %4155 = vmatprep.mubr.f32.mxu0 0.0
    %4156 = vmatmul.mubr.f32.gmra.mrb[0].mxu0 %v3765
    %v4157 = vpop.f32.mrb[0].mxu0
    %v4158 = vadd.f32 0.0, %v4157
    %v4159 = vpop.f32.mrb[0].mxu0
    %v4160 = vadd.f32 0.0, %v4159
    %4161 = vdwg.mxu0
    %4162 = vmatprep.subr.mxu0 %v861
    %4163 = vmatpush1.msra.mxu0 %v860
    %4164 = vmatprep.subr.mxu0 %v865
    %4165 = vmatpush1.msra.mxu0 %v864
    %4166 = vmatprep.subr.mxu0 %v869
    %4167 = vmatpush1.msra.mxu0 %v868
    %4168 = vmatprep.subr.mxu0 %v873
    %4169 = vmatpush1.msra.mxu0 %v872
    %4170 = vmatprep.subr.mxu0 %v877
    %4171 = vmatpush1.msra.mxu0 %v876
    %4172 = vmatprep.subr.mxu0 %v881
    %4173 = vmatpush1.msra.mxu0 %v880
    %4174 = vmatprep.subr.mxu0 %v885
    %4175 = vmatpush1.msra.mxu0 %v884
    %4176 = vmatprep.subr.mxu0 %v889
    %4177 = vmatpush1.msra.mxu0 %v888
    %4178 = vmatprep.subr.mxu0 %v893
    %4179 = vmatpush1.msra.mxu0 %v892
    %4180 = vmatprep.subr.mxu0 %v897
    %4181 = vmatpush1.msra.mxu0 %v896
    %4182 = vmatprep.subr.mxu0 %v901
    %4183 = vmatpush1.msra.mxu0 %v900
    %4184 = vmatprep.subr.mxu0 %v905
    %4185 = vmatpush1.msra.mxu0 %v904
    %4186 = vmatprep.subr.mxu0 %v909
    %4187 = vmatpush1.msra.mxu0 %v908
    %4188 = vmatprep.subr.mxu0 %v913
    %4189 = vmatpush1.msra.mxu0 %v912
    %4190 = vmatprep.subr.mxu0 %v917
    %4191 = vmatpush1.msra.mxu0 %v916
    %4192 = vmatprep.subr.mxu0 %v921
    %4193 = vmatpush1.msra.mxu0 %v920
    %4194 = vmatprep.subr.mxu0 0.0
    %4195 = vmatpush1.msra.mxu0 0.0
    %4196 = vmatprep.subr.mxu0 0.0
    %4197 = vmatpush1.msra.mxu0 0.0
    %4198 = vmatprep.subr.mxu0 0.0
    %4199 = vmatpush1.msra.mxu0 0.0
    %4200 = vmatprep.subr.mxu0 0.0
    %4201 = vmatpush1.msra.mxu0 0.0
    %4202 = vmatprep.subr.mxu0 0.0
    %4203 = vmatpush1.msra.mxu0 0.0
    %4204 = vmatprep.subr.mxu0 0.0
    %4205 = vmatpush1.msra.mxu0 0.0
    %4206 = vmatprep.subr.mxu0 0.0
    %4207 = vmatpush1.msra.mxu0 0.0
    %4208 = vmatprep.subr.mxu0 0.0
    %4209 = vmatpush1.msra.mxu0 0.0
    %4210 = vmatprep.subr.mxu0 0.0
    %4211 = vmatpush1.msra.mxu0 0.0
    %4212 = vmatprep.subr.mxu0 0.0
    %4213 = vmatpush1.msra.mxu0 0.0
    %4214 = vmatprep.subr.mxu0 0.0
    %4215 = vmatpush1.msra.mxu0 0.0
    %4216 = vmatprep.subr.mxu0 0.0
    %4217 = vmatpush1.msra.mxu0 0.0
    %4218 = vmatprep.subr.mxu0 0.0
    %4219 = vmatpush1.msra.mxu0 0.0
    %4220 = vmatprep.subr.mxu0 0.0
    %4221 = vmatpush1.msra.mxu0 0.0
    %4222 = vmatprep.subr.mxu0 0.0
    %4223 = vmatpush1.msra.mxu0 0.0
    %4224 = vmatprep.subr.mxu0 0.0
    %4225 = vmatpush1.msra.mxu0 0.0
    %4226 = vmatprep.mubr.f32.mxu0 0.0
    %4227 = vmatmul.mubr.f32.gmra.mrb[0].mxu0 %v3762
    %v4228 = vpop.f32.mrb[0].mxu0
    %v4229 = vadd.f32 0.0, %v4228
    %v4230 = vpop.f32.mrb[0].mxu0
    %v4231 = vadd.f32 0.0, %v4230
    %4232 = vmatprep.mubr.f32.mxu0 0.0
    %4233 = vmatmul.mubr.f32.gmra.mrb[0].mxu0 %v3763
    %v4234 = vpop.f32.mrb[0].mxu0
    %v4235 = vadd.f32 0.0, %v4234
    %v4236 = vpop.f32.mrb[0].mxu0
    %v4237 = vadd.f32 0.0, %v4236
    %4238 = vmatprep.mubr.f32.mxu0 0.0
    %4239 = vmatmul.mubr.f32.gmra.mrb[0].mxu0 %v3764
    %v4240 = vpop.f32.mrb[0].mxu0
    %v4241 = vadd.f32 0.0, %v4240
    %v4242 = vpop.f32.mrb[0].mxu0
    %v4243 = vadd.f32 0.0, %v4242
    %4244 = vmatprep.mubr.f32.mxu0 0.0
    %4245 = vmatmul.mubr.f32.gmra.mrb[0].mxu0 %v3765
    %v4246 = vpop.f32.mrb[0].mxu0
    %v4247 = vadd.f32 0.0, %v4246
    %v4248 = vpop.f32.mrb[0].mxu0
    %v4249 = vadd.f32 0.0, %v4248
    %4250 = vdwg.mxu0
    %v4251 = vadd.f32 %v4057, %v4140
    %v4252 = vadd.f32 %v4058, %v4142
    %v4253 = vadd.f32 %v4059, %v4229
    %v4254 = vadd.f32 %v4060, %v4231
    %v4255 = vadd.f32 %v4061, %v4146
    %v4256 = vadd.f32 %v4062, %v4148
    %v4257 = vadd.f32 %v4063, %v4235
    %v4258 = vadd.f32 %v4064, %v4237
    %v4259 = vadd.f32 %v4065, %v4152
    %v4260 = vadd.f32 %v4066, %v4154
    %v4261 = vadd.f32 %v4067, %v4241
    %v4262 = vadd.f32 %v4068, %v4243
    %v4263 = vadd.f32 %v4069, %v4158
    %v4264 = vadd.f32 %v4070, %v4160
    %v4265 = vadd.f32 %v4071, %v4247
    %v4266 = vadd.f32 %v4072, %v4249
    %v4267 = vxor.u32 %v4251, 2147483648
    %v4268 = vxor.u32 %v4252, 2147483648
    %v4269 = vxor.u32 %v4253, 2147483648
    %v4270 = vxor.u32 %v4255, 2147483648
    %v4271 = vxor.u32 %v4256, 2147483648
    %v4272 = vxor.u32 %v4257, 2147483648
    %v4273 = vxor.u32 %v4259, 2147483648
    %v4274 = vxor.u32 %v4260, 2147483648
    %v4275 = vxor.u32 %v4261, 2147483648
    %v4276 = vxor.u32 %v4263, 2147483648
    %v4277 = vxor.u32 %v4264, 2147483648
    %v4278 = vxor.u32 %v4265, 2147483648
    %v4279 = vmul.f32 %v4267, 1.442695
    %v4280 = vpow.pop %v4279
    %v4281 = vmul.f32 %v4268, 1.442695
    %v4282 = vpow.pop %v4281
    %v4283 = vmul.f32 %v4269, 1.442695
    %v4284 = vpow.pop %v4283
    %v4285 = vmul.f32 %v4270, 1.442695
    %v4286 = vpow.pop %v4285
    %v4287 = vmul.f32 %v4271, 1.442695
    %v4288 = vpow.pop %v4287
    %v4289 = vmul.f32 %v4272, 1.442695
    %v4290 = vpow.pop %v4289
    %v4291 = vmul.f32 %v4273, 1.442695
    %v4292 = vpow.pop %v4291
    %v4293 = vmul.f32 %v4274, 1.442695
    %v4294 = vpow.pop %v4293
    %v4295 = vmul.f32 %v4275, 1.442695
    %v4296 = vpow.pop %v4295
    %v4297 = vmul.f32 %v4276, 1.442695
    %v4298 = vpow.pop %v4297
    %v4299 = vmul.f32 %v4277, 1.442695
    %v4300 = vpow.pop %v4299
    %v4301 = vmul.f32 %v4278, 1.442695
    %v4302 = vpow.pop %v4301
    %v4303 = vadd.f32 %v4280, 1.0
    %v4304 = vadd.f32 %v4282, 1.0
    %v4305 = vadd.f32 %v4284, 1.0
    %v4306 = vadd.f32 %v4286, 1.0
    %v4307 = vadd.f32 %v4288, 1.0
    %v4308 = vadd.f32 %v4290, 1.0
    %v4309 = vadd.f32 %v4292, 1.0
    %v4310 = vadd.f32 %v4294, 1.0
    %v4311 = vadd.f32 %v4296, 1.0
    %v4312 = vadd.f32 %v4298, 1.0
    %v4313 = vadd.f32 %v4300, 1.0
    %v4314 = vadd.f32 %v4302, 1.0
    %v4315 = vrcp.pop %v4303
    %v4316 = vmul.f32 1.0, %v4315
    %v4317 = vrcp.pop %v4304
    %v4318 = vmul.f32 1.0, %v4317
    %v4319 = vrcp.pop %v4305
    %v4320 = vmul.f32 1.0, %v4319
    %v4321 = vrcp.pop %v4306
    %v4322 = vmul.f32 1.0, %v4321
    %v4323 = vrcp.pop %v4307
    %v4324 = vmul.f32 1.0, %v4323
    %v4325 = vrcp.pop %v4308
    %v4326 = vmul.f32 1.0, %v4325
    %v4327 = vrcp.pop %v4309
    %v4328 = vmul.f32 1.0, %v4327
    %v4329 = vrcp.pop %v4310
    %v4330 = vmul.f32 1.0, %v4329
    %v4331 = vrcp.pop %v4311
    %v4332 = vmul.f32 1.0, %v4331
    %v4333 = vrcp.pop %v4312
    %v4334 = vmul.f32 1.0, %v4333
    %v4335 = vrcp.pop %v4313
    %v4336 = vmul.f32 1.0, %v4335
    %v4337 = vrcp.pop %v4314
    %v4338 = vmul.f32 1.0, %v4337
    %v4339 = vtanh.pop %v4254
    %v4340 = vtanh.pop %v4258
    %v4341 = vtanh.pop %v4262
    %v4342 = vtanh.pop %v4266
    %v4343 = vmul.f32 %v4318, %v3754
    %v4344 = vmul.f32 %v4324, %v3755
    %v4345 = vmul.f32 %v4330, %v3756
    %v4346 = vmul.f32 %v4336, %v3757
    %v4347 = vmul.f32 %v4316, %v4339
    %v4348 = vmul.f32 %v4322, %v4340
    %v4349 = vmul.f32 %v4328, %v4341
    %v4350 = vmul.f32 %v4334, %v4342
    %v4351 = vadd.f32 %v4343, %v4347
    %v4352 = vadd.f32 %v4344, %v4348
    %v4353 = vadd.f32 %v4345, %v4349
    %v4354 = vadd.f32 %v4346, %v4350
    %v4355 = vtanh.pop %v4351
    %v4356 = vtanh.pop %v4352
    %v4357 = vtanh.pop %v4353
    %v4358 = vtanh.pop %v4354
    %v4359 = vmul.f32 %v4320, %v4355
    %v4360 = vmul.f32 %v4326, %v4356
    %v4361 = vmul.f32 %v4332, %v4357
    %v4362 = vmul.f32 %v4338, %v4358
    %4363 = vmatprep.subr.mxu0 %v923
    %4364 = vmatpush1.msra.mxu0 %v922
    %4365 = vmatprep.subr.mxu0 %v927
    %4366 = vmatpush1.msra.mxu0 %v926
    %4367 = vmatprep.subr.mxu0 %v931
    %4368 = vmatpush1.msra.mxu0 %v930
    %4369 = vmatprep.subr.mxu0 %v935
    %4370 = vmatpush1.msra.mxu0 %v934
    %4371 = vmatprep.subr.mxu0 %v939
    %4372 = vmatpush1.msra.mxu0 %v938
    %4373 = vmatprep.subr.mxu0 %v943
    %4374 = vmatpush1.msra.mxu0 %v942
    %4375 = vmatprep.subr.mxu0 %v947
    %4376 = vmatpush1.msra.mxu0 %v946
    %4377 = vmatprep.subr.mxu0 %v951
    %4378 = vmatpush1.msra.mxu0 %v950
    %4379 = vmatprep.subr.mxu0 %v955
    %4380 = vmatpush1.msra.mxu0 %v954
    %4381 = vmatprep.subr.mxu0 %v959
    %4382 = vmatpush1.msra.mxu0 %v958
    %4383 = vmatprep.subr.mxu0 %v963
    %4384 = vmatpush1.msra.mxu0 %v962
    %4385 = vmatprep.subr.mxu0 %v967
    %4386 = vmatpush1.msra.mxu0 %v966
    %4387 = vmatprep.subr.mxu0 %v971
    %4388 = vmatpush1.msra.mxu0 %v970
    %4389 = vmatprep.subr.mxu0 %v975
    %4390 = vmatpush1.msra.mxu0 %v974
    %4391 = vmatprep.subr.mxu0 %v979
    %4392 = vmatpush1.msra.mxu0 %v978
    %4393 = vmatprep.subr.mxu0 %v983
    %4394 = vmatpush1.msra.mxu0 %v982
    %4395 = vmatprep.subr.mxu0 %v987
    %4396 = vmatpush1.msra.mxu0 %v986
    %4397 = vmatprep.subr.mxu0 %v991
    %4398 = vmatpush1.msra.mxu0 %v990
    %4399 = vmatprep.subr.mxu0 %v995
    %4400 = vmatpush1.msra.mxu0 %v994
    %4401 = vmatprep.subr.mxu0 %v999
    %4402 = vmatpush1.msra.mxu0 %v998
    %4403 = vmatprep.subr.mxu0 %v1003
    %4404 = vmatpush1.msra.mxu0 %v1002
    %4405 = vmatprep.subr.mxu0 %v1007
    %4406 = vmatpush1.msra.mxu0 %v1006
    %4407 = vmatprep.subr.mxu0 %v1011
    %4408 = vmatpush1.msra.mxu0 %v1010
    %4409 = vmatprep.subr.mxu0 %v1015
    %4410 = vmatpush1.msra.mxu0 %v1014
    %4411 = vmatprep.subr.mxu0 %v1019
    %4412 = vmatpush1.msra.mxu0 %v1018
    %4413 = vmatprep.subr.mxu0 %v1023
    %4414 = vmatpush1.msra.mxu0 %v1022
    %4415 = vmatprep.subr.mxu0 %v1027
    %4416 = vmatpush1.msra.mxu0 %v1026
    %4417 = vmatprep.subr.mxu0 %v1031
    %4418 = vmatpush1.msra.mxu0 %v1030
    %4419 = vmatprep.subr.mxu0 %v1035
    %4420 = vmatpush1.msra.mxu0 %v1034
    %4421 = vmatprep.subr.mxu0 %v1039
    %4422 = vmatpush1.msra.mxu0 %v1038
    %4423 = vmatprep.subr.mxu0 %v1043
    %4424 = vmatpush1.msra.mxu0 %v1042
    %4425 = vmatprep.subr.mxu0 %v1047
    %4426 = vmatpush1.msra.mxu0 %v1046
    %4427 = vmatprep.mubr.f32.mxu0 %v4052
    %4428 = vmatmul.mubr.f32.gmra.mrb[0].mxu0 %v4359
    %v4429 = vpop.f32.mrb[0].mxu0
    %v4430 = vadd.f32 0.0, %v4429
    %v4431 = vpop.f32.mrb[0].mxu0
    %v4432 = vadd.f32 0.0, %v4431
    %4433 = vmatprep.mubr.f32.mxu0 %v4053
    %4434 = vmatmul.mubr.f32.gmra.mrb[0].mxu0 %v4360
    %v4435 = vpop.f32.mrb[0].mxu0
    %v4436 = vadd.f32 0.0, %v4435
    %v4437 = vpop.f32.mrb[0].mxu0
    %v4438 = vadd.f32 0.0, %v4437
    %4439 = vmatprep.mubr.f32.mxu0 %v4054
    %4440 = vmatmul.mubr.f32.gmra.mrb[0].mxu0 %v4361
    %v4441 = vpop.f32.mrb[0].mxu0
    %v4442 = vadd.f32 0.0, %v4441
    %v4443 = vpop.f32.mrb[0].mxu0
    %v4444 = vadd.f32 0.0, %v4443
    %4445 = vmatprep.mubr.f32.mxu0 %v4055
    %4446 = vmatmul.mubr.f32.gmra.mrb[0].mxu0 %v4362
    %v4447 = vpop.f32.mrb[0].mxu0
    %v4448 = vadd.f32 0.0, %v4447
    %v4449 = vpop.f32.mrb[0].mxu0
    %v4450 = vadd.f32 0.0, %v4449
    %4451 = vdwg.mxu0
    %4452 = vmatprep.subr.mxu0 %v925
    %4453 = vmatpush1.msra.mxu0 %v924
    %4454 = vmatprep.subr.mxu0 %v929
    %4455 = vmatpush1.msra.mxu0 %v928
    %4456 = vmatprep.subr.mxu0 %v933
    %4457 = vmatpush1.msra.mxu0 %v932
    %4458 = vmatprep.subr.mxu0 %v937
    %4459 = vmatpush1.msra.mxu0 %v936
    %4460 = vmatprep.subr.mxu0 %v941
    %4461 = vmatpush1.msra.mxu0 %v940
    %4462 = vmatprep.subr.mxu0 %v945
    %4463 = vmatpush1.msra.mxu0 %v944
    %4464 = vmatprep.subr.mxu0 %v949
    %4465 = vmatpush1.msra.mxu0 %v948
    %4466 = vmatprep.subr.mxu0 %v953
    %4467 = vmatpush1.msra.mxu0 %v952
    %4468 = vmatprep.subr.mxu0 %v957
    %4469 = vmatpush1.msra.mxu0 %v956
    %4470 = vmatprep.subr.mxu0 %v961
    %4471 = vmatpush1.msra.mxu0 %v960
    %4472 = vmatprep.subr.mxu0 %v965
    %4473 = vmatpush1.msra.mxu0 %v964
    %4474 = vmatprep.subr.mxu0 %v969
    %4475 = vmatpush1.msra.mxu0 %v968
    %4476 = vmatprep.subr.mxu0 %v973
    %4477 = vmatpush1.msra.mxu0 %v972
    %4478 = vmatprep.subr.mxu0 %v977
    %4479 = vmatpush1.msra.mxu0 %v976
    %4480 = vmatprep.subr.mxu0 %v981
    %4481 = vmatpush1.msra.mxu0 %v980
    %4482 = vmatprep.subr.mxu0 %v985
    %4483 = vmatpush1.msra.mxu0 %v984
    %4484 = vmatprep.subr.mxu0 %v989
    %4485 = vmatpush1.msra.mxu0 %v988
    %4486 = vmatprep.subr.mxu0 %v993
    %4487 = vmatpush1.msra.mxu0 %v992
    %4488 = vmatprep.subr.mxu0 %v997
    %4489 = vmatpush1.msra.mxu0 %v996
    %4490 = vmatprep.subr.mxu0 %v1001
    %4491 = vmatpush1.msra.mxu0 %v1000
    %4492 = vmatprep.subr.mxu0 %v1005
    %4493 = vmatpush1.msra.mxu0 %v1004
    %4494 = vmatprep.subr.mxu0 %v1009
    %4495 = vmatpush1.msra.mxu0 %v1008
    %4496 = vmatprep.subr.mxu0 %v1013
    %4497 = vmatpush1.msra.mxu0 %v1012
    %4498 = vmatprep.subr.mxu0 %v1017
    %4499 = vmatpush1.msra.mxu0 %v1016
    %4500 = vmatprep.subr.mxu0 %v1021
    %4501 = vmatpush1.msra.mxu0 %v1020
    %4502 = vmatprep.subr.mxu0 %v1025
    %4503 = vmatpush1.msra.mxu0 %v1024
    %4504 = vmatprep.subr.mxu0 %v1029
    %4505 = vmatpush1.msra.mxu0 %v1028
    %4506 = vmatprep.subr.mxu0 %v1033
    %4507 = vmatpush1.msra.mxu0 %v1032
    %4508 = vmatprep.subr.mxu0 %v1037
    %4509 = vmatpush1.msra.mxu0 %v1036
    %4510 = vmatprep.subr.mxu0 %v1041
    %4511 = vmatpush1.msra.mxu0 %v1040
    %4512 = vmatprep.subr.mxu0 %v1045
    %4513 = vmatpush1.msra.mxu0 %v1044
    %4514 = vmatprep.subr.mxu0 %v1049
    %4515 = vmatpush1.msra.mxu0 %v1048
    %4516 = vmatprep.mubr.f32.mxu0 %v4052
    %4517 = vmatmul.mubr.f32.gmra.mrb[0].mxu0 %v4359
    %v4518 = vpop.f32.mrb[0].mxu0
    %v4519 = vadd.f32 0.0, %v4518
    %v4520 = vpop.f32.mrb[0].mxu0
    %v4521 = vadd.f32 0.0, %v4520
    %4522 = vmatprep.mubr.f32.mxu0 %v4053
    %4523 = vmatmul.mubr.f32.gmra.mrb[0].mxu0 %v4360
    %v4524 = vpop.f32.mrb[0].mxu0
    %v4525 = vadd.f32 0.0, %v4524
    %v4526 = vpop.f32.mrb[0].mxu0
    %v4527 = vadd.f32 0.0, %v4526
    %4528 = vmatprep.mubr.f32.mxu0 %v4054
    %4529 = vmatmul.mubr.f32.gmra.mrb[0].mxu0 %v4361
    %v4530 = vpop.f32.mrb[0].mxu0
    %v4531 = vadd.f32 0.0, %v4530
    %v4532 = vpop.f32.mrb[0].mxu0
    %v4533 = vadd.f32 0.0, %v4532
    %4534 = vmatprep.mubr.f32.mxu0 %v4055
    %4535 = vmatmul.mubr.f32.gmra.mrb[0].mxu0 %v4362
    %v4536 = vpop.f32.mrb[0].mxu0
    %v4537 = vadd.f32 0.0, %v4536
    %v4538 = vpop.f32.mrb[0].mxu0
    %v4539 = vadd.f32 0.0, %v4538
    %4540 = vdwg.mxu0
    %v4541 = vadd.f32 %v1539, %v4430
    %v4542 = vadd.f32 %v1543, %v4432
    %v4543 = vadd.f32 %v1547, %v4519
    %v4544 = vadd.f32 %v1551, %v4521
    %v4545 = vadd.f32 %v1539, %v4436
    %v4546 = vadd.f32 %v1543, %v4438
    %v4547 = vadd.f32 %v1547, %v4525
    %v4548 = vadd.f32 %v1551, %v4527
    %v4549 = vadd.f32 %v1539, %v4442
    %v4550 = vadd.f32 %v1543, %v4444
    %v4551 = vadd.f32 %v1547, %v4531
    %v4552 = vadd.f32 %v1551, %v4533
    %v4553 = vadd.f32 %v1539, %v4448
    %v4554 = vadd.f32 %v1543, %v4450
    %v4555 = vadd.f32 %v1547, %v4537
    %v4556 = vadd.f32 %v1551, %v4539
    %v4557 = vxor.u32 %v4541, 2147483648
    %v4558 = vxor.u32 %v4542, 2147483648
    %v4559 = vxor.u32 %v4543, 2147483648
    %v4560 = vxor.u32 %v4545, 2147483648
    %v4561 = vxor.u32 %v4546, 2147483648
    %v4562 = vxor.u32 %v4547, 2147483648
    %v4563 = vxor.u32 %v4549, 2147483648
    %v4564 = vxor.u32 %v4550, 2147483648
    %v4565 = vxor.u32 %v4551, 2147483648
    %v4566 = vxor.u32 %v4553, 2147483648
    %v4567 = vxor.u32 %v4554, 2147483648
    %v4568 = vxor.u32 %v4555, 2147483648
    %v4569 = vmul.f32 %v4557, 1.442695
    %v4570 = vpow.pop %v4569
    %v4571 = vmul.f32 %v4558, 1.442695
    %v4572 = vpow.pop %v4571
    %v4573 = vmul.f32 %v4559, 1.442695
    %v4574 = vpow.pop %v4573
    %v4575 = vmul.f32 %v4560, 1.442695
    %v4576 = vpow.pop %v4575
    %v4577 = vmul.f32 %v4561, 1.442695
    %v4578 = vpow.pop %v4577
    %v4579 = vmul.f32 %v4562, 1.442695
    %v4580 = vpow.pop %v4579
    %v4581 = vmul.f32 %v4563, 1.442695
    %v4582 = vpow.pop %v4581
    %v4583 = vmul.f32 %v4564, 1.442695
    %v4584 = vpow.pop %v4583
    %v4585 = vmul.f32 %v4565, 1.442695
    %v4586 = vpow.pop %v4585
    %v4587 = vmul.f32 %v4566, 1.442695
    %v4588 = vpow.pop %v4587
    %v4589 = vmul.f32 %v4567, 1.442695
    %v4590 = vpow.pop %v4589
    %v4591 = vmul.f32 %v4568, 1.442695
    %v4592 = vpow.pop %v4591
    %v4593 = vadd.f32 %v4570, 1.0
    %v4594 = vadd.f32 %v4572, 1.0
    %v4595 = vadd.f32 %v4574, 1.0
    %v4596 = vadd.f32 %v4576, 1.0
    %v4597 = vadd.f32 %v4578, 1.0
    %v4598 = vadd.f32 %v4580, 1.0
    %v4599 = vadd.f32 %v4582, 1.0
    %v4600 = vadd.f32 %v4584, 1.0
    %v4601 = vadd.f32 %v4586, 1.0
    %v4602 = vadd.f32 %v4588, 1.0
    %v4603 = vadd.f32 %v4590, 1.0
    %v4604 = vadd.f32 %v4592, 1.0
    %v4605 = vrcp.pop %v4593
    %v4606 = vmul.f32 1.0, %v4605
    %v4607 = vrcp.pop %v4594
    %v4608 = vmul.f32 1.0, %v4607
    %v4609 = vrcp.pop %v4595
    %v4610 = vmul.f32 1.0, %v4609
    %v4611 = vrcp.pop %v4596
    %v4612 = vmul.f32 1.0, %v4611
    %v4613 = vrcp.pop %v4597
    %v4614 = vmul.f32 1.0, %v4613
    %v4615 = vrcp.pop %v4598
    %v4616 = vmul.f32 1.0, %v4615
    %v4617 = vrcp.pop %v4599
    %v4618 = vmul.f32 1.0, %v4617
    %v4619 = vrcp.pop %v4600
    %v4620 = vmul.f32 1.0, %v4619
    %v4621 = vrcp.pop %v4601
    %v4622 = vmul.f32 1.0, %v4621
    %v4623 = vrcp.pop %v4602
    %v4624 = vmul.f32 1.0, %v4623
    %v4625 = vrcp.pop %v4603
    %v4626 = vmul.f32 1.0, %v4625
    %v4627 = vrcp.pop %v4604
    %v4628 = vmul.f32 1.0, %v4627
    %v4629 = vtanh.pop %v4544
    %v4630 = vtanh.pop %v4548
    %v4631 = vtanh.pop %v4552
    %v4632 = vtanh.pop %v4556
    %v4633 = vmul.f32 %v4608, %v4044
    %v4634 = vmul.f32 %v4614, %v4045
    %v4635 = vmul.f32 %v4620, %v4046
    %v4636 = vmul.f32 %v4626, %v4047
    %v4637 = vmul.f32 %v4606, %v4629
    %v4638 = vmul.f32 %v4612, %v4630
    %v4639 = vmul.f32 %v4618, %v4631
    %v4640 = vmul.f32 %v4624, %v4632
    %v4641 = vadd.f32 %v4633, %v4637
    %v4642 = vadd.f32 %v4634, %v4638
    %v4643 = vadd.f32 %v4635, %v4639
    %v4644 = vadd.f32 %v4636, %v4640
    %v4645 = vtanh.pop %v4641
    %v4646 = vtanh.pop %v4642
    %v4647 = vtanh.pop %v4643
    %v4648 = vtanh.pop %v4644
    %v4649 = vmul.f32 %v4610, %v4645
    %v4650 = vmul.f32 %v4616, %v4646
    %v4651 = vmul.f32 %v4622, %v4647
    %v4652 = vmul.f32 %v4628, %v4648
    %s4653 = scalar_lea.vmem [#allocation2], 768
    %v4654 = vld [vmem:[%s4653] sm:$0xff]
    %v4655 = vld [vmem:[%s4653 + $0x8] sm:$0xff]
    %v4656 = vld [vmem:[%s4653 + $0x10] sm:$0xff]
    %v4657 = vld [vmem:[%s4653 + $0x18] sm:$0xff]
    %v4658 = vld [vmem:[%s4653 + $0x20] sm:$0xff]
    %v4659 = vld [vmem:[%s4653 + $0x28] sm:$0xff]
    %v4660 = vld [vmem:[%s4653 + $0x30] sm:$0xff]
    %v4661 = vld [vmem:[%s4653 + $0x38] sm:$0xff]
    %v4662 = vld [vmem:[%s4653 + $0x40] sm:$0xff]
    %v4663 = vld [vmem:[%s4653 + $0x48] sm:$0xff]
    %v4664 = vld [vmem:[%s4653 + $0x50] sm:$0xff]
    %v4665 = vld [vmem:[%s4653 + $0x58] sm:$0xff]
    %v4666 = vld [vmem:[%s4653 + $0x60] sm:$0xff]
    %v4667 = vld [vmem:[%s4653 + $0x68] sm:$0xff]
    %v4668 = vld [vmem:[%s4653 + $0x70] sm:$0xff]
    %v4669 = vld [vmem:[%s4653 + $0x78] sm:$0xff]
    %4670 = vmatprep.subr.mxu0 %v859
    %4671 = vmatpush1.msra.mxu0 %v858
    %4672 = vmatprep.subr.mxu0 %v863
    %4673 = vmatpush1.msra.mxu0 %v862
    %4674 = vmatprep.subr.mxu0 %v867
    %4675 = vmatpush1.msra.mxu0 %v866
    %4676 = vmatprep.subr.mxu0 %v871
    %4677 = vmatpush1.msra.mxu0 %v870
    %4678 = vmatprep.subr.mxu0 %v875
    %4679 = vmatpush1.msra.mxu0 %v874
    %4680 = vmatprep.subr.mxu0 %v879
    %4681 = vmatpush1.msra.mxu0 %v878
    %4682 = vmatprep.subr.mxu0 %v883
    %4683 = vmatpush1.msra.mxu0 %v882
    %4684 = vmatprep.subr.mxu0 %v887
    %4685 = vmatpush1.msra.mxu0 %v886
    %4686 = vmatprep.subr.mxu0 %v891
    %4687 = vmatpush1.msra.mxu0 %v890
    %4688 = vmatprep.subr.mxu0 %v895
    %4689 = vmatpush1.msra.mxu0 %v894
    %4690 = vmatprep.subr.mxu0 %v899
    %4691 = vmatpush1.msra.mxu0 %v898
    %4692 = vmatprep.subr.mxu0 %v903
    %4693 = vmatpush1.msra.mxu0 %v902
    %4694 = vmatprep.subr.mxu0 %v907
    %4695 = vmatpush1.msra.mxu0 %v906
    %4696 = vmatprep.subr.mxu0 %v911
    %4697 = vmatpush1.msra.mxu0 %v910
    %4698 = vmatprep.subr.mxu0 %v915
    %4699 = vmatpush1.msra.mxu0 %v914
    %4700 = vmatprep.subr.mxu0 %v919
    %4701 = vmatpush1.msra.mxu0 %v918
    %4702 = vmatprep.subr.mxu0 0.0
    %4703 = vmatpush1.msra.mxu0 0.0
    %4704 = vmatprep.subr.mxu0 0.0
    %4705 = vmatpush1.msra.mxu0 0.0
    %4706 = vmatprep.subr.mxu0 0.0
    %4707 = vmatpush1.msra.mxu0 0.0
    %4708 = vmatprep.subr.mxu0 0.0
    %4709 = vmatpush1.msra.mxu0 0.0
    %4710 = vmatprep.subr.mxu0 0.0
    %4711 = vmatpush1.msra.mxu0 0.0
    %4712 = vmatprep.subr.mxu0 0.0
    %4713 = vmatpush1.msra.mxu0 0.0
    %4714 = vmatprep.subr.mxu0 0.0
    %4715 = vmatpush1.msra.mxu0 0.0
    %4716 = vmatprep.subr.mxu0 0.0
    %4717 = vmatpush1.msra.mxu0 0.0
    %4718 = vmatprep.subr.mxu0 0.0
    %4719 = vmatpush1.msra.mxu0 0.0
    %4720 = vmatprep.subr.mxu0 0.0
    %4721 = vmatpush1.msra.mxu0 0.0
    %4722 = vmatprep.subr.mxu0 0.0
    %4723 = vmatpush1.msra.mxu0 0.0
    %4724 = vmatprep.subr.mxu0 0.0
    %4725 = vmatpush1.msra.mxu0 0.0
    %4726 = vmatprep.subr.mxu0 0.0
    %4727 = vmatpush1.msra.mxu0 0.0
    %4728 = vmatprep.subr.mxu0 0.0
    %4729 = vmatpush1.msra.mxu0 0.0
    %4730 = vmatprep.subr.mxu0 0.0
    %4731 = vmatpush1.msra.mxu0 0.0
    %4732 = vmatprep.subr.mxu0 0.0
    %4733 = vmatpush1.msra.mxu0 0.0
    %4734 = vmatprep.mubr.f32.mxu0 0.0
    %4735 = vmatmul.mubr.f32.gmra.mrb[0].mxu0 %v4359
    %v4736 = vpop.f32.mrb[0].mxu0
    %v4737 = vadd.f32 0.0, %v4736
    %v4738 = vpop.f32.mrb[0].mxu0
    %v4739 = vadd.f32 0.0, %v4738
    %4740 = vmatprep.mubr.f32.mxu0 0.0
    %4741 = vmatmul.mubr.f32.gmra.mrb[0].mxu0 %v4360
    %v4742 = vpop.f32.mrb[0].mxu0
    %v4743 = vadd.f32 0.0, %v4742
    %v4744 = vpop.f32.mrb[0].mxu0
    %v4745 = vadd.f32 0.0, %v4744
    %4746 = vmatprep.mubr.f32.mxu0 0.0
    %4747 = vmatmul.mubr.f32.gmra.mrb[0].mxu0 %v4361
    %v4748 = vpop.f32.mrb[0].mxu0
    %v4749 = vadd.f32 0.0, %v4748
    %v4750 = vpop.f32.mrb[0].mxu0
    %v4751 = vadd.f32 0.0, %v4750
    %4752 = vmatprep.mubr.f32.mxu0 0.0
    %4753 = vmatmul.mubr.f32.gmra.mrb[0].mxu0 %v4362
    %v4754 = vpop.f32.mrb[0].mxu0
    %v4755 = vadd.f32 0.0, %v4754
    %v4756 = vpop.f32.mrb[0].mxu0
    %v4757 = vadd.f32 0.0, %v4756
    %4758 = vdwg.mxu0
    %4759 = vmatprep.subr.mxu0 %v861
    %4760 = vmatpush1.msra.mxu0 %v860
    %4761 = vmatprep.subr.mxu0 %v865
    %4762 = vmatpush1.msra.mxu0 %v864
    %4763 = vmatprep.subr.mxu0 %v869
    %4764 = vmatpush1.msra.mxu0 %v868
    %4765 = vmatprep.subr.mxu0 %v873
    %4766 = vmatpush1.msra.mxu0 %v872
    %4767 = vmatprep.subr.mxu0 %v877
    %4768 = vmatpush1.msra.mxu0 %v876
    %4769 = vmatprep.subr.mxu0 %v881
    %4770 = vmatpush1.msra.mxu0 %v880
    %4771 = vmatprep.subr.mxu0 %v885
    %4772 = vmatpush1.msra.mxu0 %v884
    %4773 = vmatprep.subr.mxu0 %v889
    %4774 = vmatpush1.msra.mxu0 %v888
    %4775 = vmatprep.subr.mxu0 %v893
    %4776 = vmatpush1.msra.mxu0 %v892
    %4777 = vmatprep.subr.mxu0 %v897
    %4778 = vmatpush1.msra.mxu0 %v896
    %4779 = vmatprep.subr.mxu0 %v901
    %4780 = vmatpush1.msra.mxu0 %v900
    %4781 = vmatprep.subr.mxu0 %v905
    %4782 = vmatpush1.msra.mxu0 %v904
    %4783 = vmatprep.subr.mxu0 %v909
    %4784 = vmatpush1.msra.mxu0 %v908
    %4785 = vmatprep.subr.mxu0 %v913
    %4786 = vmatpush1.msra.mxu0 %v912
    %4787 = vmatprep.subr.mxu0 %v917
    %4788 = vmatpush1.msra.mxu0 %v916
    %4789 = vmatprep.subr.mxu0 %v921
    %4790 = vmatpush1.msra.mxu0 %v920
    %4791 = vmatprep.subr.mxu0 0.0
    %4792 = vmatpush1.msra.mxu0 0.0
    %4793 = vmatprep.subr.mxu0 0.0
    %4794 = vmatpush1.msra.mxu0 0.0
    %4795 = vmatprep.subr.mxu0 0.0
    %4796 = vmatpush1.msra.mxu0 0.0
    %4797 = vmatprep.subr.mxu0 0.0
    %4798 = vmatpush1.msra.mxu0 0.0
    %4799 = vmatprep.subr.mxu0 0.0
    %4800 = vmatpush1.msra.mxu0 0.0
    %4801 = vmatprep.subr.mxu0 0.0
    %4802 = vmatpush1.msra.mxu0 0.0
    %4803 = vmatprep.subr.mxu0 0.0
    %4804 = vmatpush1.msra.mxu0 0.0
    %4805 = vmatprep.subr.mxu0 0.0
    %4806 = vmatpush1.msra.mxu0 0.0
    %4807 = vmatprep.subr.mxu0 0.0
    %4808 = vmatpush1.msra.mxu0 0.0
    %4809 = vmatprep.subr.mxu0 0.0
    %4810 = vmatpush1.msra.mxu0 0.0
    %4811 = vmatprep.subr.mxu0 0.0
    %4812 = vmatpush1.msra.mxu0 0.0
    %4813 = vmatprep.subr.mxu0 0.0
    %4814 = vmatpush1.msra.mxu0 0.0
    %4815 = vmatprep.subr.mxu0 0.0
    %4816 = vmatpush1.msra.mxu0 0.0
    %4817 = vmatprep.subr.mxu0 0.0
    %4818 = vmatpush1.msra.mxu0 0.0
    %4819 = vmatprep.subr.mxu0 0.0
    %4820 = vmatpush1.msra.mxu0 0.0
    %4821 = vmatprep.subr.mxu0 0.0
    %4822 = vmatpush1.msra.mxu0 0.0
    %4823 = vmatprep.mubr.f32.mxu0 0.0
    %4824 = vmatmul.mubr.f32.gmra.mrb[0].mxu0 %v4359
    %v4825 = vpop.f32.mrb[0].mxu0
    %v4826 = vadd.f32 0.0, %v4825
    %v4827 = vpop.f32.mrb[0].mxu0
    %v4828 = vadd.f32 0.0, %v4827
    %4829 = vmatprep.mubr.f32.mxu0 0.0
    %4830 = vmatmul.mubr.f32.gmra.mrb[0].mxu0 %v4360
    %v4831 = vpop.f32.mrb[0].mxu0
    %v4832 = vadd.f32 0.0, %v4831
    %v4833 = vpop.f32.mrb[0].mxu0
    %v4834 = vadd.f32 0.0, %v4833
    %4835 = vmatprep.mubr.f32.mxu0 0.0
    %4836 = vmatmul.mubr.f32.gmra.mrb[0].mxu0 %v4361
    %v4837 = vpop.f32.mrb[0].mxu0
    %v4838 = vadd.f32 0.0, %v4837
    %v4839 = vpop.f32.mrb[0].mxu0
    %v4840 = vadd.f32 0.0, %v4839
    %4841 = vmatprep.mubr.f32.mxu0 0.0
    %4842 = vmatmul.mubr.f32.gmra.mrb[0].mxu0 %v4362
    %v4843 = vpop.f32.mrb[0].mxu0
    %v4844 = vadd.f32 0.0, %v4843
    %v4845 = vpop.f32.mrb[0].mxu0
    %v4846 = vadd.f32 0.0, %v4845
    %4847 = vdwg.mxu0
    %v4848 = vadd.f32 %v4654, %v4737
    %v4849 = vadd.f32 %v4655, %v4739
    %v4850 = vadd.f32 %v4656, %v4826
    %v4851 = vadd.f32 %v4657, %v4828
    %v4852 = vadd.f32 %v4658, %v4743
    %v4853 = vadd.f32 %v4659, %v4745
    %v4854 = vadd.f32 %v4660, %v4832
    %v4855 = vadd.f32 %v4661, %v4834
    %v4856 = vadd.f32 %v4662, %v4749
    %v4857 = vadd.f32 %v4663, %v4751
    %v4858 = vadd.f32 %v4664, %v4838
    %v4859 = vadd.f32 %v4665, %v4840
    %v4860 = vadd.f32 %v4666, %v4755
    %v4861 = vadd.f32 %v4667, %v4757
    %v4862 = vadd.f32 %v4668, %v4844
    %v4863 = vadd.f32 %v4669, %v4846
    %v4864 = vxor.u32 %v4848, 2147483648
    %v4865 = vxor.u32 %v4849, 2147483648
    %v4866 = vxor.u32 %v4850, 2147483648
    %v4867 = vxor.u32 %v4852, 2147483648
    %v4868 = vxor.u32 %v4853, 2147483648
    %v4869 = vxor.u32 %v4854, 2147483648
    %v4870 = vxor.u32 %v4856, 2147483648
    %v4871 = vxor.u32 %v4857, 2147483648
    %v4872 = vxor.u32 %v4858, 2147483648
    %v4873 = vxor.u32 %v4860, 2147483648
    %v4874 = vxor.u32 %v4861, 2147483648
    %v4875 = vxor.u32 %v4862, 2147483648
    %v4876 = vmul.f32 %v4864, 1.442695
    %v4877 = vpow.pop %v4876
    %v4878 = vmul.f32 %v4865, 1.442695
    %v4879 = vpow.pop %v4878
    %v4880 = vmul.f32 %v4866, 1.442695
    %v4881 = vpow.pop %v4880
    %v4882 = vmul.f32 %v4867, 1.442695
    %v4883 = vpow.pop %v4882
    %v4884 = vmul.f32 %v4868, 1.442695
    %v4885 = vpow.pop %v4884
    %v4886 = vmul.f32 %v4869, 1.442695
    %v4887 = vpow.pop %v4886
    %v4888 = vmul.f32 %v4870, 1.442695
    %v4889 = vpow.pop %v4888
    %v4890 = vmul.f32 %v4871, 1.442695
    %v4891 = vpow.pop %v4890
    %v4892 = vmul.f32 %v4872, 1.442695
    %v4893 = vpow.pop %v4892
    %v4894 = vmul.f32 %v4873, 1.442695
    %v4895 = vpow.pop %v4894
    %v4896 = vmul.f32 %v4874, 1.442695
    %v4897 = vpow.pop %v4896
    %v4898 = vmul.f32 %v4875, 1.442695
    %v4899 = vpow.pop %v4898
    %v4900 = vadd.f32 %v4877, 1.0
    %v4901 = vadd.f32 %v4879, 1.0
    %v4902 = vadd.f32 %v4881, 1.0
    %v4903 = vadd.f32 %v4883, 1.0
    %v4904 = vadd.f32 %v4885, 1.0
    %v4905 = vadd.f32 %v4887, 1.0
    %v4906 = vadd.f32 %v4889, 1.0
    %v4907 = vadd.f32 %v4891, 1.0
    %v4908 = vadd.f32 %v4893, 1.0
    %v4909 = vadd.f32 %v4895, 1.0
    %v4910 = vadd.f32 %v4897, 1.0
    %v4911 = vadd.f32 %v4899, 1.0
    %v4912 = vrcp.pop %v4900
    %v4913 = vmul.f32 1.0, %v4912
    %v4914 = vrcp.pop %v4901
    %v4915 = vmul.f32 1.0, %v4914
    %v4916 = vrcp.pop %v4902
    %v4917 = vmul.f32 1.0, %v4916
    %v4918 = vrcp.pop %v4903
    %v4919 = vmul.f32 1.0, %v4918
    %v4920 = vrcp.pop %v4904
    %v4921 = vmul.f32 1.0, %v4920
    %v4922 = vrcp.pop %v4905
    %v4923 = vmul.f32 1.0, %v4922
    %v4924 = vrcp.pop %v4906
    %v4925 = vmul.f32 1.0, %v4924
    %v4926 = vrcp.pop %v4907
    %v4927 = vmul.f32 1.0, %v4926
    %v4928 = vrcp.pop %v4908
    %v4929 = vmul.f32 1.0, %v4928
    %v4930 = vrcp.pop %v4909
    %v4931 = vmul.f32 1.0, %v4930
    %v4932 = vrcp.pop %v4910
    %v4933 = vmul.f32 1.0, %v4932
    %v4934 = vrcp.pop %v4911
    %v4935 = vmul.f32 1.0, %v4934
    %v4936 = vtanh.pop %v4851
    %v4937 = vtanh.pop %v4855
    %v4938 = vtanh.pop %v4859
    %v4939 = vtanh.pop %v4863
    %v4940 = vmul.f32 %v4915, %v4351
    %v4941 = vmul.f32 %v4921, %v4352
    %v4942 = vmul.f32 %v4927, %v4353
    %v4943 = vmul.f32 %v4933, %v4354
    %v4944 = vmul.f32 %v4913, %v4936
    %v4945 = vmul.f32 %v4919, %v4937
    %v4946 = vmul.f32 %v4925, %v4938
    %v4947 = vmul.f32 %v4931, %v4939
    %v4948 = vadd.f32 %v4940, %v4944
    %v4949 = vadd.f32 %v4941, %v4945
    %v4950 = vadd.f32 %v4942, %v4946
    %v4951 = vadd.f32 %v4943, %v4947
    %v4952 = vtanh.pop %v4948
    %v4953 = vtanh.pop %v4949
    %v4954 = vtanh.pop %v4950
    %v4955 = vtanh.pop %v4951
    %v4956 = vmul.f32 %v4917, %v4952
    %v4957 = vmul.f32 %v4923, %v4953
    %v4958 = vmul.f32 %v4929, %v4954
    %v4959 = vmul.f32 %v4935, %v4955
    %4960 = vmatprep.subr.mxu0 %v923
    %4961 = vmatpush1.msra.mxu0 %v922
    %4962 = vmatprep.subr.mxu0 %v927
    %4963 = vmatpush1.msra.mxu0 %v926
    %4964 = vmatprep.subr.mxu0 %v931
    %4965 = vmatpush1.msra.mxu0 %v930
    %4966 = vmatprep.subr.mxu0 %v935
    %4967 = vmatpush1.msra.mxu0 %v934
    %4968 = vmatprep.subr.mxu0 %v939
    %4969 = vmatpush1.msra.mxu0 %v938
    %4970 = vmatprep.subr.mxu0 %v943
    %4971 = vmatpush1.msra.mxu0 %v942
    %4972 = vmatprep.subr.mxu0 %v947
    %4973 = vmatpush1.msra.mxu0 %v946
    %4974 = vmatprep.subr.mxu0 %v951
    %4975 = vmatpush1.msra.mxu0 %v950
    %4976 = vmatprep.subr.mxu0 %v955
    %4977 = vmatpush1.msra.mxu0 %v954
    %4978 = vmatprep.subr.mxu0 %v959
    %4979 = vmatpush1.msra.mxu0 %v958
    %4980 = vmatprep.subr.mxu0 %v963
    %4981 = vmatpush1.msra.mxu0 %v962
    %4982 = vmatprep.subr.mxu0 %v967
    %4983 = vmatpush1.msra.mxu0 %v966
    %4984 = vmatprep.subr.mxu0 %v971
    %4985 = vmatpush1.msra.mxu0 %v970
    %4986 = vmatprep.subr.mxu0 %v975
    %4987 = vmatpush1.msra.mxu0 %v974
    %4988 = vmatprep.subr.mxu0 %v979
    %4989 = vmatpush1.msra.mxu0 %v978
    %4990 = vmatprep.subr.mxu0 %v983
    %4991 = vmatpush1.msra.mxu0 %v982
    %4992 = vmatprep.subr.mxu0 %v987
    %4993 = vmatpush1.msra.mxu0 %v986
    %4994 = vmatprep.subr.mxu0 %v991
    %4995 = vmatpush1.msra.mxu0 %v990
    %4996 = vmatprep.subr.mxu0 %v995
    %4997 = vmatpush1.msra.mxu0 %v994
    %4998 = vmatprep.subr.mxu0 %v999
    %4999 = vmatpush1.msra.mxu0 %v998
    %5000 = vmatprep.subr.mxu0 %v1003
    %5001 = vmatpush1.msra.mxu0 %v1002
    %5002 = vmatprep.subr.mxu0 %v1007
    %5003 = vmatpush1.msra.mxu0 %v1006
    %5004 = vmatprep.subr.mxu0 %v1011
    %5005 = vmatpush1.msra.mxu0 %v1010
    %5006 = vmatprep.subr.mxu0 %v1015
    %5007 = vmatpush1.msra.mxu0 %v1014
    %5008 = vmatprep.subr.mxu0 %v1019
    %5009 = vmatpush1.msra.mxu0 %v1018
    %5010 = vmatprep.subr.mxu0 %v1023
    %5011 = vmatpush1.msra.mxu0 %v1022
    %5012 = vmatprep.subr.mxu0 %v1027
    %5013 = vmatpush1.msra.mxu0 %v1026
    %5014 = vmatprep.subr.mxu0 %v1031
    %5015 = vmatpush1.msra.mxu0 %v1030
    %5016 = vmatprep.subr.mxu0 %v1035
    %5017 = vmatpush1.msra.mxu0 %v1034
    %5018 = vmatprep.subr.mxu0 %v1039
    %5019 = vmatpush1.msra.mxu0 %v1038
    %5020 = vmatprep.subr.mxu0 %v1043
    %5021 = vmatpush1.msra.mxu0 %v1042
    %5022 = vmatprep.subr.mxu0 %v1047
    %5023 = vmatpush1.msra.mxu0 %v1046
    %5024 = vmatprep.mubr.f32.mxu0 %v4649
    %5025 = vmatmul.mubr.f32.gmra.mrb[0].mxu0 %v4956
    %v5026 = vpop.f32.mrb[0].mxu0
    %v5027 = vadd.f32 0.0, %v5026
    %v5028 = vpop.f32.mrb[0].mxu0
    %v5029 = vadd.f32 0.0, %v5028
    %5030 = vmatprep.mubr.f32.mxu0 %v4650
    %5031 = vmatmul.mubr.f32.gmra.mrb[0].mxu0 %v4957
    %v5032 = vpop.f32.mrb[0].mxu0
    %v5033 = vadd.f32 0.0, %v5032
    %v5034 = vpop.f32.mrb[0].mxu0
    %v5035 = vadd.f32 0.0, %v5034
    %5036 = vmatprep.mubr.f32.mxu0 %v4651
    %5037 = vmatmul.mubr.f32.gmra.mrb[0].mxu0 %v4958
    %v5038 = vpop.f32.mrb[0].mxu0
    %v5039 = vadd.f32 0.0, %v5038
    %v5040 = vpop.f32.mrb[0].mxu0
    %v5041 = vadd.f32 0.0, %v5040
    %5042 = vmatprep.mubr.f32.mxu0 %v4652
    %5043 = vmatmul.mubr.f32.gmra.mrb[0].mxu0 %v4959
    %v5044 = vpop.f32.mrb[0].mxu0
    %v5045 = vadd.f32 0.0, %v5044
    %v5046 = vpop.f32.mrb[0].mxu0
    %v5047 = vadd.f32 0.0, %v5046
    %5048 = vdwg.mxu0
    %5049 = vmatprep.subr.mxu0 %v925
    %5050 = vmatpush1.msra.mxu0 %v924
    %5051 = vmatprep.subr.mxu0 %v929
    %5052 = vmatpush1.msra.mxu0 %v928
    %5053 = vmatprep.subr.mxu0 %v933
    %5054 = vmatpush1.msra.mxu0 %v932
    %5055 = vmatprep.subr.mxu0 %v937
    %5056 = vmatpush1.msra.mxu0 %v936
    %5057 = vmatprep.subr.mxu0 %v941
    %5058 = vmatpush1.msra.mxu0 %v940
    %5059 = vmatprep.subr.mxu0 %v945
    %5060 = vmatpush1.msra.mxu0 %v944
    %5061 = vmatprep.subr.mxu0 %v949
    %5062 = vmatpush1.msra.mxu0 %v948
    %5063 = vmatprep.subr.mxu0 %v953
    %5064 = vmatpush1.msra.mxu0 %v952
    %5065 = vmatprep.subr.mxu0 %v957
    %5066 = vmatpush1.msra.mxu0 %v956
    %5067 = vmatprep.subr.mxu0 %v961
    %5068 = vmatpush1.msra.mxu0 %v960
    %5069 = vmatprep.subr.mxu0 %v965
    %5070 = vmatpush1.msra.mxu0 %v964
    %5071 = vmatprep.subr.mxu0 %v969
    %5072 = vmatpush1.msra.mxu0 %v968
    %5073 = vmatprep.subr.mxu0 %v973
    %5074 = vmatpush1.msra.mxu0 %v972
    %5075 = vmatprep.subr.mxu0 %v977
    %5076 = vmatpush1.msra.mxu0 %v976
    %5077 = vmatprep.subr.mxu0 %v981
    %5078 = vmatpush1.msra.mxu0 %v980
    %5079 = vmatprep.subr.mxu0 %v985
    %5080 = vmatpush1.msra.mxu0 %v984
    %5081 = vmatprep.subr.mxu0 %v989
    %5082 = vmatpush1.msra.mxu0 %v988
    %5083 = vmatprep.subr.mxu0 %v993
    %5084 = vmatpush1.msra.mxu0 %v992
    %5085 = vmatprep.subr.mxu0 %v997
    %5086 = vmatpush1.msra.mxu0 %v996
    %5087 = vmatprep.subr.mxu0 %v1001
    %5088 = vmatpush1.msra.mxu0 %v1000
    %5089 = vmatprep.subr.mxu0 %v1005
    %5090 = vmatpush1.msra.mxu0 %v1004
    %5091 = vmatprep.subr.mxu0 %v1009
    %5092 = vmatpush1.msra.mxu0 %v1008
    %5093 = vmatprep.subr.mxu0 %v1013
    %5094 = vmatpush1.msra.mxu0 %v1012
    %5095 = vmatprep.subr.mxu0 %v1017
    %5096 = vmatpush1.msra.mxu0 %v1016
    %5097 = vmatprep.subr.mxu0 %v1021
    %5098 = vmatpush1.msra.mxu0 %v1020
    %5099 = vmatprep.subr.mxu0 %v1025
    %5100 = vmatpush1.msra.mxu0 %v1024
    %5101 = vmatprep.subr.mxu0 %v1029
    %5102 = vmatpush1.msra.mxu0 %v1028
    %5103 = vmatprep.subr.mxu0 %v1033
    %5104 = vmatpush1.msra.mxu0 %v1032
    %5105 = vmatprep.subr.mxu0 %v1037
    %5106 = vmatpush1.msra.mxu0 %v1036
    %5107 = vmatprep.subr.mxu0 %v1041
    %5108 = vmatpush1.msra.mxu0 %v1040
    %5109 = vmatprep.subr.mxu0 %v1045
    %5110 = vmatpush1.msra.mxu0 %v1044
    %5111 = vmatprep.subr.mxu0 %v1049
    %5112 = vmatpush1.msra.mxu0 %v1048
    %5113 = vmatprep.mubr.f32.mxu0 %v4649
    %5114 = vmatmul.mubr.f32.gmra.mrb[0].mxu0 %v4956
    %v5115 = vpop.f32.mrb[0].mxu0
    %v5116 = vadd.f32 0.0, %v5115
    %v5117 = vpop.f32.mrb[0].mxu0
    %v5118 = vadd.f32 0.0, %v5117
    %5119 = vmatprep.mubr.f32.mxu0 %v4650
    %5120 = vmatmul.mubr.f32.gmra.mrb[0].mxu0 %v4957
    %v5121 = vpop.f32.mrb[0].mxu0
    %v5122 = vadd.f32 0.0, %v5121
    %v5123 = vpop.f32.mrb[0].mxu0
    %v5124 = vadd.f32 0.0, %v5123
    %5125 = vmatprep.mubr.f32.mxu0 %v4651
    %5126 = vmatmul.mubr.f32.gmra.mrb[0].mxu0 %v4958
    %v5127 = vpop.f32.mrb[0].mxu0
    %v5128 = vadd.f32 0.0, %v5127
    %v5129 = vpop.f32.mrb[0].mxu0
    %v5130 = vadd.f32 0.0, %v5129
    %5131 = vmatprep.mubr.f32.mxu0 %v4652
    %5132 = vmatmul.mubr.f32.gmra.mrb[0].mxu0 %v4959
    %v5133 = vpop.f32.mrb[0].mxu0
    %v5134 = vadd.f32 0.0, %v5133
    %v5135 = vpop.f32.mrb[0].mxu0
    %v5136 = vadd.f32 0.0, %v5135
    %5137 = vdwg.mxu0
    %v5138 = vadd.f32 %v1539, %v5027
    %v5139 = vadd.f32 %v1543, %v5029
    %v5140 = vadd.f32 %v1547, %v5116
    %v5141 = vadd.f32 %v1551, %v5118
    %v5142 = vadd.f32 %v1539, %v5033
    %v5143 = vadd.f32 %v1543, %v5035
    %v5144 = vadd.f32 %v1547, %v5122
    %v5145 = vadd.f32 %v1551, %v5124
    %v5146 = vadd.f32 %v1539, %v5039
    %v5147 = vadd.f32 %v1543, %v5041
    %v5148 = vadd.f32 %v1547, %v5128
    %v5149 = vadd.f32 %v1551, %v5130
    %v5150 = vadd.f32 %v1539, %v5045
    %v5151 = vadd.f32 %v1543, %v5047
    %v5152 = vadd.f32 %v1547, %v5134
    %v5153 = vadd.f32 %v1551, %v5136
    %v5154 = vxor.u32 %v5138, 2147483648
    %v5155 = vxor.u32 %v5139, 2147483648
    %v5156 = vxor.u32 %v5140, 2147483648
    %v5157 = vxor.u32 %v5142, 2147483648
    %v5158 = vxor.u32 %v5143, 2147483648
    %v5159 = vxor.u32 %v5144, 2147483648
    %v5160 = vxor.u32 %v5146, 2147483648
    %v5161 = vxor.u32 %v5147, 2147483648
    %v5162 = vxor.u32 %v5148, 2147483648
    %v5163 = vxor.u32 %v5150, 2147483648
    %v5164 = vxor.u32 %v5151, 2147483648
    %v5165 = vxor.u32 %v5152, 2147483648
    %v5166 = vmul.f32 %v5154, 1.442695
    %v5167 = vpow.pop %v5166
    %v5168 = vmul.f32 %v5155, 1.442695
    %v5169 = vpow.pop %v5168
    %v5170 = vmul.f32 %v5156, 1.442695
    %v5171 = vpow.pop %v5170
    %v5172 = vmul.f32 %v5157, 1.442695
    %v5173 = vpow.pop %v5172
    %v5174 = vmul.f32 %v5158, 1.442695
    %v5175 = vpow.pop %v5174
    %v5176 = vmul.f32 %v5159, 1.442695
    %v5177 = vpow.pop %v5176
    %v5178 = vmul.f32 %v5160, 1.442695
    %v5179 = vpow.pop %v5178
    %v5180 = vmul.f32 %v5161, 1.442695
    %v5181 = vpow.pop %v5180
    %v5182 = vmul.f32 %v5162, 1.442695
    %v5183 = vpow.pop %v5182
    %v5184 = vmul.f32 %v5163, 1.442695
    %v5185 = vpow.pop %v5184
    %v5186 = vmul.f32 %v5164, 1.442695
    %v5187 = vpow.pop %v5186
    %v5188 = vmul.f32 %v5165, 1.442695
    %v5189 = vpow.pop %v5188
    %v5190 = vadd.f32 %v5167, 1.0
    %v5191 = vadd.f32 %v5169, 1.0
    %v5192 = vadd.f32 %v5171, 1.0
    %v5193 = vadd.f32 %v5173, 1.0
    %v5194 = vadd.f32 %v5175, 1.0
    %v5195 = vadd.f32 %v5177, 1.0
    %v5196 = vadd.f32 %v5179, 1.0
    %v5197 = vadd.f32 %v5181, 1.0
    %v5198 = vadd.f32 %v5183, 1.0
    %v5199 = vadd.f32 %v5185, 1.0
    %v5200 = vadd.f32 %v5187, 1.0
    %v5201 = vadd.f32 %v5189, 1.0
    %v5202 = vrcp.pop %v5190
    %v5203 = vmul.f32 1.0, %v5202
    %v5204 = vrcp.pop %v5191
    %v5205 = vmul.f32 1.0, %v5204
    %v5206 = vrcp.pop %v5192
    %v5207 = vmul.f32 1.0, %v5206
    %v5208 = vrcp.pop %v5193
    %v5209 = vmul.f32 1.0, %v5208
    %v5210 = vrcp.pop %v5194
    %v5211 = vmul.f32 1.0, %v5210
    %v5212 = vrcp.pop %v5195
    %v5213 = vmul.f32 1.0, %v5212
    %v5214 = vrcp.pop %v5196
    %v5215 = vmul.f32 1.0, %v5214
    %v5216 = vrcp.pop %v5197
    %v5217 = vmul.f32 1.0, %v5216
    %v5218 = vrcp.pop %v5198
    %v5219 = vmul.f32 1.0, %v5218
    %v5220 = vrcp.pop %v5199
    %v5221 = vmul.f32 1.0, %v5220
    %v5222 = vrcp.pop %v5200
    %v5223 = vmul.f32 1.0, %v5222
    %v5224 = vrcp.pop %v5201
    %v5225 = vmul.f32 1.0, %v5224
    %v5226 = vtanh.pop %v5141
    %v5227 = vtanh.pop %v5145
    %v5228 = vtanh.pop %v5149
    %v5229 = vtanh.pop %v5153
    %v5230 = vmul.f32 %v5205, %v4641
    %v5231 = vmul.f32 %v5211, %v4642
    %v5232 = vmul.f32 %v5217, %v4643
    %v5233 = vmul.f32 %v5223, %v4644
    %v5234 = vmul.f32 %v5203, %v5226
    %v5235 = vmul.f32 %v5209, %v5227
    %v5236 = vmul.f32 %v5215, %v5228
    %v5237 = vmul.f32 %v5221, %v5229
    %v5238 = vadd.f32 %v5230, %v5234
    %v5239 = vadd.f32 %v5231, %v5235
    %v5240 = vadd.f32 %v5232, %v5236
    %v5241 = vadd.f32 %v5233, %v5237
    %v5242 = vtanh.pop %v5238
    %v5243 = vtanh.pop %v5239
    %v5244 = vtanh.pop %v5240
    %v5245 = vtanh.pop %v5241
    %v5246 = vmul.f32 %v5207, %v5242
    %v5247 = vmul.f32 %v5213, %v5243
    %v5248 = vmul.f32 %v5219, %v5244
    %v5249 = vmul.f32 %v5225, %v5245
    %s5250 = scalar_lea.vmem [#allocation2], 896
    %v5251 = vld [vmem:[%s5250] sm:$0xff]
    %v5252 = vld [vmem:[%s5250 + $0x8] sm:$0xff]
    %v5253 = vld [vmem:[%s5250 + $0x10] sm:$0xff]
    %v5254 = vld [vmem:[%s5250 + $0x18] sm:$0xff]
    %v5255 = vld [vmem:[%s5250 + $0x20] sm:$0xff]
    %v5256 = vld [vmem:[%s5250 + $0x28] sm:$0xff]
    %v5257 = vld [vmem:[%s5250 + $0x30] sm:$0xff]
    %v5258 = vld [vmem:[%s5250 + $0x38] sm:$0xff]
    %v5259 = vld [vmem:[%s5250 + $0x40] sm:$0xff]
    %v5260 = vld [vmem:[%s5250 + $0x48] sm:$0xff]
    %v5261 = vld [vmem:[%s5250 + $0x50] sm:$0xff]
    %v5262 = vld [vmem:[%s5250 + $0x58] sm:$0xff]
    %v5263 = vld [vmem:[%s5250 + $0x60] sm:$0xff]
    %v5264 = vld [vmem:[%s5250 + $0x68] sm:$0xff]
    %v5265 = vld [vmem:[%s5250 + $0x70] sm:$0xff]
    %v5266 = vld [vmem:[%s5250 + $0x78] sm:$0xff]
    %5267 = vmatprep.subr.mxu0 %v859
    %5268 = vmatpush1.msra.mxu0 %v858
    %5269 = vmatprep.subr.mxu0 %v863
    %5270 = vmatpush1.msra.mxu0 %v862
    %5271 = vmatprep.subr.mxu0 %v867
    %5272 = vmatpush1.msra.mxu0 %v866
    %5273 = vmatprep.subr.mxu0 %v871
    %5274 = vmatpush1.msra.mxu0 %v870
    %5275 = vmatprep.subr.mxu0 %v875
    %5276 = vmatpush1.msra.mxu0 %v874
    %5277 = vmatprep.subr.mxu0 %v879
    %5278 = vmatpush1.msra.mxu0 %v878
    %5279 = vmatprep.subr.mxu0 %v883
    %5280 = vmatpush1.msra.mxu0 %v882
    %5281 = vmatprep.subr.mxu0 %v887
    %5282 = vmatpush1.msra.mxu0 %v886
    %5283 = vmatprep.subr.mxu0 %v891
    %5284 = vmatpush1.msra.mxu0 %v890
    %5285 = vmatprep.subr.mxu0 %v895
    %5286 = vmatpush1.msra.mxu0 %v894
    %5287 = vmatprep.subr.mxu0 %v899
    %5288 = vmatpush1.msra.mxu0 %v898
    %5289 = vmatprep.subr.mxu0 %v903
    %5290 = vmatpush1.msra.mxu0 %v902
    %5291 = vmatprep.subr.mxu0 %v907
    %5292 = vmatpush1.msra.mxu0 %v906
    %5293 = vmatprep.subr.mxu0 %v911
    %5294 = vmatpush1.msra.mxu0 %v910
    %5295 = vmatprep.subr.mxu0 %v915
    %5296 = vmatpush1.msra.mxu0 %v914
    %5297 = vmatprep.subr.mxu0 %v919
    %5298 = vmatpush1.msra.mxu0 %v918
    %5299 = vmatprep.subr.mxu0 0.0
    %5300 = vmatpush1.msra.mxu0 0.0
    %5301 = vmatprep.subr.mxu0 0.0
    %5302 = vmatpush1.msra.mxu0 0.0
    %5303 = vmatprep.subr.mxu0 0.0
    %5304 = vmatpush1.msra.mxu0 0.0
    %5305 = vmatprep.subr.mxu0 0.0
    %5306 = vmatpush1.msra.mxu0 0.0
    %5307 = vmatprep.subr.mxu0 0.0
    %5308 = vmatpush1.msra.mxu0 0.0
    %5309 = vmatprep.subr.mxu0 0.0
    %5310 = vmatpush1.msra.mxu0 0.0
    %5311 = vmatprep.subr.mxu0 0.0
    %5312 = vmatpush1.msra.mxu0 0.0
    %5313 = vmatprep.subr.mxu0 0.0
    %5314 = vmatpush1.msra.mxu0 0.0
    %5315 = vmatprep.subr.mxu0 0.0
    %5316 = vmatpush1.msra.mxu0 0.0
    %5317 = vmatprep.subr.mxu0 0.0
    %5318 = vmatpush1.msra.mxu0 0.0
    %5319 = vmatprep.subr.mxu0 0.0
    %5320 = vmatpush1.msra.mxu0 0.0
    %5321 = vmatprep.subr.mxu0 0.0
    %5322 = vmatpush1.msra.mxu0 0.0
    %5323 = vmatprep.subr.mxu0 0.0
    %5324 = vmatpush1.msra.mxu0 0.0
    %5325 = vmatprep.subr.mxu0 0.0
    %5326 = vmatpush1.msra.mxu0 0.0
    %5327 = vmatprep.subr.mxu0 0.0
    %5328 = vmatpush1.msra.mxu0 0.0
    %5329 = vmatprep.subr.mxu0 0.0
    %5330 = vmatpush1.msra.mxu0 0.0
    %5331 = vmatprep.mubr.f32.mxu0 0.0
    %5332 = vmatmul.mubr.f32.gmra.mrb[0].mxu0 %v4956
    %v5333 = vpop.f32.mrb[0].mxu0
    %v5334 = vadd.f32 0.0, %v5333
    %v5335 = vpop.f32.mrb[0].mxu0
    %v5336 = vadd.f32 0.0, %v5335
    %5337 = vmatprep.mubr.f32.mxu0 0.0
    %5338 = vmatmul.mubr.f32.gmra.mrb[0].mxu0 %v4957
    %v5339 = vpop.f32.mrb[0].mxu0
    %v5340 = vadd.f32 0.0, %v5339
    %v5341 = vpop.f32.mrb[0].mxu0
    %v5342 = vadd.f32 0.0, %v5341
    %5343 = vmatprep.mubr.f32.mxu0 0.0
    %5344 = vmatmul.mubr.f32.gmra.mrb[0].mxu0 %v4958
    %v5345 = vpop.f32.mrb[0].mxu0
    %v5346 = vadd.f32 0.0, %v5345
    %v5347 = vpop.f32.mrb[0].mxu0
    %v5348 = vadd.f32 0.0, %v5347
    %5349 = vmatprep.mubr.f32.mxu0 0.0
    %5350 = vmatmul.mubr.f32.gmra.mrb[0].mxu0 %v4959
    %v5351 = vpop.f32.mrb[0].mxu0
    %v5352 = vadd.f32 0.0, %v5351
    %v5353 = vpop.f32.mrb[0].mxu0
    %v5354 = vadd.f32 0.0, %v5353
    %5355 = vdwg.mxu0
    %5356 = vmatprep.subr.mxu0 %v861
    %5357 = vmatpush1.msra.mxu0 %v860
    %5358 = vmatprep.subr.mxu0 %v865
    %5359 = vmatpush1.msra.mxu0 %v864
    %5360 = vmatprep.subr.mxu0 %v869
    %5361 = vmatpush1.msra.mxu0 %v868
    %5362 = vmatprep.subr.mxu0 %v873
    %5363 = vmatpush1.msra.mxu0 %v872
    %5364 = vmatprep.subr.mxu0 %v877
    %5365 = vmatpush1.msra.mxu0 %v876
    %5366 = vmatprep.subr.mxu0 %v881
    %5367 = vmatpush1.msra.mxu0 %v880
    %5368 = vmatprep.subr.mxu0 %v885
    %5369 = vmatpush1.msra.mxu0 %v884
    %5370 = vmatprep.subr.mxu0 %v889
    %5371 = vmatpush1.msra.mxu0 %v888
    %5372 = vmatprep.subr.mxu0 %v893
    %5373 = vmatpush1.msra.mxu0 %v892
    %5374 = vmatprep.subr.mxu0 %v897
    %5375 = vmatpush1.msra.mxu0 %v896
    %5376 = vmatprep.subr.mxu0 %v901
    %5377 = vmatpush1.msra.mxu0 %v900
    %5378 = vmatprep.subr.mxu0 %v905
    %5379 = vmatpush1.msra.mxu0 %v904
    %5380 = vmatprep.subr.mxu0 %v909
    %5381 = vmatpush1.msra.mxu0 %v908
    %5382 = vmatprep.subr.mxu0 %v913
    %5383 = vmatpush1.msra.mxu0 %v912
    %5384 = vmatprep.subr.mxu0 %v917
    %5385 = vmatpush1.msra.mxu0 %v916
    %5386 = vmatprep.subr.mxu0 %v921
    %5387 = vmatpush1.msra.mxu0 %v920
    %5388 = vmatprep.subr.mxu0 0.0
    %5389 = vmatpush1.msra.mxu0 0.0
    %5390 = vmatprep.subr.mxu0 0.0
    %5391 = vmatpush1.msra.mxu0 0.0
    %5392 = vmatprep.subr.mxu0 0.0
    %5393 = vmatpush1.msra.mxu0 0.0
    %5394 = vmatprep.subr.mxu0 0.0
    %5395 = vmatpush1.msra.mxu0 0.0
    %5396 = vmatprep.subr.mxu0 0.0
    %5397 = vmatpush1.msra.mxu0 0.0
    %5398 = vmatprep.subr.mxu0 0.0
    %5399 = vmatpush1.msra.mxu0 0.0
    %5400 = vmatprep.subr.mxu0 0.0
    %5401 = vmatpush1.msra.mxu0 0.0
    %5402 = vmatprep.subr.mxu0 0.0
    %5403 = vmatpush1.msra.mxu0 0.0
    %5404 = vmatprep.subr.mxu0 0.0
    %5405 = vmatpush1.msra.mxu0 0.0
    %5406 = vmatprep.subr.mxu0 0.0
    %5407 = vmatpush1.msra.mxu0 0.0
    %5408 = vmatprep.subr.mxu0 0.0
    %5409 = vmatpush1.msra.mxu0 0.0
    %5410 = vmatprep.subr.mxu0 0.0
    %5411 = vmatpush1.msra.mxu0 0.0
    %5412 = vmatprep.subr.mxu0 0.0
    %5413 = vmatpush1.msra.mxu0 0.0
    %5414 = vmatprep.subr.mxu0 0.0
    %5415 = vmatpush1.msra.mxu0 0.0
    %5416 = vmatprep.subr.mxu0 0.0
    %5417 = vmatpush1.msra.mxu0 0.0
    %5418 = vmatprep.subr.mxu0 0.0
    %5419 = vmatpush1.msra.mxu0 0.0
    %5420 = vmatprep.mubr.f32.mxu0 0.0
    %5421 = vmatmul.mubr.f32.gmra.mrb[0].mxu0 %v4956
    %v5422 = vpop.f32.mrb[0].mxu0
    %v5423 = vadd.f32 0.0, %v5422
    %v5424 = vpop.f32.mrb[0].mxu0
    %v5425 = vadd.f32 0.0, %v5424
    %5426 = vmatprep.mubr.f32.mxu0 0.0
    %5427 = vmatmul.mubr.f32.gmra.mrb[0].mxu0 %v4957
    %v5428 = vpop.f32.mrb[0].mxu0
    %v5429 = vadd.f32 0.0, %v5428
    %v5430 = vpop.f32.mrb[0].mxu0
    %v5431 = vadd.f32 0.0, %v5430
    %5432 = vmatprep.mubr.f32.mxu0 0.0
    %5433 = vmatmul.mubr.f32.gmra.mrb[0].mxu0 %v4958
    %v5434 = vpop.f32.mrb[0].mxu0
    %v5435 = vadd.f32 0.0, %v5434
    %v5436 = vpop.f32.mrb[0].mxu0
    %v5437 = vadd.f32 0.0, %v5436
    %5438 = vmatprep.mubr.f32.mxu0 0.0
    %5439 = vmatmul.mubr.f32.gmra.mrb[0].mxu0 %v4959
    %v5440 = vpop.f32.mrb[0].mxu0
    %v5441 = vadd.f32 0.0, %v5440
    %v5442 = vpop.f32.mrb[0].mxu0
    %v5443 = vadd.f32 0.0, %v5442
    %5444 = vdwg.mxu0
    %v5445 = vadd.f32 %v5251, %v5334
    %v5446 = vadd.f32 %v5252, %v5336
    %v5447 = vadd.f32 %v5253, %v5423
    %v5448 = vadd.f32 %v5254, %v5425
    %v5449 = vadd.f32 %v5255, %v5340
    %v5450 = vadd.f32 %v5256, %v5342
    %v5451 = vadd.f32 %v5257, %v5429
    %v5452 = vadd.f32 %v5258, %v5431
    %v5453 = vadd.f32 %v5259, %v5346
    %v5454 = vadd.f32 %v5260, %v5348
    %v5455 = vadd.f32 %v5261, %v5435
    %v5456 = vadd.f32 %v5262, %v5437
    %v5457 = vadd.f32 %v5263, %v5352
    %v5458 = vadd.f32 %v5264, %v5354
    %v5459 = vadd.f32 %v5265, %v5441
    %v5460 = vadd.f32 %v5266, %v5443
    %v5461 = vxor.u32 %v5445, 2147483648
    %v5462 = vxor.u32 %v5446, 2147483648
    %v5463 = vxor.u32 %v5447, 2147483648
    %v5464 = vxor.u32 %v5449, 2147483648
    %v5465 = vxor.u32 %v5450, 2147483648
    %v5466 = vxor.u32 %v5451, 2147483648
    %v5467 = vxor.u32 %v5453, 2147483648
    %v5468 = vxor.u32 %v5454, 2147483648
    %v5469 = vxor.u32 %v5455, 2147483648
    %v5470 = vxor.u32 %v5457, 2147483648
    %v5471 = vxor.u32 %v5458, 2147483648
    %v5472 = vxor.u32 %v5459, 2147483648
    %v5473 = vmul.f32 %v5461, 1.442695
    %v5474 = vpow.pop %v5473
    %v5475 = vmul.f32 %v5462, 1.442695
    %v5476 = vpow.pop %v5475
    %v5477 = vmul.f32 %v5463, 1.442695
    %v5478 = vpow.pop %v5477
    %v5479 = vmul.f32 %v5464, 1.442695
    %v5480 = vpow.pop %v5479
    %v5481 = vmul.f32 %v5465, 1.442695
    %v5482 = vpow.pop %v5481
    %v5483 = vmul.f32 %v5466, 1.442695
    %v5484 = vpow.pop %v5483
    %v5485 = vmul.f32 %v5467, 1.442695
    %v5486 = vpow.pop %v5485
    %v5487 = vmul.f32 %v5468, 1.442695
    %v5488 = vpow.pop %v5487
    %v5489 = vmul.f32 %v5469, 1.442695
    %v5490 = vpow.pop %v5489
    %v5491 = vmul.f32 %v5470, 1.442695
    %v5492 = vpow.pop %v5491
    %v5493 = vmul.f32 %v5471, 1.442695
    %v5494 = vpow.pop %v5493
    %v5495 = vmul.f32 %v5472, 1.442695
    %v5496 = vpow.pop %v5495
    %v5497 = vadd.f32 %v5474, 1.0
    %v5498 = vadd.f32 %v5476, 1.0
    %v5499 = vadd.f32 %v5478, 1.0
    %v5500 = vadd.f32 %v5480, 1.0
    %v5501 = vadd.f32 %v5482, 1.0
    %v5502 = vadd.f32 %v5484, 1.0
    %v5503 = vadd.f32 %v5486, 1.0
    %v5504 = vadd.f32 %v5488, 1.0
    %v5505 = vadd.f32 %v5490, 1.0
    %v5506 = vadd.f32 %v5492, 1.0
    %v5507 = vadd.f32 %v5494, 1.0
    %v5508 = vadd.f32 %v5496, 1.0
    %v5509 = vrcp.pop %v5497
    %v5510 = vmul.f32 1.0, %v5509
    %v5511 = vrcp.pop %v5498
    %v5512 = vmul.f32 1.0, %v5511
    %v5513 = vrcp.pop %v5499
    %v5514 = vmul.f32 1.0, %v5513
    %v5515 = vrcp.pop %v5500
    %v5516 = vmul.f32 1.0, %v5515
    %v5517 = vrcp.pop %v5501
    %v5518 = vmul.f32 1.0, %v5517
    %v5519 = vrcp.pop %v5502
    %v5520 = vmul.f32 1.0, %v5519
    %v5521 = vrcp.pop %v5503
    %v5522 = vmul.f32 1.0, %v5521
    %v5523 = vrcp.pop %v5504
    %v5524 = vmul.f32 1.0, %v5523
    %v5525 = vrcp.pop %v5505
    %v5526 = vmul.f32 1.0, %v5525
    %v5527 = vrcp.pop %v5506
    %v5528 = vmul.f32 1.0, %v5527
    %v5529 = vrcp.pop %v5507
    %v5530 = vmul.f32 1.0, %v5529
    %v5531 = vrcp.pop %v5508
    %v5532 = vmul.f32 1.0, %v5531
    %v5533 = vtanh.pop %v5448
    %v5534 = vtanh.pop %v5452
    %v5535 = vtanh.pop %v5456
    %v5536 = vtanh.pop %v5460
    %v5537 = vmul.f32 %v5512, %v4948
    %v5538 = vmul.f32 %v5518, %v4949
    %v5539 = vmul.f32 %v5524, %v4950
    %v5540 = vmul.f32 %v5530, %v4951
    %v5541 = vmul.f32 %v5510, %v5533
    %v5542 = vmul.f32 %v5516, %v5534
    %v5543 = vmul.f32 %v5522, %v5535
    %v5544 = vmul.f32 %v5528, %v5536
    %v5545 = vadd.f32 %v5537, %v5541
    %v5546 = vadd.f32 %v5538, %v5542
    %v5547 = vadd.f32 %v5539, %v5543
    %v5548 = vadd.f32 %v5540, %v5544
    %v5549 = vtanh.pop %v5545
    %v5550 = vtanh.pop %v5546
    %v5551 = vtanh.pop %v5547
    %v5552 = vtanh.pop %v5548
    %v5553 = vmul.f32 %v5514, %v5549
    %v5554 = vmul.f32 %v5520, %v5550
    %v5555 = vmul.f32 %v5526, %v5551
    %v5556 = vmul.f32 %v5532, %v5552
    %5557 = vmatprep.subr.mxu0 %v923
    %5558 = vmatpush1.msra.mxu0 %v922
    %5559 = vmatprep.subr.mxu0 %v927
    %5560 = vmatpush1.msra.mxu0 %v926
    %5561 = vmatprep.subr.mxu0 %v931
    %5562 = vmatpush1.msra.mxu0 %v930
    %5563 = vmatprep.subr.mxu0 %v935
    %5564 = vmatpush1.msra.mxu0 %v934
    %5565 = vmatprep.subr.mxu0 %v939
    %5566 = vmatpush1.msra.mxu0 %v938
    %5567 = vmatprep.subr.mxu0 %v943
    %5568 = vmatpush1.msra.mxu0 %v942
    %5569 = vmatprep.subr.mxu0 %v947
    %5570 = vmatpush1.msra.mxu0 %v946
    %5571 = vmatprep.subr.mxu0 %v951
    %5572 = vmatpush1.msra.mxu0 %v950
    %5573 = vmatprep.subr.mxu0 %v955
    %5574 = vmatpush1.msra.mxu0 %v954
    %5575 = vmatprep.subr.mxu0 %v959
    %5576 = vmatpush1.msra.mxu0 %v958
    %5577 = vmatprep.subr.mxu0 %v963
    %5578 = vmatpush1.msra.mxu0 %v962
    %5579 = vmatprep.subr.mxu0 %v967
    %5580 = vmatpush1.msra.mxu0 %v966
    %5581 = vmatprep.subr.mxu0 %v971
    %5582 = vmatpush1.msra.mxu0 %v970
    %5583 = vmatprep.subr.mxu0 %v975
    %5584 = vmatpush1.msra.mxu0 %v974
    %5585 = vmatprep.subr.mxu0 %v979
    %5586 = vmatpush1.msra.mxu0 %v978
    %5587 = vmatprep.subr.mxu0 %v983
    %5588 = vmatpush1.msra.mxu0 %v982
    %5589 = vmatprep.subr.mxu0 %v987
    %5590 = vmatpush1.msra.mxu0 %v986
    %5591 = vmatprep.subr.mxu0 %v991
    %5592 = vmatpush1.msra.mxu0 %v990
    %5593 = vmatprep.subr.mxu0 %v995
    %5594 = vmatpush1.msra.mxu0 %v994
    %5595 = vmatprep.subr.mxu0 %v999
    %5596 = vmatpush1.msra.mxu0 %v998
    %5597 = vmatprep.subr.mxu0 %v1003
    %5598 = vmatpush1.msra.mxu0 %v1002
    %5599 = vmatprep.subr.mxu0 %v1007
    %5600 = vmatpush1.msra.mxu0 %v1006
    %5601 = vmatprep.subr.mxu0 %v1011
    %5602 = vmatpush1.msra.mxu0 %v1010
    %5603 = vmatprep.subr.mxu0 %v1015
    %5604 = vmatpush1.msra.mxu0 %v1014
    %5605 = vmatprep.subr.mxu0 %v1019
    %5606 = vmatpush1.msra.mxu0 %v1018
    %5607 = vmatprep.subr.mxu0 %v1023
    %5608 = vmatpush1.msra.mxu0 %v1022
    %5609 = vmatprep.subr.mxu0 %v1027
    %5610 = vmatpush1.msra.mxu0 %v1026
    %5611 = vmatprep.subr.mxu0 %v1031
    %5612 = vmatpush1.msra.mxu0 %v1030
    %5613 = vmatprep.subr.mxu0 %v1035
    %5614 = vmatpush1.msra.mxu0 %v1034
    %5615 = vmatprep.subr.mxu0 %v1039
    %5616 = vmatpush1.msra.mxu0 %v1038
    %5617 = vmatprep.subr.mxu0 %v1043
    %5618 = vmatpush1.msra.mxu0 %v1042
    %5619 = vmatprep.subr.mxu0 %v1047
    %5620 = vmatpush1.msra.mxu0 %v1046
    %5621 = vmatprep.mubr.f32.mxu0 %v5246
    %5622 = vmatmul.mubr.f32.gmra.mrb[0].mxu0 %v5553
    %v5623 = vpop.f32.mrb[0].mxu0
    %v5624 = vadd.f32 0.0, %v5623
    %v5625 = vpop.f32.mrb[0].mxu0
    %v5626 = vadd.f32 0.0, %v5625
    %5627 = vmatprep.mubr.f32.mxu0 %v5247
    %5628 = vmatmul.mubr.f32.gmra.mrb[0].mxu0 %v5554
    %v5629 = vpop.f32.mrb[0].mxu0
    %v5630 = vadd.f32 0.0, %v5629
    %v5631 = vpop.f32.mrb[0].mxu0
    %v5632 = vadd.f32 0.0, %v5631
    %5633 = vmatprep.mubr.f32.mxu0 %v5248
    %5634 = vmatmul.mubr.f32.gmra.mrb[0].mxu0 %v5555
    %v5635 = vpop.f32.mrb[0].mxu0
    %v5636 = vadd.f32 0.0, %v5635
    %v5637 = vpop.f32.mrb[0].mxu0
    %v5638 = vadd.f32 0.0, %v5637
    %5639 = vmatprep.mubr.f32.mxu0 %v5249
    %5640 = vmatmul.mubr.f32.gmra.mrb[0].mxu0 %v5556
    %v5641 = vpop.f32.mrb[0].mxu0
    %v5642 = vadd.f32 0.0, %v5641
    %v5643 = vpop.f32.mrb[0].mxu0
    %v5644 = vadd.f32 0.0, %v5643
    %5645 = vdwg.mxu0
    %5646 = vmatprep.subr.mxu0 %v925
    %5647 = vmatpush1.msra.mxu0 %v924
    %5648 = vmatprep.subr.mxu0 %v929
    %5649 = vmatpush1.msra.mxu0 %v928
    %5650 = vmatprep.subr.mxu0 %v933
    %5651 = vmatpush1.msra.mxu0 %v932
    %5652 = vmatprep.subr.mxu0 %v937
    %5653 = vmatpush1.msra.mxu0 %v936
    %5654 = vmatprep.subr.mxu0 %v941
    %5655 = vmatpush1.msra.mxu0 %v940
    %5656 = vmatprep.subr.mxu0 %v945
    %5657 = vmatpush1.msra.mxu0 %v944
    %5658 = vmatprep.subr.mxu0 %v949
    %5659 = vmatpush1.msra.mxu0 %v948
    %5660 = vmatprep.subr.mxu0 %v953
    %5661 = vmatpush1.msra.mxu0 %v952
    %5662 = vmatprep.subr.mxu0 %v957
    %5663 = vmatpush1.msra.mxu0 %v956
    %5664 = vmatprep.subr.mxu0 %v961
    %5665 = vmatpush1.msra.mxu0 %v960
    %5666 = vmatprep.subr.mxu0 %v965
    %5667 = vmatpush1.msra.mxu0 %v964
    %5668 = vmatprep.subr.mxu0 %v969
    %5669 = vmatpush1.msra.mxu0 %v968
    %5670 = vmatprep.subr.mxu0 %v973
    %5671 = vmatpush1.msra.mxu0 %v972
    %5672 = vmatprep.subr.mxu0 %v977
    %5673 = vmatpush1.msra.mxu0 %v976
    %5674 = vmatprep.subr.mxu0 %v981
    %5675 = vmatpush1.msra.mxu0 %v980
    %5676 = vmatprep.subr.mxu0 %v985
    %5677 = vmatpush1.msra.mxu0 %v984
    %5678 = vmatprep.subr.mxu0 %v989
    %5679 = vmatpush1.msra.mxu0 %v988
    %5680 = vmatprep.subr.mxu0 %v993
    %5681 = vmatpush1.msra.mxu0 %v992
    %5682 = vmatprep.subr.mxu0 %v997
    %5683 = vmatpush1.msra.mxu0 %v996
    %5684 = vmatprep.subr.mxu0 %v1001
    %5685 = vmatpush1.msra.mxu0 %v1000
    %5686 = vmatprep.subr.mxu0 %v1005
    %5687 = vmatpush1.msra.mxu0 %v1004
    %5688 = vmatprep.subr.mxu0 %v1009
    %5689 = vmatpush1.msra.mxu0 %v1008
    %5690 = vmatprep.subr.mxu0 %v1013
    %5691 = vmatpush1.msra.mxu0 %v1012
    %5692 = vmatprep.subr.mxu0 %v1017
    %5693 = vmatpush1.msra.mxu0 %v1016
    %5694 = vmatprep.subr.mxu0 %v1021
    %5695 = vmatpush1.msra.mxu0 %v1020
    %5696 = vmatprep.subr.mxu0 %v1025
    %5697 = vmatpush1.msra.mxu0 %v1024
    %5698 = vmatprep.subr.mxu0 %v1029
    %5699 = vmatpush1.msra.mxu0 %v1028
    %5700 = vmatprep.subr.mxu0 %v1033
    %5701 = vmatpush1.msra.mxu0 %v1032
    %5702 = vmatprep.subr.mxu0 %v1037
    %5703 = vmatpush1.msra.mxu0 %v1036
    %5704 = vmatprep.subr.mxu0 %v1041
    %5705 = vmatpush1.msra.mxu0 %v1040
    %5706 = vmatprep.subr.mxu0 %v1045
    %5707 = vmatpush1.msra.mxu0 %v1044
    %5708 = vmatprep.subr.mxu0 %v1049
    %5709 = vmatpush1.msra.mxu0 %v1048
    %5710 = vmatprep.mubr.f32.mxu0 %v5246
    %5711 = vmatmul.mubr.f32.gmra.mrb[0].mxu0 %v5553
    %v5712 = vpop.f32.mrb[0].mxu0
    %v5713 = vadd.f32 0.0, %v5712
    %v5714 = vpop.f32.mrb[0].mxu0
    %v5715 = vadd.f32 0.0, %v5714
    %5716 = vmatprep.mubr.f32.mxu0 %v5247
    %5717 = vmatmul.mubr.f32.gmra.mrb[0].mxu0 %v5554
    %v5718 = vpop.f32.mrb[0].mxu0
    %v5719 = vadd.f32 0.0, %v5718
    %v5720 = vpop.f32.mrb[0].mxu0
    %v5721 = vadd.f32 0.0, %v5720
    %5722 = vmatprep.mubr.f32.mxu0 %v5248
    %5723 = vmatmul.mubr.f32.gmra.mrb[0].mxu0 %v5555
    %v5724 = vpop.f32.mrb[0].mxu0
    %v5725 = vadd.f32 0.0, %v5724
    %v5726 = vpop.f32.mrb[0].mxu0
    %v5727 = vadd.f32 0.0, %v5726
    %5728 = vmatprep.mubr.f32.mxu0 %v5249
    %5729 = vmatmul.mubr.f32.gmra.mrb[0].mxu0 %v5556
    %v5730 = vpop.f32.mrb[0].mxu0
    %v5731 = vadd.f32 0.0, %v5730
    %v5732 = vpop.f32.mrb[0].mxu0
    %v5733 = vadd.f32 0.0, %v5732
    %5734 = vdwg.mxu0
    %v5735 = vadd.f32 %v1539, %v5624
    %v5736 = vadd.f32 %v1543, %v5626
    %v5737 = vadd.f32 %v1547, %v5713
    %v5738 = vadd.f32 %v1551, %v5715
    %v5739 = vadd.f32 %v1539, %v5630
    %v5740 = vadd.f32 %v1543, %v5632
    %v5741 = vadd.f32 %v1547, %v5719
    %v5742 = vadd.f32 %v1551, %v5721
    %v5743 = vadd.f32 %v1539, %v5636
    %v5744 = vadd.f32 %v1543, %v5638
    %v5745 = vadd.f32 %v1547, %v5725
    %v5746 = vadd.f32 %v1551, %v5727
    %v5747 = vadd.f32 %v1539, %v5642
    %v5748 = vadd.f32 %v1543, %v5644
    %v5749 = vadd.f32 %v1547, %v5731
    %v5750 = vadd.f32 %v1551, %v5733
    %v5751 = vxor.u32 %v5735, 2147483648
    %v5752 = vxor.u32 %v5736, 2147483648
    %v5753 = vxor.u32 %v5737, 2147483648
    %v5754 = vxor.u32 %v5739, 2147483648
    %v5755 = vxor.u32 %v5740, 2147483648
    %v5756 = vxor.u32 %v5741, 2147483648
    %v5757 = vxor.u32 %v5743, 2147483648
    %v5758 = vxor.u32 %v5744, 2147483648
    %v5759 = vxor.u32 %v5745, 2147483648
    %v5760 = vxor.u32 %v5747, 2147483648
    %v5761 = vxor.u32 %v5748, 2147483648
    %v5762 = vxor.u32 %v5749, 2147483648
    %v5763 = vmul.f32 %v5751, 1.442695
    %v5764 = vpow.pop %v5763
    %v5765 = vmul.f32 %v5752, 1.442695
    %v5766 = vpow.pop %v5765
    %v5767 = vmul.f32 %v5753, 1.442695
    %v5768 = vpow.pop %v5767
    %v5769 = vmul.f32 %v5754, 1.442695
    %v5770 = vpow.pop %v5769
    %v5771 = vmul.f32 %v5755, 1.442695
    %v5772 = vpow.pop %v5771
    %v5773 = vmul.f32 %v5756, 1.442695
    %v5774 = vpow.pop %v5773
    %v5775 = vmul.f32 %v5757, 1.442695
    %v5776 = vpow.pop %v5775
    %v5777 = vmul.f32 %v5758, 1.442695
    %v5778 = vpow.pop %v5777
    %v5779 = vmul.f32 %v5759, 1.442695
    %v5780 = vpow.pop %v5779
    %v5781 = vmul.f32 %v5760, 1.442695
    %v5782 = vpow.pop %v5781
    %v5783 = vmul.f32 %v5761, 1.442695
    %v5784 = vpow.pop %v5783
    %v5785 = vmul.f32 %v5762, 1.442695
    %v5786 = vpow.pop %v5785
    %v5787 = vadd.f32 %v5764, 1.0
    %v5788 = vadd.f32 %v5766, 1.0
    %v5789 = vadd.f32 %v5768, 1.0
    %v5790 = vadd.f32 %v5770, 1.0
    %v5791 = vadd.f32 %v5772, 1.0
    %v5792 = vadd.f32 %v5774, 1.0
    %v5793 = vadd.f32 %v5776, 1.0
    %v5794 = vadd.f32 %v5778, 1.0
    %v5795 = vadd.f32 %v5780, 1.0
    %v5796 = vadd.f32 %v5782, 1.0
    %v5797 = vadd.f32 %v5784, 1.0
    %v5798 = vadd.f32 %v5786, 1.0
    %v5799 = vrcp.pop %v5787
    %v5800 = vmul.f32 1.0, %v5799
    %v5801 = vrcp.pop %v5788
    %v5802 = vmul.f32 1.0, %v5801
    %v5803 = vrcp.pop %v5789
    %v5804 = vmul.f32 1.0, %v5803
    %v5805 = vrcp.pop %v5790
    %v5806 = vmul.f32 1.0, %v5805
    %v5807 = vrcp.pop %v5791
    %v5808 = vmul.f32 1.0, %v5807
    %v5809 = vrcp.pop %v5792
    %v5810 = vmul.f32 1.0, %v5809
    %v5811 = vrcp.pop %v5793
    %v5812 = vmul.f32 1.0, %v5811
    %v5813 = vrcp.pop %v5794
    %v5814 = vmul.f32 1.0, %v5813
    %v5815 = vrcp.pop %v5795
    %v5816 = vmul.f32 1.0, %v5815
    %v5817 = vrcp.pop %v5796
    %v5818 = vmul.f32 1.0, %v5817
    %v5819 = vrcp.pop %v5797
    %v5820 = vmul.f32 1.0, %v5819
    %v5821 = vrcp.pop %v5798
    %v5822 = vmul.f32 1.0, %v5821
    %v5823 = vtanh.pop %v5738
    %v5824 = vtanh.pop %v5742
    %v5825 = vtanh.pop %v5746
    %v5826 = vtanh.pop %v5750
    %v5827 = vmul.f32 %v5802, %v5238
    %v5828 = vmul.f32 %v5808, %v5239
    %v5829 = vmul.f32 %v5814, %v5240
    %v5830 = vmul.f32 %v5820, %v5241
    %v5831 = vmul.f32 %v5800, %v5823
    %v5832 = vmul.f32 %v5806, %v5824
    %v5833 = vmul.f32 %v5812, %v5825
    %v5834 = vmul.f32 %v5818, %v5826
    %v5835 = vadd.f32 %v5827, %v5831
    %v5836 = vadd.f32 %v5828, %v5832
    %v5837 = vadd.f32 %v5829, %v5833
    %v5838 = vadd.f32 %v5830, %v5834
    %v5839 = vtanh.pop %v5835
    %v5840 = vtanh.pop %v5836
    %v5841 = vtanh.pop %v5837
    %v5842 = vtanh.pop %v5838
    %v5843 = vmul.f32 %v5804, %v5839
    %v5844 = vmul.f32 %v5810, %v5840
    %v5845 = vmul.f32 %v5816, %v5841
    %v5846 = vmul.f32 %v5822, %v5842
    %v5847 = vld [vmem:[#allocation11] sm:$0xff]
    %v5848 = vld [vmem:[#allocation11 + $0x8] sm:$0xff]
    %v5849 = vld [vmem:[#allocation11 + $0x10] sm:$0xff]
    %v5850 = vld [vmem:[#allocation11 + $0x18] sm:$0xff]
    %v5851 = vld [vmem:[#allocation11 + $0x20] sm:$0xff]
    %v5852 = vld [vmem:[#allocation11 + $0x28] sm:$0xff]
    %v5853 = vld [vmem:[#allocation11 + $0x30] sm:$0xff]
    %v5854 = vld [vmem:[#allocation11 + $0x38] sm:$0xff]
    %v5855 = vld [vmem:[#allocation11 + $0x40] sm:$0xff]
    %v5856 = vld [vmem:[#allocation11 + $0x48] sm:$0xff]
    %v5857 = vld [vmem:[#allocation11 + $0x50] sm:$0xff]
    %v5858 = vld [vmem:[#allocation11 + $0x58] sm:$0xff]
    %v5859 = vld [vmem:[#allocation11 + $0x60] sm:$0xff]
    %v5860 = vld [vmem:[#allocation11 + $0x68] sm:$0xff]
    %v5861 = vld [vmem:[#allocation11 + $0x70] sm:$0xff]
    %v5862 = vld [vmem:[#allocation11 + $0x78] sm:$0xff]
    %v5863 = vld [vmem:[%s7] sm:$0x1]
    %v5865 = vlaneseq
    %v5866 = vshrl.u32 %v5865, 7
    %v5867 = vsub.s32 0, %v5866
    %v5868 = vrot.slane %v5863, %v5867
    %5870 = vmatprep.subr.mxu0 0.0
    %5871 = vmatpush1.msra.mxu0 %v5847
    %5872 = vmatprep.subr.mxu0 0.0
    %5873 = vmatpush1.msra.mxu0 %v5848
    %5874 = vmatprep.subr.mxu0 0.0
    %5875 = vmatpush1.msra.mxu0 %v5849
    %5876 = vmatprep.subr.mxu0 0.0
    %5877 = vmatpush1.msra.mxu0 %v5850
    %5878 = vmatprep.subr.mxu0 0.0
    %5879 = vmatpush1.msra.mxu0 %v5851
    %5880 = vmatprep.subr.mxu0 0.0
    %5881 = vmatpush1.msra.mxu0 %v5852
    %5882 = vmatprep.subr.mxu0 0.0
    %5883 = vmatpush1.msra.mxu0 %v5853
    %5884 = vmatprep.subr.mxu0 0.0
    %5885 = vmatpush1.msra.mxu0 %v5854
    %5886 = vmatprep.subr.mxu0 0.0
    %5887 = vmatpush1.msra.mxu0 %v5855
    %5888 = vmatprep.subr.mxu0 0.0
    %5889 = vmatpush1.msra.mxu0 %v5856
    %5890 = vmatprep.subr.mxu0 0.0
    %5891 = vmatpush1.msra.mxu0 %v5857
    %5892 = vmatprep.subr.mxu0 0.0
    %5893 = vmatpush1.msra.mxu0 %v5858
    %5894 = vmatprep.subr.mxu0 0.0
    %5895 = vmatpush1.msra.mxu0 %v5859
    %5896 = vmatprep.subr.mxu0 0.0
    %5897 = vmatpush1.msra.mxu0 %v5860
    %5898 = vmatprep.subr.mxu0 0.0
    %5899 = vmatpush1.msra.mxu0 %v5861
    %5900 = vmatprep.subr.mxu0 0.0
    %5901 = vmatpush1.msra.mxu0 %v5862
    %5902 = vmatprep.subr.mxu0 0.0
    %5903 = vmatpush1.msra.mxu0 0.0
    %5904 = vmatprep.subr.mxu0 0.0
    %5905 = vmatpush1.msra.mxu0 0.0
    %5906 = vmatprep.subr.mxu0 0.0
    %5907 = vmatpush1.msra.mxu0 0.0
    %5908 = vmatprep.subr.mxu0 0.0
    %5909 = vmatpush1.msra.mxu0 0.0
    %5910 = vmatprep.subr.mxu0 0.0
    %5911 = vmatpush1.msra.mxu0 0.0
    %5912 = vmatprep.subr.mxu0 0.0
    %5913 = vmatpush1.msra.mxu0 0.0
    %5914 = vmatprep.subr.mxu0 0.0
    %5915 = vmatpush1.msra.mxu0 0.0
    %5916 = vmatprep.subr.mxu0 0.0
    %5917 = vmatpush1.msra.mxu0 0.0
    %5918 = vmatprep.subr.mxu0 0.0
    %5919 = vmatpush1.msra.mxu0 0.0
    %5920 = vmatprep.subr.mxu0 0.0
    %5921 = vmatpush1.msra.mxu0 0.0
    %5922 = vmatprep.subr.mxu0 0.0
    %5923 = vmatpush1.msra.mxu0 0.0
    %5924 = vmatprep.subr.mxu0 0.0
    %5925 = vmatpush1.msra.mxu0 0.0
    %5926 = vmatprep.subr.mxu0 0.0
    %5927 = vmatpush1.msra.mxu0 0.0
    %5928 = vmatprep.subr.mxu0 0.0
    %5929 = vmatpush1.msra.mxu0 0.0
    %5930 = vmatprep.subr.mxu0 0.0
    %5931 = vmatpush1.msra.mxu0 0.0
    %5932 = vmatprep.subr.mxu0 0.0
    %5933 = vmatpush1.msra.mxu0 0.0
    %5934 = vmatprep.mubr.f32.mxu0 0.0
    %5935 = vmatmul.mubr.f32.gmra.mrb[0].mxu0 %v5843
    %v5936 = vpop.f32.mrb[0].mxu0
    %v5937 = vadd.f32 %v5868, %v5936
    %v5938 = vpop.f32.mrb[0].mxu0
    %5939 = vmatprep.mubr.f32.mxu0 0.0
    %5940 = vmatmul.mubr.f32.gmra.mrb[0].mxu0 %v5844
    %v5941 = vpop.f32.mrb[0].mxu0
    %v5942 = vadd.f32 %v5868, %v5941
    %v5943 = vpop.f32.mrb[0].mxu0
    %5944 = vmatprep.mubr.f32.mxu0 0.0
    %5945 = vmatmul.mubr.f32.gmra.mrb[0].mxu0 %v5845
    %v5946 = vpop.f32.mrb[0].mxu0
    %v5947 = vadd.f32 %v5868, %v5946
    %v5948 = vpop.f32.mrb[0].mxu0
    %5949 = vmatprep.mubr.f32.mxu0 0.0
    %5950 = vmatmul.mubr.f32.gmra.mrb[0].mxu0 %v5846
    %v5951 = vpop.f32.mrb[0].mxu0
    %v5952 = vadd.f32 %v5868, %v5951
    %v5953 = vpop.f32.mrb[0].mxu0
    %5954 = vdwg.mxu0
    %5955 = vst [vmem:[#allocation12] sm:$0xff] %v5937
    %5956 = vst [vmem:[#allocation12 + $0x8] sm:$0xff] %v5942
    %5957 = vst [vmem:[#allocation12 + $0x10] sm:$0xff] %v5947
    %5958 = vst [vmem:[#allocation12 + $0x18] sm:$0xff] %v5952
    // Predicated region
    $region54: #{tpu_custom_call.1} parent=1 // pred_check
      _
    $region55: #{tpu_custom_call.1} parent=1 // pred_check_branch
      %5960 = sbr.rel (0) target = $region57
    $region56: #{tpu_custom_call.1} parent=1 // pred_region
      %s5962 = ssub.s32 512, 512
      %5963 = vsyncadd [#allocation5], %s5962
      %s5964 = sshll.u32 [#allocation12], 4
      %s5965 = int_to_ptr.vmem [resolvable:$true] %s5964
      %5970 = dma.vmem_to_hbm [thread:$0]  %s5965, 512, %s8, [#allocation5], 128, 128, 8
    $region57: #{tpu_custom_call.1} parent=1 // pred_fallthru
      _
    // Predicated region
    $region58: #{tpu_custom_call.1} parent=1 // pred_check
      _
    $region59: #{tpu_custom_call.1} parent=1 // pred_check_branch
      %5972 = sbr.rel (0) target = $region61
    $region60: #{tpu_custom_call.1} parent=1 // pred_region
      %5973 = dma.done [#allocation5], 512
    $region61: #{tpu_custom_call.1} parent=1 // pred_fallthru
      _
    %5974 = vsyncpa [#allocation4], 1
    %5975 = vsyncpa [#allocation7], 1
    %5976 = vsyncpa [#allocation10], 1
    %5977 = vsyncpa [#allocation5], 1

</llo_original>
